<compile_context>
chip_gen: v7x
topology: tpu7x:2x2x1
jax: 0.10.0
libtpu: 0.0.40
codegen_flags: <defaults>
</compile_context>

<pallas_src>
import jax
import jax.numpy as jnp
from jax.experimental import pallas as pl
from jax.experimental.pallas import tpu as pltpu


# The PyTorch module hard-codes Linear(32*32*64, n_classes) -> spatial is 32x32.
H = 32
W = 32
C_IN = 3
C1 = 32            # conv1 output channels
C2 = 64            # conv2 output channels
K1 = 9 * C_IN      # 27   im2col contraction for conv1
K2 = 9 * C1        # 288  im2col contraction for conv2

R1 = 4             # conv1 output rows per in-kernel block (128 positions)
R2 = 2             # conv2 output rows per in-kernel block (64 positions)
FC_CHUNK = 128     # positions per FC reduction chunk


def _fused_cnn_kernel(xcol_ref, w1_ref, w2_ref, fcw_ref, fcb_ref,
                      probs_ref, scores_ref, a1_ref, a2_ref):
    # xcol_ref : (H*W, 27)        conv1 im2col patches for this image
    # w1_ref   : (27, 32)         conv1 weight, (dy,dx,ci) x co
    # w2_ref   : (288, 64)        conv2 weight, (dy,dx,ci) x co
    # fcw_ref  : (C, H*W, 64)     FC weight, NHWC order, class-major
    # fcb_ref  : (1, C)
    # probs_ref, scores_ref : (1, C)
    # a1_ref   : (H+2, W+2, C1)   VMEM scratch: zero-padded conv1 activation
    # a2_ref   : (H*W, C2)        VMEM scratch: conv2 activation (NHWC flatten)
    n_classes = fcw_ref.shape[0]

    # ---------------- conv1 (3x3, pad=1, no bias) + ReLU ----------------
    # Row-tiled im2col matmul, K = 27.  Zero-init gives the padded border.
    a1_ref[...] = jnp.zeros_like(a1_ref)

    @pl.loop(0, H // R1)
    def _conv1(i):
        start = pl.multiple_of(i * (R1 * W), R1 * W)
        patch = xcol_ref[pl.ds(start, R1 * W), :]                    # (R1*W, 27)
        out = jnp.dot(patch, w1_ref[...],
                      preferred_element_type=jnp.float32)            # (R1*W, 32)
        out = jnp.maximum(out, 0.0)
        a1_ref[pl.ds(1 + i * R1, R1), 1:1 + W, :] = out.reshape(R1, W, C1)

    # ---------------- conv2 (3x3, pad=1, no bias) + ReLU ----------------
    # Per 2-row block: build an im2col tile (64, 288) and do ONE K=288 matmul.
    @pl.loop(0, H // R2)
    def _conv2(i):
        parts = []
        for dy in range(3):
            for dx in range(3):
                sl = a1_ref[pl.ds(i * R2 + dy, R2), dx:dx + W, :]    # (R2, W, 32)
                parts.append(sl.reshape(R2 * W, C1))
        patch = jnp.concatenate(parts, axis=-1)                      # (R2*W, 288)
        out = jnp.dot(patch, w2_ref[...],
                      preferred_element_type=jnp.float32)            # (R2*W, 64)
        out = jnp.maximum(out, 0.0)
        start = pl.multiple_of(i * (R2 * W), R2 * W)
        a2_ref[pl.ds(start, R2 * W), :] = out

    # ---------------- fully connected + softmax ----------------
    # scores[c] = sum_{p,k} a2[p,k] * fcw[c,p,k]  (VPU multiply + reduce).
    # Both operands share the same (positions, 64) layout -> no relayout, and
    # the chunking keeps the live set to ~48 vregs.
    n_chunks = (H * W) // FC_CHUNK
    acc = [jnp.zeros((1, C2), jnp.float32) for _ in range(n_classes)]
    for j in range(n_chunks):
        a2_chunk = a2_ref[pl.ds(j * FC_CHUNK, FC_CHUNK), :]          # (128, 64)
        for c in range(n_classes):
            w_chunk = fcw_ref[c, pl.ds(j * FC_CHUNK, FC_CHUNK), :]   # (128, 64)
            acc[c] = acc[c] + jnp.sum(a2_chunk * w_chunk, axis=0, keepdims=True)

    scores = jnp.concatenate(
        [jnp.sum(a, axis=1, keepdims=True) for a in acc], axis=1)    # (1, C)
    scores = scores + fcb_ref[...]
    scores_ref[...] = scores.astype(scores_ref.dtype)

    m = jnp.max(scores, axis=-1, keepdims=True)
    e = jnp.exp(scores - m)
    probs_ref[...] = (e / jnp.sum(e, axis=-1, keepdims=True)).astype(probs_ref.dtype)


def two_layer_cnn_forward(images_nchw, params):
    """Forward pass matching TwoLayerCNN.forward; returns (logits, scores)."""
    n, cin, h, w = images_nchw.shape
    assert (cin, h, w) == (C_IN, H, W), "module hard-codes 3x32x32 inputs"
    n_classes = params["fc_b"].shape[0]

    # NCHW -> NHWC, zero pad, and build the conv1 im2col patches once in XLA
    # (Cin=3 is a pure layout problem; the matmul itself runs in the kernel).
    x = jnp.transpose(images_nchw, (0, 2, 3, 1)).astype(jnp.float32)
    xp = jnp.pad(x, ((0, 0), (1, 1), (1, 1), (0, 0)))
    cols = [xp[:, dy:dy + H, dx:dx + W, :] for dy in range(3) for dx in range(3)]
    xcol = jnp.concatenate(cols, axis=-1).reshape(n, H * W, K1)      # (N, 1024, 27)

    w1 = params["conv1_w"].reshape(K1, C1)                           # (27, 32)
    w2 = params["conv2_w"].reshape(K2, C2)                           # (288, 64)

    # fc_w rows are in PyTorch NCHW-flatten order (co, h, w).  Permute once to
    # the kernel's NHWC flatten order and make it class-major / lane-dense.
    fcw = params["fc_w"].reshape(C2, H, W, n_classes)
    fcw = jnp.transpose(fcw, (3, 1, 2, 0)).reshape(n_classes, H * W, C2)
    fcb = params["fc_b"].reshape(1, n_classes)

    probs, scores = pl.pallas_call(
        _fused_cnn_kernel,
        out_shape=(jax.ShapeDtypeStruct((n, 1, n_classes), jnp.float32),
                   jax.ShapeDtypeStruct((n, 1, n_classes), jnp.float32)),
        grid=(n,),
        in_specs=[
            pl.BlockSpec((None, H * W, K1), lambda i: (i, 0, 0)),
            pl.BlockSpec((K1, C1), lambda i: (0, 0)),
            pl.BlockSpec((K2, C2), lambda i: (0, 0)),
            pl.BlockSpec((n_classes, H * W, C2), lambda i: (0, 0, 0)),
            pl.BlockSpec((1, n_classes), lambda i: (0, 0)),
        ],
        out_specs=(pl.BlockSpec((None, 1, n_classes), lambda i: (i, 0, 0)),
                   pl.BlockSpec((None, 1, n_classes), lambda i: (i, 0, 0))),
        scratch_shapes=[pltpu.VMEM((H + 2, W + 2, C1), jnp.float32),
                        pltpu.VMEM((H * W, C2), jnp.float32)],
        compiler_params=pltpu.CompilerParams(
            dimension_semantics=("parallel",),
            vmem_limit_bytes=40 * 1024 * 1024),
    )(xcol, w1, w2, fcw, fcb)

    return probs.reshape(n, n_classes), scores.reshape(n, n_classes)


# ----------------------------------------------------------------------------
# Pure-JAX reference (same math, XLA convolutions) used as a sanity check.
# ----------------------------------------------------------------------------
def reference_forward(images_nchw, params):
    w1 = jnp.transpose(params["conv1_w"], (3, 2, 0, 1))   # HWIO -> OIHW
    w2 = jnp.transpose(params["conv2_w"], (3, 2, 0, 1))
    dn = ("NCHW", "OIHW", "NCHW")
    x = jax.lax.conv_general_dilated(images_nchw, w1, (1, 1), "SAME",
                                     dimension_numbers=dn)
    x = jnp.maximum(x, 0.0)
    x = jax.lax.conv_general_dilated(x, w2, (1, 1), "SAME",
                                     dimension_numbers=dn)
    x = jnp.maximum(x, 0.0)
    flat = x.reshape(x.shape[0], -1)
    scores = flat @ params["fc_w"] + params["fc_b"]
    probs = jax.nn.softmax(scores, axis=1)
    return probs, scores


if __name__ == "__main__":
    key = jax.random.PRNGKey(0)
    k_img, k1, k2, k3, k4 = jax.random.split(key, 5)

    N = 2
    n_classes = 10
    D = C2 * H * W   # 65536 = 32 * 32 * 64 (flattened_dim of the module)

    images = jax.random.normal(k_img, (N, C_IN, H, W), jnp.float32)

    # Deterministic parameter init (HWIO convs, (in, out) linear as before).
    params = {
        "conv1_w": jax.random.normal(k1, (3, 3, C_IN, C1), jnp.float32)
                   / jnp.sqrt(27.0),
        "conv2_w": jax.random.normal(k2, (3, 3, C1, C2), jnp.float32)
                   / jnp.sqrt(288.0),
        "fc_w": jax.random.normal(k3, (D, n_classes), jnp.float32)
                / jnp.sqrt(float(D)),
        "fc_b": jax.random.normal(k4, (n_classes,), jnp.float32) * 0.01,
    }

    probs, scores = jax.jit(two_layer_cnn_forward)(images, params)
    jax.block_until_ready((probs, scores))

    ref_probs, ref_scores = reference_forward(images, params)
    assert probs.shape == (N, n_classes) and scores.shape == (N, n_classes)
    assert jnp.allclose(scores, ref_scores, atol=2e-3, rtol=2e-3)
    assert jnp.allclose(probs, ref_probs, atol=2e-3, rtol=2e-3)

    print("KERNEL_OK")
</pallas_src>

<mosaic_0001>
module attributes {stable_mosaic.version = 11 : i64} {
  func.func @_fused_cnn_kernel(%arg0: i32, %arg1: memref<1x1024x27xf32, #tpu.memory_space<vmem>>, %arg2: memref<27x32xf32, #tpu.memory_space<vmem>>, %arg3: memref<288x64xf32, #tpu.memory_space<vmem>>, %arg4: memref<10x1024x64xf32, #tpu.memory_space<vmem>>, %arg5: memref<1x10xf32, #tpu.memory_space<vmem>>, %arg6: memref<1x1x10xf32, #tpu.memory_space<vmem>>, %arg7: memref<1x1x10xf32, #tpu.memory_space<vmem>>, %arg8: memref<34x34x32xf32, #tpu.memory_space<vmem>>, %arg9: memref<1024x64xf32, #tpu.memory_space<vmem>>) attributes {dimension_semantics = [#tpu.dimension_semantics<parallel>], iteration_bounds = array<i64: 2>, scalar_prefetch = 0 : i64, scratch_operands = 2 : i64, tpu.core_type = #tpu.core_type<tc>, window_params = [{transform_indices = @transform_0, window_bounds = array<i64: 1, 1024, 27>}, {pipeline_mode = #tpu.pipeline_mode<synchronous>, transform_indices = @transform_1, window_bounds = array<i64: 27, 32>}, {pipeline_mode = #tpu.pipeline_mode<synchronous>, transform_indices = @transform_2, window_bounds = array<i64: 288, 64>}, {pipeline_mode = #tpu.pipeline_mode<synchronous>, transform_indices = @transform_3, window_bounds = array<i64: 10, 1024, 64>}, {pipeline_mode = #tpu.pipeline_mode<synchronous>, transform_indices = @transform_4, window_bounds = array<i64: 1, 10>}, {transform_indices = @transform_5, window_bounds = array<i64: 1, 1, 10>}, {transform_indices = @transform_6, window_bounds = array<i64: 1, 1, 10>}]} {
    %cst = arith.constant 0.000000e+00 : f32
    %0 = vector.broadcast %cst : f32 to vector<34x34x32xf32>
    %c0 = arith.constant 0 : index
    %c0_0 = arith.constant 0 : index
    %c0_1 = arith.constant 0 : index
    %1 = vector.load %arg8[%c0, %c0_0, %c0_1] : memref<34x34x32xf32, #tpu.memory_space<vmem>>, vector<34x34x32xf32>
    tpu.vector_store %arg8[%c0, %c0_0, %c0_1], %0 {strides = array<i32>} : memref<34x34x32xf32, #tpu.memory_space<vmem>>, vector<34x34x32xf32>,
    %c0_i32 = arith.constant 0 : i32
    %c8_i32 = arith.constant 8 : i32
    %2 = arith.addi %c0_i32, %c8_i32 : i32
    %c1_i32 = arith.constant 1 : i32
    scf.for %arg10 = %c0_i32 to %2 step %c1_i32  : i32 {
      %c1_i32_356 = arith.constant 1 : i32
      %540 = arith.muli %arg10, %c1_i32_356 : i32
      %c0_i32_357 = arith.constant 0 : i32
      %541 = arith.addi %c0_i32_357, %540 : i32
      %c128_i32 = arith.constant 128 : i32
      %542 = arith.muli %541, %c128_i32 : i32
      %543 = tpu.assume_multiple %542, 128 : i32
      %c0_358 = arith.constant 0 : index
      %544 = arith.index_cast %543 : i32 to index
      %c0_359 = arith.constant 0 : index
      %545 = vector.load %arg1[%c0_358, %544, %c0_359] : memref<1x1024x27xf32, #tpu.memory_space<vmem>>, vector<1x128x27xf32>
      %546 = vector.shape_cast %545 : vector<1x128x27xf32> to vector<128x27xf32>
      %c0_360 = arith.constant 0 : index
      %c0_361 = arith.constant 0 : index
      %547 = vector.load %arg2[%c0_360, %c0_361] : memref<27x32xf32, #tpu.memory_space<vmem>>, vector<27x32xf32>
      %cst_362 = arith.constant dense<0.000000e+00> : vector<128x32xf32>
      %548 = tpu.matmul %546, %547, %cst_362 {dimension_numbers = #tpu.dot_dimension_numbers<[1], [0], [0], [1], [0, 0, 1, 1], [], []>} : vector<128x27xf32>, vector<27x32xf32>, vector<128x32xf32> -> vector<128x32xf32>
      %cst_363 = arith.constant 0.000000e+00 : f32
      %549 = vector.broadcast %cst_363 : f32 to vector<128x32xf32>
      %550 = arith.maximumf %548, %549 : vector<128x32xf32>
      %551 = vector.shape_cast %550 : vector<128x32xf32> to vector<4x32x32xf32>
      %c4_i32 = arith.constant 4 : i32
      %552 = arith.muli %541, %c4_i32 : i32
      %c1_i32_364 = arith.constant 1 : i32
      %553 = arith.addi %c1_i32_364, %552 : i32
      %554 = arith.index_cast %553 : i32 to index
      %c1_365 = arith.constant 1 : index
      %c0_366 = arith.constant 0 : index
      %555 = vector.load %arg8[%554, %c1_365, %c0_366] : memref<34x34x32xf32, #tpu.memory_space<vmem>>, vector<4x32x32xf32>
      tpu.vector_store %arg8[%554, %c1_365, %c0_366], %551 {strides = array<i32>} : memref<34x34x32xf32, #tpu.memory_space<vmem>>, vector<4x32x32xf32>,
    }
    %c8_i32_2 = arith.constant 8 : i32
    %c0_i32_3 = arith.constant 0 : i32
    %c16_i32 = arith.constant 16 : i32
    %3 = arith.addi %c0_i32_3, %c16_i32 : i32
    %c1_i32_4 = arith.constant 1 : i32
    scf.for %arg10 = %c0_i32_3 to %3 step %c1_i32_4  : i32 {
      %c1_i32_356 = arith.constant 1 : i32
      %540 = arith.muli %arg10, %c1_i32_356 : i32
      %c0_i32_357 = arith.constant 0 : i32
      %541 = arith.addi %c0_i32_357, %540 : i32
      %c2_i32 = arith.constant 2 : i32
      %542 = arith.muli %541, %c2_i32 : i32
      %c0_i32_358 = arith.constant 0 : i32
      %543 = arith.addi %542, %c0_i32_358 : i32
      %544 = arith.index_cast %543 : i32 to index
      %c0_359 = arith.constant 0 : index
      %c0_360 = arith.constant 0 : index
      %545 = vector.load %arg8[%544, %c0_359, %c0_360] : memref<34x34x32xf32, #tpu.memory_space<vmem>>, vector<2x32x32xf32>
      %546 = vector.shape_cast %545 : vector<2x32x32xf32> to vector<64x32xf32>
      %c2_i32_361 = arith.constant 2 : i32
      %547 = arith.muli %541, %c2_i32_361 : i32
      %c0_i32_362 = arith.constant 0 : i32
      %548 = arith.addi %547, %c0_i32_362 : i32
      %549 = arith.index_cast %548 : i32 to index
      %c1_363 = arith.constant 1 : index
      %c0_364 = arith.constant 0 : index
      %550 = vector.load %arg8[%549, %c1_363, %c0_364] : memref<34x34x32xf32, #tpu.memory_space<vmem>>, vector<2x32x32xf32>
      %551 = vector.shape_cast %550 : vector<2x32x32xf32> to vector<64x32xf32>
      %c2_i32_365 = arith.constant 2 : i32
      %552 = arith.muli %541, %c2_i32_365 : i32
      %c0_i32_366 = arith.constant 0 : i32
      %553 = arith.addi %552, %c0_i32_366 : i32
      %554 = arith.index_cast %553 : i32 to index
      %c2_367 = arith.constant 2 : index
      %c0_368 = arith.constant 0 : index
      %555 = vector.load %arg8[%554, %c2_367, %c0_368] : memref<34x34x32xf32, #tpu.memory_space<vmem>>, vector<2x32x32xf32>
      %556 = vector.shape_cast %555 : vector<2x32x32xf32> to vector<64x32xf32>
      %c2_i32_369 = arith.constant 2 : i32
      %557 = arith.muli %541, %c2_i32_369 : i32
      %c1_i32_370 = arith.constant 1 : i32
      %558 = arith.addi %557, %c1_i32_370 : i32
      %559 = arith.index_cast %558 : i32 to index
      %c0_371 = arith.constant 0 : index
      %c0_372 = arith.constant 0 : index
      %560 = vector.load %arg8[%559, %c0_371, %c0_372] : memref<34x34x32xf32, #tpu.memory_space<vmem>>, vector<2x32x32xf32>
      %561 = vector.shape_cast %560 : vector<2x32x32xf32> to vector<64x32xf32>
      %c2_i32_373 = arith.constant 2 : i32
      %562 = arith.muli %541, %c2_i32_373 : i32
      %c1_i32_374 = arith.constant 1 : i32
      %563 = arith.addi %562, %c1_i32_374 : i32
      %564 = arith.index_cast %563 : i32 to index
      %c1_375 = arith.constant 1 : index
      %c0_376 = arith.constant 0 : index
      %565 = vector.load %arg8[%564, %c1_375, %c0_376] : memref<34x34x32xf32, #tpu.memory_space<vmem>>, vector<2x32x32xf32>
      %566 = vector.shape_cast %565 : vector<2x32x32xf32> to vector<64x32xf32>
      %c2_i32_377 = arith.constant 2 : i32
      %567 = arith.muli %541, %c2_i32_377 : i32
      %c1_i32_378 = arith.constant 1 : i32
      %568 = arith.addi %567, %c1_i32_378 : i32
      %569 = arith.index_cast %568 : i32 to index
      %c2_379 = arith.constant 2 : index
      %c0_380 = arith.constant 0 : index
      %570 = vector.load %arg8[%569, %c2_379, %c0_380] : memref<34x34x32xf32, #tpu.memory_space<vmem>>, vector<2x32x32xf32>
      %571 = vector.shape_cast %570 : vector<2x32x32xf32> to vector<64x32xf32>
      %c2_i32_381 = arith.constant 2 : i32
      %572 = arith.muli %541, %c2_i32_381 : i32
      %c2_i32_382 = arith.constant 2 : i32
      %573 = arith.addi %572, %c2_i32_382 : i32
      %574 = arith.index_cast %573 : i32 to index
      %c0_383 = arith.constant 0 : index
      %c0_384 = arith.constant 0 : index
      %575 = vector.load %arg8[%574, %c0_383, %c0_384] : memref<34x34x32xf32, #tpu.memory_space<vmem>>, vector<2x32x32xf32>
      %576 = vector.shape_cast %575 : vector<2x32x32xf32> to vector<64x32xf32>
      %c2_i32_385 = arith.constant 2 : i32
      %577 = arith.muli %541, %c2_i32_385 : i32
      %c2_i32_386 = arith.constant 2 : i32
      %578 = arith.addi %577, %c2_i32_386 : i32
      %579 = arith.index_cast %578 : i32 to index
      %c1_387 = arith.constant 1 : index
      %c0_388 = arith.constant 0 : index
      %580 = vector.load %arg8[%579, %c1_387, %c0_388] : memref<34x34x32xf32, #tpu.memory_space<vmem>>, vector<2x32x32xf32>
      %581 = vector.shape_cast %580 : vector<2x32x32xf32> to vector<64x32xf32>
      %c2_i32_389 = arith.constant 2 : i32
      %582 = arith.muli %541, %c2_i32_389 : i32
      %c2_i32_390 = arith.constant 2 : i32
      %583 = arith.addi %582, %c2_i32_390 : i32
      %584 = arith.index_cast %583 : i32 to index
      %c2_391 = arith.constant 2 : index
      %c0_392 = arith.constant 0 : index
      %585 = vector.load %arg8[%584, %c2_391, %c0_392] : memref<34x34x32xf32, #tpu.memory_space<vmem>>, vector<2x32x32xf32>
      %586 = vector.shape_cast %585 : vector<2x32x32xf32> to vector<64x32xf32>
      %587 = tpu.concatenate %546, %551, %556, %561, %566, %571, %576, %581, %586 in 1 : vector<64x32xf32>, vector<64x32xf32>, vector<64x32xf32>, vector<64x32xf32>, vector<64x32xf32>, vector<64x32xf32>, vector<64x32xf32>, vector<64x32xf32>, vector<64x32xf32> -> vector<64x288xf32>
      %c0_393 = arith.constant 0 : index
      %c0_394 = arith.constant 0 : index
      %588 = vector.load %arg3[%c0_393, %c0_394] : memref<288x64xf32, #tpu.memory_space<vmem>>, vector<288x64xf32>
      %cst_395 = arith.constant dense<0.000000e+00> : vector<64x64xf32>
      %589 = tpu.matmul %587, %588, %cst_395 {dimension_numbers = #tpu.dot_dimension_numbers<[1], [0], [0], [1], [0, 0, 1, 1], [], []>} : vector<64x288xf32>, vector<288x64xf32>, vector<64x64xf32> -> vector<64x64xf32>
      %cst_396 = arith.constant 0.000000e+00 : f32
      %590 = vector.broadcast %cst_396 : f32 to vector<64x64xf32>
      %591 = arith.maximumf %589, %590 : vector<64x64xf32>
      %c64_i32 = arith.constant 64 : i32
      %592 = arith.muli %541, %c64_i32 : i32
      %593 = tpu.assume_multiple %592, 64 : i32
      %594 = arith.index_cast %593 : i32 to index
      %c0_397 = arith.constant 0 : index
      %595 = vector.load %arg9[%594, %c0_397] : memref<1024x64xf32, #tpu.memory_space<vmem>>, vector<64x64xf32>
      tpu.vector_store %arg9[%594, %c0_397], %591 {strides = array<i32>} : memref<1024x64xf32, #tpu.memory_space<vmem>>, vector<64x64xf32>,
    }
    %c16_i32_5 = arith.constant 16 : i32
    %cst_6 = arith.constant 0.000000e+00 : f32
    %4 = vector.broadcast %cst_6 : f32 to vector<1x64xf32>
    %cst_7 = arith.constant 0.000000e+00 : f32
    %5 = vector.broadcast %cst_7 : f32 to vector<1x64xf32>
    %cst_8 = arith.constant 0.000000e+00 : f32
    %6 = vector.broadcast %cst_8 : f32 to vector<1x64xf32>
    %cst_9 = arith.constant 0.000000e+00 : f32
    %7 = vector.broadcast %cst_9 : f32 to vector<1x64xf32>
    %cst_10 = arith.constant 0.000000e+00 : f32
    %8 = vector.broadcast %cst_10 : f32 to vector<1x64xf32>
    %cst_11 = arith.constant 0.000000e+00 : f32
    %9 = vector.broadcast %cst_11 : f32 to vector<1x64xf32>
    %cst_12 = arith.constant 0.000000e+00 : f32
    %10 = vector.broadcast %cst_12 : f32 to vector<1x64xf32>
    %cst_13 = arith.constant 0.000000e+00 : f32
    %11 = vector.broadcast %cst_13 : f32 to vector<1x64xf32>
    %cst_14 = arith.constant 0.000000e+00 : f32
    %12 = vector.broadcast %cst_14 : f32 to vector<1x64xf32>
    %cst_15 = arith.constant 0.000000e+00 : f32
    %13 = vector.broadcast %cst_15 : f32 to vector<1x64xf32>
    %c0_16 = arith.constant 0 : index
    %c0_17 = arith.constant 0 : index
    %14 = vector.load %arg9[%c0_16, %c0_17] : memref<1024x64xf32, #tpu.memory_space<vmem>>, vector<128x64xf32>
    %c0_18 = arith.constant 0 : index
    %c0_19 = arith.constant 0 : index
    %c0_20 = arith.constant 0 : index
    %15 = vector.load %arg4[%c0_18, %c0_19, %c0_20] : memref<10x1024x64xf32, #tpu.memory_space<vmem>>, vector<1x128x64xf32>
    %16 = vector.shape_cast %15 : vector<1x128x64xf32> to vector<128x64xf32>
    %17 = arith.mulf %14, %16 : vector<128x64xf32>
    %cst_21 = arith.constant dense<0.000000e+00> : vector<64xf32>
    %18 = vector.multi_reduction <add>, %17, %cst_21 [0] : vector<128x64xf32> to vector<64xf32>
    %19 = vector.shape_cast %18 : vector<64xf32> to vector<1x64xf32>
    %20 = arith.addf %4, %19 : vector<1x64xf32>
    %c1 = arith.constant 1 : index
    %c0_22 = arith.constant 0 : index
    %c0_23 = arith.constant 0 : index
    %21 = vector.load %arg4[%c1, %c0_22, %c0_23] : memref<10x1024x64xf32, #tpu.memory_space<vmem>>, vector<1x128x64xf32>
    %22 = vector.shape_cast %21 : vector<1x128x64xf32> to vector<128x64xf32>
    %23 = arith.mulf %14, %22 : vector<128x64xf32>
    %cst_24 = arith.constant dense<0.000000e+00> : vector<64xf32>
    %24 = vector.multi_reduction <add>, %23, %cst_24 [0] : vector<128x64xf32> to vector<64xf32>
    %25 = vector.shape_cast %24 : vector<64xf32> to vector<1x64xf32>
    %26 = arith.addf %5, %25 : vector<1x64xf32>
    %c2 = arith.constant 2 : index
    %c0_25 = arith.constant 0 : index
    %c0_26 = arith.constant 0 : index
    %27 = vector.load %arg4[%c2, %c0_25, %c0_26] : memref<10x1024x64xf32, #tpu.memory_space<vmem>>, vector<1x128x64xf32>
    %28 = vector.shape_cast %27 : vector<1x128x64xf32> to vector<128x64xf32>
    %29 = arith.mulf %14, %28 : vector<128x64xf32>
    %cst_27 = arith.constant dense<0.000000e+00> : vector<64xf32>
    %30 = vector.multi_reduction <add>, %29, %cst_27 [0] : vector<128x64xf32> to vector<64xf32>
    %31 = vector.shape_cast %30 : vector<64xf32> to vector<1x64xf32>
    %32 = arith.addf %6, %31 : vector<1x64xf32>
    %c3 = arith.constant 3 : index
    %c0_28 = arith.constant 0 : index
    %c0_29 = arith.constant 0 : index
    %33 = vector.load %arg4[%c3, %c0_28, %c0_29] : memref<10x1024x64xf32, #tpu.memory_space<vmem>>, vector<1x128x64xf32>
    %34 = vector.shape_cast %33 : vector<1x128x64xf32> to vector<128x64xf32>
    %35 = arith.mulf %14, %34 : vector<128x64xf32>
    %cst_30 = arith.constant dense<0.000000e+00> : vector<64xf32>
    %36 = vector.multi_reduction <add>, %35, %cst_30 [0] : vector<128x64xf32> to vector<64xf32>
    %37 = vector.shape_cast %36 : vector<64xf32> to vector<1x64xf32>
    %38 = arith.addf %7, %37 : vector<1x64xf32>
    %c4 = arith.constant 4 : index
    %c0_31 = arith.constant 0 : index
    %c0_32 = arith.constant 0 : index
    %39 = vector.load %arg4[%c4, %c0_31, %c0_32] : memref<10x1024x64xf32, #tpu.memory_space<vmem>>, vector<1x128x64xf32>
    %40 = vector.shape_cast %39 : vector<1x128x64xf32> to vector<128x64xf32>
    %41 = arith.mulf %14, %40 : vector<128x64xf32>
    %cst_33 = arith.constant dense<0.000000e+00> : vector<64xf32>
    %42 = vector.multi_reduction <add>, %41, %cst_33 [0] : vector<128x64xf32> to vector<64xf32>
    %43 = vector.shape_cast %42 : vector<64xf32> to vector<1x64xf32>
    %44 = arith.addf %8, %43 : vector<1x64xf32>
    %c5 = arith.constant 5 : index
    %c0_34 = arith.constant 0 : index
    %c0_35 = arith.constant 0 : index
    %45 = vector.load %arg4[%c5, %c0_34, %c0_35] : memref<10x1024x64xf32, #tpu.memory_space<vmem>>, vector<1x128x64xf32>
    %46 = vector.shape_cast %45 : vector<1x128x64xf32> to vector<128x64xf32>
    %47 = arith.mulf %14, %46 : vector<128x64xf32>
    %cst_36 = arith.constant dense<0.000000e+00> : vector<64xf32>
    %48 = vector.multi_reduction <add>, %47, %cst_36 [0] : vector<128x64xf32> to vector<64xf32>
    %49 = vector.shape_cast %48 : vector<64xf32> to vector<1x64xf32>
    %50 = arith.addf %9, %49 : vector<1x64xf32>
    %c6 = arith.constant 6 : index
    %c0_37 = arith.constant 0 : index
    %c0_38 = arith.constant 0 : index
    %51 = vector.load %arg4[%c6, %c0_37, %c0_38] : memref<10x1024x64xf32, #tpu.memory_space<vmem>>, vector<1x128x64xf32>
    %52 = vector.shape_cast %51 : vector<1x128x64xf32> to vector<128x64xf32>
    %53 = arith.mulf %14, %52 : vector<128x64xf32>
    %cst_39 = arith.constant dense<0.000000e+00> : vector<64xf32>
    %54 = vector.multi_reduction <add>, %53, %cst_39 [0] : vector<128x64xf32> to vector<64xf32>
    %55 = vector.shape_cast %54 : vector<64xf32> to vector<1x64xf32>
    %56 = arith.addf %10, %55 : vector<1x64xf32>
    %c7 = arith.constant 7 : index
    %c0_40 = arith.constant 0 : index
    %c0_41 = arith.constant 0 : index
    %57 = vector.load %arg4[%c7, %c0_40, %c0_41] : memref<10x1024x64xf32, #tpu.memory_space<vmem>>, vector<1x128x64xf32>
    %58 = vector.shape_cast %57 : vector<1x128x64xf32> to vector<128x64xf32>
    %59 = arith.mulf %14, %58 : vector<128x64xf32>
    %cst_42 = arith.constant dense<0.000000e+00> : vector<64xf32>
    %60 = vector.multi_reduction <add>, %59, %cst_42 [0] : vector<128x64xf32> to vector<64xf32>
    %61 = vector.shape_cast %60 : vector<64xf32> to vector<1x64xf32>
    %62 = arith.addf %11, %61 : vector<1x64xf32>
    %c8 = arith.constant 8 : index
    %c0_43 = arith.constant 0 : index
    %c0_44 = arith.constant 0 : index
    %63 = vector.load %arg4[%c8, %c0_43, %c0_44] : memref<10x1024x64xf32, #tpu.memory_space<vmem>>, vector<1x128x64xf32>
    %64 = vector.shape_cast %63 : vector<1x128x64xf32> to vector<128x64xf32>
    %65 = arith.mulf %14, %64 : vector<128x64xf32>
    %cst_45 = arith.constant dense<0.000000e+00> : vector<64xf32>
    %66 = vector.multi_reduction <add>, %65, %cst_45 [0] : vector<128x64xf32> to vector<64xf32>
    %67 = vector.shape_cast %66 : vector<64xf32> to vector<1x64xf32>
    %68 = arith.addf %12, %67 : vector<1x64xf32>
    %c9 = arith.constant 9 : index
    %c0_46 = arith.constant 0 : index
    %c0_47 = arith.constant 0 : index
    %69 = vector.load %arg4[%c9, %c0_46, %c0_47] : memref<10x1024x64xf32, #tpu.memory_space<vmem>>, vector<1x128x64xf32>
    %70 = vector.shape_cast %69 : vector<1x128x64xf32> to vector<128x64xf32>
    %71 = arith.mulf %14, %70 : vector<128x64xf32>
    %cst_48 = arith.constant dense<0.000000e+00> : vector<64xf32>
    %72 = vector.multi_reduction <add>, %71, %cst_48 [0] : vector<128x64xf32> to vector<64xf32>
    %73 = vector.shape_cast %72 : vector<64xf32> to vector<1x64xf32>
    %74 = arith.addf %13, %73 : vector<1x64xf32>
    %c128 = arith.constant 128 : index
    %c0_49 = arith.constant 0 : index
    %75 = vector.load %arg9[%c128, %c0_49] : memref<1024x64xf32, #tpu.memory_space<vmem>>, vector<128x64xf32>
    %c0_50 = arith.constant 0 : index
    %c128_51 = arith.constant 128 : index
    %c0_52 = arith.constant 0 : index
    %76 = vector.load %arg4[%c0_50, %c128_51, %c0_52] : memref<10x1024x64xf32, #tpu.memory_space<vmem>>, vector<1x128x64xf32>
    %77 = vector.shape_cast %76 : vector<1x128x64xf32> to vector<128x64xf32>
    %78 = arith.mulf %75, %77 : vector<128x64xf32>
    %cst_53 = arith.constant dense<0.000000e+00> : vector<64xf32>
    %79 = vector.multi_reduction <add>, %78, %cst_53 [0] : vector<128x64xf32> to vector<64xf32>
    %80 = vector.shape_cast %79 : vector<64xf32> to vector<1x64xf32>
    %81 = arith.addf %20, %80 : vector<1x64xf32>
    %c1_54 = arith.constant 1 : index
    %c128_55 = arith.constant 128 : index
    %c0_56 = arith.constant 0 : index
    %82 = vector.load %arg4[%c1_54, %c128_55, %c0_56] : memref<10x1024x64xf32, #tpu.memory_space<vmem>>, vector<1x128x64xf32>
    %83 = vector.shape_cast %82 : vector<1x128x64xf32> to vector<128x64xf32>
    %84 = arith.mulf %75, %83 : vector<128x64xf32>
    %cst_57 = arith.constant dense<0.000000e+00> : vector<64xf32>
    %85 = vector.multi_reduction <add>, %84, %cst_57 [0] : vector<128x64xf32> to vector<64xf32>
    %86 = vector.shape_cast %85 : vector<64xf32> to vector<1x64xf32>
    %87 = arith.addf %26, %86 : vector<1x64xf32>
    %c2_58 = arith.constant 2 : index
    %c128_59 = arith.constant 128 : index
    %c0_60 = arith.constant 0 : index
    %88 = vector.load %arg4[%c2_58, %c128_59, %c0_60] : memref<10x1024x64xf32, #tpu.memory_space<vmem>>, vector<1x128x64xf32>
    %89 = vector.shape_cast %88 : vector<1x128x64xf32> to vector<128x64xf32>
    %90 = arith.mulf %75, %89 : vector<128x64xf32>
    %cst_61 = arith.constant dense<0.000000e+00> : vector<64xf32>
    %91 = vector.multi_reduction <add>, %90, %cst_61 [0] : vector<128x64xf32> to vector<64xf32>
    %92 = vector.shape_cast %91 : vector<64xf32> to vector<1x64xf32>
    %93 = arith.addf %32, %92 : vector<1x64xf32>
    %c3_62 = arith.constant 3 : index
    %c128_63 = arith.constant 128 : index
    %c0_64 = arith.constant 0 : index
    %94 = vector.load %arg4[%c3_62, %c128_63, %c0_64] : memref<10x1024x64xf32, #tpu.memory_space<vmem>>, vector<1x128x64xf32>
    %95 = vector.shape_cast %94 : vector<1x128x64xf32> to vector<128x64xf32>
    %96 = arith.mulf %75, %95 : vector<128x64xf32>
    %cst_65 = arith.constant dense<0.000000e+00> : vector<64xf32>
    %97 = vector.multi_reduction <add>, %96, %cst_65 [0] : vector<128x64xf32> to vector<64xf32>
    %98 = vector.shape_cast %97 : vector<64xf32> to vector<1x64xf32>
    %99 = arith.addf %38, %98 : vector<1x64xf32>
    %c4_66 = arith.constant 4 : index
    %c128_67 = arith.constant 128 : index
    %c0_68 = arith.constant 0 : index
    %100 = vector.load %arg4[%c4_66, %c128_67, %c0_68] : memref<10x1024x64xf32, #tpu.memory_space<vmem>>, vector<1x128x64xf32>
    %101 = vector.shape_cast %100 : vector<1x128x64xf32> to vector<128x64xf32>
    %102 = arith.mulf %75, %101 : vector<128x64xf32>
    %cst_69 = arith.constant dense<0.000000e+00> : vector<64xf32>
    %103 = vector.multi_reduction <add>, %102, %cst_69 [0] : vector<128x64xf32> to vector<64xf32>
    %104 = vector.shape_cast %103 : vector<64xf32> to vector<1x64xf32>
    %105 = arith.addf %44, %104 : vector<1x64xf32>
    %c5_70 = arith.constant 5 : index
    %c128_71 = arith.constant 128 : index
    %c0_72 = arith.constant 0 : index
    %106 = vector.load %arg4[%c5_70, %c128_71, %c0_72] : memref<10x1024x64xf32, #tpu.memory_space<vmem>>, vector<1x128x64xf32>
    %107 = vector.shape_cast %106 : vector<1x128x64xf32> to vector<128x64xf32>
    %108 = arith.mulf %75, %107 : vector<128x64xf32>
    %cst_73 = arith.constant dense<0.000000e+00> : vector<64xf32>
    %109 = vector.multi_reduction <add>, %108, %cst_73 [0] : vector<128x64xf32> to vector<64xf32>
    %110 = vector.shape_cast %109 : vector<64xf32> to vector<1x64xf32>
    %111 = arith.addf %50, %110 : vector<1x64xf32>
    %c6_74 = arith.constant 6 : index
    %c128_75 = arith.constant 128 : index
    %c0_76 = arith.constant 0 : index
    %112 = vector.load %arg4[%c6_74, %c128_75, %c0_76] : memref<10x1024x64xf32, #tpu.memory_space<vmem>>, vector<1x128x64xf32>
    %113 = vector.shape_cast %112 : vector<1x128x64xf32> to vector<128x64xf32>
    %114 = arith.mulf %75, %113 : vector<128x64xf32>
    %cst_77 = arith.constant dense<0.000000e+00> : vector<64xf32>
    %115 = vector.multi_reduction <add>, %114, %cst_77 [0] : vector<128x64xf32> to vector<64xf32>
    %116 = vector.shape_cast %115 : vector<64xf32> to vector<1x64xf32>
    %117 = arith.addf %56, %116 : vector<1x64xf32>
    %c7_78 = arith.constant 7 : index
    %c128_79 = arith.constant 128 : index
    %c0_80 = arith.constant 0 : index
    %118 = vector.load %arg4[%c7_78, %c128_79, %c0_80] : memref<10x1024x64xf32, #tpu.memory_space<vmem>>, vector<1x128x64xf32>
    %119 = vector.shape_cast %118 : vector<1x128x64xf32> to vector<128x64xf32>
    %120 = arith.mulf %75, %119 : vector<128x64xf32>
    %cst_81 = arith.constant dense<0.000000e+00> : vector<64xf32>
    %121 = vector.multi_reduction <add>, %120, %cst_81 [0] : vector<128x64xf32> to vector<64xf32>
    %122 = vector.shape_cast %121 : vector<64xf32> to vector<1x64xf32>
    %123 = arith.addf %62, %122 : vector<1x64xf32>
    %c8_82 = arith.constant 8 : index
    %c128_83 = arith.constant 128 : index
    %c0_84 = arith.constant 0 : index
    %124 = vector.load %arg4[%c8_82, %c128_83, %c0_84] : memref<10x1024x64xf32, #tpu.memory_space<vmem>>, vector<1x128x64xf32>
    %125 = vector.shape_cast %124 : vector<1x128x64xf32> to vector<128x64xf32>
    %126 = arith.mulf %75, %125 : vector<128x64xf32>
    %cst_85 = arith.constant dense<0.000000e+00> : vector<64xf32>
    %127 = vector.multi_reduction <add>, %126, %cst_85 [0] : vector<128x64xf32> to vector<64xf32>
    %128 = vector.shape_cast %127 : vector<64xf32> to vector<1x64xf32>
    %129 = arith.addf %68, %128 : vector<1x64xf32>
    %c9_86 = arith.constant 9 : index
    %c128_87 = arith.constant 128 : index
    %c0_88 = arith.constant 0 : index
    %130 = vector.load %arg4[%c9_86, %c128_87, %c0_88] : memref<10x1024x64xf32, #tpu.memory_space<vmem>>, vector<1x128x64xf32>
    %131 = vector.shape_cast %130 : vector<1x128x64xf32> to vector<128x64xf32>
    %132 = arith.mulf %75, %131 : vector<128x64xf32>
    %cst_89 = arith.constant dense<0.000000e+00> : vector<64xf32>
    %133 = vector.multi_reduction <add>, %132, %cst_89 [0] : vector<128x64xf32> to vector<64xf32>
    %134 = vector.shape_cast %133 : vector<64xf32> to vector<1x64xf32>
    %135 = arith.addf %74, %134 : vector<1x64xf32>
    %c256 = arith.constant 256 : index
    %c0_90 = arith.constant 0 : index
    %136 = vector.load %arg9[%c256, %c0_90] : memref<1024x64xf32, #tpu.memory_space<vmem>>, vector<128x64xf32>
    %c0_91 = arith.constant 0 : index
    %c256_92 = arith.constant 256 : index
    %c0_93 = arith.constant 0 : index
    %137 = vector.load %arg4[%c0_91, %c256_92, %c0_93] : memref<10x1024x64xf32, #tpu.memory_space<vmem>>, vector<1x128x64xf32>
    %138 = vector.shape_cast %137 : vector<1x128x64xf32> to vector<128x64xf32>
    %139 = arith.mulf %136, %138 : vector<128x64xf32>
    %cst_94 = arith.constant dense<0.000000e+00> : vector<64xf32>
    %140 = vector.multi_reduction <add>, %139, %cst_94 [0] : vector<128x64xf32> to vector<64xf32>
    %141 = vector.shape_cast %140 : vector<64xf32> to vector<1x64xf32>
    %142 = arith.addf %81, %141 : vector<1x64xf32>
    %c1_95 = arith.constant 1 : index
    %c256_96 = arith.constant 256 : index
    %c0_97 = arith.constant 0 : index
    %143 = vector.load %arg4[%c1_95, %c256_96, %c0_97] : memref<10x1024x64xf32, #tpu.memory_space<vmem>>, vector<1x128x64xf32>
    %144 = vector.shape_cast %143 : vector<1x128x64xf32> to vector<128x64xf32>
    %145 = arith.mulf %136, %144 : vector<128x64xf32>
    %cst_98 = arith.constant dense<0.000000e+00> : vector<64xf32>
    %146 = vector.multi_reduction <add>, %145, %cst_98 [0] : vector<128x64xf32> to vector<64xf32>
    %147 = vector.shape_cast %146 : vector<64xf32> to vector<1x64xf32>
    %148 = arith.addf %87, %147 : vector<1x64xf32>
    %c2_99 = arith.constant 2 : index
    %c256_100 = arith.constant 256 : index
    %c0_101 = arith.constant 0 : index
    %149 = vector.load %arg4[%c2_99, %c256_100, %c0_101] : memref<10x1024x64xf32, #tpu.memory_space<vmem>>, vector<1x128x64xf32>
    %150 = vector.shape_cast %149 : vector<1x128x64xf32> to vector<128x64xf32>
    %151 = arith.mulf %136, %150 : vector<128x64xf32>
    %cst_102 = arith.constant dense<0.000000e+00> : vector<64xf32>
    %152 = vector.multi_reduction <add>, %151, %cst_102 [0] : vector<128x64xf32> to vector<64xf32>
    %153 = vector.shape_cast %152 : vector<64xf32> to vector<1x64xf32>
    %154 = arith.addf %93, %153 : vector<1x64xf32>
    %c3_103 = arith.constant 3 : index
    %c256_104 = arith.constant 256 : index
    %c0_105 = arith.constant 0 : index
    %155 = vector.load %arg4[%c3_103, %c256_104, %c0_105] : memref<10x1024x64xf32, #tpu.memory_space<vmem>>, vector<1x128x64xf32>
    %156 = vector.shape_cast %155 : vector<1x128x64xf32> to vector<128x64xf32>
    %157 = arith.mulf %136, %156 : vector<128x64xf32>
    %cst_106 = arith.constant dense<0.000000e+00> : vector<64xf32>
    %158 = vector.multi_reduction <add>, %157, %cst_106 [0] : vector<128x64xf32> to vector<64xf32>
    %159 = vector.shape_cast %158 : vector<64xf32> to vector<1x64xf32>
    %160 = arith.addf %99, %159 : vector<1x64xf32>
    %c4_107 = arith.constant 4 : index
    %c256_108 = arith.constant 256 : index
    %c0_109 = arith.constant 0 : index
    %161 = vector.load %arg4[%c4_107, %c256_108, %c0_109] : memref<10x1024x64xf32, #tpu.memory_space<vmem>>, vector<1x128x64xf32>
    %162 = vector.shape_cast %161 : vector<1x128x64xf32> to vector<128x64xf32>
    %163 = arith.mulf %136, %162 : vector<128x64xf32>
    %cst_110 = arith.constant dense<0.000000e+00> : vector<64xf32>
    %164 = vector.multi_reduction <add>, %163, %cst_110 [0] : vector<128x64xf32> to vector<64xf32>
    %165 = vector.shape_cast %164 : vector<64xf32> to vector<1x64xf32>
    %166 = arith.addf %105, %165 : vector<1x64xf32>
    %c5_111 = arith.constant 5 : index
    %c256_112 = arith.constant 256 : index
    %c0_113 = arith.constant 0 : index
    %167 = vector.load %arg4[%c5_111, %c256_112, %c0_113] : memref<10x1024x64xf32, #tpu.memory_space<vmem>>, vector<1x128x64xf32>
    %168 = vector.shape_cast %167 : vector<1x128x64xf32> to vector<128x64xf32>
    %169 = arith.mulf %136, %168 : vector<128x64xf32>
    %cst_114 = arith.constant dense<0.000000e+00> : vector<64xf32>
    %170 = vector.multi_reduction <add>, %169, %cst_114 [0] : vector<128x64xf32> to vector<64xf32>
    %171 = vector.shape_cast %170 : vector<64xf32> to vector<1x64xf32>
    %172 = arith.addf %111, %171 : vector<1x64xf32>
    %c6_115 = arith.constant 6 : index
    %c256_116 = arith.constant 256 : index
    %c0_117 = arith.constant 0 : index
    %173 = vector.load %arg4[%c6_115, %c256_116, %c0_117] : memref<10x1024x64xf32, #tpu.memory_space<vmem>>, vector<1x128x64xf32>
    %174 = vector.shape_cast %173 : vector<1x128x64xf32> to vector<128x64xf32>
    %175 = arith.mulf %136, %174 : vector<128x64xf32>
    %cst_118 = arith.constant dense<0.000000e+00> : vector<64xf32>
    %176 = vector.multi_reduction <add>, %175, %cst_118 [0] : vector<128x64xf32> to vector<64xf32>
    %177 = vector.shape_cast %176 : vector<64xf32> to vector<1x64xf32>
    %178 = arith.addf %117, %177 : vector<1x64xf32>
    %c7_119 = arith.constant 7 : index
    %c256_120 = arith.constant 256 : index
    %c0_121 = arith.constant 0 : index
    %179 = vector.load %arg4[%c7_119, %c256_120, %c0_121] : memref<10x1024x64xf32, #tpu.memory_space<vmem>>, vector<1x128x64xf32>
    %180 = vector.shape_cast %179 : vector<1x128x64xf32> to vector<128x64xf32>
    %181 = arith.mulf %136, %180 : vector<128x64xf32>
    %cst_122 = arith.constant dense<0.000000e+00> : vector<64xf32>
    %182 = vector.multi_reduction <add>, %181, %cst_122 [0] : vector<128x64xf32> to vector<64xf32>
    %183 = vector.shape_cast %182 : vector<64xf32> to vector<1x64xf32>
    %184 = arith.addf %123, %183 : vector<1x64xf32>
    %c8_123 = arith.constant 8 : index
    %c256_124 = arith.constant 256 : index
    %c0_125 = arith.constant 0 : index
    %185 = vector.load %arg4[%c8_123, %c256_124, %c0_125] : memref<10x1024x64xf32, #tpu.memory_space<vmem>>, vector<1x128x64xf32>
    %186 = vector.shape_cast %185 : vector<1x128x64xf32> to vector<128x64xf32>
    %187 = arith.mulf %136, %186 : vector<128x64xf32>
    %cst_126 = arith.constant dense<0.000000e+00> : vector<64xf32>
    %188 = vector.multi_reduction <add>, %187, %cst_126 [0] : vector<128x64xf32> to vector<64xf32>
    %189 = vector.shape_cast %188 : vector<64xf32> to vector<1x64xf32>
    %190 = arith.addf %129, %189 : vector<1x64xf32>
    %c9_127 = arith.constant 9 : index
    %c256_128 = arith.constant 256 : index
    %c0_129 = arith.constant 0 : index
    %191 = vector.load %arg4[%c9_127, %c256_128, %c0_129] : memref<10x1024x64xf32, #tpu.memory_space<vmem>>, vector<1x128x64xf32>
    %192 = vector.shape_cast %191 : vector<1x128x64xf32> to vector<128x64xf32>
    %193 = arith.mulf %136, %192 : vector<128x64xf32>
    %cst_130 = arith.constant dense<0.000000e+00> : vector<64xf32>
    %194 = vector.multi_reduction <add>, %193, %cst_130 [0] : vector<128x64xf32> to vector<64xf32>
    %195 = vector.shape_cast %194 : vector<64xf32> to vector<1x64xf32>
    %196 = arith.addf %135, %195 : vector<1x64xf32>
    %c384 = arith.constant 384 : index
    %c0_131 = arith.constant 0 : index
    %197 = vector.load %arg9[%c384, %c0_131] : memref<1024x64xf32, #tpu.memory_space<vmem>>, vector<128x64xf32>
    %c0_132 = arith.constant 0 : index
    %c384_133 = arith.constant 384 : index
    %c0_134 = arith.constant 0 : index
    %198 = vector.load %arg4[%c0_132, %c384_133, %c0_134] : memref<10x1024x64xf32, #tpu.memory_space<vmem>>, vector<1x128x64xf32>
    %199 = vector.shape_cast %198 : vector<1x128x64xf32> to vector<128x64xf32>
    %200 = arith.mulf %197, %199 : vector<128x64xf32>
    %cst_135 = arith.constant dense<0.000000e+00> : vector<64xf32>
    %201 = vector.multi_reduction <add>, %200, %cst_135 [0] : vector<128x64xf32> to vector<64xf32>
    %202 = vector.shape_cast %201 : vector<64xf32> to vector<1x64xf32>
    %203 = arith.addf %142, %202 : vector<1x64xf32>
    %c1_136 = arith.constant 1 : index
    %c384_137 = arith.constant 384 : index
    %c0_138 = arith.constant 0 : index
    %204 = vector.load %arg4[%c1_136, %c384_137, %c0_138] : memref<10x1024x64xf32, #tpu.memory_space<vmem>>, vector<1x128x64xf32>
    %205 = vector.shape_cast %204 : vector<1x128x64xf32> to vector<128x64xf32>
    %206 = arith.mulf %197, %205 : vector<128x64xf32>
    %cst_139 = arith.constant dense<0.000000e+00> : vector<64xf32>
    %207 = vector.multi_reduction <add>, %206, %cst_139 [0] : vector<128x64xf32> to vector<64xf32>
    %208 = vector.shape_cast %207 : vector<64xf32> to vector<1x64xf32>
    %209 = arith.addf %148, %208 : vector<1x64xf32>
    %c2_140 = arith.constant 2 : index
    %c384_141 = arith.constant 384 : index
    %c0_142 = arith.constant 0 : index
    %210 = vector.load %arg4[%c2_140, %c384_141, %c0_142] : memref<10x1024x64xf32, #tpu.memory_space<vmem>>, vector<1x128x64xf32>
    %211 = vector.shape_cast %210 : vector<1x128x64xf32> to vector<128x64xf32>
    %212 = arith.mulf %197, %211 : vector<128x64xf32>
    %cst_143 = arith.constant dense<0.000000e+00> : vector<64xf32>
    %213 = vector.multi_reduction <add>, %212, %cst_143 [0] : vector<128x64xf32> to vector<64xf32>
    %214 = vector.shape_cast %213 : vector<64xf32> to vector<1x64xf32>
    %215 = arith.addf %154, %214 : vector<1x64xf32>
    %c3_144 = arith.constant 3 : index
    %c384_145 = arith.constant 384 : index
    %c0_146 = arith.constant 0 : index
    %216 = vector.load %arg4[%c3_144, %c384_145, %c0_146] : memref<10x1024x64xf32, #tpu.memory_space<vmem>>, vector<1x128x64xf32>
    %217 = vector.shape_cast %216 : vector<1x128x64xf32> to vector<128x64xf32>
    %218 = arith.mulf %197, %217 : vector<128x64xf32>
    %cst_147 = arith.constant dense<0.000000e+00> : vector<64xf32>
    %219 = vector.multi_reduction <add>, %218, %cst_147 [0] : vector<128x64xf32> to vector<64xf32>
    %220 = vector.shape_cast %219 : vector<64xf32> to vector<1x64xf32>
    %221 = arith.addf %160, %220 : vector<1x64xf32>
    %c4_148 = arith.constant 4 : index
    %c384_149 = arith.constant 384 : index
    %c0_150 = arith.constant 0 : index
    %222 = vector.load %arg4[%c4_148, %c384_149, %c0_150] : memref<10x1024x64xf32, #tpu.memory_space<vmem>>, vector<1x128x64xf32>
    %223 = vector.shape_cast %222 : vector<1x128x64xf32> to vector<128x64xf32>
    %224 = arith.mulf %197, %223 : vector<128x64xf32>
    %cst_151 = arith.constant dense<0.000000e+00> : vector<64xf32>
    %225 = vector.multi_reduction <add>, %224, %cst_151 [0] : vector<128x64xf32> to vector<64xf32>
    %226 = vector.shape_cast %225 : vector<64xf32> to vector<1x64xf32>
    %227 = arith.addf %166, %226 : vector<1x64xf32>
    %c5_152 = arith.constant 5 : index
    %c384_153 = arith.constant 384 : index
    %c0_154 = arith.constant 0 : index
    %228 = vector.load %arg4[%c5_152, %c384_153, %c0_154] : memref<10x1024x64xf32, #tpu.memory_space<vmem>>, vector<1x128x64xf32>
    %229 = vector.shape_cast %228 : vector<1x128x64xf32> to vector<128x64xf32>
    %230 = arith.mulf %197, %229 : vector<128x64xf32>
    %cst_155 = arith.constant dense<0.000000e+00> : vector<64xf32>
    %231 = vector.multi_reduction <add>, %230, %cst_155 [0] : vector<128x64xf32> to vector<64xf32>
    %232 = vector.shape_cast %231 : vector<64xf32> to vector<1x64xf32>
    %233 = arith.addf %172, %232 : vector<1x64xf32>
    %c6_156 = arith.constant 6 : index
    %c384_157 = arith.constant 384 : index
    %c0_158 = arith.constant 0 : index
    %234 = vector.load %arg4[%c6_156, %c384_157, %c0_158] : memref<10x1024x64xf32, #tpu.memory_space<vmem>>, vector<1x128x64xf32>
    %235 = vector.shape_cast %234 : vector<1x128x64xf32> to vector<128x64xf32>
    %236 = arith.mulf %197, %235 : vector<128x64xf32>
    %cst_159 = arith.constant dense<0.000000e+00> : vector<64xf32>
    %237 = vector.multi_reduction <add>, %236, %cst_159 [0] : vector<128x64xf32> to vector<64xf32>
    %238 = vector.shape_cast %237 : vector<64xf32> to vector<1x64xf32>
    %239 = arith.addf %178, %238 : vector<1x64xf32>
    %c7_160 = arith.constant 7 : index
    %c384_161 = arith.constant 384 : index
    %c0_162 = arith.constant 0 : index
    %240 = vector.load %arg4[%c7_160, %c384_161, %c0_162] : memref<10x1024x64xf32, #tpu.memory_space<vmem>>, vector<1x128x64xf32>
    %241 = vector.shape_cast %240 : vector<1x128x64xf32> to vector<128x64xf32>
    %242 = arith.mulf %197, %241 : vector<128x64xf32>
    %cst_163 = arith.constant dense<0.000000e+00> : vector<64xf32>
    %243 = vector.multi_reduction <add>, %242, %cst_163 [0] : vector<128x64xf32> to vector<64xf32>
    %244 = vector.shape_cast %243 : vector<64xf32> to vector<1x64xf32>
    %245 = arith.addf %184, %244 : vector<1x64xf32>
    %c8_164 = arith.constant 8 : index
    %c384_165 = arith.constant 384 : index
    %c0_166 = arith.constant 0 : index
    %246 = vector.load %arg4[%c8_164, %c384_165, %c0_166] : memref<10x1024x64xf32, #tpu.memory_space<vmem>>, vector<1x128x64xf32>
    %247 = vector.shape_cast %246 : vector<1x128x64xf32> to vector<128x64xf32>
    %248 = arith.mulf %197, %247 : vector<128x64xf32>
    %cst_167 = arith.constant dense<0.000000e+00> : vector<64xf32>
    %249 = vector.multi_reduction <add>, %248, %cst_167 [0] : vector<128x64xf32> to vector<64xf32>
    %250 = vector.shape_cast %249 : vector<64xf32> to vector<1x64xf32>
    %251 = arith.addf %190, %250 : vector<1x64xf32>
    %c9_168 = arith.constant 9 : index
    %c384_169 = arith.constant 384 : index
    %c0_170 = arith.constant 0 : index
    %252 = vector.load %arg4[%c9_168, %c384_169, %c0_170] : memref<10x1024x64xf32, #tpu.memory_space<vmem>>, vector<1x128x64xf32>
    %253 = vector.shape_cast %252 : vector<1x128x64xf32> to vector<128x64xf32>
    %254 = arith.mulf %197, %253 : vector<128x64xf32>
    %cst_171 = arith.constant dense<0.000000e+00> : vector<64xf32>
    %255 = vector.multi_reduction <add>, %254, %cst_171 [0] : vector<128x64xf32> to vector<64xf32>
    %256 = vector.shape_cast %255 : vector<64xf32> to vector<1x64xf32>
    %257 = arith.addf %196, %256 : vector<1x64xf32>
    %c512 = arith.constant 512 : index
    %c0_172 = arith.constant 0 : index
    %258 = vector.load %arg9[%c512, %c0_172] : memref<1024x64xf32, #tpu.memory_space<vmem>>, vector<128x64xf32>
    %c0_173 = arith.constant 0 : index
    %c512_174 = arith.constant 512 : index
    %c0_175 = arith.constant 0 : index
    %259 = vector.load %arg4[%c0_173, %c512_174, %c0_175] : memref<10x1024x64xf32, #tpu.memory_space<vmem>>, vector<1x128x64xf32>
    %260 = vector.shape_cast %259 : vector<1x128x64xf32> to vector<128x64xf32>
    %261 = arith.mulf %258, %260 : vector<128x64xf32>
    %cst_176 = arith.constant dense<0.000000e+00> : vector<64xf32>
    %262 = vector.multi_reduction <add>, %261, %cst_176 [0] : vector<128x64xf32> to vector<64xf32>
    %263 = vector.shape_cast %262 : vector<64xf32> to vector<1x64xf32>
    %264 = arith.addf %203, %263 : vector<1x64xf32>
    %c1_177 = arith.constant 1 : index
    %c512_178 = arith.constant 512 : index
    %c0_179 = arith.constant 0 : index
    %265 = vector.load %arg4[%c1_177, %c512_178, %c0_179] : memref<10x1024x64xf32, #tpu.memory_space<vmem>>, vector<1x128x64xf32>
    %266 = vector.shape_cast %265 : vector<1x128x64xf32> to vector<128x64xf32>
    %267 = arith.mulf %258, %266 : vector<128x64xf32>
    %cst_180 = arith.constant dense<0.000000e+00> : vector<64xf32>
    %268 = vector.multi_reduction <add>, %267, %cst_180 [0] : vector<128x64xf32> to vector<64xf32>
    %269 = vector.shape_cast %268 : vector<64xf32> to vector<1x64xf32>
    %270 = arith.addf %209, %269 : vector<1x64xf32>
    %c2_181 = arith.constant 2 : index
    %c512_182 = arith.constant 512 : index
    %c0_183 = arith.constant 0 : index
    %271 = vector.load %arg4[%c2_181, %c512_182, %c0_183] : memref<10x1024x64xf32, #tpu.memory_space<vmem>>, vector<1x128x64xf32>
    %272 = vector.shape_cast %271 : vector<1x128x64xf32> to vector<128x64xf32>
    %273 = arith.mulf %258, %272 : vector<128x64xf32>
    %cst_184 = arith.constant dense<0.000000e+00> : vector<64xf32>
    %274 = vector.multi_reduction <add>, %273, %cst_184 [0] : vector<128x64xf32> to vector<64xf32>
    %275 = vector.shape_cast %274 : vector<64xf32> to vector<1x64xf32>
    %276 = arith.addf %215, %275 : vector<1x64xf32>
    %c3_185 = arith.constant 3 : index
    %c512_186 = arith.constant 512 : index
    %c0_187 = arith.constant 0 : index
    %277 = vector.load %arg4[%c3_185, %c512_186, %c0_187] : memref<10x1024x64xf32, #tpu.memory_space<vmem>>, vector<1x128x64xf32>
    %278 = vector.shape_cast %277 : vector<1x128x64xf32> to vector<128x64xf32>
    %279 = arith.mulf %258, %278 : vector<128x64xf32>
    %cst_188 = arith.constant dense<0.000000e+00> : vector<64xf32>
    %280 = vector.multi_reduction <add>, %279, %cst_188 [0] : vector<128x64xf32> to vector<64xf32>
    %281 = vector.shape_cast %280 : vector<64xf32> to vector<1x64xf32>
    %282 = arith.addf %221, %281 : vector<1x64xf32>
    %c4_189 = arith.constant 4 : index
    %c512_190 = arith.constant 512 : index
    %c0_191 = arith.constant 0 : index
    %283 = vector.load %arg4[%c4_189, %c512_190, %c0_191] : memref<10x1024x64xf32, #tpu.memory_space<vmem>>, vector<1x128x64xf32>
    %284 = vector.shape_cast %283 : vector<1x128x64xf32> to vector<128x64xf32>
    %285 = arith.mulf %258, %284 : vector<128x64xf32>
    %cst_192 = arith.constant dense<0.000000e+00> : vector<64xf32>
    %286 = vector.multi_reduction <add>, %285, %cst_192 [0] : vector<128x64xf32> to vector<64xf32>
    %287 = vector.shape_cast %286 : vector<64xf32> to vector<1x64xf32>
    %288 = arith.addf %227, %287 : vector<1x64xf32>
    %c5_193 = arith.constant 5 : index
    %c512_194 = arith.constant 512 : index
    %c0_195 = arith.constant 0 : index
    %289 = vector.load %arg4[%c5_193, %c512_194, %c0_195] : memref<10x1024x64xf32, #tpu.memory_space<vmem>>, vector<1x128x64xf32>
    %290 = vector.shape_cast %289 : vector<1x128x64xf32> to vector<128x64xf32>
    %291 = arith.mulf %258, %290 : vector<128x64xf32>
    %cst_196 = arith.constant dense<0.000000e+00> : vector<64xf32>
    %292 = vector.multi_reduction <add>, %291, %cst_196 [0] : vector<128x64xf32> to vector<64xf32>
    %293 = vector.shape_cast %292 : vector<64xf32> to vector<1x64xf32>
    %294 = arith.addf %233, %293 : vector<1x64xf32>
    %c6_197 = arith.constant 6 : index
    %c512_198 = arith.constant 512 : index
    %c0_199 = arith.constant 0 : index
    %295 = vector.load %arg4[%c6_197, %c512_198, %c0_199] : memref<10x1024x64xf32, #tpu.memory_space<vmem>>, vector<1x128x64xf32>
    %296 = vector.shape_cast %295 : vector<1x128x64xf32> to vector<128x64xf32>
    %297 = arith.mulf %258, %296 : vector<128x64xf32>
    %cst_200 = arith.constant dense<0.000000e+00> : vector<64xf32>
    %298 = vector.multi_reduction <add>, %297, %cst_200 [0] : vector<128x64xf32> to vector<64xf32>
    %299 = vector.shape_cast %298 : vector<64xf32> to vector<1x64xf32>
    %300 = arith.addf %239, %299 : vector<1x64xf32>
    %c7_201 = arith.constant 7 : index
    %c512_202 = arith.constant 512 : index
    %c0_203 = arith.constant 0 : index
    %301 = vector.load %arg4[%c7_201, %c512_202, %c0_203] : memref<10x1024x64xf32, #tpu.memory_space<vmem>>, vector<1x128x64xf32>
    %302 = vector.shape_cast %301 : vector<1x128x64xf32> to vector<128x64xf32>
    %303 = arith.mulf %258, %302 : vector<128x64xf32>
    %cst_204 = arith.constant dense<0.000000e+00> : vector<64xf32>
    %304 = vector.multi_reduction <add>, %303, %cst_204 [0] : vector<128x64xf32> to vector<64xf32>
    %305 = vector.shape_cast %304 : vector<64xf32> to vector<1x64xf32>
    %306 = arith.addf %245, %305 : vector<1x64xf32>
    %c8_205 = arith.constant 8 : index
    %c512_206 = arith.constant 512 : index
    %c0_207 = arith.constant 0 : index
    %307 = vector.load %arg4[%c8_205, %c512_206, %c0_207] : memref<10x1024x64xf32, #tpu.memory_space<vmem>>, vector<1x128x64xf32>
    %308 = vector.shape_cast %307 : vector<1x128x64xf32> to vector<128x64xf32>
    %309 = arith.mulf %258, %308 : vector<128x64xf32>
    %cst_208 = arith.constant dense<0.000000e+00> : vector<64xf32>
    %310 = vector.multi_reduction <add>, %309, %cst_208 [0] : vector<128x64xf32> to vector<64xf32>
    %311 = vector.shape_cast %310 : vector<64xf32> to vector<1x64xf32>
    %312 = arith.addf %251, %311 : vector<1x64xf32>
    %c9_209 = arith.constant 9 : index
    %c512_210 = arith.constant 512 : index
    %c0_211 = arith.constant 0 : index
    %313 = vector.load %arg4[%c9_209, %c512_210, %c0_211] : memref<10x1024x64xf32, #tpu.memory_space<vmem>>, vector<1x128x64xf32>
    %314 = vector.shape_cast %313 : vector<1x128x64xf32> to vector<128x64xf32>
    %315 = arith.mulf %258, %314 : vector<128x64xf32>
    %cst_212 = arith.constant dense<0.000000e+00> : vector<64xf32>
    %316 = vector.multi_reduction <add>, %315, %cst_212 [0] : vector<128x64xf32> to vector<64xf32>
    %317 = vector.shape_cast %316 : vector<64xf32> to vector<1x64xf32>
    %318 = arith.addf %257, %317 : vector<1x64xf32>
    %c640 = arith.constant 640 : index
    %c0_213 = arith.constant 0 : index
    %319 = vector.load %arg9[%c640, %c0_213] : memref<1024x64xf32, #tpu.memory_space<vmem>>, vector<128x64xf32>
    %c0_214 = arith.constant 0 : index
    %c640_215 = arith.constant 640 : index
    %c0_216 = arith.constant 0 : index
    %320 = vector.load %arg4[%c0_214, %c640_215, %c0_216] : memref<10x1024x64xf32, #tpu.memory_space<vmem>>, vector<1x128x64xf32>
    %321 = vector.shape_cast %320 : vector<1x128x64xf32> to vector<128x64xf32>
    %322 = arith.mulf %319, %321 : vector<128x64xf32>
    %cst_217 = arith.constant dense<0.000000e+00> : vector<64xf32>
    %323 = vector.multi_reduction <add>, %322, %cst_217 [0] : vector<128x64xf32> to vector<64xf32>
    %324 = vector.shape_cast %323 : vector<64xf32> to vector<1x64xf32>
    %325 = arith.addf %264, %324 : vector<1x64xf32>
    %c1_218 = arith.constant 1 : index
    %c640_219 = arith.constant 640 : index
    %c0_220 = arith.constant 0 : index
    %326 = vector.load %arg4[%c1_218, %c640_219, %c0_220] : memref<10x1024x64xf32, #tpu.memory_space<vmem>>, vector<1x128x64xf32>
    %327 = vector.shape_cast %326 : vector<1x128x64xf32> to vector<128x64xf32>
    %328 = arith.mulf %319, %327 : vector<128x64xf32>
    %cst_221 = arith.constant dense<0.000000e+00> : vector<64xf32>
    %329 = vector.multi_reduction <add>, %328, %cst_221 [0] : vector<128x64xf32> to vector<64xf32>
    %330 = vector.shape_cast %329 : vector<64xf32> to vector<1x64xf32>
    %331 = arith.addf %270, %330 : vector<1x64xf32>
    %c2_222 = arith.constant 2 : index
    %c640_223 = arith.constant 640 : index
    %c0_224 = arith.constant 0 : index
    %332 = vector.load %arg4[%c2_222, %c640_223, %c0_224] : memref<10x1024x64xf32, #tpu.memory_space<vmem>>, vector<1x128x64xf32>
    %333 = vector.shape_cast %332 : vector<1x128x64xf32> to vector<128x64xf32>
    %334 = arith.mulf %319, %333 : vector<128x64xf32>
    %cst_225 = arith.constant dense<0.000000e+00> : vector<64xf32>
    %335 = vector.multi_reduction <add>, %334, %cst_225 [0] : vector<128x64xf32> to vector<64xf32>
    %336 = vector.shape_cast %335 : vector<64xf32> to vector<1x64xf32>
    %337 = arith.addf %276, %336 : vector<1x64xf32>
    %c3_226 = arith.constant 3 : index
    %c640_227 = arith.constant 640 : index
    %c0_228 = arith.constant 0 : index
    %338 = vector.load %arg4[%c3_226, %c640_227, %c0_228] : memref<10x1024x64xf32, #tpu.memory_space<vmem>>, vector<1x128x64xf32>
    %339 = vector.shape_cast %338 : vector<1x128x64xf32> to vector<128x64xf32>
    %340 = arith.mulf %319, %339 : vector<128x64xf32>
    %cst_229 = arith.constant dense<0.000000e+00> : vector<64xf32>
    %341 = vector.multi_reduction <add>, %340, %cst_229 [0] : vector<128x64xf32> to vector<64xf32>
    %342 = vector.shape_cast %341 : vector<64xf32> to vector<1x64xf32>
    %343 = arith.addf %282, %342 : vector<1x64xf32>
    %c4_230 = arith.constant 4 : index
    %c640_231 = arith.constant 640 : index
    %c0_232 = arith.constant 0 : index
    %344 = vector.load %arg4[%c4_230, %c640_231, %c0_232] : memref<10x1024x64xf32, #tpu.memory_space<vmem>>, vector<1x128x64xf32>
    %345 = vector.shape_cast %344 : vector<1x128x64xf32> to vector<128x64xf32>
    %346 = arith.mulf %319, %345 : vector<128x64xf32>
    %cst_233 = arith.constant dense<0.000000e+00> : vector<64xf32>
    %347 = vector.multi_reduction <add>, %346, %cst_233 [0] : vector<128x64xf32> to vector<64xf32>
    %348 = vector.shape_cast %347 : vector<64xf32> to vector<1x64xf32>
    %349 = arith.addf %288, %348 : vector<1x64xf32>
    %c5_234 = arith.constant 5 : index
    %c640_235 = arith.constant 640 : index
    %c0_236 = arith.constant 0 : index
    %350 = vector.load %arg4[%c5_234, %c640_235, %c0_236] : memref<10x1024x64xf32, #tpu.memory_space<vmem>>, vector<1x128x64xf32>
    %351 = vector.shape_cast %350 : vector<1x128x64xf32> to vector<128x64xf32>
    %352 = arith.mulf %319, %351 : vector<128x64xf32>
    %cst_237 = arith.constant dense<0.000000e+00> : vector<64xf32>
    %353 = vector.multi_reduction <add>, %352, %cst_237 [0] : vector<128x64xf32> to vector<64xf32>
    %354 = vector.shape_cast %353 : vector<64xf32> to vector<1x64xf32>
    %355 = arith.addf %294, %354 : vector<1x64xf32>
    %c6_238 = arith.constant 6 : index
    %c640_239 = arith.constant 640 : index
    %c0_240 = arith.constant 0 : index
    %356 = vector.load %arg4[%c6_238, %c640_239, %c0_240] : memref<10x1024x64xf32, #tpu.memory_space<vmem>>, vector<1x128x64xf32>
    %357 = vector.shape_cast %356 : vector<1x128x64xf32> to vector<128x64xf32>
    %358 = arith.mulf %319, %357 : vector<128x64xf32>
    %cst_241 = arith.constant dense<0.000000e+00> : vector<64xf32>
    %359 = vector.multi_reduction <add>, %358, %cst_241 [0] : vector<128x64xf32> to vector<64xf32>
    %360 = vector.shape_cast %359 : vector<64xf32> to vector<1x64xf32>
    %361 = arith.addf %300, %360 : vector<1x64xf32>
    %c7_242 = arith.constant 7 : index
    %c640_243 = arith.constant 640 : index
    %c0_244 = arith.constant 0 : index
    %362 = vector.load %arg4[%c7_242, %c640_243, %c0_244] : memref<10x1024x64xf32, #tpu.memory_space<vmem>>, vector<1x128x64xf32>
    %363 = vector.shape_cast %362 : vector<1x128x64xf32> to vector<128x64xf32>
    %364 = arith.mulf %319, %363 : vector<128x64xf32>
    %cst_245 = arith.constant dense<0.000000e+00> : vector<64xf32>
    %365 = vector.multi_reduction <add>, %364, %cst_245 [0] : vector<128x64xf32> to vector<64xf32>
    %366 = vector.shape_cast %365 : vector<64xf32> to vector<1x64xf32>
    %367 = arith.addf %306, %366 : vector<1x64xf32>
    %c8_246 = arith.constant 8 : index
    %c640_247 = arith.constant 640 : index
    %c0_248 = arith.constant 0 : index
    %368 = vector.load %arg4[%c8_246, %c640_247, %c0_248] : memref<10x1024x64xf32, #tpu.memory_space<vmem>>, vector<1x128x64xf32>
    %369 = vector.shape_cast %368 : vector<1x128x64xf32> to vector<128x64xf32>
    %370 = arith.mulf %319, %369 : vector<128x64xf32>
    %cst_249 = arith.constant dense<0.000000e+00> : vector<64xf32>
    %371 = vector.multi_reduction <add>, %370, %cst_249 [0] : vector<128x64xf32> to vector<64xf32>
    %372 = vector.shape_cast %371 : vector<64xf32> to vector<1x64xf32>
    %373 = arith.addf %312, %372 : vector<1x64xf32>
    %c9_250 = arith.constant 9 : index
    %c640_251 = arith.constant 640 : index
    %c0_252 = arith.constant 0 : index
    %374 = vector.load %arg4[%c9_250, %c640_251, %c0_252] : memref<10x1024x64xf32, #tpu.memory_space<vmem>>, vector<1x128x64xf32>
    %375 = vector.shape_cast %374 : vector<1x128x64xf32> to vector<128x64xf32>
    %376 = arith.mulf %319, %375 : vector<128x64xf32>
    %cst_253 = arith.constant dense<0.000000e+00> : vector<64xf32>
    %377 = vector.multi_reduction <add>, %376, %cst_253 [0] : vector<128x64xf32> to vector<64xf32>
    %378 = vector.shape_cast %377 : vector<64xf32> to vector<1x64xf32>
    %379 = arith.addf %318, %378 : vector<1x64xf32>
    %c768 = arith.constant 768 : index
    %c0_254 = arith.constant 0 : index
    %380 = vector.load %arg9[%c768, %c0_254] : memref<1024x64xf32, #tpu.memory_space<vmem>>, vector<128x64xf32>
    %c0_255 = arith.constant 0 : index
    %c768_256 = arith.constant 768 : index
    %c0_257 = arith.constant 0 : index
    %381 = vector.load %arg4[%c0_255, %c768_256, %c0_257] : memref<10x1024x64xf32, #tpu.memory_space<vmem>>, vector<1x128x64xf32>
    %382 = vector.shape_cast %381 : vector<1x128x64xf32> to vector<128x64xf32>
    %383 = arith.mulf %380, %382 : vector<128x64xf32>
    %cst_258 = arith.constant dense<0.000000e+00> : vector<64xf32>
    %384 = vector.multi_reduction <add>, %383, %cst_258 [0] : vector<128x64xf32> to vector<64xf32>
    %385 = vector.shape_cast %384 : vector<64xf32> to vector<1x64xf32>
    %386 = arith.addf %325, %385 : vector<1x64xf32>
    %c1_259 = arith.constant 1 : index
    %c768_260 = arith.constant 768 : index
    %c0_261 = arith.constant 0 : index
    %387 = vector.load %arg4[%c1_259, %c768_260, %c0_261] : memref<10x1024x64xf32, #tpu.memory_space<vmem>>, vector<1x128x64xf32>
    %388 = vector.shape_cast %387 : vector<1x128x64xf32> to vector<128x64xf32>
    %389 = arith.mulf %380, %388 : vector<128x64xf32>
    %cst_262 = arith.constant dense<0.000000e+00> : vector<64xf32>
    %390 = vector.multi_reduction <add>, %389, %cst_262 [0] : vector<128x64xf32> to vector<64xf32>
    %391 = vector.shape_cast %390 : vector<64xf32> to vector<1x64xf32>
    %392 = arith.addf %331, %391 : vector<1x64xf32>
    %c2_263 = arith.constant 2 : index
    %c768_264 = arith.constant 768 : index
    %c0_265 = arith.constant 0 : index
    %393 = vector.load %arg4[%c2_263, %c768_264, %c0_265] : memref<10x1024x64xf32, #tpu.memory_space<vmem>>, vector<1x128x64xf32>
    %394 = vector.shape_cast %393 : vector<1x128x64xf32> to vector<128x64xf32>
    %395 = arith.mulf %380, %394 : vector<128x64xf32>
    %cst_266 = arith.constant dense<0.000000e+00> : vector<64xf32>
    %396 = vector.multi_reduction <add>, %395, %cst_266 [0] : vector<128x64xf32> to vector<64xf32>
    %397 = vector.shape_cast %396 : vector<64xf32> to vector<1x64xf32>
    %398 = arith.addf %337, %397 : vector<1x64xf32>
    %c3_267 = arith.constant 3 : index
    %c768_268 = arith.constant 768 : index
    %c0_269 = arith.constant 0 : index
    %399 = vector.load %arg4[%c3_267, %c768_268, %c0_269] : memref<10x1024x64xf32, #tpu.memory_space<vmem>>, vector<1x128x64xf32>
    %400 = vector.shape_cast %399 : vector<1x128x64xf32> to vector<128x64xf32>
    %401 = arith.mulf %380, %400 : vector<128x64xf32>
    %cst_270 = arith.constant dense<0.000000e+00> : vector<64xf32>
    %402 = vector.multi_reduction <add>, %401, %cst_270 [0] : vector<128x64xf32> to vector<64xf32>
    %403 = vector.shape_cast %402 : vector<64xf32> to vector<1x64xf32>
    %404 = arith.addf %343, %403 : vector<1x64xf32>
    %c4_271 = arith.constant 4 : index
    %c768_272 = arith.constant 768 : index
    %c0_273 = arith.constant 0 : index
    %405 = vector.load %arg4[%c4_271, %c768_272, %c0_273] : memref<10x1024x64xf32, #tpu.memory_space<vmem>>, vector<1x128x64xf32>
    %406 = vector.shape_cast %405 : vector<1x128x64xf32> to vector<128x64xf32>
    %407 = arith.mulf %380, %406 : vector<128x64xf32>
    %cst_274 = arith.constant dense<0.000000e+00> : vector<64xf32>
    %408 = vector.multi_reduction <add>, %407, %cst_274 [0] : vector<128x64xf32> to vector<64xf32>
    %409 = vector.shape_cast %408 : vector<64xf32> to vector<1x64xf32>
    %410 = arith.addf %349, %409 : vector<1x64xf32>
    %c5_275 = arith.constant 5 : index
    %c768_276 = arith.constant 768 : index
    %c0_277 = arith.constant 0 : index
    %411 = vector.load %arg4[%c5_275, %c768_276, %c0_277] : memref<10x1024x64xf32, #tpu.memory_space<vmem>>, vector<1x128x64xf32>
    %412 = vector.shape_cast %411 : vector<1x128x64xf32> to vector<128x64xf32>
    %413 = arith.mulf %380, %412 : vector<128x64xf32>
    %cst_278 = arith.constant dense<0.000000e+00> : vector<64xf32>
    %414 = vector.multi_reduction <add>, %413, %cst_278 [0] : vector<128x64xf32> to vector<64xf32>
    %415 = vector.shape_cast %414 : vector<64xf32> to vector<1x64xf32>
    %416 = arith.addf %355, %415 : vector<1x64xf32>
    %c6_279 = arith.constant 6 : index
    %c768_280 = arith.constant 768 : index
    %c0_281 = arith.constant 0 : index
    %417 = vector.load %arg4[%c6_279, %c768_280, %c0_281] : memref<10x1024x64xf32, #tpu.memory_space<vmem>>, vector<1x128x64xf32>
    %418 = vector.shape_cast %417 : vector<1x128x64xf32> to vector<128x64xf32>
    %419 = arith.mulf %380, %418 : vector<128x64xf32>
    %cst_282 = arith.constant dense<0.000000e+00> : vector<64xf32>
    %420 = vector.multi_reduction <add>, %419, %cst_282 [0] : vector<128x64xf32> to vector<64xf32>
    %421 = vector.shape_cast %420 : vector<64xf32> to vector<1x64xf32>
    %422 = arith.addf %361, %421 : vector<1x64xf32>
    %c7_283 = arith.constant 7 : index
    %c768_284 = arith.constant 768 : index
    %c0_285 = arith.constant 0 : index
    %423 = vector.load %arg4[%c7_283, %c768_284, %c0_285] : memref<10x1024x64xf32, #tpu.memory_space<vmem>>, vector<1x128x64xf32>
    %424 = vector.shape_cast %423 : vector<1x128x64xf32> to vector<128x64xf32>
    %425 = arith.mulf %380, %424 : vector<128x64xf32>
    %cst_286 = arith.constant dense<0.000000e+00> : vector<64xf32>
    %426 = vector.multi_reduction <add>, %425, %cst_286 [0] : vector<128x64xf32> to vector<64xf32>
    %427 = vector.shape_cast %426 : vector<64xf32> to vector<1x64xf32>
    %428 = arith.addf %367, %427 : vector<1x64xf32>
    %c8_287 = arith.constant 8 : index
    %c768_288 = arith.constant 768 : index
    %c0_289 = arith.constant 0 : index
    %429 = vector.load %arg4[%c8_287, %c768_288, %c0_289] : memref<10x1024x64xf32, #tpu.memory_space<vmem>>, vector<1x128x64xf32>
    %430 = vector.shape_cast %429 : vector<1x128x64xf32> to vector<128x64xf32>
    %431 = arith.mulf %380, %430 : vector<128x64xf32>
    %cst_290 = arith.constant dense<0.000000e+00> : vector<64xf32>
    %432 = vector.multi_reduction <add>, %431, %cst_290 [0] : vector<128x64xf32> to vector<64xf32>
    %433 = vector.shape_cast %432 : vector<64xf32> to vector<1x64xf32>
    %434 = arith.addf %373, %433 : vector<1x64xf32>
    %c9_291 = arith.constant 9 : index
    %c768_292 = arith.constant 768 : index
    %c0_293 = arith.constant 0 : index
    %435 = vector.load %arg4[%c9_291, %c768_292, %c0_293] : memref<10x1024x64xf32, #tpu.memory_space<vmem>>, vector<1x128x64xf32>
    %436 = vector.shape_cast %435 : vector<1x128x64xf32> to vector<128x64xf32>
    %437 = arith.mulf %380, %436 : vector<128x64xf32>
    %cst_294 = arith.constant dense<0.000000e+00> : vector<64xf32>
    %438 = vector.multi_reduction <add>, %437, %cst_294 [0] : vector<128x64xf32> to vector<64xf32>
    %439 = vector.shape_cast %438 : vector<64xf32> to vector<1x64xf32>
    %440 = arith.addf %379, %439 : vector<1x64xf32>
    %c896 = arith.constant 896 : index
    %c0_295 = arith.constant 0 : index
    %441 = vector.load %arg9[%c896, %c0_295] : memref<1024x64xf32, #tpu.memory_space<vmem>>, vector<128x64xf32>
    %c0_296 = arith.constant 0 : index
    %c896_297 = arith.constant 896 : index
    %c0_298 = arith.constant 0 : index
    %442 = vector.load %arg4[%c0_296, %c896_297, %c0_298] : memref<10x1024x64xf32, #tpu.memory_space<vmem>>, vector<1x128x64xf32>
    %443 = vector.shape_cast %442 : vector<1x128x64xf32> to vector<128x64xf32>
    %444 = arith.mulf %441, %443 : vector<128x64xf32>
    %cst_299 = arith.constant dense<0.000000e+00> : vector<64xf32>
    %445 = vector.multi_reduction <add>, %444, %cst_299 [0] : vector<128x64xf32> to vector<64xf32>
    %446 = vector.shape_cast %445 : vector<64xf32> to vector<1x64xf32>
    %447 = arith.addf %386, %446 : vector<1x64xf32>
    %c1_300 = arith.constant 1 : index
    %c896_301 = arith.constant 896 : index
    %c0_302 = arith.constant 0 : index
    %448 = vector.load %arg4[%c1_300, %c896_301, %c0_302] : memref<10x1024x64xf32, #tpu.memory_space<vmem>>, vector<1x128x64xf32>
    %449 = vector.shape_cast %448 : vector<1x128x64xf32> to vector<128x64xf32>
    %450 = arith.mulf %441, %449 : vector<128x64xf32>
    %cst_303 = arith.constant dense<0.000000e+00> : vector<64xf32>
    %451 = vector.multi_reduction <add>, %450, %cst_303 [0] : vector<128x64xf32> to vector<64xf32>
    %452 = vector.shape_cast %451 : vector<64xf32> to vector<1x64xf32>
    %453 = arith.addf %392, %452 : vector<1x64xf32>
    %c2_304 = arith.constant 2 : index
    %c896_305 = arith.constant 896 : index
    %c0_306 = arith.constant 0 : index
    %454 = vector.load %arg4[%c2_304, %c896_305, %c0_306] : memref<10x1024x64xf32, #tpu.memory_space<vmem>>, vector<1x128x64xf32>
    %455 = vector.shape_cast %454 : vector<1x128x64xf32> to vector<128x64xf32>
    %456 = arith.mulf %441, %455 : vector<128x64xf32>
    %cst_307 = arith.constant dense<0.000000e+00> : vector<64xf32>
    %457 = vector.multi_reduction <add>, %456, %cst_307 [0] : vector<128x64xf32> to vector<64xf32>
    %458 = vector.shape_cast %457 : vector<64xf32> to vector<1x64xf32>
    %459 = arith.addf %398, %458 : vector<1x64xf32>
    %c3_308 = arith.constant 3 : index
    %c896_309 = arith.constant 896 : index
    %c0_310 = arith.constant 0 : index
    %460 = vector.load %arg4[%c3_308, %c896_309, %c0_310] : memref<10x1024x64xf32, #tpu.memory_space<vmem>>, vector<1x128x64xf32>
    %461 = vector.shape_cast %460 : vector<1x128x64xf32> to vector<128x64xf32>
    %462 = arith.mulf %441, %461 : vector<128x64xf32>
    %cst_311 = arith.constant dense<0.000000e+00> : vector<64xf32>
    %463 = vector.multi_reduction <add>, %462, %cst_311 [0] : vector<128x64xf32> to vector<64xf32>
    %464 = vector.shape_cast %463 : vector<64xf32> to vector<1x64xf32>
    %465 = arith.addf %404, %464 : vector<1x64xf32>
    %c4_312 = arith.constant 4 : index
    %c896_313 = arith.constant 896 : index
    %c0_314 = arith.constant 0 : index
    %466 = vector.load %arg4[%c4_312, %c896_313, %c0_314] : memref<10x1024x64xf32, #tpu.memory_space<vmem>>, vector<1x128x64xf32>
    %467 = vector.shape_cast %466 : vector<1x128x64xf32> to vector<128x64xf32>
    %468 = arith.mulf %441, %467 : vector<128x64xf32>
    %cst_315 = arith.constant dense<0.000000e+00> : vector<64xf32>
    %469 = vector.multi_reduction <add>, %468, %cst_315 [0] : vector<128x64xf32> to vector<64xf32>
    %470 = vector.shape_cast %469 : vector<64xf32> to vector<1x64xf32>
    %471 = arith.addf %410, %470 : vector<1x64xf32>
    %c5_316 = arith.constant 5 : index
    %c896_317 = arith.constant 896 : index
    %c0_318 = arith.constant 0 : index
    %472 = vector.load %arg4[%c5_316, %c896_317, %c0_318] : memref<10x1024x64xf32, #tpu.memory_space<vmem>>, vector<1x128x64xf32>
    %473 = vector.shape_cast %472 : vector<1x128x64xf32> to vector<128x64xf32>
    %474 = arith.mulf %441, %473 : vector<128x64xf32>
    %cst_319 = arith.constant dense<0.000000e+00> : vector<64xf32>
    %475 = vector.multi_reduction <add>, %474, %cst_319 [0] : vector<128x64xf32> to vector<64xf32>
    %476 = vector.shape_cast %475 : vector<64xf32> to vector<1x64xf32>
    %477 = arith.addf %416, %476 : vector<1x64xf32>
    %c6_320 = arith.constant 6 : index
    %c896_321 = arith.constant 896 : index
    %c0_322 = arith.constant 0 : index
    %478 = vector.load %arg4[%c6_320, %c896_321, %c0_322] : memref<10x1024x64xf32, #tpu.memory_space<vmem>>, vector<1x128x64xf32>
    %479 = vector.shape_cast %478 : vector<1x128x64xf32> to vector<128x64xf32>
    %480 = arith.mulf %441, %479 : vector<128x64xf32>
    %cst_323 = arith.constant dense<0.000000e+00> : vector<64xf32>
    %481 = vector.multi_reduction <add>, %480, %cst_323 [0] : vector<128x64xf32> to vector<64xf32>
    %482 = vector.shape_cast %481 : vector<64xf32> to vector<1x64xf32>
    %483 = arith.addf %422, %482 : vector<1x64xf32>
    %c7_324 = arith.constant 7 : index
    %c896_325 = arith.constant 896 : index
    %c0_326 = arith.constant 0 : index
    %484 = vector.load %arg4[%c7_324, %c896_325, %c0_326] : memref<10x1024x64xf32, #tpu.memory_space<vmem>>, vector<1x128x64xf32>
    %485 = vector.shape_cast %484 : vector<1x128x64xf32> to vector<128x64xf32>
    %486 = arith.mulf %441, %485 : vector<128x64xf32>
    %cst_327 = arith.constant dense<0.000000e+00> : vector<64xf32>
    %487 = vector.multi_reduction <add>, %486, %cst_327 [0] : vector<128x64xf32> to vector<64xf32>
    %488 = vector.shape_cast %487 : vector<64xf32> to vector<1x64xf32>
    %489 = arith.addf %428, %488 : vector<1x64xf32>
    %c8_328 = arith.constant 8 : index
    %c896_329 = arith.constant 896 : index
    %c0_330 = arith.constant 0 : index
    %490 = vector.load %arg4[%c8_328, %c896_329, %c0_330] : memref<10x1024x64xf32, #tpu.memory_space<vmem>>, vector<1x128x64xf32>
    %491 = vector.shape_cast %490 : vector<1x128x64xf32> to vector<128x64xf32>
    %492 = arith.mulf %441, %491 : vector<128x64xf32>
    %cst_331 = arith.constant dense<0.000000e+00> : vector<64xf32>
    %493 = vector.multi_reduction <add>, %492, %cst_331 [0] : vector<128x64xf32> to vector<64xf32>
    %494 = vector.shape_cast %493 : vector<64xf32> to vector<1x64xf32>
    %495 = arith.addf %434, %494 : vector<1x64xf32>
    %c9_332 = arith.constant 9 : index
    %c896_333 = arith.constant 896 : index
    %c0_334 = arith.constant 0 : index
    %496 = vector.load %arg4[%c9_332, %c896_333, %c0_334] : memref<10x1024x64xf32, #tpu.memory_space<vmem>>, vector<1x128x64xf32>
    %497 = vector.shape_cast %496 : vector<1x128x64xf32> to vector<128x64xf32>
    %498 = arith.mulf %441, %497 : vector<128x64xf32>
    %cst_335 = arith.constant dense<0.000000e+00> : vector<64xf32>
    %499 = vector.multi_reduction <add>, %498, %cst_335 [0] : vector<128x64xf32> to vector<64xf32>
    %500 = vector.shape_cast %499 : vector<64xf32> to vector<1x64xf32>
    %501 = arith.addf %440, %500 : vector<1x64xf32>
    %cst_336 = arith.constant dense<0.000000e+00> : vector<1xf32>
    %502 = vector.multi_reduction <add>, %447, %cst_336 [1] : vector<1x64xf32> to vector<1xf32>
    %503 = vector.shape_cast %502 : vector<1xf32> to vector<1x1xf32>
    %cst_337 = arith.constant dense<0.000000e+00> : vector<1xf32>
    %504 = vector.multi_reduction <add>, %453, %cst_337 [1] : vector<1x64xf32> to vector<1xf32>
    %505 = vector.shape_cast %504 : vector<1xf32> to vector<1x1xf32>
    %cst_338 = arith.constant dense<0.000000e+00> : vector<1xf32>
    %506 = vector.multi_reduction <add>, %459, %cst_338 [1] : vector<1x64xf32> to vector<1xf32>
    %507 = vector.shape_cast %506 : vector<1xf32> to vector<1x1xf32>
    %cst_339 = arith.constant dense<0.000000e+00> : vector<1xf32>
    %508 = vector.multi_reduction <add>, %465, %cst_339 [1] : vector<1x64xf32> to vector<1xf32>
    %509 = vector.shape_cast %508 : vector<1xf32> to vector<1x1xf32>
    %cst_340 = arith.constant dense<0.000000e+00> : vector<1xf32>
    %510 = vector.multi_reduction <add>, %471, %cst_340 [1] : vector<1x64xf32> to vector<1xf32>
    %511 = vector.shape_cast %510 : vector<1xf32> to vector<1x1xf32>
    %cst_341 = arith.constant dense<0.000000e+00> : vector<1xf32>
    %512 = vector.multi_reduction <add>, %477, %cst_341 [1] : vector<1x64xf32> to vector<1xf32>
    %513 = vector.shape_cast %512 : vector<1xf32> to vector<1x1xf32>
    %cst_342 = arith.constant dense<0.000000e+00> : vector<1xf32>
    %514 = vector.multi_reduction <add>, %483, %cst_342 [1] : vector<1x64xf32> to vector<1xf32>
    %515 = vector.shape_cast %514 : vector<1xf32> to vector<1x1xf32>
    %cst_343 = arith.constant dense<0.000000e+00> : vector<1xf32>
    %516 = vector.multi_reduction <add>, %489, %cst_343 [1] : vector<1x64xf32> to vector<1xf32>
    %517 = vector.shape_cast %516 : vector<1xf32> to vector<1x1xf32>
    %cst_344 = arith.constant dense<0.000000e+00> : vector<1xf32>
    %518 = vector.multi_reduction <add>, %495, %cst_344 [1] : vector<1x64xf32> to vector<1xf32>
    %519 = vector.shape_cast %518 : vector<1xf32> to vector<1x1xf32>
    %cst_345 = arith.constant dense<0.000000e+00> : vector<1xf32>
    %520 = vector.multi_reduction <add>, %501, %cst_345 [1] : vector<1x64xf32> to vector<1xf32>
    %521 = vector.shape_cast %520 : vector<1xf32> to vector<1x1xf32>
    %522 = tpu.concatenate %503, %505, %507, %509, %511, %513, %515, %517, %519, %521 in 1 : vector<1x1xf32>, vector<1x1xf32>, vector<1x1xf32>, vector<1x1xf32>, vector<1x1xf32>, vector<1x1xf32>, vector<1x1xf32>, vector<1x1xf32>, vector<1x1xf32>, vector<1x1xf32> -> vector<1x10xf32>
    %c0_346 = arith.constant 0 : index
    %c0_347 = arith.constant 0 : index
    %523 = vector.load %arg5[%c0_346, %c0_347] : memref<1x10xf32, #tpu.memory_space<vmem>>, vector<1x10xf32>
    %524 = arith.addf %522, %523 : vector<1x10xf32>
    %c0_348 = arith.constant 0 : index
    %c0_349 = arith.constant 0 : index
    %c0_350 = arith.constant 0 : index
    %525 = vector.load %arg7[%c0_348, %c0_349, %c0_350] : memref<1x1x10xf32, #tpu.memory_space<vmem>>, vector<1x1x10xf32>
    %526 = vector.shape_cast %525 : vector<1x1x10xf32> to vector<1x10xf32>
    %527 = vector.shape_cast %524 : vector<1x10xf32> to vector<1x1x10xf32>
    tpu.vector_store %arg7[%c0_348, %c0_349, %c0_350], %527 {strides = array<i32>} : memref<1x1x10xf32, #tpu.memory_space<vmem>>, vector<1x1x10xf32>,
    %cst_351 = arith.constant dense<0xFF800000> : vector<1xf32>
    %528 = vector.multi_reduction <maximumf>, %524, %cst_351 [1] : vector<1x10xf32> to vector<1xf32>
    %529 = vector.shape_cast %528 : vector<1xf32> to vector<1x1xf32>
    %530 = vector.broadcast %529 : vector<1x1xf32> to vector<1x10xf32>
    %531 = arith.subf %524, %530 : vector<1x10xf32>
    %532 = math.exp %531 : vector<1x10xf32>
    %cst_352 = arith.constant dense<0.000000e+00> : vector<1xf32>
    %533 = vector.multi_reduction <add>, %532, %cst_352 [1] : vector<1x10xf32> to vector<1xf32>
    %534 = vector.shape_cast %533 : vector<1xf32> to vector<1x1xf32>
    %535 = vector.broadcast %534 : vector<1x1xf32> to vector<1x10xf32>
    %536 = arith.divf %532, %535 : vector<1x10xf32>
    %c0_353 = arith.constant 0 : index
    %c0_354 = arith.constant 0 : index
    %c0_355 = arith.constant 0 : index
    %537 = vector.load %arg6[%c0_353, %c0_354, %c0_355] : memref<1x1x10xf32, #tpu.memory_space<vmem>>, vector<1x1x10xf32>
    %538 = vector.shape_cast %537 : vector<1x1x10xf32> to vector<1x10xf32>
    %539 = vector.shape_cast %536 : vector<1x10xf32> to vector<1x1x10xf32>
    tpu.vector_store %arg6[%c0_353, %c0_354, %c0_355], %539 {strides = array<i32>} : memref<1x1x10xf32, #tpu.memory_space<vmem>>, vector<1x1x10xf32>,
    return
  }
  func.func @transform_0(%arg0: i32) -> (i32, i32, i32) {
    %c0_i32 = arith.constant 0 : i32
    %c0_i32_0 = arith.constant 0 : i32
    %c0_i32_1 = arith.constant 0 : i32
    return %arg0, %c0_i32, %c0_i32_0 : i32, i32, i32
  }
  func.func @transform_1(%arg0: i32) -> (i32, i32) {
    %c0_i32 = arith.constant 0 : i32
    %c0_i32_0 = arith.constant 0 : i32
    %c0_i32_1 = arith.constant 0 : i32
    return %c0_i32, %c0_i32_0 : i32, i32
  }
  func.func @transform_2(%arg0: i32) -> (i32, i32) {
    %c0_i32 = arith.constant 0 : i32
    %c0_i32_0 = arith.constant 0 : i32
    %c0_i32_1 = arith.constant 0 : i32
    return %c0_i32, %c0_i32_0 : i32, i32
  }
  func.func @transform_3(%arg0: i32) -> (i32, i32, i32) {
    %c0_i32 = arith.constant 0 : i32
    %c0_i32_0 = arith.constant 0 : i32
    %c0_i32_1 = arith.constant 0 : i32
    %c0_i32_2 = arith.constant 0 : i32
    return %c0_i32, %c0_i32_0, %c0_i32_1 : i32, i32, i32
  }
  func.func @transform_4(%arg0: i32) -> (i32, i32) {
    %c0_i32 = arith.constant 0 : i32
    %c0_i32_0 = arith.constant 0 : i32
    %c0_i32_1 = arith.constant 0 : i32
    return %c0_i32, %c0_i32_0 : i32, i32
  }
  func.func @transform_5(%arg0: i32) -> (i32, i32, i32) {
    %c0_i32 = arith.constant 0 : i32
    %c0_i32_0 = arith.constant 0 : i32
    %c0_i32_1 = arith.constant 0 : i32
    return %arg0, %c0_i32, %c0_i32_0 : i32, i32, i32
  }
  func.func @transform_6(%arg0: i32) -> (i32, i32, i32) {
    %c0_i32 = arith.constant 0 : i32
    %c0_i32_0 = arith.constant 0 : i32
    %c0_i32_1 = arith.constant 0 : i32
    return %arg0, %c0_i32, %c0_i32_0 : i32, i32, i32
  }
}

</mosaic_0001>

<llo_original>
// kernel: two_layer_cnn_forward.1
$region0: #{two_layer_cnn_forward.1}
  #allocation0 [shape = 'u32[]', space=smem, size = 0x4, offset = 0x4, fixed_abs, tag = 'smem constant byte address 0x4 - core index']
  #allocation1 [shape = 'u32[144,128]{1,0:T(1,128)}', space=vmem, size = 0x12000, scoped, tag = 'internal scratch']
  #allocation2 [shape = 'f32[34,34,32]{2,1,0:T(8,128)}', space=vmem, size = 0xaa000, scoped, tag = 'scratch operand']
  #allocation3 [shape = 'f32[1024,64]{1,0:T(8,128)}', space=vmem, size = 0x80000, scoped, tag = 'scratch operand']
  %s0 = inlined_call_operand.vmem [shape: f32[2,1024,27], index: 0, kind: input, shape index: {}]
  %s1 = inlined_call_operand.vmem [shape: f32[27,32], index: 1, kind: input, shape index: {}]
  %s2 = inlined_call_operand.vmem [shape: f32[288,64], index: 2, kind: input, shape index: {}]
  %s3 = inlined_call_operand.vmem [shape: f32[10,1024,64], index: 3, kind: input, shape index: {}]
  %s4 = inlined_call_operand.vmem [shape: f32[1,10], index: 4, kind: input, shape index: {}]
  %s5 = inlined_call_operand.hbm [shape: f32[2,1,10], index: 5, kind: output, shape index: {0}]
  %s6 = inlined_call_operand.hbm [shape: f32[2,1,10], index: 6, kind: output, shape index: {1}]
  %7 = xla_tuple %s5, %s6
  %s8 = sld [smem:[#allocation0]]
  $region75: #{two_layer_cnn_forward.1} parent=0
    _
  %s10 = ssub.s32 1, %s8
  %s11 = scalar_select 0, %s10, %s8
  $region1: #{two_layer_cnn_forward.1} parent=0
    #allocation4 [shape = 'u8[1024]{0}', space=vmem, size = 0x400, scoped, tag = 'output window, operand 0']
    #allocation5 [shape = 's32[2]{0}', space=sflag, size = 0x8, scoped, tag = 'scoped memory for two_layer_cnn_forward.1']
    #allocation6 [shape = 'u8[1024]{0}', space=vmem, size = 0x400, scoped, tag = 'output window, operand 1']
    #allocation7 [shape = 's32[2]{0}', space=sflag, size = 0x8, scoped, tag = 'scoped memory for two_layer_cnn_forward.1']
    %12 = vsyncpa [#allocation5], 0
    %s13 = scalar_lea.sflag [#allocation5], 1
    %14 = vsyncpa %s13, 0
    %15 = vsyncpa [#allocation7], 0
    %s16 = scalar_lea.sflag [#allocation7], 1
    %17 = vsyncpa %s16, 0
    loop: start=0, step=1, limit=4
    $region2: #{two_layer_cnn_forward.1} parent=1 // loop_pre_header
      _
    $region3: #{two_layer_cnn_forward.1} parent=1 // loop_header
      %s19 = sphi 0, %s23
      %p20 = scmp.ge.s32.totalorder %s19, 4
      %s29 = sphi 0, %s31
      %s32 = sphi 0, %s29
      %s33 = sphi 0, %s32
      %s49 = sphi 0, %s33
      %s53 = sphi 0, %s53
      %s55 = sphi 0, %s53
      %s56 = sphi 0, %s55
      %s70 = sphi 0, %s56
      %s74 = sphi 0, %s74
      %s76 = sphi 0, %s74
      %s77 = sphi 0, %s76
      %s91 = sphi 0, %s77
      %s95 = sphi 0, %s95
      %s97 = sphi 0, %s95
      %s98 = sphi 0, %s97
      %s112 = sphi 0, %s98
      %s116 = sphi 0, %s116
      %s118 = sphi 0, %s116
      %s119 = sphi 0, %s118
      %s133 = sphi 0, %s119
      %s139 = sphi 0, %s141
      %s142 = sphi 0, %s139
      %s143 = sphi 0, %s142
      %s159 = sphi 0, %s143
      %s165 = sphi 0, %s167
      %s168 = sphi 0, %s165
      %s169 = sphi 0, %s168
      %s185 = sphi 0, %s169
    $region4: #{two_layer_cnn_forward.1} parent=1 // loop_header_branch
      %22 = sbr.rel (%p20) target = $region8
    $region5: #{two_layer_cnn_forward.1} parent=1 // loop_body
      %s24 = ssub.s32 %s19, 1
      %s25 = ssub.s32 %s19, 2
      %s26 = sadd.s32 %s19, 1
      %s27 = ssub.s32 %s19, %s26
      %p28 = scmp.eq.s32.totalorder %s27, 0
      %s30 = sadd.s32 %s29, 1
      %s31 = scalar_select %p28, %s29, %s30
      %p34 = pneg %p28
      %p35 = scmp.eq.s32.totalorder %s19, 1
      %p36 = por %p34, %p35
      %p37 = scmp.ne.s32.totalorder %s29, %s32
      %p38 = scmp.eq.s32.totalorder %s19, 0
      %p39 = por %p37, %p38
      %p40 = scmp.ne.s32.totalorder %s29, %s32
      %p41 = scmp.eq.s32.totalorder %s24, 1
      %p42 = por %p40, %p41
      %p43 = scmp.ne.s32.totalorder %s32, %s33
      %p44 = scmp.eq.s32.totalorder %s24, 0
      %p45 = por %p43, %p44
      %p46 = scmp.ne.s32.totalorder %s32, %s33
      %p47 = scmp.eq.s32.totalorder %s25, 1
      %p48 = por %p46, %p47
      %p50 = scmp.ne.s32.totalorder %s33, %s49
      %p51 = scmp.eq.s32.totalorder %s25, 0
      %p52 = por %p50, %p51
      %s54 = sadd.s32 %s53, 1
      %p57 = scmp.eq.s32.totalorder %s19, 1
      %p58 = scmp.ne.s32.totalorder %s53, %s55
      %p59 = scmp.eq.s32.totalorder %s19, 0
      %p60 = por %p58, %p59
      %p61 = scmp.ne.s32.totalorder %s53, %s55
      %p62 = scmp.eq.s32.totalorder %s24, 1
      %p63 = por %p61, %p62
      %p64 = scmp.ne.s32.totalorder %s55, %s56
      %p65 = scmp.eq.s32.totalorder %s24, 0
      %p66 = por %p64, %p65
      %p67 = scmp.ne.s32.totalorder %s55, %s56
      %p68 = scmp.eq.s32.totalorder %s25, 1
      %p69 = por %p67, %p68
      %p71 = scmp.ne.s32.totalorder %s56, %s70
      %p72 = scmp.eq.s32.totalorder %s25, 0
      %p73 = por %p71, %p72
      %s75 = sadd.s32 %s74, 1
      %p78 = scmp.eq.s32.totalorder %s19, 1
      %p79 = scmp.ne.s32.totalorder %s74, %s76
      %p80 = scmp.eq.s32.totalorder %s19, 0
      %p81 = por %p79, %p80
      %p82 = scmp.ne.s32.totalorder %s74, %s76
      %p83 = scmp.eq.s32.totalorder %s24, 1
      %p84 = por %p82, %p83
      %p85 = scmp.ne.s32.totalorder %s76, %s77
      %p86 = scmp.eq.s32.totalorder %s24, 0
      %p87 = por %p85, %p86
      %p88 = scmp.ne.s32.totalorder %s76, %s77
      %p89 = scmp.eq.s32.totalorder %s25, 1
      %p90 = por %p88, %p89
      %p92 = scmp.ne.s32.totalorder %s77, %s91
      %p93 = scmp.eq.s32.totalorder %s25, 0
      %p94 = por %p92, %p93
      %s96 = sadd.s32 %s95, 1
      %p99 = scmp.eq.s32.totalorder %s19, 1
      %p100 = scmp.ne.s32.totalorder %s95, %s97
      %p101 = scmp.eq.s32.totalorder %s19, 0
      %p102 = por %p100, %p101
      %p103 = scmp.ne.s32.totalorder %s95, %s97
      %p104 = scmp.eq.s32.totalorder %s24, 1
      %p105 = por %p103, %p104
      %p106 = scmp.ne.s32.totalorder %s97, %s98
      %p107 = scmp.eq.s32.totalorder %s24, 0
      %p108 = por %p106, %p107
      %p109 = scmp.ne.s32.totalorder %s97, %s98
      %p110 = scmp.eq.s32.totalorder %s25, 1
      %p111 = por %p109, %p110
      %p113 = scmp.ne.s32.totalorder %s98, %s112
      %p114 = scmp.eq.s32.totalorder %s25, 0
      %p115 = por %p113, %p114
      %s117 = sadd.s32 %s116, 1
      %p120 = scmp.eq.s32.totalorder %s19, 1
      %p121 = scmp.ne.s32.totalorder %s116, %s118
      %p122 = scmp.eq.s32.totalorder %s19, 0
      %p123 = por %p121, %p122
      %p124 = scmp.ne.s32.totalorder %s116, %s118
      %p125 = scmp.eq.s32.totalorder %s24, 1
      %p126 = por %p124, %p125
      %p127 = scmp.ne.s32.totalorder %s118, %s119
      %p128 = scmp.eq.s32.totalorder %s24, 0
      %p129 = por %p127, %p128
      %p130 = scmp.ne.s32.totalorder %s118, %s119
      %p131 = scmp.eq.s32.totalorder %s25, 1
      %p132 = por %p130, %p131
      %p134 = scmp.ne.s32.totalorder %s119, %s133
      %p135 = scmp.eq.s32.totalorder %s25, 0
      %p136 = por %p134, %p135
      %s137 = ssub.s32 %s19, %s26
      %p138 = scmp.eq.s32.totalorder %s137, 0
      %s140 = sadd.s32 %s139, 1
      %s141 = scalar_select %p138, %s139, %s140
      %p144 = pneg %p138
      %p145 = scmp.eq.s32.totalorder %s19, 1
      %p146 = por %p144, %p145
      %p147 = scmp.ne.s32.totalorder %s139, %s142
      %p148 = scmp.eq.s32.totalorder %s19, 0
      %p149 = por %p147, %p148
      %p150 = scmp.ne.s32.totalorder %s139, %s142
      %p151 = scmp.eq.s32.totalorder %s24, 1
      %p152 = por %p150, %p151
      %p153 = scmp.ne.s32.totalorder %s142, %s143
      %p154 = scmp.eq.s32.totalorder %s24, 0
      %p155 = por %p153, %p154
      %p156 = scmp.ne.s32.totalorder %s142, %s143
      %p157 = scmp.eq.s32.totalorder %s25, 1
      %p158 = por %p156, %p157
      %p160 = scmp.ne.s32.totalorder %s143, %s159
      %p161 = scmp.eq.s32.totalorder %s25, 0
      %p162 = por %p160, %p161
      %s163 = ssub.s32 %s19, %s26
      %p164 = scmp.eq.s32.totalorder %s163, 0
      %s166 = sadd.s32 %s165, 1
      %s167 = scalar_select %p164, %s165, %s166
      %p170 = pneg %p164
      %p171 = scmp.eq.s32.totalorder %s19, 1
      %p172 = por %p170, %p171
      %p173 = scmp.ne.s32.totalorder %s165, %s168
      %p174 = scmp.eq.s32.totalorder %s19, 0
      %p175 = por %p173, %p174
      %p176 = scmp.ne.s32.totalorder %s165, %s168
      %p177 = scmp.eq.s32.totalorder %s24, 1
      %p178 = por %p176, %p177
      %p179 = scmp.ne.s32.totalorder %s168, %s169
      %p180 = scmp.eq.s32.totalorder %s24, 0
      %p181 = por %p179, %p180
      %p182 = scmp.ne.s32.totalorder %s168, %s169
      %p183 = scmp.eq.s32.totalorder %s25, 1
      %p184 = por %p182, %p183
      %p186 = scmp.ne.s32.totalorder %s169, %s185
      %p187 = scmp.eq.s32.totalorder %s25, 0
      %p188 = por %p186, %p187
      %p189 = scmp.le.s32.totalorder 1, %s19
      %p190 = scmp.lt.s32.totalorder %s19, 3
      %p191 = pnand %p189, %p190
      %p192 = pneg %p191
      // Predicated region
      $region9: #{two_layer_cnn_forward.1} parent=5 // pred_check
        _
      $region10: #{two_layer_cnn_forward.1} parent=5 // pred_check_branch
        %194 = sbr.rel (%p191) target = $region12
      $region11: #{two_layer_cnn_forward.1} parent=5 // pred_region
        %s195 = ssub.s32 %s19, 1
        // Predicated region
        $region13: #{two_layer_cnn_forward.1} parent=11 // pred_check
          %p196 = pneg %p66
        $region14: #{two_layer_cnn_forward.1} parent=11 // pred_check_branch
          %198 = sbr.rel (%p196) target = $region16
        $region15: #{two_layer_cnn_forward.1} parent=11 // pred_region
          _
        $region16: #{two_layer_cnn_forward.1} parent=11 // pred_fallthru
          _
        // Predicated region
        $region17: #{two_layer_cnn_forward.1} parent=11 // pred_check
          %p199 = pneg %p87
        $region18: #{two_layer_cnn_forward.1} parent=11 // pred_check_branch
          %201 = sbr.rel (%p199) target = $region20
        $region19: #{two_layer_cnn_forward.1} parent=11 // pred_region
          _
        $region20: #{two_layer_cnn_forward.1} parent=11 // pred_fallthru
          _
        // Predicated region
        $region21: #{two_layer_cnn_forward.1} parent=11 // pred_check
          %p202 = pneg %p108
        $region22: #{two_layer_cnn_forward.1} parent=11 // pred_check_branch
          %204 = sbr.rel (%p202) target = $region24
        $region23: #{two_layer_cnn_forward.1} parent=11 // pred_region
          _
        $region24: #{two_layer_cnn_forward.1} parent=11 // pred_fallthru
          _
        // Predicated region
        $region25: #{two_layer_cnn_forward.1} parent=11 // pred_check
          %p205 = pneg %p129
        $region26: #{two_layer_cnn_forward.1} parent=11 // pred_check_branch
          %207 = sbr.rel (%p205) target = $region28
        $region27: #{two_layer_cnn_forward.1} parent=11 // pred_region
          _
        $region28: #{two_layer_cnn_forward.1} parent=11 // pred_fallthru
          _
      $region12: #{two_layer_cnn_forward.1} parent=5 // pred_fallthru
        _
      %p208 = scmp.lt.s32.totalorder %s19, 2
      // Predicated region
      $region29: #{two_layer_cnn_forward.1} parent=5 // pred_check
        %p209 = pneg %p208
      $region30: #{two_layer_cnn_forward.1} parent=5 // pred_check_branch
        %211 = sbr.rel (%p209) target = $region32
      $region31: #{two_layer_cnn_forward.1} parent=5 // pred_region
        // Predicated region
        $region33: #{two_layer_cnn_forward.1} parent=31 // pred_check
          %p212 = pneg %p39
        $region34: #{two_layer_cnn_forward.1} parent=31 // pred_check_branch
          %214 = sbr.rel (%p212) target = $region36
        $region35: #{two_layer_cnn_forward.1} parent=31 // pred_region
          %p215 = scmp.lt.s32.totalorder %s19, 1
          %s216 = scalar_select %p215, %s19, 1
          %s217 = smul.addr %s216, 128
          %s218 = smul.addr %s217, 8
          %s219 = scalar_lea.vmem %s0, %s218
        $region36: #{two_layer_cnn_forward.1} parent=31 // pred_fallthru
          _
      $region32: #{two_layer_cnn_forward.1} parent=5 // pred_fallthru
        _
      %p220 = scmp.le.s32.totalorder 1, %s19
      %p221 = scmp.lt.s32.totalorder %s19, 3
      %p222 = pnand %p220, %p221
      %p223 = pneg %p222
      // Predicated region
      $region37: #{two_layer_cnn_forward.1} parent=5 // pred_check
        _
      $region38: #{two_layer_cnn_forward.1} parent=5 // pred_check_branch
        %225 = sbr.rel (%p222) target = $region40
      $region39: #{two_layer_cnn_forward.1} parent=5 // pred_region
        %s226 = ssub.s32 %s19, 1
        %p227 = scmp.lt.s32.totalorder %s24, 1
        %s228 = scalar_select %p227, %s24, 1
        %s229 = smul.addr %s228, 128
        %s230 = smul.addr %s229, 8
        %s231 = scalar_lea.vmem %s0, %s230
        %p232 = pneg %p45
        %p233 = pneg %p42
        %p234 = pneg %p66
        %p235 = pneg %p63
        %p236 = pneg %p87
        %p237 = pneg %p84
        %p238 = pneg %p108
        %p239 = pneg %p105
        %p240 = pneg %p129
        %p241 = pneg %p126
        %p242 = pneg %p155
        %p243 = pneg %p152
        %s244 = sand.u32 %s142, 1
        %s245 = scalar_lea.sflag [#allocation5], %s244
        %s246 = sand.u32 %s142, 1
        %s247 = scalar_lea.vmem [#allocation4], %s246
        %p248 = pneg %p181
        %p249 = pneg %p178
        %s250 = sand.u32 %s168, 1
        %s251 = scalar_lea.sflag [#allocation7], %s250
        %s252 = sand.u32 %s168, 1
        %s253 = scalar_lea.vmem [#allocation6], %s252
        %p254 = scmp.lt.s32.totalorder %s24, 1
        %s255 = scalar_select %p254, %s24, 1
        %s256 = smul.addr %s255, 128
        %s257 = smul.addr %s256, 8
        %s258 = scalar_lea.vmem %s0, %s257
        %vm259 = vcmask 261120
        %260 = vst.msk [vmem:[#allocation2] sm:$0xff] %vm259, 0.0
        %261 = vst.msk [vmem:[#allocation2 + $0x8] sm:$0xff] %vm259, 0.0
        %262 = vst.msk [vmem:[#allocation2 + $0x10] sm:$0xff] %vm259, 0.0
        %263 = vst.msk [vmem:[#allocation2 + $0x18] sm:$0xff] %vm259, 0.0
        %vm264 = vcmask 254976
        %265 = vst.msk [vmem:[#allocation2 + $0x20] sm:$0x3] %vm264, 0.0
        %266 = vst.msk [vmem:[#allocation2 + $0x28] sm:$0xff] %vm259, 0.0
        %267 = vst.msk [vmem:[#allocation2 + $0x30] sm:$0xff] %vm259, 0.0
        %268 = vst.msk [vmem:[#allocation2 + $0x38] sm:$0xff] %vm259, 0.0
        %269 = vst.msk [vmem:[#allocation2 + $0x40] sm:$0xff] %vm259, 0.0
        %270 = vst.msk [vmem:[#allocation2 + $0x48] sm:$0x3] %vm264, 0.0
        %271 = vst.msk [vmem:[#allocation2 + $0x50] sm:$0xff] %vm259, 0.0
        %272 = vst.msk [vmem:[#allocation2 + $0x58] sm:$0xff] %vm259, 0.0
        %273 = vst.msk [vmem:[#allocation2 + $0x60] sm:$0xff] %vm259, 0.0
        %274 = vst.msk [vmem:[#allocation2 + $0x68] sm:$0xff] %vm259, 0.0
        %275 = vst.msk [vmem:[#allocation2 + $0x70] sm:$0x3] %vm264, 0.0
        %276 = vst.msk [vmem:[#allocation2 + $0x78] sm:$0xff] %vm259, 0.0
        %277 = vst.msk [vmem:[#allocation2 + $0x80] sm:$0xff] %vm259, 0.0
        %278 = vst.msk [vmem:[#allocation2 + $0x88] sm:$0xff] %vm259, 0.0
        %279 = vst.msk [vmem:[#allocation2 + $0x90] sm:$0xff] %vm259, 0.0
        %280 = vst.msk [vmem:[#allocation2 + $0x98] sm:$0x3] %vm264, 0.0
        %281 = vst.msk [vmem:[#allocation2 + $0xa0] sm:$0xff] %vm259, 0.0
        %282 = vst.msk [vmem:[#allocation2 + $0xa8] sm:$0xff] %vm259, 0.0
        %283 = vst.msk [vmem:[#allocation2 + $0xb0] sm:$0xff] %vm259, 0.0
        %284 = vst.msk [vmem:[#allocation2 + $0xb8] sm:$0xff] %vm259, 0.0
        %285 = vst.msk [vmem:[#allocation2 + $0xc0] sm:$0x3] %vm264, 0.0
        %286 = vst.msk [vmem:[#allocation2 + $0xc8] sm:$0xff] %vm259, 0.0
        %287 = vst.msk [vmem:[#allocation2 + $0xd0] sm:$0xff] %vm259, 0.0
        %288 = vst.msk [vmem:[#allocation2 + $0xd8] sm:$0xff] %vm259, 0.0
        %289 = vst.msk [vmem:[#allocation2 + $0xe0] sm:$0xff] %vm259, 0.0
        %290 = vst.msk [vmem:[#allocation2 + $0xe8] sm:$0x3] %vm264, 0.0
        %291 = vst.msk [vmem:[#allocation2 + $0xf0] sm:$0xff] %vm259, 0.0
        %292 = vst.msk [vmem:[#allocation2 + $0xf8] sm:$0xff] %vm259, 0.0
        %293 = vst.msk [vmem:[#allocation2 + $0x100] sm:$0xff] %vm259, 0.0
        %294 = vst.msk [vmem:[#allocation2 + $0x108] sm:$0xff] %vm259, 0.0
        %295 = vst.msk [vmem:[#allocation2 + $0x110] sm:$0x3] %vm264, 0.0
        %296 = vst.msk [vmem:[#allocation2 + $0x118] sm:$0xff] %vm259, 0.0
        %297 = vst.msk [vmem:[#allocation2 + $0x120] sm:$0xff] %vm259, 0.0
        %298 = vst.msk [vmem:[#allocation2 + $0x128] sm:$0xff] %vm259, 0.0
        %299 = vst.msk [vmem:[#allocation2 + $0x130] sm:$0xff] %vm259, 0.0
        %300 = vst.msk [vmem:[#allocation2 + $0x138] sm:$0x3] %vm264, 0.0
        %301 = vst.msk [vmem:[#allocation2 + $0x140] sm:$0xff] %vm259, 0.0
        %302 = vst.msk [vmem:[#allocation2 + $0x148] sm:$0xff] %vm259, 0.0
        %303 = vst.msk [vmem:[#allocation2 + $0x150] sm:$0xff] %vm259, 0.0
        %304 = vst.msk [vmem:[#allocation2 + $0x158] sm:$0xff] %vm259, 0.0
        %305 = vst.msk [vmem:[#allocation2 + $0x160] sm:$0x3] %vm264, 0.0
        %306 = vst.msk [vmem:[#allocation2 + $0x168] sm:$0xff] %vm259, 0.0
        %307 = vst.msk [vmem:[#allocation2 + $0x170] sm:$0xff] %vm259, 0.0
        %308 = vst.msk [vmem:[#allocation2 + $0x178] sm:$0xff] %vm259, 0.0
        %309 = vst.msk [vmem:[#allocation2 + $0x180] sm:$0xff] %vm259, 0.0
        %310 = vst.msk [vmem:[#allocation2 + $0x188] sm:$0x3] %vm264, 0.0
        %311 = vst.msk [vmem:[#allocation2 + $0x190] sm:$0xff] %vm259, 0.0
        %312 = vst.msk [vmem:[#allocation2 + $0x198] sm:$0xff] %vm259, 0.0
        %313 = vst.msk [vmem:[#allocation2 + $0x1a0] sm:$0xff] %vm259, 0.0
        %314 = vst.msk [vmem:[#allocation2 + $0x1a8] sm:$0xff] %vm259, 0.0
        %315 = vst.msk [vmem:[#allocation2 + $0x1b0] sm:$0x3] %vm264, 0.0
        %316 = vst.msk [vmem:[#allocation2 + $0x1b8] sm:$0xff] %vm259, 0.0
        %317 = vst.msk [vmem:[#allocation2 + $0x1c0] sm:$0xff] %vm259, 0.0
        %318 = vst.msk [vmem:[#allocation2 + $0x1c8] sm:$0xff] %vm259, 0.0
        %319 = vst.msk [vmem:[#allocation2 + $0x1d0] sm:$0xff] %vm259, 0.0
        %320 = vst.msk [vmem:[#allocation2 + $0x1d8] sm:$0x3] %vm264, 0.0
        %321 = vst.msk [vmem:[#allocation2 + $0x1e0] sm:$0xff] %vm259, 0.0
        %322 = vst.msk [vmem:[#allocation2 + $0x1e8] sm:$0xff] %vm259, 0.0
        %323 = vst.msk [vmem:[#allocation2 + $0x1f0] sm:$0xff] %vm259, 0.0
        %324 = vst.msk [vmem:[#allocation2 + $0x1f8] sm:$0xff] %vm259, 0.0
        %325 = vst.msk [vmem:[#allocation2 + $0x200] sm:$0x3] %vm264, 0.0
        %326 = vst.msk [vmem:[#allocation2 + $0x208] sm:$0xff] %vm259, 0.0
        %327 = vst.msk [vmem:[#allocation2 + $0x210] sm:$0xff] %vm259, 0.0
        %328 = vst.msk [vmem:[#allocation2 + $0x218] sm:$0xff] %vm259, 0.0
        %329 = vst.msk [vmem:[#allocation2 + $0x220] sm:$0xff] %vm259, 0.0
        %330 = vst.msk [vmem:[#allocation2 + $0x228] sm:$0x3] %vm264, 0.0
        %331 = vst.msk [vmem:[#allocation2 + $0x230] sm:$0xff] %vm259, 0.0
        %332 = vst.msk [vmem:[#allocation2 + $0x238] sm:$0xff] %vm259, 0.0
        %333 = vst.msk [vmem:[#allocation2 + $0x240] sm:$0xff] %vm259, 0.0
        %334 = vst.msk [vmem:[#allocation2 + $0x248] sm:$0xff] %vm259, 0.0
        %335 = vst.msk [vmem:[#allocation2 + $0x250] sm:$0x3] %vm264, 0.0
        %336 = vst.msk [vmem:[#allocation2 + $0x258] sm:$0xff] %vm259, 0.0
        %337 = vst.msk [vmem:[#allocation2 + $0x260] sm:$0xff] %vm259, 0.0
        %338 = vst.msk [vmem:[#allocation2 + $0x268] sm:$0xff] %vm259, 0.0
        %339 = vst.msk [vmem:[#allocation2 + $0x270] sm:$0xff] %vm259, 0.0
        %340 = vst.msk [vmem:[#allocation2 + $0x278] sm:$0x3] %vm264, 0.0
        %341 = vst.msk [vmem:[#allocation2 + $0x280] sm:$0xff] %vm259, 0.0
        %342 = vst.msk [vmem:[#allocation2 + $0x288] sm:$0xff] %vm259, 0.0
        %343 = vst.msk [vmem:[#allocation2 + $0x290] sm:$0xff] %vm259, 0.0
        %344 = vst.msk [vmem:[#allocation2 + $0x298] sm:$0xff] %vm259, 0.0
        %345 = vst.msk [vmem:[#allocation2 + $0x2a0] sm:$0x3] %vm264, 0.0
        %346 = vst.msk [vmem:[#allocation2 + $0x2a8] sm:$0xff] %vm259, 0.0
        %347 = vst.msk [vmem:[#allocation2 + $0x2b0] sm:$0xff] %vm259, 0.0
        %348 = vst.msk [vmem:[#allocation2 + $0x2b8] sm:$0xff] %vm259, 0.0
        %349 = vst.msk [vmem:[#allocation2 + $0x2c0] sm:$0xff] %vm259, 0.0
        %350 = vst.msk [vmem:[#allocation2 + $0x2c8] sm:$0x3] %vm264, 0.0
        %351 = vst.msk [vmem:[#allocation2 + $0x2d0] sm:$0xff] %vm259, 0.0
        %352 = vst.msk [vmem:[#allocation2 + $0x2d8] sm:$0xff] %vm259, 0.0
        %353 = vst.msk [vmem:[#allocation2 + $0x2e0] sm:$0xff] %vm259, 0.0
        %354 = vst.msk [vmem:[#allocation2 + $0x2e8] sm:$0xff] %vm259, 0.0
        %355 = vst.msk [vmem:[#allocation2 + $0x2f0] sm:$0x3] %vm264, 0.0
        %356 = vst.msk [vmem:[#allocation2 + $0x2f8] sm:$0xff] %vm259, 0.0
        %357 = vst.msk [vmem:[#allocation2 + $0x300] sm:$0xff] %vm259, 0.0
        %358 = vst.msk [vmem:[#allocation2 + $0x308] sm:$0xff] %vm259, 0.0
        %359 = vst.msk [vmem:[#allocation2 + $0x310] sm:$0xff] %vm259, 0.0
        %360 = vst.msk [vmem:[#allocation2 + $0x318] sm:$0x3] %vm264, 0.0
        %361 = vst.msk [vmem:[#allocation2 + $0x320] sm:$0xff] %vm259, 0.0
        %362 = vst.msk [vmem:[#allocation2 + $0x328] sm:$0xff] %vm259, 0.0
        %363 = vst.msk [vmem:[#allocation2 + $0x330] sm:$0xff] %vm259, 0.0
        %364 = vst.msk [vmem:[#allocation2 + $0x338] sm:$0xff] %vm259, 0.0
        %365 = vst.msk [vmem:[#allocation2 + $0x340] sm:$0x3] %vm264, 0.0
        %366 = vst.msk [vmem:[#allocation2 + $0x348] sm:$0xff] %vm259, 0.0
        %367 = vst.msk [vmem:[#allocation2 + $0x350] sm:$0xff] %vm259, 0.0
        %368 = vst.msk [vmem:[#allocation2 + $0x358] sm:$0xff] %vm259, 0.0
        %369 = vst.msk [vmem:[#allocation2 + $0x360] sm:$0xff] %vm259, 0.0
        %370 = vst.msk [vmem:[#allocation2 + $0x368] sm:$0x3] %vm264, 0.0
        %371 = vst.msk [vmem:[#allocation2 + $0x370] sm:$0xff] %vm259, 0.0
        %372 = vst.msk [vmem:[#allocation2 + $0x378] sm:$0xff] %vm259, 0.0
        %373 = vst.msk [vmem:[#allocation2 + $0x380] sm:$0xff] %vm259, 0.0
        %374 = vst.msk [vmem:[#allocation2 + $0x388] sm:$0xff] %vm259, 0.0
        %375 = vst.msk [vmem:[#allocation2 + $0x390] sm:$0x3] %vm264, 0.0
        %376 = vst.msk [vmem:[#allocation2 + $0x398] sm:$0xff] %vm259, 0.0
        %377 = vst.msk [vmem:[#allocation2 + $0x3a0] sm:$0xff] %vm259, 0.0
        %378 = vst.msk [vmem:[#allocation2 + $0x3a8] sm:$0xff] %vm259, 0.0
        %379 = vst.msk [vmem:[#allocation2 + $0x3b0] sm:$0xff] %vm259, 0.0
        %380 = vst.msk [vmem:[#allocation2 + $0x3b8] sm:$0x3] %vm264, 0.0
        %381 = vst.msk [vmem:[#allocation2 + $0x3c0] sm:$0xff] %vm259, 0.0
        %382 = vst.msk [vmem:[#allocation2 + $0x3c8] sm:$0xff] %vm259, 0.0
        %383 = vst.msk [vmem:[#allocation2 + $0x3d0] sm:$0xff] %vm259, 0.0
        %384 = vst.msk [vmem:[#allocation2 + $0x3d8] sm:$0xff] %vm259, 0.0
        %385 = vst.msk [vmem:[#allocation2 + $0x3e0] sm:$0x3] %vm264, 0.0
        %386 = vst.msk [vmem:[#allocation2 + $0x3e8] sm:$0xff] %vm259, 0.0
        %387 = vst.msk [vmem:[#allocation2 + $0x3f0] sm:$0xff] %vm259, 0.0
        %388 = vst.msk [vmem:[#allocation2 + $0x3f8] sm:$0xff] %vm259, 0.0
        %389 = vst.msk [vmem:[#allocation2 + $0x400] sm:$0xff] %vm259, 0.0
        %390 = vst.msk [vmem:[#allocation2 + $0x408] sm:$0x3] %vm264, 0.0
        %391 = vst.msk [vmem:[#allocation2 + $0x410] sm:$0xff] %vm259, 0.0
        %392 = vst.msk [vmem:[#allocation2 + $0x418] sm:$0xff] %vm259, 0.0
        %393 = vst.msk [vmem:[#allocation2 + $0x420] sm:$0xff] %vm259, 0.0
        %394 = vst.msk [vmem:[#allocation2 + $0x428] sm:$0xff] %vm259, 0.0
        %395 = vst.msk [vmem:[#allocation2 + $0x430] sm:$0x3] %vm264, 0.0
        %396 = vst.msk [vmem:[#allocation2 + $0x438] sm:$0xff] %vm259, 0.0
        %397 = vst.msk [vmem:[#allocation2 + $0x440] sm:$0xff] %vm259, 0.0
        %398 = vst.msk [vmem:[#allocation2 + $0x448] sm:$0xff] %vm259, 0.0
        %399 = vst.msk [vmem:[#allocation2 + $0x450] sm:$0xff] %vm259, 0.0
        %400 = vst.msk [vmem:[#allocation2 + $0x458] sm:$0x3] %vm264, 0.0
        %401 = vst.msk [vmem:[#allocation2 + $0x460] sm:$0xff] %vm259, 0.0
        %402 = vst.msk [vmem:[#allocation2 + $0x468] sm:$0xff] %vm259, 0.0
        %403 = vst.msk [vmem:[#allocation2 + $0x470] sm:$0xff] %vm259, 0.0
        %404 = vst.msk [vmem:[#allocation2 + $0x478] sm:$0xff] %vm259, 0.0
        %405 = vst.msk [vmem:[#allocation2 + $0x480] sm:$0x3] %vm264, 0.0
        %406 = vst.msk [vmem:[#allocation2 + $0x488] sm:$0xff] %vm259, 0.0
        %407 = vst.msk [vmem:[#allocation2 + $0x490] sm:$0xff] %vm259, 0.0
        %408 = vst.msk [vmem:[#allocation2 + $0x498] sm:$0xff] %vm259, 0.0
        %409 = vst.msk [vmem:[#allocation2 + $0x4a0] sm:$0xff] %vm259, 0.0
        %410 = vst.msk [vmem:[#allocation2 + $0x4a8] sm:$0x3] %vm264, 0.0
        %411 = vst.msk [vmem:[#allocation2 + $0x4b0] sm:$0xff] %vm259, 0.0
        %412 = vst.msk [vmem:[#allocation2 + $0x4b8] sm:$0xff] %vm259, 0.0
        %413 = vst.msk [vmem:[#allocation2 + $0x4c0] sm:$0xff] %vm259, 0.0
        %414 = vst.msk [vmem:[#allocation2 + $0x4c8] sm:$0xff] %vm259, 0.0
        %415 = vst.msk [vmem:[#allocation2 + $0x4d0] sm:$0x3] %vm264, 0.0
        %416 = vst.msk [vmem:[#allocation2 + $0x4d8] sm:$0xff] %vm259, 0.0
        %417 = vst.msk [vmem:[#allocation2 + $0x4e0] sm:$0xff] %vm259, 0.0
        %418 = vst.msk [vmem:[#allocation2 + $0x4e8] sm:$0xff] %vm259, 0.0
        %419 = vst.msk [vmem:[#allocation2 + $0x4f0] sm:$0xff] %vm259, 0.0
        %420 = vst.msk [vmem:[#allocation2 + $0x4f8] sm:$0x3] %vm264, 0.0
        %421 = vst.msk [vmem:[#allocation2 + $0x500] sm:$0xff] %vm259, 0.0
        %422 = vst.msk [vmem:[#allocation2 + $0x508] sm:$0xff] %vm259, 0.0
        %423 = vst.msk [vmem:[#allocation2 + $0x510] sm:$0xff] %vm259, 0.0
        %424 = vst.msk [vmem:[#allocation2 + $0x518] sm:$0xff] %vm259, 0.0
        %425 = vst.msk [vmem:[#allocation2 + $0x520] sm:$0x3] %vm264, 0.0
        %426 = vst.msk [vmem:[#allocation2 + $0x528] sm:$0xff] %vm259, 0.0
        %427 = vst.msk [vmem:[#allocation2 + $0x530] sm:$0xff] %vm259, 0.0
        %428 = vst.msk [vmem:[#allocation2 + $0x538] sm:$0xff] %vm259, 0.0
        %429 = vst.msk [vmem:[#allocation2 + $0x540] sm:$0xff] %vm259, 0.0
        %430 = vst.msk [vmem:[#allocation2 + $0x548] sm:$0x3] %vm264, 0.0
        loop: start=0, step=1, limit=8
        $region41: #{two_layer_cnn_forward.1} parent=39 // loop_pre_header
          _
        $region42: #{two_layer_cnn_forward.1} parent=39 // loop_header
          %s432 = sphi 0, %s436
          %p433 = scmp.ge.s32.totalorder %s432, 8
        $region43: #{two_layer_cnn_forward.1} parent=39 // loop_header_branch
          %435 = sbr.rel (%p433) target = $region47
        $region44: #{two_layer_cnn_forward.1} parent=39 // loop_body
          %s437 = smul.u32 %s432, 128
          %s438 = scalar_lea.vmem %s258, %s437
          %v439 = vld [vmem:[%s438] sm:$0xff]
          %v440 = vld [vmem:[%s438 + $0x8] sm:$0xff]
          %v441 = vld [vmem:[%s438 + $0x10] sm:$0xff]
          %v442 = vld [vmem:[%s438 + $0x18] sm:$0xff]
          %v443 = vld [vmem:[%s438 + $0x20] sm:$0xff]
          %v444 = vld [vmem:[%s438 + $0x28] sm:$0xff]
          %v445 = vld [vmem:[%s438 + $0x30] sm:$0xff]
          %v446 = vld [vmem:[%s438 + $0x38] sm:$0xff]
          %v447 = vld [vmem:[%s438 + $0x40] sm:$0xff]
          %v448 = vld [vmem:[%s438 + $0x48] sm:$0xff]
          %v449 = vld [vmem:[%s438 + $0x50] sm:$0xff]
          %v450 = vld [vmem:[%s438 + $0x58] sm:$0xff]
          %v451 = vld [vmem:[%s438 + $0x60] sm:$0xff]
          %v452 = vld [vmem:[%s438 + $0x68] sm:$0xff]
          %v453 = vld [vmem:[%s438 + $0x70] sm:$0xff]
          %v454 = vld [vmem:[%s438 + $0x78] sm:$0xff]
          %v455 = vld [vmem:[%s1] sm:$0xff]
          %v456 = vld [vmem:[%s1 + $0x8] sm:$0xff]
          %v457 = vld [vmem:[%s1 + $0x10] sm:$0xff]
          %v458 = vld [vmem:[%s1 + $0x18] sm:$0x7]
          %vm459 = vcmask 220160
          %v461 = vsel %vm459, %v439, 0
          %v464 = vsel %vm459, %v440, 0
          %v467 = vsel %vm459, %v441, 0
          %v470 = vsel %vm459, %v442, 0
          %v473 = vsel %vm459, %v443, 0
          %v476 = vsel %vm459, %v444, 0
          %v479 = vsel %vm459, %v445, 0
          %v482 = vsel %vm459, %v446, 0
          %v485 = vsel %vm459, %v447, 0
          %v488 = vsel %vm459, %v448, 0
          %v491 = vsel %vm459, %v449, 0
          %v494 = vsel %vm459, %v450, 0
          %v497 = vsel %vm459, %v451, 0
          %v500 = vsel %vm459, %v452, 0
          %v503 = vsel %vm459, %v453, 0
          %v506 = vsel %vm459, %v454, 0
          %vm508 = vcmask 1042432
          %v510 = vsel %vm508, %v458, 0
          %512 = vmatprep.subr.mxu0 0.0
          %513 = vmatpush1.msra.mxu0 %v455
          %514 = vmatprep.subr.mxu0 0.0
          %515 = vmatpush1.msra.mxu0 %v456
          %516 = vmatprep.subr.mxu0 0.0
          %517 = vmatpush1.msra.mxu0 %v457
          %518 = vmatprep.subr.mxu0 0.0
          %519 = vmatpush1.msra.mxu0 %v510
          %520 = vmatprep.subr.mxu0 0.0
          %521 = vmatpush1.msra.mxu0 0.0
          %522 = vmatprep.subr.mxu0 0.0
          %523 = vmatpush1.msra.mxu0 0.0
          %524 = vmatprep.subr.mxu0 0.0
          %525 = vmatpush1.msra.mxu0 0.0
          %526 = vmatprep.subr.mxu0 0.0
          %527 = vmatpush1.msra.mxu0 0.0
          %528 = vmatprep.subr.mxu0 0.0
          %529 = vmatpush1.msra.mxu0 0.0
          %530 = vmatprep.subr.mxu0 0.0
          %531 = vmatpush1.msra.mxu0 0.0
          %532 = vmatprep.subr.mxu0 0.0
          %533 = vmatpush1.msra.mxu0 0.0
          %534 = vmatprep.subr.mxu0 0.0
          %535 = vmatpush1.msra.mxu0 0.0
          %536 = vmatprep.subr.mxu0 0.0
          %537 = vmatpush1.msra.mxu0 0.0
          %538 = vmatprep.subr.mxu0 0.0
          %539 = vmatpush1.msra.mxu0 0.0
          %540 = vmatprep.subr.mxu0 0.0
          %541 = vmatpush1.msra.mxu0 0.0
          %542 = vmatprep.subr.mxu0 0.0
          %543 = vmatpush1.msra.mxu0 0.0
          %544 = vmatprep.subr.mxu0 0.0
          %545 = vmatpush1.msra.mxu0 0.0
          %546 = vmatprep.subr.mxu0 0.0
          %547 = vmatpush1.msra.mxu0 0.0
          %548 = vmatprep.subr.mxu0 0.0
          %549 = vmatpush1.msra.mxu0 0.0
          %550 = vmatprep.subr.mxu0 0.0
          %551 = vmatpush1.msra.mxu0 0.0
          %552 = vmatprep.subr.mxu0 0.0
          %553 = vmatpush1.msra.mxu0 0.0
          %554 = vmatprep.subr.mxu0 0.0
          %555 = vmatpush1.msra.mxu0 0.0
          %556 = vmatprep.subr.mxu0 0.0
          %557 = vmatpush1.msra.mxu0 0.0
          %558 = vmatprep.subr.mxu0 0.0
          %559 = vmatpush1.msra.mxu0 0.0
          %560 = vmatprep.subr.mxu0 0.0
          %561 = vmatpush1.msra.mxu0 0.0
          %562 = vmatprep.subr.mxu0 0.0
          %563 = vmatpush1.msra.mxu0 0.0
          %564 = vmatprep.subr.mxu0 0.0
          %565 = vmatpush1.msra.mxu0 0.0
          %566 = vmatprep.subr.mxu0 0.0
          %567 = vmatpush1.msra.mxu0 0.0
          %568 = vmatprep.subr.mxu0 0.0
          %569 = vmatpush1.msra.mxu0 0.0
          %570 = vmatprep.subr.mxu0 0.0
          %571 = vmatpush1.msra.mxu0 0.0
          %572 = vmatprep.subr.mxu0 0.0
          %573 = vmatpush1.msra.mxu0 0.0
          %574 = vmatprep.subr.mxu0 0.0
          %575 = vmatpush1.msra.mxu0 0.0
          %576 = vmatprep.mubr.f32.mxu0 0.0
          %577 = vmatmul.mubr.f32.gmra.mrb[0].mxu0 %v461
          %v578 = vpop.f32.mrb[0].mxu0
          %v579 = vadd.f32 0.0, %v578
          %v580 = vpop.f32.mrb[0].mxu0
          %581 = vmatprep.mubr.f32.mxu0 0.0
          %582 = vmatmul.mubr.f32.gmra.mrb[0].mxu0 %v464
          %v583 = vpop.f32.mrb[0].mxu0
          %v584 = vadd.f32 0.0, %v583
          %v585 = vpop.f32.mrb[0].mxu0
          %586 = vmatprep.mubr.f32.mxu0 0.0
          %587 = vmatmul.mubr.f32.gmra.mrb[0].mxu0 %v467
          %v588 = vpop.f32.mrb[0].mxu0
          %v589 = vadd.f32 0.0, %v588
          %v590 = vpop.f32.mrb[0].mxu0
          %591 = vmatprep.mubr.f32.mxu0 0.0
          %592 = vmatmul.mubr.f32.gmra.mrb[0].mxu0 %v470
          %v593 = vpop.f32.mrb[0].mxu0
          %v594 = vadd.f32 0.0, %v593
          %v595 = vpop.f32.mrb[0].mxu0
          %596 = vmatprep.mubr.f32.mxu0 0.0
          %597 = vmatmul.mubr.f32.gmra.mrb[0].mxu0 %v473
          %v598 = vpop.f32.mrb[0].mxu0
          %v599 = vadd.f32 0.0, %v598
          %v600 = vpop.f32.mrb[0].mxu0
          %601 = vmatprep.mubr.f32.mxu0 0.0
          %602 = vmatmul.mubr.f32.gmra.mrb[0].mxu0 %v476
          %v603 = vpop.f32.mrb[0].mxu0
          %v604 = vadd.f32 0.0, %v603
          %v605 = vpop.f32.mrb[0].mxu0
          %606 = vmatprep.mubr.f32.mxu0 0.0
          %607 = vmatmul.mubr.f32.gmra.mrb[0].mxu0 %v479
          %v608 = vpop.f32.mrb[0].mxu0
          %v609 = vadd.f32 0.0, %v608
          %v610 = vpop.f32.mrb[0].mxu0
          %611 = vmatprep.mubr.f32.mxu0 0.0
          %612 = vmatmul.mubr.f32.gmra.mrb[0].mxu0 %v482
          %v613 = vpop.f32.mrb[0].mxu0
          %v614 = vadd.f32 0.0, %v613
          %v615 = vpop.f32.mrb[0].mxu0
          %616 = vmatprep.mubr.f32.mxu0 0.0
          %617 = vmatmul.mubr.f32.gmra.mrb[0].mxu0 %v485
          %v618 = vpop.f32.mrb[0].mxu0
          %v619 = vadd.f32 0.0, %v618
          %v620 = vpop.f32.mrb[0].mxu0
          %621 = vmatprep.mubr.f32.mxu0 0.0
          %622 = vmatmul.mubr.f32.gmra.mrb[0].mxu0 %v488
          %v623 = vpop.f32.mrb[0].mxu0
          %v624 = vadd.f32 0.0, %v623
          %v625 = vpop.f32.mrb[0].mxu0
          %626 = vmatprep.mubr.f32.mxu0 0.0
          %627 = vmatmul.mubr.f32.gmra.mrb[0].mxu0 %v491
          %v628 = vpop.f32.mrb[0].mxu0
          %v629 = vadd.f32 0.0, %v628
          %v630 = vpop.f32.mrb[0].mxu0
          %631 = vmatprep.mubr.f32.mxu0 0.0
          %632 = vmatmul.mubr.f32.gmra.mrb[0].mxu0 %v494
          %v633 = vpop.f32.mrb[0].mxu0
          %v634 = vadd.f32 0.0, %v633
          %v635 = vpop.f32.mrb[0].mxu0
          %636 = vmatprep.mubr.f32.mxu0 0.0
          %637 = vmatmul.mubr.f32.gmra.mrb[0].mxu0 %v497
          %v638 = vpop.f32.mrb[0].mxu0
          %v639 = vadd.f32 0.0, %v638
          %v640 = vpop.f32.mrb[0].mxu0
          %641 = vmatprep.mubr.f32.mxu0 0.0
          %642 = vmatmul.mubr.f32.gmra.mrb[0].mxu0 %v500
          %v643 = vpop.f32.mrb[0].mxu0
          %v644 = vadd.f32 0.0, %v643
          %v645 = vpop.f32.mrb[0].mxu0
          %646 = vmatprep.mubr.f32.mxu0 0.0
          %647 = vmatmul.mubr.f32.gmra.mrb[0].mxu0 %v503
          %v648 = vpop.f32.mrb[0].mxu0
          %v649 = vadd.f32 0.0, %v648
          %v650 = vpop.f32.mrb[0].mxu0
          %651 = vmatprep.mubr.f32.mxu0 0.0
          %652 = vmatmul.mubr.f32.gmra.mrb[0].mxu0 %v506
          %v653 = vpop.f32.mrb[0].mxu0
          %v654 = vadd.f32 0.0, %v653
          %v655 = vpop.f32.mrb[0].mxu0
          %656 = vdwg.mxu0
          %v657 = vmax.f32 %v579, 0.0
          %v658 = vmax.f32 %v584, 0.0
          %v659 = vmax.f32 %v589, 0.0
          %v660 = vmax.f32 %v594, 0.0
          %v661 = vmax.f32 %v599, 0.0
          %v662 = vmax.f32 %v604, 0.0
          %v663 = vmax.f32 %v609, 0.0
          %v664 = vmax.f32 %v614, 0.0
          %v665 = vmax.f32 %v619, 0.0
          %v666 = vmax.f32 %v624, 0.0
          %v667 = vmax.f32 %v629, 0.0
          %v668 = vmax.f32 %v634, 0.0
          %v669 = vmax.f32 %v639, 0.0
          %v670 = vmax.f32 %v644, 0.0
          %v671 = vmax.f32 %v649, 0.0
          %v672 = vmax.f32 %v654, 0.0
          %s673 = smul.u32 %s432, 4
          %s674 = sadd.s32 %s673, 1
          %s675 = smul.u32 %s674, 40
          %s676 = scalar_lea.vmem [#allocation2], %s675
          %677 = vst.msk [vmem:[%s676 + $0x1] sm:$0xff] %vm259, %v657
          %678 = vst.msk [vmem:[%s676 + $0x9] sm:$0xff] %vm259, %v658
          %679 = vst.msk [vmem:[%s676 + $0x11] sm:$0xff] %vm259, %v659
          %680 = vst.msk [vmem:[%s676 + $0x19] sm:$0xff] %vm259, %v660
          %681 = vst.msk [vmem:[%s676 + $0x29] sm:$0xff] %vm259, %v661
          %682 = vst.msk [vmem:[%s676 + $0x31] sm:$0xff] %vm259, %v662
          %683 = vst.msk [vmem:[%s676 + $0x39] sm:$0xff] %vm259, %v663
          %684 = vst.msk [vmem:[%s676 + $0x41] sm:$0xff] %vm259, %v664
          %685 = vst.msk [vmem:[%s676 + $0x51] sm:$0xff] %vm259, %v665
          %686 = vst.msk [vmem:[%s676 + $0x59] sm:$0xff] %vm259, %v666
          %687 = vst.msk [vmem:[%s676 + $0x61] sm:$0xff] %vm259, %v667
          %688 = vst.msk [vmem:[%s676 + $0x69] sm:$0xff] %vm259, %v668
          %689 = vst.msk [vmem:[%s676 + $0x79] sm:$0xff] %vm259, %v669
          %690 = vst.msk [vmem:[%s676 + $0x81] sm:$0xff] %vm259, %v670
          %691 = vst.msk [vmem:[%s676 + $0x89] sm:$0xff] %vm259, %v671
          %692 = vst.msk [vmem:[%s676 + $0x91] sm:$0xff] %vm259, %v672
        $region45: #{two_layer_cnn_forward.1} parent=39 // loop_footer
          %s436 = sadd.s32 1, %s432
        $region46: #{two_layer_cnn_forward.1} parent=39 // loop_footer_branch
          %431 = sbr.rel target = $region42
        $region47: #{two_layer_cnn_forward.1} parent=39 // loop_exit
          _
        loop: start=0, step=1, limit=16
        $region48: #{two_layer_cnn_forward.1} parent=39 // loop_pre_header
          _
        $region49: #{two_layer_cnn_forward.1} parent=39 // loop_header
          %s694 = sphi 0, %s698
          %p695 = scmp.ge.s32.totalorder %s694, 16
        $region50: #{two_layer_cnn_forward.1} parent=39 // loop_header_branch
          %697 = sbr.rel (%p695) target = $region54
        $region51: #{two_layer_cnn_forward.1} parent=39 // loop_body
          %s699 = smul.u32 %s694, 2
          %s700 = smul.u32 %s699, 40
          %s701 = scalar_lea.vmem [#allocation2], %s700
          %v702 = vld [vmem:[%s701] sm:$0xff]
          %v703 = vld [vmem:[%s701 + $0x8] sm:$0xff]
          %v704 = vld [vmem:[%s701 + $0x10] sm:$0xff]
          %v705 = vld [vmem:[%s701 + $0x18] sm:$0xff]
          %v706 = vld [vmem:[%s701 + $0x28] sm:$0xff]
          %v707 = vld [vmem:[%s701 + $0x30] sm:$0xff]
          %v708 = vld [vmem:[%s701 + $0x38] sm:$0xff]
          %v709 = vld [vmem:[%s701 + $0x40] sm:$0xff]
          %v710 = vld [vmem:[%s701 + $0x1] sm:$0xff]
          %v711 = vld [vmem:[%s701 + $0x9] sm:$0xff]
          %v712 = vld [vmem:[%s701 + $0x11] sm:$0xff]
          %v713 = vld [vmem:[%s701 + $0x19] sm:$0xff]
          %v714 = vld [vmem:[%s701 + $0x29] sm:$0xff]
          %v715 = vld [vmem:[%s701 + $0x31] sm:$0xff]
          %v716 = vld [vmem:[%s701 + $0x39] sm:$0xff]
          %v717 = vld [vmem:[%s701 + $0x41] sm:$0xff]
          %v718 = vld [vmem:[%s701 + $0x2] sm:$0xff]
          %v719 = vld [vmem:[%s701 + $0xa] sm:$0xff]
          %v720 = vld [vmem:[%s701 + $0x12] sm:$0xff]
          %v721 = vld [vmem:[%s701 + $0x1a] sm:$0xff]
          %v722 = vld [vmem:[%s701 + $0x2a] sm:$0xff]
          %v723 = vld [vmem:[%s701 + $0x32] sm:$0xff]
          %v724 = vld [vmem:[%s701 + $0x3a] sm:$0xff]
          %v725 = vld [vmem:[%s701 + $0x42] sm:$0xff]
          %s726 = sadd.s32 %s699, 1
          %s727 = smul.u32 %s726, 40
          %s728 = scalar_lea.vmem [#allocation2], %s727
          %v729 = vld [vmem:[%s728] sm:$0xff]
          %v730 = vld [vmem:[%s728 + $0x8] sm:$0xff]
          %v731 = vld [vmem:[%s728 + $0x10] sm:$0xff]
          %v732 = vld [vmem:[%s728 + $0x18] sm:$0xff]
          %v733 = vld [vmem:[%s728 + $0x28] sm:$0xff]
          %v734 = vld [vmem:[%s728 + $0x30] sm:$0xff]
          %v735 = vld [vmem:[%s728 + $0x38] sm:$0xff]
          %v736 = vld [vmem:[%s728 + $0x40] sm:$0xff]
          %v737 = vld [vmem:[%s728 + $0x1] sm:$0xff]
          %v738 = vld [vmem:[%s728 + $0x9] sm:$0xff]
          %v739 = vld [vmem:[%s728 + $0x11] sm:$0xff]
          %v740 = vld [vmem:[%s728 + $0x19] sm:$0xff]
          %v741 = vld [vmem:[%s728 + $0x29] sm:$0xff]
          %v742 = vld [vmem:[%s728 + $0x31] sm:$0xff]
          %v743 = vld [vmem:[%s728 + $0x39] sm:$0xff]
          %v744 = vld [vmem:[%s728 + $0x41] sm:$0xff]
          %v745 = vld [vmem:[%s728 + $0x2] sm:$0xff]
          %v746 = vld [vmem:[%s728 + $0xa] sm:$0xff]
          %v747 = vld [vmem:[%s728 + $0x12] sm:$0xff]
          %v748 = vld [vmem:[%s728 + $0x1a] sm:$0xff]
          %v749 = vld [vmem:[%s728 + $0x2a] sm:$0xff]
          %v750 = vld [vmem:[%s728 + $0x32] sm:$0xff]
          %v751 = vld [vmem:[%s728 + $0x3a] sm:$0xff]
          %v752 = vld [vmem:[%s728 + $0x42] sm:$0xff]
          %s753 = sadd.s32 %s699, 2
          %s754 = smul.u32 %s753, 40
          %s755 = scalar_lea.vmem [#allocation2], %s754
          %v756 = vld [vmem:[%s755] sm:$0xff]
          %v757 = vld [vmem:[%s755 + $0x8] sm:$0xff]
          %v758 = vld [vmem:[%s755 + $0x10] sm:$0xff]
          %v759 = vld [vmem:[%s755 + $0x18] sm:$0xff]
          %v760 = vld [vmem:[%s755 + $0x28] sm:$0xff]
          %v761 = vld [vmem:[%s755 + $0x30] sm:$0xff]
          %v762 = vld [vmem:[%s755 + $0x38] sm:$0xff]
          %v763 = vld [vmem:[%s755 + $0x40] sm:$0xff]
          %v764 = vld [vmem:[%s755 + $0x1] sm:$0xff]
          %v765 = vld [vmem:[%s755 + $0x9] sm:$0xff]
          %v766 = vld [vmem:[%s755 + $0x11] sm:$0xff]
          %v767 = vld [vmem:[%s755 + $0x19] sm:$0xff]
          %v768 = vld [vmem:[%s755 + $0x29] sm:$0xff]
          %v769 = vld [vmem:[%s755 + $0x31] sm:$0xff]
          %v770 = vld [vmem:[%s755 + $0x39] sm:$0xff]
          %v771 = vld [vmem:[%s755 + $0x41] sm:$0xff]
          %v772 = vld [vmem:[%s755 + $0x2] sm:$0xff]
          %v773 = vld [vmem:[%s755 + $0xa] sm:$0xff]
          %v774 = vld [vmem:[%s755 + $0x12] sm:$0xff]
          %v775 = vld [vmem:[%s755 + $0x1a] sm:$0xff]
          %v776 = vld [vmem:[%s755 + $0x2a] sm:$0xff]
          %v777 = vld [vmem:[%s755 + $0x32] sm:$0xff]
          %v778 = vld [vmem:[%s755 + $0x3a] sm:$0xff]
          %v779 = vld [vmem:[%s755 + $0x42] sm:$0xff]
          %788 = vrot.lane.b32.xlu0 %v710, 32
          %v789 = vpop.permute.xlu0 %788
          %790 = vrot.lane.b32.xlu0 %v711, 32
          %v791 = vpop.permute.xlu0 %790
          %792 = vrot.lane.b32.xlu0 %v712, 32
          %v793 = vpop.permute.xlu0 %792
          %794 = vrot.lane.b32.xlu0 %v713, 32
          %v795 = vpop.permute.xlu0 %794
          %796 = vrot.lane.b32.xlu0 %v714, 32
          %v797 = vpop.permute.xlu0 %796
          %798 = vrot.lane.b32.xlu0 %v715, 32
          %v799 = vpop.permute.xlu0 %798
          %800 = vrot.lane.b32.xlu0 %v716, 32
          %v801 = vpop.permute.xlu0 %800
          %802 = vrot.lane.b32.xlu0 %v717, 32
          %v803 = vpop.permute.xlu0 %802
          %820 = vrot.lane.b32.xlu0 %v718, 64
          %v821 = vpop.permute.xlu0 %820
          %822 = vrot.lane.b32.xlu0 %v719, 64
          %v823 = vpop.permute.xlu0 %822
          %824 = vrot.lane.b32.xlu0 %v720, 64
          %v825 = vpop.permute.xlu0 %824
          %826 = vrot.lane.b32.xlu0 %v721, 64
          %v827 = vpop.permute.xlu0 %826
          %828 = vrot.lane.b32.xlu0 %v722, 64
          %v829 = vpop.permute.xlu0 %828
          %830 = vrot.lane.b32.xlu0 %v723, 64
          %v831 = vpop.permute.xlu0 %830
          %832 = vrot.lane.b32.xlu0 %v724, 64
          %v833 = vpop.permute.xlu0 %832
          %834 = vrot.lane.b32.xlu0 %v725, 64
          %v835 = vpop.permute.xlu0 %834
          %852 = vrot.lane.b32.xlu0 %v729, 96
          %v853 = vpop.permute.xlu0 %852
          %854 = vrot.lane.b32.xlu0 %v730, 96
          %v855 = vpop.permute.xlu0 %854
          %856 = vrot.lane.b32.xlu0 %v731, 96
          %v857 = vpop.permute.xlu0 %856
          %858 = vrot.lane.b32.xlu0 %v732, 96
          %v859 = vpop.permute.xlu0 %858
          %860 = vrot.lane.b32.xlu0 %v733, 96
          %v861 = vpop.permute.xlu0 %860
          %862 = vrot.lane.b32.xlu0 %v734, 96
          %v863 = vpop.permute.xlu0 %862
          %864 = vrot.lane.b32.xlu0 %v735, 96
          %v865 = vpop.permute.xlu0 %864
          %866 = vrot.lane.b32.xlu0 %v736, 96
          %v867 = vpop.permute.xlu0 %866
          %884 = vrot.lane.b32.xlu0 %v745, 32
          %v885 = vpop.permute.xlu0 %884
          %886 = vrot.lane.b32.xlu0 %v746, 32
          %v887 = vpop.permute.xlu0 %886
          %888 = vrot.lane.b32.xlu0 %v747, 32
          %v889 = vpop.permute.xlu0 %888
          %890 = vrot.lane.b32.xlu0 %v748, 32
          %v891 = vpop.permute.xlu0 %890
          %892 = vrot.lane.b32.xlu0 %v749, 32
          %v893 = vpop.permute.xlu0 %892
          %894 = vrot.lane.b32.xlu0 %v750, 32
          %v895 = vpop.permute.xlu0 %894
          %896 = vrot.lane.b32.xlu0 %v751, 32
          %v897 = vpop.permute.xlu0 %896
          %898 = vrot.lane.b32.xlu0 %v752, 32
          %v899 = vpop.permute.xlu0 %898
          %916 = vrot.lane.b32.xlu0 %v756, 64
          %v917 = vpop.permute.xlu0 %916
          %918 = vrot.lane.b32.xlu0 %v757, 64
          %v919 = vpop.permute.xlu0 %918
          %920 = vrot.lane.b32.xlu0 %v758, 64
          %v921 = vpop.permute.xlu0 %920
          %922 = vrot.lane.b32.xlu0 %v759, 64
          %v923 = vpop.permute.xlu0 %922
          %924 = vrot.lane.b32.xlu0 %v760, 64
          %v925 = vpop.permute.xlu0 %924
          %926 = vrot.lane.b32.xlu0 %v761, 64
          %v927 = vpop.permute.xlu0 %926
          %928 = vrot.lane.b32.xlu0 %v762, 64
          %v929 = vpop.permute.xlu0 %928
          %930 = vrot.lane.b32.xlu0 %v763, 64
          %v931 = vpop.permute.xlu0 %930
          %948 = vrot.lane.b32.xlu0 %v764, 96
          %v949 = vpop.permute.xlu0 %948
          %950 = vrot.lane.b32.xlu0 %v765, 96
          %v951 = vpop.permute.xlu0 %950
          %952 = vrot.lane.b32.xlu0 %v766, 96
          %v953 = vpop.permute.xlu0 %952
          %954 = vrot.lane.b32.xlu0 %v767, 96
          %v955 = vpop.permute.xlu0 %954
          %956 = vrot.lane.b32.xlu0 %v768, 96
          %v957 = vpop.permute.xlu0 %956
          %958 = vrot.lane.b32.xlu0 %v769, 96
          %v959 = vpop.permute.xlu0 %958
          %960 = vrot.lane.b32.xlu0 %v770, 96
          %v961 = vpop.permute.xlu0 %960
          %962 = vrot.lane.b32.xlu0 %v771, 96
          %v963 = vpop.permute.xlu0 %962
          %v972 = vsel %vm259, %v702, %v789
          %v973 = vsel %vm259, %v703, %v791
          %v974 = vsel %vm259, %v704, %v793
          %v975 = vsel %vm259, %v705, %v795
          %v976 = vsel %vm259, %v706, %v797
          %v977 = vsel %vm259, %v707, %v799
          %v978 = vsel %vm259, %v708, %v801
          %v979 = vsel %vm259, %v709, %v803
          %vm980 = vcmask 523264
          %v981 = vsel %vm980, %v972, %v821
          %v982 = vsel %vm980, %v973, %v823
          %v983 = vsel %vm980, %v974, %v825
          %v984 = vsel %vm980, %v975, %v827
          %v985 = vsel %vm980, %v976, %v829
          %v986 = vsel %vm980, %v977, %v831
          %v987 = vsel %vm980, %v978, %v833
          %v988 = vsel %vm980, %v979, %v835
          %vm989 = vcmask 785408
          %v990 = vsel %vm989, %v981, %v853
          %v991 = vsel %vm989, %v982, %v855
          %v992 = vsel %vm989, %v983, %v857
          %v993 = vsel %vm989, %v984, %v859
          %v994 = vsel %vm989, %v985, %v861
          %v995 = vsel %vm989, %v986, %v863
          %v996 = vsel %vm989, %v987, %v865
          %v997 = vsel %vm989, %v988, %v867
          %v998 = vsel %vm259, %v737, %v885
          %v999 = vsel %vm259, %v738, %v887
          %v1000 = vsel %vm259, %v739, %v889
          %v1001 = vsel %vm259, %v740, %v891
          %v1002 = vsel %vm259, %v741, %v893
          %v1003 = vsel %vm259, %v742, %v895
          %v1004 = vsel %vm259, %v743, %v897
          %v1005 = vsel %vm259, %v744, %v899
          %v1006 = vsel %vm980, %v998, %v917
          %v1007 = vsel %vm980, %v999, %v919
          %v1008 = vsel %vm980, %v1000, %v921
          %v1009 = vsel %vm980, %v1001, %v923
          %v1010 = vsel %vm980, %v1002, %v925
          %v1011 = vsel %vm980, %v1003, %v927
          %v1012 = vsel %vm980, %v1004, %v929
          %v1013 = vsel %vm980, %v1005, %v931
          %v1014 = vsel %vm989, %v1006, %v949
          %v1015 = vsel %vm989, %v1007, %v951
          %v1016 = vsel %vm989, %v1008, %v953
          %v1017 = vsel %vm989, %v1009, %v955
          %v1018 = vsel %vm989, %v1010, %v957
          %v1019 = vsel %vm989, %v1011, %v959
          %v1020 = vsel %vm989, %v1012, %v961
          %v1021 = vsel %vm989, %v1013, %v963
          %v1022 = vld [vmem:[%s2] sm:$0xff]
          %v1023 = vld [vmem:[%s2 + $0x8] sm:$0xff]
          %v1024 = vld [vmem:[%s2 + $0x10] sm:$0xff]
          %v1025 = vld [vmem:[%s2 + $0x18] sm:$0xff]
          %v1026 = vld [vmem:[%s2 + $0x20] sm:$0xff]
          %v1027 = vld [vmem:[%s2 + $0x28] sm:$0xff]
          %v1028 = vld [vmem:[%s2 + $0x30] sm:$0xff]
          %v1029 = vld [vmem:[%s2 + $0x38] sm:$0xff]
          %v1030 = vld [vmem:[%s2 + $0x40] sm:$0xff]
          %v1031 = vld [vmem:[%s2 + $0x48] sm:$0xff]
          %v1032 = vld [vmem:[%s2 + $0x50] sm:$0xff]
          %v1033 = vld [vmem:[%s2 + $0x58] sm:$0xff]
          %v1034 = vld [vmem:[%s2 + $0x60] sm:$0xff]
          %v1035 = vld [vmem:[%s2 + $0x68] sm:$0xff]
          %v1036 = vld [vmem:[%s2 + $0x70] sm:$0xff]
          %v1037 = vld [vmem:[%s2 + $0x78] sm:$0xff]
          %v1038 = vld [vmem:[%s2 + $0x80] sm:$0xff]
          %v1039 = vld [vmem:[%s2 + $0x88] sm:$0xff]
          %v1040 = vld [vmem:[%s2 + $0x90] sm:$0xff]
          %v1041 = vld [vmem:[%s2 + $0x98] sm:$0xff]
          %v1042 = vld [vmem:[%s2 + $0xa0] sm:$0xff]
          %v1043 = vld [vmem:[%s2 + $0xa8] sm:$0xff]
          %v1044 = vld [vmem:[%s2 + $0xb0] sm:$0xff]
          %v1045 = vld [vmem:[%s2 + $0xb8] sm:$0xff]
          %v1046 = vld [vmem:[%s2 + $0xc0] sm:$0xff]
          %v1047 = vld [vmem:[%s2 + $0xc8] sm:$0xff]
          %v1048 = vld [vmem:[%s2 + $0xd0] sm:$0xff]
          %v1049 = vld [vmem:[%s2 + $0xd8] sm:$0xff]
          %v1050 = vld [vmem:[%s2 + $0xe0] sm:$0xff]
          %v1051 = vld [vmem:[%s2 + $0xe8] sm:$0xff]
          %v1052 = vld [vmem:[%s2 + $0xf0] sm:$0xff]
          %v1053 = vld [vmem:[%s2 + $0xf8] sm:$0xff]
          %v1054 = vld [vmem:[%s2 + $0x100] sm:$0xff]
          %v1055 = vld [vmem:[%s2 + $0x108] sm:$0xff]
          %v1056 = vld [vmem:[%s2 + $0x110] sm:$0xff]
          %v1057 = vld [vmem:[%s2 + $0x118] sm:$0xff]
          %v1059 = vsel %vm259, %v772, 0
          %v1062 = vsel %vm259, %v773, 0
          %v1065 = vsel %vm259, %v774, 0
          %v1068 = vsel %vm259, %v775, 0
          %v1071 = vsel %vm259, %v776, 0
          %v1074 = vsel %vm259, %v777, 0
          %v1077 = vsel %vm259, %v778, 0
          %v1080 = vsel %vm259, %v779, 0
          %1082 = vmatprep.subr.mxu0 0.0
          %1083 = vmatpush1.msra.mxu0 %v1022
          %1084 = vmatprep.subr.mxu0 0.0
          %1085 = vmatpush1.msra.mxu0 %v1023
          %1086 = vmatprep.subr.mxu0 0.0
          %1087 = vmatpush1.msra.mxu0 %v1024
          %1088 = vmatprep.subr.mxu0 0.0
          %1089 = vmatpush1.msra.mxu0 %v1025
          %1090 = vmatprep.subr.mxu0 0.0
          %1091 = vmatpush1.msra.mxu0 %v1026
          %1092 = vmatprep.subr.mxu0 0.0
          %1093 = vmatpush1.msra.mxu0 %v1027
          %1094 = vmatprep.subr.mxu0 0.0
          %1095 = vmatpush1.msra.mxu0 %v1028
          %1096 = vmatprep.subr.mxu0 0.0
          %1097 = vmatpush1.msra.mxu0 %v1029
          %1098 = vmatprep.subr.mxu0 0.0
          %1099 = vmatpush1.msra.mxu0 %v1030
          %1100 = vmatprep.subr.mxu0 0.0
          %1101 = vmatpush1.msra.mxu0 %v1031
          %1102 = vmatprep.subr.mxu0 0.0
          %1103 = vmatpush1.msra.mxu0 %v1032
          %1104 = vmatprep.subr.mxu0 0.0
          %1105 = vmatpush1.msra.mxu0 %v1033
          %1106 = vmatprep.subr.mxu0 0.0
          %1107 = vmatpush1.msra.mxu0 %v1034
          %1108 = vmatprep.subr.mxu0 0.0
          %1109 = vmatpush1.msra.mxu0 %v1035
          %1110 = vmatprep.subr.mxu0 0.0
          %1111 = vmatpush1.msra.mxu0 %v1036
          %1112 = vmatprep.subr.mxu0 0.0
          %1113 = vmatpush1.msra.mxu0 %v1037
          %1114 = vmatprep.subr.mxu0 0.0
          %1115 = vmatpush1.msra.mxu0 %v1038
          %1116 = vmatprep.subr.mxu0 0.0
          %1117 = vmatpush1.msra.mxu0 %v1039
          %1118 = vmatprep.subr.mxu0 0.0
          %1119 = vmatpush1.msra.mxu0 %v1040
          %1120 = vmatprep.subr.mxu0 0.0
          %1121 = vmatpush1.msra.mxu0 %v1041
          %1122 = vmatprep.subr.mxu0 0.0
          %1123 = vmatpush1.msra.mxu0 %v1042
          %1124 = vmatprep.subr.mxu0 0.0
          %1125 = vmatpush1.msra.mxu0 %v1043
          %1126 = vmatprep.subr.mxu0 0.0
          %1127 = vmatpush1.msra.mxu0 %v1044
          %1128 = vmatprep.subr.mxu0 0.0
          %1129 = vmatpush1.msra.mxu0 %v1045
          %1130 = vmatprep.subr.mxu0 0.0
          %1131 = vmatpush1.msra.mxu0 %v1046
          %1132 = vmatprep.subr.mxu0 0.0
          %1133 = vmatpush1.msra.mxu0 %v1047
          %1134 = vmatprep.subr.mxu0 0.0
          %1135 = vmatpush1.msra.mxu0 %v1048
          %1136 = vmatprep.subr.mxu0 0.0
          %1137 = vmatpush1.msra.mxu0 %v1049
          %1138 = vmatprep.subr.mxu0 0.0
          %1139 = vmatpush1.msra.mxu0 %v1050
          %1140 = vmatprep.subr.mxu0 0.0
          %1141 = vmatpush1.msra.mxu0 %v1051
          %1142 = vmatprep.subr.mxu0 0.0
          %1143 = vmatpush1.msra.mxu0 %v1052
          %1144 = vmatprep.subr.mxu0 0.0
          %1145 = vmatpush1.msra.mxu0 %v1053
          %1146 = vmatprep.mubr.f32.mxu0 %v1014
          %1147 = vmatmul.mubr.f32.gmra.mrb[0].mxu0 %v990
          %v1148 = vpop.f32.mrb[0].mxu0
          %v1149 = vadd.f32 0.0, %v1148
          %v1150 = vpop.f32.mrb[0].mxu0
          %1151 = vmatprep.mubr.f32.mxu0 %v1015
          %1152 = vmatmul.mubr.f32.gmra.mrb[0].mxu0 %v991
          %v1153 = vpop.f32.mrb[0].mxu0
          %v1154 = vadd.f32 0.0, %v1153
          %v1155 = vpop.f32.mrb[0].mxu0
          %1156 = vmatprep.mubr.f32.mxu0 %v1016
          %1157 = vmatmul.mubr.f32.gmra.mrb[0].mxu0 %v992
          %v1158 = vpop.f32.mrb[0].mxu0
          %v1159 = vadd.f32 0.0, %v1158
          %v1160 = vpop.f32.mrb[0].mxu0
          %1161 = vmatprep.mubr.f32.mxu0 %v1017
          %1162 = vmatmul.mubr.f32.gmra.mrb[0].mxu0 %v993
          %v1163 = vpop.f32.mrb[0].mxu0
          %v1164 = vadd.f32 0.0, %v1163
          %v1165 = vpop.f32.mrb[0].mxu0
          %1166 = vmatprep.mubr.f32.mxu0 %v1018
          %1167 = vmatmul.mubr.f32.gmra.mrb[0].mxu0 %v994
          %v1168 = vpop.f32.mrb[0].mxu0
          %v1169 = vadd.f32 0.0, %v1168
          %v1170 = vpop.f32.mrb[0].mxu0
          %1171 = vmatprep.mubr.f32.mxu0 %v1019
          %1172 = vmatmul.mubr.f32.gmra.mrb[0].mxu0 %v995
          %v1173 = vpop.f32.mrb[0].mxu0
          %v1174 = vadd.f32 0.0, %v1173
          %v1175 = vpop.f32.mrb[0].mxu0
          %1176 = vmatprep.mubr.f32.mxu0 %v1020
          %1177 = vmatmul.mubr.f32.gmra.mrb[0].mxu0 %v996
          %v1178 = vpop.f32.mrb[0].mxu0
          %v1179 = vadd.f32 0.0, %v1178
          %v1180 = vpop.f32.mrb[0].mxu0
          %1181 = vmatprep.mubr.f32.mxu0 %v1021
          %1182 = vmatmul.mubr.f32.gmra.mrb[0].mxu0 %v997
          %v1183 = vpop.f32.mrb[0].mxu0
          %v1184 = vadd.f32 0.0, %v1183
          %v1185 = vpop.f32.mrb[0].mxu0
          %1186 = vdwg.mxu0
          %1187 = vmatprep.subr.mxu0 0.0
          %1188 = vmatpush1.msra.mxu0 %v1054
          %1189 = vmatprep.subr.mxu0 0.0
          %1190 = vmatpush1.msra.mxu0 %v1055
          %1191 = vmatprep.subr.mxu0 0.0
          %1192 = vmatpush1.msra.mxu0 %v1056
          %1193 = vmatprep.subr.mxu0 0.0
          %1194 = vmatpush1.msra.mxu0 %v1057
          %1195 = vmatprep.subr.mxu0 0.0
          %1196 = vmatpush1.msra.mxu0 0.0
          %1197 = vmatprep.subr.mxu0 0.0
          %1198 = vmatpush1.msra.mxu0 0.0
          %1199 = vmatprep.subr.mxu0 0.0
          %1200 = vmatpush1.msra.mxu0 0.0
          %1201 = vmatprep.subr.mxu0 0.0
          %1202 = vmatpush1.msra.mxu0 0.0
          %1203 = vmatprep.subr.mxu0 0.0
          %1204 = vmatpush1.msra.mxu0 0.0
          %1205 = vmatprep.subr.mxu0 0.0
          %1206 = vmatpush1.msra.mxu0 0.0
          %1207 = vmatprep.subr.mxu0 0.0
          %1208 = vmatpush1.msra.mxu0 0.0
          %1209 = vmatprep.subr.mxu0 0.0
          %1210 = vmatpush1.msra.mxu0 0.0
          %1211 = vmatprep.subr.mxu0 0.0
          %1212 = vmatpush1.msra.mxu0 0.0
          %1213 = vmatprep.subr.mxu0 0.0
          %1214 = vmatpush1.msra.mxu0 0.0
          %1215 = vmatprep.subr.mxu0 0.0
          %1216 = vmatpush1.msra.mxu0 0.0
          %1217 = vmatprep.subr.mxu0 0.0
          %1218 = vmatpush1.msra.mxu0 0.0
          %1219 = vmatprep.subr.mxu0 0.0
          %1220 = vmatpush1.msra.mxu0 0.0
          %1221 = vmatprep.subr.mxu0 0.0
          %1222 = vmatpush1.msra.mxu0 0.0
          %1223 = vmatprep.subr.mxu0 0.0
          %1224 = vmatpush1.msra.mxu0 0.0
          %1225 = vmatprep.subr.mxu0 0.0
          %1226 = vmatpush1.msra.mxu0 0.0
          %1227 = vmatprep.subr.mxu0 0.0
          %1228 = vmatpush1.msra.mxu0 0.0
          %1229 = vmatprep.subr.mxu0 0.0
          %1230 = vmatpush1.msra.mxu0 0.0
          %1231 = vmatprep.subr.mxu0 0.0
          %1232 = vmatpush1.msra.mxu0 0.0
          %1233 = vmatprep.subr.mxu0 0.0
          %1234 = vmatpush1.msra.mxu0 0.0
          %1235 = vmatprep.subr.mxu0 0.0
          %1236 = vmatpush1.msra.mxu0 0.0
          %1237 = vmatprep.subr.mxu0 0.0
          %1238 = vmatpush1.msra.mxu0 0.0
          %1239 = vmatprep.subr.mxu0 0.0
          %1240 = vmatpush1.msra.mxu0 0.0
          %1241 = vmatprep.subr.mxu0 0.0
          %1242 = vmatpush1.msra.mxu0 0.0
          %1243 = vmatprep.subr.mxu0 0.0
          %1244 = vmatpush1.msra.mxu0 0.0
          %1245 = vmatprep.subr.mxu0 0.0
          %1246 = vmatpush1.msra.mxu0 0.0
          %1247 = vmatprep.subr.mxu0 0.0
          %1248 = vmatpush1.msra.mxu0 0.0
          %1249 = vmatprep.subr.mxu0 0.0
          %1250 = vmatpush1.msra.mxu0 0.0
          %1251 = vmatprep.mubr.f32.mxu0 0.0
          %1252 = vmatmul.mubr.f32.gmra.mrb[0].mxu0 %v1059
          %v1253 = vpop.f32.mrb[0].mxu0
          %v1254 = vadd.f32 %v1149, %v1253
          %v1255 = vpop.f32.mrb[0].mxu0
          %1256 = vmatprep.mubr.f32.mxu0 0.0
          %1257 = vmatmul.mubr.f32.gmra.mrb[0].mxu0 %v1062
          %v1258 = vpop.f32.mrb[0].mxu0
          %v1259 = vadd.f32 %v1154, %v1258
          %v1260 = vpop.f32.mrb[0].mxu0
          %1261 = vmatprep.mubr.f32.mxu0 0.0
          %1262 = vmatmul.mubr.f32.gmra.mrb[0].mxu0 %v1065
          %v1263 = vpop.f32.mrb[0].mxu0
          %v1264 = vadd.f32 %v1159, %v1263
          %v1265 = vpop.f32.mrb[0].mxu0
          %1266 = vmatprep.mubr.f32.mxu0 0.0
          %1267 = vmatmul.mubr.f32.gmra.mrb[0].mxu0 %v1068
          %v1268 = vpop.f32.mrb[0].mxu0
          %v1269 = vadd.f32 %v1164, %v1268
          %v1270 = vpop.f32.mrb[0].mxu0
          %1271 = vmatprep.mubr.f32.mxu0 0.0
          %1272 = vmatmul.mubr.f32.gmra.mrb[0].mxu0 %v1071
          %v1273 = vpop.f32.mrb[0].mxu0
          %v1274 = vadd.f32 %v1169, %v1273
          %v1275 = vpop.f32.mrb[0].mxu0
          %1276 = vmatprep.mubr.f32.mxu0 0.0
          %1277 = vmatmul.mubr.f32.gmra.mrb[0].mxu0 %v1074
          %v1278 = vpop.f32.mrb[0].mxu0
          %v1279 = vadd.f32 %v1174, %v1278
          %v1280 = vpop.f32.mrb[0].mxu0
          %1281 = vmatprep.mubr.f32.mxu0 0.0
          %1282 = vmatmul.mubr.f32.gmra.mrb[0].mxu0 %v1077
          %v1283 = vpop.f32.mrb[0].mxu0
          %v1284 = vadd.f32 %v1179, %v1283
          %v1285 = vpop.f32.mrb[0].mxu0
          %1286 = vmatprep.mubr.f32.mxu0 0.0
          %1287 = vmatmul.mubr.f32.gmra.mrb[0].mxu0 %v1080
          %v1288 = vpop.f32.mrb[0].mxu0
          %v1289 = vadd.f32 %v1184, %v1288
          %v1290 = vpop.f32.mrb[0].mxu0
          %1291 = vdwg.mxu0
          %v1292 = vmax.f32 %v1254, 0.0
          %v1293 = vmax.f32 %v1259, 0.0
          %v1294 = vmax.f32 %v1264, 0.0
          %v1295 = vmax.f32 %v1269, 0.0
          %v1296 = vmax.f32 %v1274, 0.0
          %v1297 = vmax.f32 %v1279, 0.0
          %v1298 = vmax.f32 %v1284, 0.0
          %v1299 = vmax.f32 %v1289, 0.0
          %s1300 = smul.u32 %s694, 64
          %s1301 = scalar_lea.vmem [#allocation3], %s1300
          %1302 = vst.msk [vmem:[%s1301] sm:$0xff] %vm980, %v1292
          %1303 = vst.msk [vmem:[%s1301 + $0x8] sm:$0xff] %vm980, %v1293
          %1304 = vst.msk [vmem:[%s1301 + $0x10] sm:$0xff] %vm980, %v1294
          %1305 = vst.msk [vmem:[%s1301 + $0x18] sm:$0xff] %vm980, %v1295
          %1306 = vst.msk [vmem:[%s1301 + $0x20] sm:$0xff] %vm980, %v1296
          %1307 = vst.msk [vmem:[%s1301 + $0x28] sm:$0xff] %vm980, %v1297
          %1308 = vst.msk [vmem:[%s1301 + $0x30] sm:$0xff] %vm980, %v1298
          %1309 = vst.msk [vmem:[%s1301 + $0x38] sm:$0xff] %vm980, %v1299
        $region52: #{two_layer_cnn_forward.1} parent=39 // loop_footer
          %s698 = sadd.s32 1, %s694
        $region53: #{two_layer_cnn_forward.1} parent=39 // loop_footer_branch
          %693 = sbr.rel target = $region49
        $region54: #{two_layer_cnn_forward.1} parent=39 // loop_exit
          _
        %v1310 = vld [vmem:[#allocation3] sm:$0xff]
        %v1311 = vld [vmem:[#allocation3 + $0x8] sm:$0xff]
        %v1312 = vld [vmem:[#allocation3 + $0x10] sm:$0xff]
        %v1313 = vld [vmem:[#allocation3 + $0x18] sm:$0xff]
        %v1314 = vld [vmem:[#allocation3 + $0x20] sm:$0xff]
        %v1315 = vld [vmem:[#allocation3 + $0x28] sm:$0xff]
        %v1316 = vld [vmem:[#allocation3 + $0x30] sm:$0xff]
        %v1317 = vld [vmem:[#allocation3 + $0x38] sm:$0xff]
        %v1318 = vld [vmem:[#allocation3 + $0x40] sm:$0xff]
        %v1319 = vld [vmem:[#allocation3 + $0x48] sm:$0xff]
        %v1320 = vld [vmem:[#allocation3 + $0x50] sm:$0xff]
        %v1321 = vld [vmem:[#allocation3 + $0x58] sm:$0xff]
        %v1322 = vld [vmem:[#allocation3 + $0x60] sm:$0xff]
        %v1323 = vld [vmem:[#allocation3 + $0x68] sm:$0xff]
        %v1324 = vld [vmem:[#allocation3 + $0x70] sm:$0xff]
        %v1325 = vld [vmem:[#allocation3 + $0x78] sm:$0xff]
        %v1326 = vld [vmem:[%s3] sm:$0xff]
        %v1327 = vld [vmem:[%s3 + $0x8] sm:$0xff]
        %v1328 = vld [vmem:[%s3 + $0x10] sm:$0xff]
        %v1329 = vld [vmem:[%s3 + $0x18] sm:$0xff]
        %v1330 = vld [vmem:[%s3 + $0x20] sm:$0xff]
        %v1331 = vld [vmem:[%s3 + $0x28] sm:$0xff]
        %v1332 = vld [vmem:[%s3 + $0x30] sm:$0xff]
        %v1333 = vld [vmem:[%s3 + $0x38] sm:$0xff]
        %v1334 = vld [vmem:[%s3 + $0x40] sm:$0xff]
        %v1335 = vld [vmem:[%s3 + $0x48] sm:$0xff]
        %v1336 = vld [vmem:[%s3 + $0x50] sm:$0xff]
        %v1337 = vld [vmem:[%s3 + $0x58] sm:$0xff]
        %v1338 = vld [vmem:[%s3 + $0x60] sm:$0xff]
        %v1339 = vld [vmem:[%s3 + $0x68] sm:$0xff]
        %v1340 = vld [vmem:[%s3 + $0x70] sm:$0xff]
        %v1341 = vld [vmem:[%s3 + $0x78] sm:$0xff]
        %v1342 = vmul.f32 %v1310, %v1326
        %v1343 = vmul.f32 %v1311, %v1327
        %v1344 = vmul.f32 %v1312, %v1328
        %v1345 = vmul.f32 %v1313, %v1329
        %v1346 = vmul.f32 %v1314, %v1330
        %v1347 = vmul.f32 %v1315, %v1331
        %v1348 = vmul.f32 %v1316, %v1332
        %v1349 = vmul.f32 %v1317, %v1333
        %v1350 = vmul.f32 %v1318, %v1334
        %v1351 = vmul.f32 %v1319, %v1335
        %v1352 = vmul.f32 %v1320, %v1336
        %v1353 = vmul.f32 %v1321, %v1337
        %v1354 = vmul.f32 %v1322, %v1338
        %v1355 = vmul.f32 %v1323, %v1339
        %v1356 = vmul.f32 %v1324, %v1340
        %v1357 = vmul.f32 %v1325, %v1341
        %vm1358 = vcmask 523264
        %v1359 = vsel %vm1358, %v1342, 0.0
        %v1360 = vsel %vm1358, %v1343, 0.0
        %v1361 = vadd.f32 %v1359, %v1360
        %v1362 = vsel %vm1358, %v1344, 0.0
        %v1363 = vadd.f32 %v1361, %v1362
        %v1364 = vsel %vm1358, %v1345, 0.0
        %v1365 = vadd.f32 %v1363, %v1364
        %v1366 = vsel %vm1358, %v1346, 0.0
        %v1367 = vadd.f32 %v1365, %v1366
        %v1368 = vsel %vm1358, %v1347, 0.0
        %v1369 = vadd.f32 %v1367, %v1368
        %v1370 = vsel %vm1358, %v1348, 0.0
        %v1371 = vadd.f32 %v1369, %v1370
        %v1372 = vsel %vm1358, %v1349, 0.0
        %v1373 = vadd.f32 %v1371, %v1372
        %v1374 = vsel %vm1358, %v1350, 0.0
        %v1375 = vadd.f32 %v1373, %v1374
        %v1376 = vsel %vm1358, %v1351, 0.0
        %v1377 = vadd.f32 %v1375, %v1376
        %v1378 = vsel %vm1358, %v1352, 0.0
        %v1379 = vadd.f32 %v1377, %v1378
        %v1380 = vsel %vm1358, %v1353, 0.0
        %v1381 = vadd.f32 %v1379, %v1380
        %v1382 = vsel %vm1358, %v1354, 0.0
        %v1383 = vadd.f32 %v1381, %v1382
        %v1384 = vsel %vm1358, %v1355, 0.0
        %v1385 = vadd.f32 %v1383, %v1384
        %v1386 = vsel %vm1358, %v1356, 0.0
        %v1387 = vadd.f32 %v1385, %v1386
        %v1388 = vsel %vm1358, %v1357, 0.0
        %v1389 = vadd.f32 %v1387, %v1388
        %v1390 = vrot.slane %v1389, 4
        %v1391 = vadd.f32 %v1389, %v1390
        %v1392 = vrot.slane %v1391, 2
        %v1393 = vadd.f32 %v1391, %v1392
        %v1394 = vrot.slane %v1393, 1
        %v1395 = vadd.f32 %v1393, %v1394
        %v1396 = vadd.f32 %v1395, 0.0
        %s1397 = scalar_lea.vmem %s3, 1024
        %v1398 = vld [vmem:[%s1397] sm:$0xff]
        %v1399 = vld [vmem:[%s1397 + $0x8] sm:$0xff]
        %v1400 = vld [vmem:[%s1397 + $0x10] sm:$0xff]
        %v1401 = vld [vmem:[%s1397 + $0x18] sm:$0xff]
        %v1402 = vld [vmem:[%s1397 + $0x20] sm:$0xff]
        %v1403 = vld [vmem:[%s1397 + $0x28] sm:$0xff]
        %v1404 = vld [vmem:[%s1397 + $0x30] sm:$0xff]
        %v1405 = vld [vmem:[%s1397 + $0x38] sm:$0xff]
        %v1406 = vld [vmem:[%s1397 + $0x40] sm:$0xff]
        %v1407 = vld [vmem:[%s1397 + $0x48] sm:$0xff]
        %v1408 = vld [vmem:[%s1397 + $0x50] sm:$0xff]
        %v1409 = vld [vmem:[%s1397 + $0x58] sm:$0xff]
        %v1410 = vld [vmem:[%s1397 + $0x60] sm:$0xff]
        %v1411 = vld [vmem:[%s1397 + $0x68] sm:$0xff]
        %v1412 = vld [vmem:[%s1397 + $0x70] sm:$0xff]
        %v1413 = vld [vmem:[%s1397 + $0x78] sm:$0xff]
        %v1414 = vmul.f32 %v1310, %v1398
        %v1415 = vmul.f32 %v1311, %v1399
        %v1416 = vmul.f32 %v1312, %v1400
        %v1417 = vmul.f32 %v1313, %v1401
        %v1418 = vmul.f32 %v1314, %v1402
        %v1419 = vmul.f32 %v1315, %v1403
        %v1420 = vmul.f32 %v1316, %v1404
        %v1421 = vmul.f32 %v1317, %v1405
        %v1422 = vmul.f32 %v1318, %v1406
        %v1423 = vmul.f32 %v1319, %v1407
        %v1424 = vmul.f32 %v1320, %v1408
        %v1425 = vmul.f32 %v1321, %v1409
        %v1426 = vmul.f32 %v1322, %v1410
        %v1427 = vmul.f32 %v1323, %v1411
        %v1428 = vmul.f32 %v1324, %v1412
        %v1429 = vmul.f32 %v1325, %v1413
        %v1430 = vsel %vm1358, %v1414, 0.0
        %v1431 = vsel %vm1358, %v1415, 0.0
        %v1432 = vadd.f32 %v1430, %v1431
        %v1433 = vsel %vm1358, %v1416, 0.0
        %v1434 = vadd.f32 %v1432, %v1433
        %v1435 = vsel %vm1358, %v1417, 0.0
        %v1436 = vadd.f32 %v1434, %v1435
        %v1437 = vsel %vm1358, %v1418, 0.0
        %v1438 = vadd.f32 %v1436, %v1437
        %v1439 = vsel %vm1358, %v1419, 0.0
        %v1440 = vadd.f32 %v1438, %v1439
        %v1441 = vsel %vm1358, %v1420, 0.0
        %v1442 = vadd.f32 %v1440, %v1441
        %v1443 = vsel %vm1358, %v1421, 0.0
        %v1444 = vadd.f32 %v1442, %v1443
        %v1445 = vsel %vm1358, %v1422, 0.0
        %v1446 = vadd.f32 %v1444, %v1445
        %v1447 = vsel %vm1358, %v1423, 0.0
        %v1448 = vadd.f32 %v1446, %v1447
        %v1449 = vsel %vm1358, %v1424, 0.0
        %v1450 = vadd.f32 %v1448, %v1449
        %v1451 = vsel %vm1358, %v1425, 0.0
        %v1452 = vadd.f32 %v1450, %v1451
        %v1453 = vsel %vm1358, %v1426, 0.0
        %v1454 = vadd.f32 %v1452, %v1453
        %v1455 = vsel %vm1358, %v1427, 0.0
        %v1456 = vadd.f32 %v1454, %v1455
        %v1457 = vsel %vm1358, %v1428, 0.0
        %v1458 = vadd.f32 %v1456, %v1457
        %v1459 = vsel %vm1358, %v1429, 0.0
        %v1460 = vadd.f32 %v1458, %v1459
        %v1461 = vrot.slane %v1460, 4
        %v1462 = vadd.f32 %v1460, %v1461
        %v1463 = vrot.slane %v1462, 2
        %v1464 = vadd.f32 %v1462, %v1463
        %v1465 = vrot.slane %v1464, 1
        %v1466 = vadd.f32 %v1464, %v1465
        %v1467 = vadd.f32 %v1466, 0.0
        %s1468 = scalar_lea.vmem %s3, 2048
        %v1469 = vld [vmem:[%s1468] sm:$0xff]
        %v1470 = vld [vmem:[%s1468 + $0x8] sm:$0xff]
        %v1471 = vld [vmem:[%s1468 + $0x10] sm:$0xff]
        %v1472 = vld [vmem:[%s1468 + $0x18] sm:$0xff]
        %v1473 = vld [vmem:[%s1468 + $0x20] sm:$0xff]
        %v1474 = vld [vmem:[%s1468 + $0x28] sm:$0xff]
        %v1475 = vld [vmem:[%s1468 + $0x30] sm:$0xff]
        %v1476 = vld [vmem:[%s1468 + $0x38] sm:$0xff]
        %v1477 = vld [vmem:[%s1468 + $0x40] sm:$0xff]
        %v1478 = vld [vmem:[%s1468 + $0x48] sm:$0xff]
        %v1479 = vld [vmem:[%s1468 + $0x50] sm:$0xff]
        %v1480 = vld [vmem:[%s1468 + $0x58] sm:$0xff]
        %v1481 = vld [vmem:[%s1468 + $0x60] sm:$0xff]
        %v1482 = vld [vmem:[%s1468 + $0x68] sm:$0xff]
        %v1483 = vld [vmem:[%s1468 + $0x70] sm:$0xff]
        %v1484 = vld [vmem:[%s1468 + $0x78] sm:$0xff]
        %v1485 = vmul.f32 %v1310, %v1469
        %v1486 = vmul.f32 %v1311, %v1470
        %v1487 = vmul.f32 %v1312, %v1471
        %v1488 = vmul.f32 %v1313, %v1472
        %v1489 = vmul.f32 %v1314, %v1473
        %v1490 = vmul.f32 %v1315, %v1474
        %v1491 = vmul.f32 %v1316, %v1475
        %v1492 = vmul.f32 %v1317, %v1476
        %v1493 = vmul.f32 %v1318, %v1477
        %v1494 = vmul.f32 %v1319, %v1478
        %v1495 = vmul.f32 %v1320, %v1479
        %v1496 = vmul.f32 %v1321, %v1480
        %v1497 = vmul.f32 %v1322, %v1481
        %v1498 = vmul.f32 %v1323, %v1482
        %v1499 = vmul.f32 %v1324, %v1483
        %v1500 = vmul.f32 %v1325, %v1484
        %v1501 = vsel %vm1358, %v1485, 0.0
        %v1502 = vsel %vm1358, %v1486, 0.0
        %v1503 = vadd.f32 %v1501, %v1502
        %v1504 = vsel %vm1358, %v1487, 0.0
        %v1505 = vadd.f32 %v1503, %v1504
        %v1506 = vsel %vm1358, %v1488, 0.0
        %v1507 = vadd.f32 %v1505, %v1506
        %v1508 = vsel %vm1358, %v1489, 0.0
        %v1509 = vadd.f32 %v1507, %v1508
        %v1510 = vsel %vm1358, %v1490, 0.0
        %v1511 = vadd.f32 %v1509, %v1510
        %v1512 = vsel %vm1358, %v1491, 0.0
        %v1513 = vadd.f32 %v1511, %v1512
        %v1514 = vsel %vm1358, %v1492, 0.0
        %v1515 = vadd.f32 %v1513, %v1514
        %v1516 = vsel %vm1358, %v1493, 0.0
        %v1517 = vadd.f32 %v1515, %v1516
        %v1518 = vsel %vm1358, %v1494, 0.0
        %v1519 = vadd.f32 %v1517, %v1518
        %v1520 = vsel %vm1358, %v1495, 0.0
        %v1521 = vadd.f32 %v1519, %v1520
        %v1522 = vsel %vm1358, %v1496, 0.0
        %v1523 = vadd.f32 %v1521, %v1522
        %v1524 = vsel %vm1358, %v1497, 0.0
        %v1525 = vadd.f32 %v1523, %v1524
        %v1526 = vsel %vm1358, %v1498, 0.0
        %v1527 = vadd.f32 %v1525, %v1526
        %v1528 = vsel %vm1358, %v1499, 0.0
        %v1529 = vadd.f32 %v1527, %v1528
        %v1530 = vsel %vm1358, %v1500, 0.0
        %v1531 = vadd.f32 %v1529, %v1530
        %v1532 = vrot.slane %v1531, 4
        %v1533 = vadd.f32 %v1531, %v1532
        %v1534 = vrot.slane %v1533, 2
        %v1535 = vadd.f32 %v1533, %v1534
        %v1536 = vrot.slane %v1535, 1
        %v1537 = vadd.f32 %v1535, %v1536
        %v1538 = vadd.f32 %v1537, 0.0
        %s1539 = scalar_lea.vmem %s3, 3072
        %v1540 = vld [vmem:[%s1539] sm:$0xff]
        %v1541 = vld [vmem:[%s1539 + $0x8] sm:$0xff]
        %v1542 = vld [vmem:[%s1539 + $0x10] sm:$0xff]
        %v1543 = vld [vmem:[%s1539 + $0x18] sm:$0xff]
        %v1544 = vld [vmem:[%s1539 + $0x20] sm:$0xff]
        %v1545 = vld [vmem:[%s1539 + $0x28] sm:$0xff]
        %v1546 = vld [vmem:[%s1539 + $0x30] sm:$0xff]
        %v1547 = vld [vmem:[%s1539 + $0x38] sm:$0xff]
        %v1548 = vld [vmem:[%s1539 + $0x40] sm:$0xff]
        %v1549 = vld [vmem:[%s1539 + $0x48] sm:$0xff]
        %v1550 = vld [vmem:[%s1539 + $0x50] sm:$0xff]
        %v1551 = vld [vmem:[%s1539 + $0x58] sm:$0xff]
        %v1552 = vld [vmem:[%s1539 + $0x60] sm:$0xff]
        %v1553 = vld [vmem:[%s1539 + $0x68] sm:$0xff]
        %v1554 = vld [vmem:[%s1539 + $0x70] sm:$0xff]
        %v1555 = vld [vmem:[%s1539 + $0x78] sm:$0xff]
        %v1556 = vmul.f32 %v1310, %v1540
        %v1557 = vmul.f32 %v1311, %v1541
        %v1558 = vmul.f32 %v1312, %v1542
        %v1559 = vmul.f32 %v1313, %v1543
        %v1560 = vmul.f32 %v1314, %v1544
        %v1561 = vmul.f32 %v1315, %v1545
        %v1562 = vmul.f32 %v1316, %v1546
        %v1563 = vmul.f32 %v1317, %v1547
        %v1564 = vmul.f32 %v1318, %v1548
        %v1565 = vmul.f32 %v1319, %v1549
        %v1566 = vmul.f32 %v1320, %v1550
        %v1567 = vmul.f32 %v1321, %v1551
        %v1568 = vmul.f32 %v1322, %v1552
        %v1569 = vmul.f32 %v1323, %v1553
        %v1570 = vmul.f32 %v1324, %v1554
        %v1571 = vmul.f32 %v1325, %v1555
        %v1572 = vsel %vm1358, %v1556, 0.0
        %v1573 = vsel %vm1358, %v1557, 0.0
        %v1574 = vadd.f32 %v1572, %v1573
        %v1575 = vsel %vm1358, %v1558, 0.0
        %v1576 = vadd.f32 %v1574, %v1575
        %v1577 = vsel %vm1358, %v1559, 0.0
        %v1578 = vadd.f32 %v1576, %v1577
        %v1579 = vsel %vm1358, %v1560, 0.0
        %v1580 = vadd.f32 %v1578, %v1579
        %v1581 = vsel %vm1358, %v1561, 0.0
        %v1582 = vadd.f32 %v1580, %v1581
        %v1583 = vsel %vm1358, %v1562, 0.0
        %v1584 = vadd.f32 %v1582, %v1583
        %v1585 = vsel %vm1358, %v1563, 0.0
        %v1586 = vadd.f32 %v1584, %v1585
        %v1587 = vsel %vm1358, %v1564, 0.0
        %v1588 = vadd.f32 %v1586, %v1587
        %v1589 = vsel %vm1358, %v1565, 0.0
        %v1590 = vadd.f32 %v1588, %v1589
        %v1591 = vsel %vm1358, %v1566, 0.0
        %v1592 = vadd.f32 %v1590, %v1591
        %v1593 = vsel %vm1358, %v1567, 0.0
        %v1594 = vadd.f32 %v1592, %v1593
        %v1595 = vsel %vm1358, %v1568, 0.0
        %v1596 = vadd.f32 %v1594, %v1595
        %v1597 = vsel %vm1358, %v1569, 0.0
        %v1598 = vadd.f32 %v1596, %v1597
        %v1599 = vsel %vm1358, %v1570, 0.0
        %v1600 = vadd.f32 %v1598, %v1599
        %v1601 = vsel %vm1358, %v1571, 0.0
        %v1602 = vadd.f32 %v1600, %v1601
        %v1603 = vrot.slane %v1602, 4
        %v1604 = vadd.f32 %v1602, %v1603
        %v1605 = vrot.slane %v1604, 2
        %v1606 = vadd.f32 %v1604, %v1605
        %v1607 = vrot.slane %v1606, 1
        %v1608 = vadd.f32 %v1606, %v1607
        %v1609 = vadd.f32 %v1608, 0.0
        %s1610 = scalar_lea.vmem %s3, 4096
        %v1611 = vld [vmem:[%s1610] sm:$0xff]
        %v1612 = vld [vmem:[%s1610 + $0x8] sm:$0xff]
        %v1613 = vld [vmem:[%s1610 + $0x10] sm:$0xff]
        %v1614 = vld [vmem:[%s1610 + $0x18] sm:$0xff]
        %v1615 = vld [vmem:[%s1610 + $0x20] sm:$0xff]
        %v1616 = vld [vmem:[%s1610 + $0x28] sm:$0xff]
        %v1617 = vld [vmem:[%s1610 + $0x30] sm:$0xff]
        %v1618 = vld [vmem:[%s1610 + $0x38] sm:$0xff]
        %v1619 = vld [vmem:[%s1610 + $0x40] sm:$0xff]
        %v1620 = vld [vmem:[%s1610 + $0x48] sm:$0xff]
        %v1621 = vld [vmem:[%s1610 + $0x50] sm:$0xff]
        %v1622 = vld [vmem:[%s1610 + $0x58] sm:$0xff]
        %v1623 = vld [vmem:[%s1610 + $0x60] sm:$0xff]
        %v1624 = vld [vmem:[%s1610 + $0x68] sm:$0xff]
        %v1625 = vld [vmem:[%s1610 + $0x70] sm:$0xff]
        %v1626 = vld [vmem:[%s1610 + $0x78] sm:$0xff]
        %v1627 = vmul.f32 %v1310, %v1611
        %v1628 = vmul.f32 %v1311, %v1612
        %v1629 = vmul.f32 %v1312, %v1613
        %v1630 = vmul.f32 %v1313, %v1614
        %v1631 = vmul.f32 %v1314, %v1615
        %v1632 = vmul.f32 %v1315, %v1616
        %v1633 = vmul.f32 %v1316, %v1617
        %v1634 = vmul.f32 %v1317, %v1618
        %v1635 = vmul.f32 %v1318, %v1619
        %v1636 = vmul.f32 %v1319, %v1620
        %v1637 = vmul.f32 %v1320, %v1621
        %v1638 = vmul.f32 %v1321, %v1622
        %v1639 = vmul.f32 %v1322, %v1623
        %v1640 = vmul.f32 %v1323, %v1624
        %v1641 = vmul.f32 %v1324, %v1625
        %v1642 = vmul.f32 %v1325, %v1626
        %v1643 = vsel %vm1358, %v1627, 0.0
        %v1644 = vsel %vm1358, %v1628, 0.0
        %v1645 = vadd.f32 %v1643, %v1644
        %v1646 = vsel %vm1358, %v1629, 0.0
        %v1647 = vadd.f32 %v1645, %v1646
        %v1648 = vsel %vm1358, %v1630, 0.0
        %v1649 = vadd.f32 %v1647, %v1648
        %v1650 = vsel %vm1358, %v1631, 0.0
        %v1651 = vadd.f32 %v1649, %v1650
        %v1652 = vsel %vm1358, %v1632, 0.0
        %v1653 = vadd.f32 %v1651, %v1652
        %v1654 = vsel %vm1358, %v1633, 0.0
        %v1655 = vadd.f32 %v1653, %v1654
        %v1656 = vsel %vm1358, %v1634, 0.0
        %v1657 = vadd.f32 %v1655, %v1656
        %v1658 = vsel %vm1358, %v1635, 0.0
        %v1659 = vadd.f32 %v1657, %v1658
        %v1660 = vsel %vm1358, %v1636, 0.0
        %v1661 = vadd.f32 %v1659, %v1660
        %v1662 = vsel %vm1358, %v1637, 0.0
        %v1663 = vadd.f32 %v1661, %v1662
        %v1664 = vsel %vm1358, %v1638, 0.0
        %v1665 = vadd.f32 %v1663, %v1664
        %v1666 = vsel %vm1358, %v1639, 0.0
        %v1667 = vadd.f32 %v1665, %v1666
        %v1668 = vsel %vm1358, %v1640, 0.0
        %v1669 = vadd.f32 %v1667, %v1668
        %v1670 = vsel %vm1358, %v1641, 0.0
        %v1671 = vadd.f32 %v1669, %v1670
        %v1672 = vsel %vm1358, %v1642, 0.0
        %v1673 = vadd.f32 %v1671, %v1672
        %v1674 = vrot.slane %v1673, 4
        %v1675 = vadd.f32 %v1673, %v1674
        %v1676 = vrot.slane %v1675, 2
        %v1677 = vadd.f32 %v1675, %v1676
        %v1678 = vrot.slane %v1677, 1
        %v1679 = vadd.f32 %v1677, %v1678
        %v1680 = vadd.f32 %v1679, 0.0
        %s1681 = scalar_lea.vmem %s3, 5120
        %v1682 = vld [vmem:[%s1681] sm:$0xff]
        %v1683 = vld [vmem:[%s1681 + $0x8] sm:$0xff]
        %v1684 = vld [vmem:[%s1681 + $0x10] sm:$0xff]
        %v1685 = vld [vmem:[%s1681 + $0x18] sm:$0xff]
        %v1686 = vld [vmem:[%s1681 + $0x20] sm:$0xff]
        %v1687 = vld [vmem:[%s1681 + $0x28] sm:$0xff]
        %v1688 = vld [vmem:[%s1681 + $0x30] sm:$0xff]
        %v1689 = vld [vmem:[%s1681 + $0x38] sm:$0xff]
        %v1690 = vld [vmem:[%s1681 + $0x40] sm:$0xff]
        %v1691 = vld [vmem:[%s1681 + $0x48] sm:$0xff]
        %v1692 = vld [vmem:[%s1681 + $0x50] sm:$0xff]
        %v1693 = vld [vmem:[%s1681 + $0x58] sm:$0xff]
        %v1694 = vld [vmem:[%s1681 + $0x60] sm:$0xff]
        %v1695 = vld [vmem:[%s1681 + $0x68] sm:$0xff]
        %v1696 = vld [vmem:[%s1681 + $0x70] sm:$0xff]
        %v1697 = vld [vmem:[%s1681 + $0x78] sm:$0xff]
        %v1698 = vmul.f32 %v1310, %v1682
        %v1699 = vmul.f32 %v1311, %v1683
        %v1700 = vmul.f32 %v1312, %v1684
        %v1701 = vmul.f32 %v1313, %v1685
        %v1702 = vmul.f32 %v1314, %v1686
        %v1703 = vmul.f32 %v1315, %v1687
        %v1704 = vmul.f32 %v1316, %v1688
        %v1705 = vmul.f32 %v1317, %v1689
        %v1706 = vmul.f32 %v1318, %v1690
        %v1707 = vmul.f32 %v1319, %v1691
        %v1708 = vmul.f32 %v1320, %v1692
        %v1709 = vmul.f32 %v1321, %v1693
        %v1710 = vmul.f32 %v1322, %v1694
        %v1711 = vmul.f32 %v1323, %v1695
        %v1712 = vmul.f32 %v1324, %v1696
        %v1713 = vmul.f32 %v1325, %v1697
        %v1714 = vsel %vm1358, %v1698, 0.0
        %v1715 = vsel %vm1358, %v1699, 0.0
        %v1716 = vadd.f32 %v1714, %v1715
        %v1717 = vsel %vm1358, %v1700, 0.0
        %v1718 = vadd.f32 %v1716, %v1717
        %v1719 = vsel %vm1358, %v1701, 0.0
        %v1720 = vadd.f32 %v1718, %v1719
        %v1721 = vsel %vm1358, %v1702, 0.0
        %v1722 = vadd.f32 %v1720, %v1721
        %v1723 = vsel %vm1358, %v1703, 0.0
        %v1724 = vadd.f32 %v1722, %v1723
        %v1725 = vsel %vm1358, %v1704, 0.0
        %v1726 = vadd.f32 %v1724, %v1725
        %v1727 = vsel %vm1358, %v1705, 0.0
        %v1728 = vadd.f32 %v1726, %v1727
        %v1729 = vsel %vm1358, %v1706, 0.0
        %v1730 = vadd.f32 %v1728, %v1729
        %v1731 = vsel %vm1358, %v1707, 0.0
        %v1732 = vadd.f32 %v1730, %v1731
        %v1733 = vsel %vm1358, %v1708, 0.0
        %v1734 = vadd.f32 %v1732, %v1733
        %v1735 = vsel %vm1358, %v1709, 0.0
        %v1736 = vadd.f32 %v1734, %v1735
        %v1737 = vsel %vm1358, %v1710, 0.0
        %v1738 = vadd.f32 %v1736, %v1737
        %v1739 = vsel %vm1358, %v1711, 0.0
        %v1740 = vadd.f32 %v1738, %v1739
        %v1741 = vsel %vm1358, %v1712, 0.0
        %v1742 = vadd.f32 %v1740, %v1741
        %v1743 = vsel %vm1358, %v1713, 0.0
        %v1744 = vadd.f32 %v1742, %v1743
        %v1745 = vrot.slane %v1744, 4
        %v1746 = vadd.f32 %v1744, %v1745
        %v1747 = vrot.slane %v1746, 2
        %v1748 = vadd.f32 %v1746, %v1747
        %v1749 = vrot.slane %v1748, 1
        %v1750 = vadd.f32 %v1748, %v1749
        %v1751 = vadd.f32 %v1750, 0.0
        %s1752 = scalar_lea.vmem %s3, 6144
        %v1753 = vld [vmem:[%s1752] sm:$0xff]
        %v1754 = vld [vmem:[%s1752 + $0x8] sm:$0xff]
        %v1755 = vld [vmem:[%s1752 + $0x10] sm:$0xff]
        %v1756 = vld [vmem:[%s1752 + $0x18] sm:$0xff]
        %v1757 = vld [vmem:[%s1752 + $0x20] sm:$0xff]
        %v1758 = vld [vmem:[%s1752 + $0x28] sm:$0xff]
        %v1759 = vld [vmem:[%s1752 + $0x30] sm:$0xff]
        %v1760 = vld [vmem:[%s1752 + $0x38] sm:$0xff]
        %v1761 = vld [vmem:[%s1752 + $0x40] sm:$0xff]
        %v1762 = vld [vmem:[%s1752 + $0x48] sm:$0xff]
        %v1763 = vld [vmem:[%s1752 + $0x50] sm:$0xff]
        %v1764 = vld [vmem:[%s1752 + $0x58] sm:$0xff]
        %v1765 = vld [vmem:[%s1752 + $0x60] sm:$0xff]
        %v1766 = vld [vmem:[%s1752 + $0x68] sm:$0xff]
        %v1767 = vld [vmem:[%s1752 + $0x70] sm:$0xff]
        %v1768 = vld [vmem:[%s1752 + $0x78] sm:$0xff]
        %v1769 = vmul.f32 %v1310, %v1753
        %v1770 = vmul.f32 %v1311, %v1754
        %v1771 = vmul.f32 %v1312, %v1755
        %v1772 = vmul.f32 %v1313, %v1756
        %v1773 = vmul.f32 %v1314, %v1757
        %v1774 = vmul.f32 %v1315, %v1758
        %v1775 = vmul.f32 %v1316, %v1759
        %v1776 = vmul.f32 %v1317, %v1760
        %v1777 = vmul.f32 %v1318, %v1761
        %v1778 = vmul.f32 %v1319, %v1762
        %v1779 = vmul.f32 %v1320, %v1763
        %v1780 = vmul.f32 %v1321, %v1764
        %v1781 = vmul.f32 %v1322, %v1765
        %v1782 = vmul.f32 %v1323, %v1766
        %v1783 = vmul.f32 %v1324, %v1767
        %v1784 = vmul.f32 %v1325, %v1768
        %v1785 = vsel %vm1358, %v1769, 0.0
        %v1786 = vsel %vm1358, %v1770, 0.0
        %v1787 = vadd.f32 %v1785, %v1786
        %v1788 = vsel %vm1358, %v1771, 0.0
        %v1789 = vadd.f32 %v1787, %v1788
        %v1790 = vsel %vm1358, %v1772, 0.0
        %v1791 = vadd.f32 %v1789, %v1790
        %v1792 = vsel %vm1358, %v1773, 0.0
        %v1793 = vadd.f32 %v1791, %v1792
        %v1794 = vsel %vm1358, %v1774, 0.0
        %v1795 = vadd.f32 %v1793, %v1794
        %v1796 = vsel %vm1358, %v1775, 0.0
        %v1797 = vadd.f32 %v1795, %v1796
        %v1798 = vsel %vm1358, %v1776, 0.0
        %v1799 = vadd.f32 %v1797, %v1798
        %v1800 = vsel %vm1358, %v1777, 0.0
        %v1801 = vadd.f32 %v1799, %v1800
        %v1802 = vsel %vm1358, %v1778, 0.0
        %v1803 = vadd.f32 %v1801, %v1802
        %v1804 = vsel %vm1358, %v1779, 0.0
        %v1805 = vadd.f32 %v1803, %v1804
        %v1806 = vsel %vm1358, %v1780, 0.0
        %v1807 = vadd.f32 %v1805, %v1806
        %v1808 = vsel %vm1358, %v1781, 0.0
        %v1809 = vadd.f32 %v1807, %v1808
        %v1810 = vsel %vm1358, %v1782, 0.0
        %v1811 = vadd.f32 %v1809, %v1810
        %v1812 = vsel %vm1358, %v1783, 0.0
        %v1813 = vadd.f32 %v1811, %v1812
        %v1814 = vsel %vm1358, %v1784, 0.0
        %v1815 = vadd.f32 %v1813, %v1814
        %v1816 = vrot.slane %v1815, 4
        %v1817 = vadd.f32 %v1815, %v1816
        %v1818 = vrot.slane %v1817, 2
        %v1819 = vadd.f32 %v1817, %v1818
        %v1820 = vrot.slane %v1819, 1
        %v1821 = vadd.f32 %v1819, %v1820
        %v1822 = vadd.f32 %v1821, 0.0
        %s1823 = scalar_lea.vmem %s3, 7168
        %v1824 = vld [vmem:[%s1823] sm:$0xff]
        %v1825 = vld [vmem:[%s1823 + $0x8] sm:$0xff]
        %v1826 = vld [vmem:[%s1823 + $0x10] sm:$0xff]
        %v1827 = vld [vmem:[%s1823 + $0x18] sm:$0xff]
        %v1828 = vld [vmem:[%s1823 + $0x20] sm:$0xff]
        %v1829 = vld [vmem:[%s1823 + $0x28] sm:$0xff]
        %v1830 = vld [vmem:[%s1823 + $0x30] sm:$0xff]
        %v1831 = vld [vmem:[%s1823 + $0x38] sm:$0xff]
        %v1832 = vld [vmem:[%s1823 + $0x40] sm:$0xff]
        %v1833 = vld [vmem:[%s1823 + $0x48] sm:$0xff]
        %v1834 = vld [vmem:[%s1823 + $0x50] sm:$0xff]
        %v1835 = vld [vmem:[%s1823 + $0x58] sm:$0xff]
        %v1836 = vld [vmem:[%s1823 + $0x60] sm:$0xff]
        %v1837 = vld [vmem:[%s1823 + $0x68] sm:$0xff]
        %v1838 = vld [vmem:[%s1823 + $0x70] sm:$0xff]
        %v1839 = vld [vmem:[%s1823 + $0x78] sm:$0xff]
        %v1840 = vmul.f32 %v1310, %v1824
        %v1841 = vmul.f32 %v1311, %v1825
        %v1842 = vmul.f32 %v1312, %v1826
        %v1843 = vmul.f32 %v1313, %v1827
        %v1844 = vmul.f32 %v1314, %v1828
        %v1845 = vmul.f32 %v1315, %v1829
        %v1846 = vmul.f32 %v1316, %v1830
        %v1847 = vmul.f32 %v1317, %v1831
        %v1848 = vmul.f32 %v1318, %v1832
        %v1849 = vmul.f32 %v1319, %v1833
        %v1850 = vmul.f32 %v1320, %v1834
        %v1851 = vmul.f32 %v1321, %v1835
        %v1852 = vmul.f32 %v1322, %v1836
        %v1853 = vmul.f32 %v1323, %v1837
        %v1854 = vmul.f32 %v1324, %v1838
        %v1855 = vmul.f32 %v1325, %v1839
        %v1856 = vsel %vm1358, %v1840, 0.0
        %v1857 = vsel %vm1358, %v1841, 0.0
        %v1858 = vadd.f32 %v1856, %v1857
        %v1859 = vsel %vm1358, %v1842, 0.0
        %v1860 = vadd.f32 %v1858, %v1859
        %v1861 = vsel %vm1358, %v1843, 0.0
        %v1862 = vadd.f32 %v1860, %v1861
        %v1863 = vsel %vm1358, %v1844, 0.0
        %v1864 = vadd.f32 %v1862, %v1863
        %v1865 = vsel %vm1358, %v1845, 0.0
        %v1866 = vadd.f32 %v1864, %v1865
        %v1867 = vsel %vm1358, %v1846, 0.0
        %v1868 = vadd.f32 %v1866, %v1867
        %v1869 = vsel %vm1358, %v1847, 0.0
        %v1870 = vadd.f32 %v1868, %v1869
        %v1871 = vsel %vm1358, %v1848, 0.0
        %v1872 = vadd.f32 %v1870, %v1871
        %v1873 = vsel %vm1358, %v1849, 0.0
        %v1874 = vadd.f32 %v1872, %v1873
        %v1875 = vsel %vm1358, %v1850, 0.0
        %v1876 = vadd.f32 %v1874, %v1875
        %v1877 = vsel %vm1358, %v1851, 0.0
        %v1878 = vadd.f32 %v1876, %v1877
        %v1879 = vsel %vm1358, %v1852, 0.0
        %v1880 = vadd.f32 %v1878, %v1879
        %v1881 = vsel %vm1358, %v1853, 0.0
        %v1882 = vadd.f32 %v1880, %v1881
        %v1883 = vsel %vm1358, %v1854, 0.0
        %v1884 = vadd.f32 %v1882, %v1883
        %v1885 = vsel %vm1358, %v1855, 0.0
        %v1886 = vadd.f32 %v1884, %v1885
        %v1887 = vrot.slane %v1886, 4
        %v1888 = vadd.f32 %v1886, %v1887
        %v1889 = vrot.slane %v1888, 2
        %v1890 = vadd.f32 %v1888, %v1889
        %v1891 = vrot.slane %v1890, 1
        %v1892 = vadd.f32 %v1890, %v1891
        %v1893 = vadd.f32 %v1892, 0.0
        %s1894 = scalar_lea.vmem %s3, 8192
        %v1895 = vld [vmem:[%s1894] sm:$0xff]
        %v1896 = vld [vmem:[%s1894 + $0x8] sm:$0xff]
        %v1897 = vld [vmem:[%s1894 + $0x10] sm:$0xff]
        %v1898 = vld [vmem:[%s1894 + $0x18] sm:$0xff]
        %v1899 = vld [vmem:[%s1894 + $0x20] sm:$0xff]
        %v1900 = vld [vmem:[%s1894 + $0x28] sm:$0xff]
        %v1901 = vld [vmem:[%s1894 + $0x30] sm:$0xff]
        %v1902 = vld [vmem:[%s1894 + $0x38] sm:$0xff]
        %v1903 = vld [vmem:[%s1894 + $0x40] sm:$0xff]
        %v1904 = vld [vmem:[%s1894 + $0x48] sm:$0xff]
        %v1905 = vld [vmem:[%s1894 + $0x50] sm:$0xff]
        %v1906 = vld [vmem:[%s1894 + $0x58] sm:$0xff]
        %v1907 = vld [vmem:[%s1894 + $0x60] sm:$0xff]
        %v1908 = vld [vmem:[%s1894 + $0x68] sm:$0xff]
        %v1909 = vld [vmem:[%s1894 + $0x70] sm:$0xff]
        %v1910 = vld [vmem:[%s1894 + $0x78] sm:$0xff]
        %v1911 = vmul.f32 %v1310, %v1895
        %v1912 = vmul.f32 %v1311, %v1896
        %v1913 = vmul.f32 %v1312, %v1897
        %v1914 = vmul.f32 %v1313, %v1898
        %v1915 = vmul.f32 %v1314, %v1899
        %v1916 = vmul.f32 %v1315, %v1900
        %v1917 = vmul.f32 %v1316, %v1901
        %v1918 = vmul.f32 %v1317, %v1902
        %v1919 = vmul.f32 %v1318, %v1903
        %v1920 = vmul.f32 %v1319, %v1904
        %v1921 = vmul.f32 %v1320, %v1905
        %v1922 = vmul.f32 %v1321, %v1906
        %v1923 = vmul.f32 %v1322, %v1907
        %v1924 = vmul.f32 %v1323, %v1908
        %v1925 = vmul.f32 %v1324, %v1909
        %v1926 = vmul.f32 %v1325, %v1910
        %v1927 = vsel %vm1358, %v1911, 0.0
        %v1928 = vsel %vm1358, %v1912, 0.0
        %v1929 = vadd.f32 %v1927, %v1928
        %v1930 = vsel %vm1358, %v1913, 0.0
        %v1931 = vadd.f32 %v1929, %v1930
        %v1932 = vsel %vm1358, %v1914, 0.0
        %v1933 = vadd.f32 %v1931, %v1932
        %v1934 = vsel %vm1358, %v1915, 0.0
        %v1935 = vadd.f32 %v1933, %v1934
        %v1936 = vsel %vm1358, %v1916, 0.0
        %v1937 = vadd.f32 %v1935, %v1936
        %v1938 = vsel %vm1358, %v1917, 0.0
        %v1939 = vadd.f32 %v1937, %v1938
        %v1940 = vsel %vm1358, %v1918, 0.0
        %v1941 = vadd.f32 %v1939, %v1940
        %v1942 = vsel %vm1358, %v1919, 0.0
        %v1943 = vadd.f32 %v1941, %v1942
        %v1944 = vsel %vm1358, %v1920, 0.0
        %v1945 = vadd.f32 %v1943, %v1944
        %v1946 = vsel %vm1358, %v1921, 0.0
        %v1947 = vadd.f32 %v1945, %v1946
        %v1948 = vsel %vm1358, %v1922, 0.0
        %v1949 = vadd.f32 %v1947, %v1948
        %v1950 = vsel %vm1358, %v1923, 0.0
        %v1951 = vadd.f32 %v1949, %v1950
        %v1952 = vsel %vm1358, %v1924, 0.0
        %v1953 = vadd.f32 %v1951, %v1952
        %v1954 = vsel %vm1358, %v1925, 0.0
        %v1955 = vadd.f32 %v1953, %v1954
        %v1956 = vsel %vm1358, %v1926, 0.0
        %v1957 = vadd.f32 %v1955, %v1956
        %v1958 = vrot.slane %v1957, 4
        %v1959 = vadd.f32 %v1957, %v1958
        %v1960 = vrot.slane %v1959, 2
        %v1961 = vadd.f32 %v1959, %v1960
        %v1962 = vrot.slane %v1961, 1
        %v1963 = vadd.f32 %v1961, %v1962
        %v1964 = vadd.f32 %v1963, 0.0
        %s1965 = scalar_lea.vmem %s3, 9216
        %v1966 = vld [vmem:[%s1965] sm:$0xff]
        %v1967 = vld [vmem:[%s1965 + $0x8] sm:$0xff]
        %v1968 = vld [vmem:[%s1965 + $0x10] sm:$0xff]
        %v1969 = vld [vmem:[%s1965 + $0x18] sm:$0xff]
        %v1970 = vld [vmem:[%s1965 + $0x20] sm:$0xff]
        %v1971 = vld [vmem:[%s1965 + $0x28] sm:$0xff]
        %v1972 = vld [vmem:[%s1965 + $0x30] sm:$0xff]
        %v1973 = vld [vmem:[%s1965 + $0x38] sm:$0xff]
        %v1974 = vld [vmem:[%s1965 + $0x40] sm:$0xff]
        %v1975 = vld [vmem:[%s1965 + $0x48] sm:$0xff]
        %v1976 = vld [vmem:[%s1965 + $0x50] sm:$0xff]
        %v1977 = vld [vmem:[%s1965 + $0x58] sm:$0xff]
        %v1978 = vld [vmem:[%s1965 + $0x60] sm:$0xff]
        %v1979 = vld [vmem:[%s1965 + $0x68] sm:$0xff]
        %v1980 = vld [vmem:[%s1965 + $0x70] sm:$0xff]
        %v1981 = vld [vmem:[%s1965 + $0x78] sm:$0xff]
        %v1982 = vmul.f32 %v1310, %v1966
        %v1983 = vmul.f32 %v1311, %v1967
        %v1984 = vmul.f32 %v1312, %v1968
        %v1985 = vmul.f32 %v1313, %v1969
        %v1986 = vmul.f32 %v1314, %v1970
        %v1987 = vmul.f32 %v1315, %v1971
        %v1988 = vmul.f32 %v1316, %v1972
        %v1989 = vmul.f32 %v1317, %v1973
        %v1990 = vmul.f32 %v1318, %v1974
        %v1991 = vmul.f32 %v1319, %v1975
        %v1992 = vmul.f32 %v1320, %v1976
        %v1993 = vmul.f32 %v1321, %v1977
        %v1994 = vmul.f32 %v1322, %v1978
        %v1995 = vmul.f32 %v1323, %v1979
        %v1996 = vmul.f32 %v1324, %v1980
        %v1997 = vmul.f32 %v1325, %v1981
        %v1998 = vsel %vm1358, %v1982, 0.0
        %v1999 = vsel %vm1358, %v1983, 0.0
        %v2000 = vadd.f32 %v1998, %v1999
        %v2001 = vsel %vm1358, %v1984, 0.0
        %v2002 = vadd.f32 %v2000, %v2001
        %v2003 = vsel %vm1358, %v1985, 0.0
        %v2004 = vadd.f32 %v2002, %v2003
        %v2005 = vsel %vm1358, %v1986, 0.0
        %v2006 = vadd.f32 %v2004, %v2005
        %v2007 = vsel %vm1358, %v1987, 0.0
        %v2008 = vadd.f32 %v2006, %v2007
        %v2009 = vsel %vm1358, %v1988, 0.0
        %v2010 = vadd.f32 %v2008, %v2009
        %v2011 = vsel %vm1358, %v1989, 0.0
        %v2012 = vadd.f32 %v2010, %v2011
        %v2013 = vsel %vm1358, %v1990, 0.0
        %v2014 = vadd.f32 %v2012, %v2013
        %v2015 = vsel %vm1358, %v1991, 0.0
        %v2016 = vadd.f32 %v2014, %v2015
        %v2017 = vsel %vm1358, %v1992, 0.0
        %v2018 = vadd.f32 %v2016, %v2017
        %v2019 = vsel %vm1358, %v1993, 0.0
        %v2020 = vadd.f32 %v2018, %v2019
        %v2021 = vsel %vm1358, %v1994, 0.0
        %v2022 = vadd.f32 %v2020, %v2021
        %v2023 = vsel %vm1358, %v1995, 0.0
        %v2024 = vadd.f32 %v2022, %v2023
        %v2025 = vsel %vm1358, %v1996, 0.0
        %v2026 = vadd.f32 %v2024, %v2025
        %v2027 = vsel %vm1358, %v1997, 0.0
        %v2028 = vadd.f32 %v2026, %v2027
        %v2029 = vrot.slane %v2028, 4
        %v2030 = vadd.f32 %v2028, %v2029
        %v2031 = vrot.slane %v2030, 2
        %v2032 = vadd.f32 %v2030, %v2031
        %v2033 = vrot.slane %v2032, 1
        %v2034 = vadd.f32 %v2032, %v2033
        %v2035 = vadd.f32 %v2034, 0.0
        %v2036 = vld [vmem:[#allocation3 + $0x80] sm:$0xff]
        %v2037 = vld [vmem:[#allocation3 + $0x88] sm:$0xff]
        %v2038 = vld [vmem:[#allocation3 + $0x90] sm:$0xff]
        %v2039 = vld [vmem:[#allocation3 + $0x98] sm:$0xff]
        %v2040 = vld [vmem:[#allocation3 + $0xa0] sm:$0xff]
        %v2041 = vld [vmem:[#allocation3 + $0xa8] sm:$0xff]
        %v2042 = vld [vmem:[#allocation3 + $0xb0] sm:$0xff]
        %v2043 = vld [vmem:[#allocation3 + $0xb8] sm:$0xff]
        %v2044 = vld [vmem:[#allocation3 + $0xc0] sm:$0xff]
        %v2045 = vld [vmem:[#allocation3 + $0xc8] sm:$0xff]
        %v2046 = vld [vmem:[#allocation3 + $0xd0] sm:$0xff]
        %v2047 = vld [vmem:[#allocation3 + $0xd8] sm:$0xff]
        %v2048 = vld [vmem:[#allocation3 + $0xe0] sm:$0xff]
        %v2049 = vld [vmem:[#allocation3 + $0xe8] sm:$0xff]
        %v2050 = vld [vmem:[#allocation3 + $0xf0] sm:$0xff]
        %v2051 = vld [vmem:[#allocation3 + $0xf8] sm:$0xff]
        %v2052 = vld [vmem:[%s3 + $0x80] sm:$0xff]
        %v2053 = vld [vmem:[%s3 + $0x88] sm:$0xff]
        %v2054 = vld [vmem:[%s3 + $0x90] sm:$0xff]
        %v2055 = vld [vmem:[%s3 + $0x98] sm:$0xff]
        %v2056 = vld [vmem:[%s3 + $0xa0] sm:$0xff]
        %v2057 = vld [vmem:[%s3 + $0xa8] sm:$0xff]
        %v2058 = vld [vmem:[%s3 + $0xb0] sm:$0xff]
        %v2059 = vld [vmem:[%s3 + $0xb8] sm:$0xff]
        %v2060 = vld [vmem:[%s3 + $0xc0] sm:$0xff]
        %v2061 = vld [vmem:[%s3 + $0xc8] sm:$0xff]
        %v2062 = vld [vmem:[%s3 + $0xd0] sm:$0xff]
        %v2063 = vld [vmem:[%s3 + $0xd8] sm:$0xff]
        %v2064 = vld [vmem:[%s3 + $0xe0] sm:$0xff]
        %v2065 = vld [vmem:[%s3 + $0xe8] sm:$0xff]
        %v2066 = vld [vmem:[%s3 + $0xf0] sm:$0xff]
        %v2067 = vld [vmem:[%s3 + $0xf8] sm:$0xff]
        %v2068 = vmul.f32 %v2036, %v2052
        %v2069 = vmul.f32 %v2037, %v2053
        %v2070 = vmul.f32 %v2038, %v2054
        %v2071 = vmul.f32 %v2039, %v2055
        %v2072 = vmul.f32 %v2040, %v2056
        %v2073 = vmul.f32 %v2041, %v2057
        %v2074 = vmul.f32 %v2042, %v2058
        %v2075 = vmul.f32 %v2043, %v2059
        %v2076 = vmul.f32 %v2044, %v2060
        %v2077 = vmul.f32 %v2045, %v2061
        %v2078 = vmul.f32 %v2046, %v2062
        %v2079 = vmul.f32 %v2047, %v2063
        %v2080 = vmul.f32 %v2048, %v2064
        %v2081 = vmul.f32 %v2049, %v2065
        %v2082 = vmul.f32 %v2050, %v2066
        %v2083 = vmul.f32 %v2051, %v2067
        %v2084 = vsel %vm1358, %v2068, 0.0
        %v2085 = vsel %vm1358, %v2069, 0.0
        %v2086 = vadd.f32 %v2084, %v2085
        %v2087 = vsel %vm1358, %v2070, 0.0
        %v2088 = vadd.f32 %v2086, %v2087
        %v2089 = vsel %vm1358, %v2071, 0.0
        %v2090 = vadd.f32 %v2088, %v2089
        %v2091 = vsel %vm1358, %v2072, 0.0
        %v2092 = vadd.f32 %v2090, %v2091
        %v2093 = vsel %vm1358, %v2073, 0.0
        %v2094 = vadd.f32 %v2092, %v2093
        %v2095 = vsel %vm1358, %v2074, 0.0
        %v2096 = vadd.f32 %v2094, %v2095
        %v2097 = vsel %vm1358, %v2075, 0.0
        %v2098 = vadd.f32 %v2096, %v2097
        %v2099 = vsel %vm1358, %v2076, 0.0
        %v2100 = vadd.f32 %v2098, %v2099
        %v2101 = vsel %vm1358, %v2077, 0.0
        %v2102 = vadd.f32 %v2100, %v2101
        %v2103 = vsel %vm1358, %v2078, 0.0
        %v2104 = vadd.f32 %v2102, %v2103
        %v2105 = vsel %vm1358, %v2079, 0.0
        %v2106 = vadd.f32 %v2104, %v2105
        %v2107 = vsel %vm1358, %v2080, 0.0
        %v2108 = vadd.f32 %v2106, %v2107
        %v2109 = vsel %vm1358, %v2081, 0.0
        %v2110 = vadd.f32 %v2108, %v2109
        %v2111 = vsel %vm1358, %v2082, 0.0
        %v2112 = vadd.f32 %v2110, %v2111
        %v2113 = vsel %vm1358, %v2083, 0.0
        %v2114 = vadd.f32 %v2112, %v2113
        %v2115 = vrot.slane %v2114, 4
        %v2116 = vadd.f32 %v2114, %v2115
        %v2117 = vrot.slane %v2116, 2
        %v2118 = vadd.f32 %v2116, %v2117
        %v2119 = vrot.slane %v2118, 1
        %v2120 = vadd.f32 %v2118, %v2119
        %v2121 = vadd.f32 %v1396, %v2120
        %v2122 = vld [vmem:[%s1397 + $0x80] sm:$0xff]
        %v2123 = vld [vmem:[%s1397 + $0x88] sm:$0xff]
        %v2124 = vld [vmem:[%s1397 + $0x90] sm:$0xff]
        %v2125 = vld [vmem:[%s1397 + $0x98] sm:$0xff]
        %v2126 = vld [vmem:[%s1397 + $0xa0] sm:$0xff]
        %v2127 = vld [vmem:[%s1397 + $0xa8] sm:$0xff]
        %v2128 = vld [vmem:[%s1397 + $0xb0] sm:$0xff]
        %v2129 = vld [vmem:[%s1397 + $0xb8] sm:$0xff]
        %v2130 = vld [vmem:[%s1397 + $0xc0] sm:$0xff]
        %v2131 = vld [vmem:[%s1397 + $0xc8] sm:$0xff]
        %v2132 = vld [vmem:[%s1397 + $0xd0] sm:$0xff]
        %v2133 = vld [vmem:[%s1397 + $0xd8] sm:$0xff]
        %v2134 = vld [vmem:[%s1397 + $0xe0] sm:$0xff]
        %v2135 = vld [vmem:[%s1397 + $0xe8] sm:$0xff]
        %v2136 = vld [vmem:[%s1397 + $0xf0] sm:$0xff]
        %v2137 = vld [vmem:[%s1397 + $0xf8] sm:$0xff]
        %v2138 = vmul.f32 %v2036, %v2122
        %v2139 = vmul.f32 %v2037, %v2123
        %v2140 = vmul.f32 %v2038, %v2124
        %v2141 = vmul.f32 %v2039, %v2125
        %v2142 = vmul.f32 %v2040, %v2126
        %v2143 = vmul.f32 %v2041, %v2127
        %v2144 = vmul.f32 %v2042, %v2128
        %v2145 = vmul.f32 %v2043, %v2129
        %v2146 = vmul.f32 %v2044, %v2130
        %v2147 = vmul.f32 %v2045, %v2131
        %v2148 = vmul.f32 %v2046, %v2132
        %v2149 = vmul.f32 %v2047, %v2133
        %v2150 = vmul.f32 %v2048, %v2134
        %v2151 = vmul.f32 %v2049, %v2135
        %v2152 = vmul.f32 %v2050, %v2136
        %v2153 = vmul.f32 %v2051, %v2137
        %v2154 = vsel %vm1358, %v2138, 0.0
        %v2155 = vsel %vm1358, %v2139, 0.0
        %v2156 = vadd.f32 %v2154, %v2155
        %v2157 = vsel %vm1358, %v2140, 0.0
        %v2158 = vadd.f32 %v2156, %v2157
        %v2159 = vsel %vm1358, %v2141, 0.0
        %v2160 = vadd.f32 %v2158, %v2159
        %v2161 = vsel %vm1358, %v2142, 0.0
        %v2162 = vadd.f32 %v2160, %v2161
        %v2163 = vsel %vm1358, %v2143, 0.0
        %v2164 = vadd.f32 %v2162, %v2163
        %v2165 = vsel %vm1358, %v2144, 0.0
        %v2166 = vadd.f32 %v2164, %v2165
        %v2167 = vsel %vm1358, %v2145, 0.0
        %v2168 = vadd.f32 %v2166, %v2167
        %v2169 = vsel %vm1358, %v2146, 0.0
        %v2170 = vadd.f32 %v2168, %v2169
        %v2171 = vsel %vm1358, %v2147, 0.0
        %v2172 = vadd.f32 %v2170, %v2171
        %v2173 = vsel %vm1358, %v2148, 0.0
        %v2174 = vadd.f32 %v2172, %v2173
        %v2175 = vsel %vm1358, %v2149, 0.0
        %v2176 = vadd.f32 %v2174, %v2175
        %v2177 = vsel %vm1358, %v2150, 0.0
        %v2178 = vadd.f32 %v2176, %v2177
        %v2179 = vsel %vm1358, %v2151, 0.0
        %v2180 = vadd.f32 %v2178, %v2179
        %v2181 = vsel %vm1358, %v2152, 0.0
        %v2182 = vadd.f32 %v2180, %v2181
        %v2183 = vsel %vm1358, %v2153, 0.0
        %v2184 = vadd.f32 %v2182, %v2183
        %v2185 = vrot.slane %v2184, 4
        %v2186 = vadd.f32 %v2184, %v2185
        %v2187 = vrot.slane %v2186, 2
        %v2188 = vadd.f32 %v2186, %v2187
        %v2189 = vrot.slane %v2188, 1
        %v2190 = vadd.f32 %v2188, %v2189
        %v2191 = vadd.f32 %v1467, %v2190
        %v2192 = vld [vmem:[%s1468 + $0x80] sm:$0xff]
        %v2193 = vld [vmem:[%s1468 + $0x88] sm:$0xff]
        %v2194 = vld [vmem:[%s1468 + $0x90] sm:$0xff]
        %v2195 = vld [vmem:[%s1468 + $0x98] sm:$0xff]
        %v2196 = vld [vmem:[%s1468 + $0xa0] sm:$0xff]
        %v2197 = vld [vmem:[%s1468 + $0xa8] sm:$0xff]
        %v2198 = vld [vmem:[%s1468 + $0xb0] sm:$0xff]
        %v2199 = vld [vmem:[%s1468 + $0xb8] sm:$0xff]
        %v2200 = vld [vmem:[%s1468 + $0xc0] sm:$0xff]
        %v2201 = vld [vmem:[%s1468 + $0xc8] sm:$0xff]
        %v2202 = vld [vmem:[%s1468 + $0xd0] sm:$0xff]
        %v2203 = vld [vmem:[%s1468 + $0xd8] sm:$0xff]
        %v2204 = vld [vmem:[%s1468 + $0xe0] sm:$0xff]
        %v2205 = vld [vmem:[%s1468 + $0xe8] sm:$0xff]
        %v2206 = vld [vmem:[%s1468 + $0xf0] sm:$0xff]
        %v2207 = vld [vmem:[%s1468 + $0xf8] sm:$0xff]
        %v2208 = vmul.f32 %v2036, %v2192
        %v2209 = vmul.f32 %v2037, %v2193
        %v2210 = vmul.f32 %v2038, %v2194
        %v2211 = vmul.f32 %v2039, %v2195
        %v2212 = vmul.f32 %v2040, %v2196
        %v2213 = vmul.f32 %v2041, %v2197
        %v2214 = vmul.f32 %v2042, %v2198
        %v2215 = vmul.f32 %v2043, %v2199
        %v2216 = vmul.f32 %v2044, %v2200
        %v2217 = vmul.f32 %v2045, %v2201
        %v2218 = vmul.f32 %v2046, %v2202
        %v2219 = vmul.f32 %v2047, %v2203
        %v2220 = vmul.f32 %v2048, %v2204
        %v2221 = vmul.f32 %v2049, %v2205
        %v2222 = vmul.f32 %v2050, %v2206
        %v2223 = vmul.f32 %v2051, %v2207
        %v2224 = vsel %vm1358, %v2208, 0.0
        %v2225 = vsel %vm1358, %v2209, 0.0
        %v2226 = vadd.f32 %v2224, %v2225
        %v2227 = vsel %vm1358, %v2210, 0.0
        %v2228 = vadd.f32 %v2226, %v2227
        %v2229 = vsel %vm1358, %v2211, 0.0
        %v2230 = vadd.f32 %v2228, %v2229
        %v2231 = vsel %vm1358, %v2212, 0.0
        %v2232 = vadd.f32 %v2230, %v2231
        %v2233 = vsel %vm1358, %v2213, 0.0
        %v2234 = vadd.f32 %v2232, %v2233
        %v2235 = vsel %vm1358, %v2214, 0.0
        %v2236 = vadd.f32 %v2234, %v2235
        %v2237 = vsel %vm1358, %v2215, 0.0
        %v2238 = vadd.f32 %v2236, %v2237
        %v2239 = vsel %vm1358, %v2216, 0.0
        %v2240 = vadd.f32 %v2238, %v2239
        %v2241 = vsel %vm1358, %v2217, 0.0
        %v2242 = vadd.f32 %v2240, %v2241
        %v2243 = vsel %vm1358, %v2218, 0.0
        %v2244 = vadd.f32 %v2242, %v2243
        %v2245 = vsel %vm1358, %v2219, 0.0
        %v2246 = vadd.f32 %v2244, %v2245
        %v2247 = vsel %vm1358, %v2220, 0.0
        %v2248 = vadd.f32 %v2246, %v2247
        %v2249 = vsel %vm1358, %v2221, 0.0
        %v2250 = vadd.f32 %v2248, %v2249
        %v2251 = vsel %vm1358, %v2222, 0.0
        %v2252 = vadd.f32 %v2250, %v2251
        %v2253 = vsel %vm1358, %v2223, 0.0
        %v2254 = vadd.f32 %v2252, %v2253
        %v2255 = vrot.slane %v2254, 4
        %v2256 = vadd.f32 %v2254, %v2255
        %v2257 = vrot.slane %v2256, 2
        %v2258 = vadd.f32 %v2256, %v2257
        %v2259 = vrot.slane %v2258, 1
        %v2260 = vadd.f32 %v2258, %v2259
        %v2261 = vadd.f32 %v1538, %v2260
        %v2262 = vld [vmem:[%s1539 + $0x80] sm:$0xff]
        %v2263 = vld [vmem:[%s1539 + $0x88] sm:$0xff]
        %v2264 = vld [vmem:[%s1539 + $0x90] sm:$0xff]
        %v2265 = vld [vmem:[%s1539 + $0x98] sm:$0xff]
        %v2266 = vld [vmem:[%s1539 + $0xa0] sm:$0xff]
        %v2267 = vld [vmem:[%s1539 + $0xa8] sm:$0xff]
        %v2268 = vld [vmem:[%s1539 + $0xb0] sm:$0xff]
        %v2269 = vld [vmem:[%s1539 + $0xb8] sm:$0xff]
        %v2270 = vld [vmem:[%s1539 + $0xc0] sm:$0xff]
        %v2271 = vld [vmem:[%s1539 + $0xc8] sm:$0xff]
        %v2272 = vld [vmem:[%s1539 + $0xd0] sm:$0xff]
        %v2273 = vld [vmem:[%s1539 + $0xd8] sm:$0xff]
        %v2274 = vld [vmem:[%s1539 + $0xe0] sm:$0xff]
        %v2275 = vld [vmem:[%s1539 + $0xe8] sm:$0xff]
        %v2276 = vld [vmem:[%s1539 + $0xf0] sm:$0xff]
        %v2277 = vld [vmem:[%s1539 + $0xf8] sm:$0xff]
        %v2278 = vmul.f32 %v2036, %v2262
        %v2279 = vmul.f32 %v2037, %v2263
        %v2280 = vmul.f32 %v2038, %v2264
        %v2281 = vmul.f32 %v2039, %v2265
        %v2282 = vmul.f32 %v2040, %v2266
        %v2283 = vmul.f32 %v2041, %v2267
        %v2284 = vmul.f32 %v2042, %v2268
        %v2285 = vmul.f32 %v2043, %v2269
        %v2286 = vmul.f32 %v2044, %v2270
        %v2287 = vmul.f32 %v2045, %v2271
        %v2288 = vmul.f32 %v2046, %v2272
        %v2289 = vmul.f32 %v2047, %v2273
        %v2290 = vmul.f32 %v2048, %v2274
        %v2291 = vmul.f32 %v2049, %v2275
        %v2292 = vmul.f32 %v2050, %v2276
        %v2293 = vmul.f32 %v2051, %v2277
        %v2294 = vsel %vm1358, %v2278, 0.0
        %v2295 = vsel %vm1358, %v2279, 0.0
        %v2296 = vadd.f32 %v2294, %v2295
        %v2297 = vsel %vm1358, %v2280, 0.0
        %v2298 = vadd.f32 %v2296, %v2297
        %v2299 = vsel %vm1358, %v2281, 0.0
        %v2300 = vadd.f32 %v2298, %v2299
        %v2301 = vsel %vm1358, %v2282, 0.0
        %v2302 = vadd.f32 %v2300, %v2301
        %v2303 = vsel %vm1358, %v2283, 0.0
        %v2304 = vadd.f32 %v2302, %v2303
        %v2305 = vsel %vm1358, %v2284, 0.0
        %v2306 = vadd.f32 %v2304, %v2305
        %v2307 = vsel %vm1358, %v2285, 0.0
        %v2308 = vadd.f32 %v2306, %v2307
        %v2309 = vsel %vm1358, %v2286, 0.0
        %v2310 = vadd.f32 %v2308, %v2309
        %v2311 = vsel %vm1358, %v2287, 0.0
        %v2312 = vadd.f32 %v2310, %v2311
        %v2313 = vsel %vm1358, %v2288, 0.0
        %v2314 = vadd.f32 %v2312, %v2313
        %v2315 = vsel %vm1358, %v2289, 0.0
        %v2316 = vadd.f32 %v2314, %v2315
        %v2317 = vsel %vm1358, %v2290, 0.0
        %v2318 = vadd.f32 %v2316, %v2317
        %v2319 = vsel %vm1358, %v2291, 0.0
        %v2320 = vadd.f32 %v2318, %v2319
        %v2321 = vsel %vm1358, %v2292, 0.0
        %v2322 = vadd.f32 %v2320, %v2321
        %v2323 = vsel %vm1358, %v2293, 0.0
        %v2324 = vadd.f32 %v2322, %v2323
        %v2325 = vrot.slane %v2324, 4
        %v2326 = vadd.f32 %v2324, %v2325
        %v2327 = vrot.slane %v2326, 2
        %v2328 = vadd.f32 %v2326, %v2327
        %v2329 = vrot.slane %v2328, 1
        %v2330 = vadd.f32 %v2328, %v2329
        %v2331 = vadd.f32 %v1609, %v2330
        %v2332 = vld [vmem:[%s1610 + $0x80] sm:$0xff]
        %v2333 = vld [vmem:[%s1610 + $0x88] sm:$0xff]
        %v2334 = vld [vmem:[%s1610 + $0x90] sm:$0xff]
        %v2335 = vld [vmem:[%s1610 + $0x98] sm:$0xff]
        %v2336 = vld [vmem:[%s1610 + $0xa0] sm:$0xff]
        %v2337 = vld [vmem:[%s1610 + $0xa8] sm:$0xff]
        %v2338 = vld [vmem:[%s1610 + $0xb0] sm:$0xff]
        %v2339 = vld [vmem:[%s1610 + $0xb8] sm:$0xff]
        %v2340 = vld [vmem:[%s1610 + $0xc0] sm:$0xff]
        %v2341 = vld [vmem:[%s1610 + $0xc8] sm:$0xff]
        %v2342 = vld [vmem:[%s1610 + $0xd0] sm:$0xff]
        %v2343 = vld [vmem:[%s1610 + $0xd8] sm:$0xff]
        %v2344 = vld [vmem:[%s1610 + $0xe0] sm:$0xff]
        %v2345 = vld [vmem:[%s1610 + $0xe8] sm:$0xff]
        %v2346 = vld [vmem:[%s1610 + $0xf0] sm:$0xff]
        %v2347 = vld [vmem:[%s1610 + $0xf8] sm:$0xff]
        %v2348 = vmul.f32 %v2036, %v2332
        %v2349 = vmul.f32 %v2037, %v2333
        %v2350 = vmul.f32 %v2038, %v2334
        %v2351 = vmul.f32 %v2039, %v2335
        %v2352 = vmul.f32 %v2040, %v2336
        %v2353 = vmul.f32 %v2041, %v2337
        %v2354 = vmul.f32 %v2042, %v2338
        %v2355 = vmul.f32 %v2043, %v2339
        %v2356 = vmul.f32 %v2044, %v2340
        %v2357 = vmul.f32 %v2045, %v2341
        %v2358 = vmul.f32 %v2046, %v2342
        %v2359 = vmul.f32 %v2047, %v2343
        %v2360 = vmul.f32 %v2048, %v2344
        %v2361 = vmul.f32 %v2049, %v2345
        %v2362 = vmul.f32 %v2050, %v2346
        %v2363 = vmul.f32 %v2051, %v2347
        %v2364 = vsel %vm1358, %v2348, 0.0
        %v2365 = vsel %vm1358, %v2349, 0.0
        %v2366 = vadd.f32 %v2364, %v2365
        %v2367 = vsel %vm1358, %v2350, 0.0
        %v2368 = vadd.f32 %v2366, %v2367
        %v2369 = vsel %vm1358, %v2351, 0.0
        %v2370 = vadd.f32 %v2368, %v2369
        %v2371 = vsel %vm1358, %v2352, 0.0
        %v2372 = vadd.f32 %v2370, %v2371
        %v2373 = vsel %vm1358, %v2353, 0.0
        %v2374 = vadd.f32 %v2372, %v2373
        %v2375 = vsel %vm1358, %v2354, 0.0
        %v2376 = vadd.f32 %v2374, %v2375
        %v2377 = vsel %vm1358, %v2355, 0.0
        %v2378 = vadd.f32 %v2376, %v2377
        %v2379 = vsel %vm1358, %v2356, 0.0
        %v2380 = vadd.f32 %v2378, %v2379
        %v2381 = vsel %vm1358, %v2357, 0.0
        %v2382 = vadd.f32 %v2380, %v2381
        %v2383 = vsel %vm1358, %v2358, 0.0
        %v2384 = vadd.f32 %v2382, %v2383
        %v2385 = vsel %vm1358, %v2359, 0.0
        %v2386 = vadd.f32 %v2384, %v2385
        %v2387 = vsel %vm1358, %v2360, 0.0
        %v2388 = vadd.f32 %v2386, %v2387
        %v2389 = vsel %vm1358, %v2361, 0.0
        %v2390 = vadd.f32 %v2388, %v2389
        %v2391 = vsel %vm1358, %v2362, 0.0
        %v2392 = vadd.f32 %v2390, %v2391
        %v2393 = vsel %vm1358, %v2363, 0.0
        %v2394 = vadd.f32 %v2392, %v2393
        %v2395 = vrot.slane %v2394, 4
        %v2396 = vadd.f32 %v2394, %v2395
        %v2397 = vrot.slane %v2396, 2
        %v2398 = vadd.f32 %v2396, %v2397
        %v2399 = vrot.slane %v2398, 1
        %v2400 = vadd.f32 %v2398, %v2399
        %v2401 = vadd.f32 %v1680, %v2400
        %v2402 = vld [vmem:[%s1681 + $0x80] sm:$0xff]
        %v2403 = vld [vmem:[%s1681 + $0x88] sm:$0xff]
        %v2404 = vld [vmem:[%s1681 + $0x90] sm:$0xff]
        %v2405 = vld [vmem:[%s1681 + $0x98] sm:$0xff]
        %v2406 = vld [vmem:[%s1681 + $0xa0] sm:$0xff]
        %v2407 = vld [vmem:[%s1681 + $0xa8] sm:$0xff]
        %v2408 = vld [vmem:[%s1681 + $0xb0] sm:$0xff]
        %v2409 = vld [vmem:[%s1681 + $0xb8] sm:$0xff]
        %v2410 = vld [vmem:[%s1681 + $0xc0] sm:$0xff]
        %v2411 = vld [vmem:[%s1681 + $0xc8] sm:$0xff]
        %v2412 = vld [vmem:[%s1681 + $0xd0] sm:$0xff]
        %v2413 = vld [vmem:[%s1681 + $0xd8] sm:$0xff]
        %v2414 = vld [vmem:[%s1681 + $0xe0] sm:$0xff]
        %v2415 = vld [vmem:[%s1681 + $0xe8] sm:$0xff]
        %v2416 = vld [vmem:[%s1681 + $0xf0] sm:$0xff]
        %v2417 = vld [vmem:[%s1681 + $0xf8] sm:$0xff]
        %v2418 = vmul.f32 %v2036, %v2402
        %v2419 = vmul.f32 %v2037, %v2403
        %v2420 = vmul.f32 %v2038, %v2404
        %v2421 = vmul.f32 %v2039, %v2405
        %v2422 = vmul.f32 %v2040, %v2406
        %v2423 = vmul.f32 %v2041, %v2407
        %v2424 = vmul.f32 %v2042, %v2408
        %v2425 = vmul.f32 %v2043, %v2409
        %v2426 = vmul.f32 %v2044, %v2410
        %v2427 = vmul.f32 %v2045, %v2411
        %v2428 = vmul.f32 %v2046, %v2412
        %v2429 = vmul.f32 %v2047, %v2413
        %v2430 = vmul.f32 %v2048, %v2414
        %v2431 = vmul.f32 %v2049, %v2415
        %v2432 = vmul.f32 %v2050, %v2416
        %v2433 = vmul.f32 %v2051, %v2417
        %v2434 = vsel %vm1358, %v2418, 0.0
        %v2435 = vsel %vm1358, %v2419, 0.0
        %v2436 = vadd.f32 %v2434, %v2435
        %v2437 = vsel %vm1358, %v2420, 0.0
        %v2438 = vadd.f32 %v2436, %v2437
        %v2439 = vsel %vm1358, %v2421, 0.0
        %v2440 = vadd.f32 %v2438, %v2439
        %v2441 = vsel %vm1358, %v2422, 0.0
        %v2442 = vadd.f32 %v2440, %v2441
        %v2443 = vsel %vm1358, %v2423, 0.0
        %v2444 = vadd.f32 %v2442, %v2443
        %v2445 = vsel %vm1358, %v2424, 0.0
        %v2446 = vadd.f32 %v2444, %v2445
        %v2447 = vsel %vm1358, %v2425, 0.0
        %v2448 = vadd.f32 %v2446, %v2447
        %v2449 = vsel %vm1358, %v2426, 0.0
        %v2450 = vadd.f32 %v2448, %v2449
        %v2451 = vsel %vm1358, %v2427, 0.0
        %v2452 = vadd.f32 %v2450, %v2451
        %v2453 = vsel %vm1358, %v2428, 0.0
        %v2454 = vadd.f32 %v2452, %v2453
        %v2455 = vsel %vm1358, %v2429, 0.0
        %v2456 = vadd.f32 %v2454, %v2455
        %v2457 = vsel %vm1358, %v2430, 0.0
        %v2458 = vadd.f32 %v2456, %v2457
        %v2459 = vsel %vm1358, %v2431, 0.0
        %v2460 = vadd.f32 %v2458, %v2459
        %v2461 = vsel %vm1358, %v2432, 0.0
        %v2462 = vadd.f32 %v2460, %v2461
        %v2463 = vsel %vm1358, %v2433, 0.0
        %v2464 = vadd.f32 %v2462, %v2463
        %v2465 = vrot.slane %v2464, 4
        %v2466 = vadd.f32 %v2464, %v2465
        %v2467 = vrot.slane %v2466, 2
        %v2468 = vadd.f32 %v2466, %v2467
        %v2469 = vrot.slane %v2468, 1
        %v2470 = vadd.f32 %v2468, %v2469
        %v2471 = vadd.f32 %v1751, %v2470
        %v2472 = vld [vmem:[%s1752 + $0x80] sm:$0xff]
        %v2473 = vld [vmem:[%s1752 + $0x88] sm:$0xff]
        %v2474 = vld [vmem:[%s1752 + $0x90] sm:$0xff]
        %v2475 = vld [vmem:[%s1752 + $0x98] sm:$0xff]
        %v2476 = vld [vmem:[%s1752 + $0xa0] sm:$0xff]
        %v2477 = vld [vmem:[%s1752 + $0xa8] sm:$0xff]
        %v2478 = vld [vmem:[%s1752 + $0xb0] sm:$0xff]
        %v2479 = vld [vmem:[%s1752 + $0xb8] sm:$0xff]
        %v2480 = vld [vmem:[%s1752 + $0xc0] sm:$0xff]
        %v2481 = vld [vmem:[%s1752 + $0xc8] sm:$0xff]
        %v2482 = vld [vmem:[%s1752 + $0xd0] sm:$0xff]
        %v2483 = vld [vmem:[%s1752 + $0xd8] sm:$0xff]
        %v2484 = vld [vmem:[%s1752 + $0xe0] sm:$0xff]
        %v2485 = vld [vmem:[%s1752 + $0xe8] sm:$0xff]
        %v2486 = vld [vmem:[%s1752 + $0xf0] sm:$0xff]
        %v2487 = vld [vmem:[%s1752 + $0xf8] sm:$0xff]
        %v2488 = vmul.f32 %v2036, %v2472
        %v2489 = vmul.f32 %v2037, %v2473
        %v2490 = vmul.f32 %v2038, %v2474
        %v2491 = vmul.f32 %v2039, %v2475
        %v2492 = vmul.f32 %v2040, %v2476
        %v2493 = vmul.f32 %v2041, %v2477
        %v2494 = vmul.f32 %v2042, %v2478
        %v2495 = vmul.f32 %v2043, %v2479
        %v2496 = vmul.f32 %v2044, %v2480
        %v2497 = vmul.f32 %v2045, %v2481
        %v2498 = vmul.f32 %v2046, %v2482
        %v2499 = vmul.f32 %v2047, %v2483
        %v2500 = vmul.f32 %v2048, %v2484
        %v2501 = vmul.f32 %v2049, %v2485
        %v2502 = vmul.f32 %v2050, %v2486
        %v2503 = vmul.f32 %v2051, %v2487
        %v2504 = vsel %vm1358, %v2488, 0.0
        %v2505 = vsel %vm1358, %v2489, 0.0
        %v2506 = vadd.f32 %v2504, %v2505
        %v2507 = vsel %vm1358, %v2490, 0.0
        %v2508 = vadd.f32 %v2506, %v2507
        %v2509 = vsel %vm1358, %v2491, 0.0
        %v2510 = vadd.f32 %v2508, %v2509
        %v2511 = vsel %vm1358, %v2492, 0.0
        %v2512 = vadd.f32 %v2510, %v2511
        %v2513 = vsel %vm1358, %v2493, 0.0
        %v2514 = vadd.f32 %v2512, %v2513
        %v2515 = vsel %vm1358, %v2494, 0.0
        %v2516 = vadd.f32 %v2514, %v2515
        %v2517 = vsel %vm1358, %v2495, 0.0
        %v2518 = vadd.f32 %v2516, %v2517
        %v2519 = vsel %vm1358, %v2496, 0.0
        %v2520 = vadd.f32 %v2518, %v2519
        %v2521 = vsel %vm1358, %v2497, 0.0
        %v2522 = vadd.f32 %v2520, %v2521
        %v2523 = vsel %vm1358, %v2498, 0.0
        %v2524 = vadd.f32 %v2522, %v2523
        %v2525 = vsel %vm1358, %v2499, 0.0
        %v2526 = vadd.f32 %v2524, %v2525
        %v2527 = vsel %vm1358, %v2500, 0.0
        %v2528 = vadd.f32 %v2526, %v2527
        %v2529 = vsel %vm1358, %v2501, 0.0
        %v2530 = vadd.f32 %v2528, %v2529
        %v2531 = vsel %vm1358, %v2502, 0.0
        %v2532 = vadd.f32 %v2530, %v2531
        %v2533 = vsel %vm1358, %v2503, 0.0
        %v2534 = vadd.f32 %v2532, %v2533
        %v2535 = vrot.slane %v2534, 4
        %v2536 = vadd.f32 %v2534, %v2535
        %v2537 = vrot.slane %v2536, 2
        %v2538 = vadd.f32 %v2536, %v2537
        %v2539 = vrot.slane %v2538, 1
        %v2540 = vadd.f32 %v2538, %v2539
        %v2541 = vadd.f32 %v1822, %v2540
        %v2542 = vld [vmem:[%s1823 + $0x80] sm:$0xff]
        %v2543 = vld [vmem:[%s1823 + $0x88] sm:$0xff]
        %v2544 = vld [vmem:[%s1823 + $0x90] sm:$0xff]
        %v2545 = vld [vmem:[%s1823 + $0x98] sm:$0xff]
        %v2546 = vld [vmem:[%s1823 + $0xa0] sm:$0xff]
        %v2547 = vld [vmem:[%s1823 + $0xa8] sm:$0xff]
        %v2548 = vld [vmem:[%s1823 + $0xb0] sm:$0xff]
        %v2549 = vld [vmem:[%s1823 + $0xb8] sm:$0xff]
        %v2550 = vld [vmem:[%s1823 + $0xc0] sm:$0xff]
        %v2551 = vld [vmem:[%s1823 + $0xc8] sm:$0xff]
        %v2552 = vld [vmem:[%s1823 + $0xd0] sm:$0xff]
        %v2553 = vld [vmem:[%s1823 + $0xd8] sm:$0xff]
        %v2554 = vld [vmem:[%s1823 + $0xe0] sm:$0xff]
        %v2555 = vld [vmem:[%s1823 + $0xe8] sm:$0xff]
        %v2556 = vld [vmem:[%s1823 + $0xf0] sm:$0xff]
        %v2557 = vld [vmem:[%s1823 + $0xf8] sm:$0xff]
        %v2558 = vmul.f32 %v2036, %v2542
        %v2559 = vmul.f32 %v2037, %v2543
        %v2560 = vmul.f32 %v2038, %v2544
        %v2561 = vmul.f32 %v2039, %v2545
        %v2562 = vmul.f32 %v2040, %v2546
        %v2563 = vmul.f32 %v2041, %v2547
        %v2564 = vmul.f32 %v2042, %v2548
        %v2565 = vmul.f32 %v2043, %v2549
        %v2566 = vmul.f32 %v2044, %v2550
        %v2567 = vmul.f32 %v2045, %v2551
        %v2568 = vmul.f32 %v2046, %v2552
        %v2569 = vmul.f32 %v2047, %v2553
        %v2570 = vmul.f32 %v2048, %v2554
        %v2571 = vmul.f32 %v2049, %v2555
        %v2572 = vmul.f32 %v2050, %v2556
        %v2573 = vmul.f32 %v2051, %v2557
        %v2574 = vsel %vm1358, %v2558, 0.0
        %v2575 = vsel %vm1358, %v2559, 0.0
        %v2576 = vadd.f32 %v2574, %v2575
        %v2577 = vsel %vm1358, %v2560, 0.0
        %v2578 = vadd.f32 %v2576, %v2577
        %v2579 = vsel %vm1358, %v2561, 0.0
        %v2580 = vadd.f32 %v2578, %v2579
        %v2581 = vsel %vm1358, %v2562, 0.0
        %v2582 = vadd.f32 %v2580, %v2581
        %v2583 = vsel %vm1358, %v2563, 0.0
        %v2584 = vadd.f32 %v2582, %v2583
        %v2585 = vsel %vm1358, %v2564, 0.0
        %v2586 = vadd.f32 %v2584, %v2585
        %v2587 = vsel %vm1358, %v2565, 0.0
        %v2588 = vadd.f32 %v2586, %v2587
        %v2589 = vsel %vm1358, %v2566, 0.0
        %v2590 = vadd.f32 %v2588, %v2589
        %v2591 = vsel %vm1358, %v2567, 0.0
        %v2592 = vadd.f32 %v2590, %v2591
        %v2593 = vsel %vm1358, %v2568, 0.0
        %v2594 = vadd.f32 %v2592, %v2593
        %v2595 = vsel %vm1358, %v2569, 0.0
        %v2596 = vadd.f32 %v2594, %v2595
        %v2597 = vsel %vm1358, %v2570, 0.0
        %v2598 = vadd.f32 %v2596, %v2597
        %v2599 = vsel %vm1358, %v2571, 0.0
        %v2600 = vadd.f32 %v2598, %v2599
        %v2601 = vsel %vm1358, %v2572, 0.0
        %v2602 = vadd.f32 %v2600, %v2601
        %v2603 = vsel %vm1358, %v2573, 0.0
        %v2604 = vadd.f32 %v2602, %v2603
        %v2605 = vrot.slane %v2604, 4
        %v2606 = vadd.f32 %v2604, %v2605
        %v2607 = vrot.slane %v2606, 2
        %v2608 = vadd.f32 %v2606, %v2607
        %v2609 = vrot.slane %v2608, 1
        %v2610 = vadd.f32 %v2608, %v2609
        %v2611 = vadd.f32 %v1893, %v2610
        %v2612 = vld [vmem:[%s1894 + $0x80] sm:$0xff]
        %v2613 = vld [vmem:[%s1894 + $0x88] sm:$0xff]
        %v2614 = vld [vmem:[%s1894 + $0x90] sm:$0xff]
        %v2615 = vld [vmem:[%s1894 + $0x98] sm:$0xff]
        %v2616 = vld [vmem:[%s1894 + $0xa0] sm:$0xff]
        %v2617 = vld [vmem:[%s1894 + $0xa8] sm:$0xff]
        %v2618 = vld [vmem:[%s1894 + $0xb0] sm:$0xff]
        %v2619 = vld [vmem:[%s1894 + $0xb8] sm:$0xff]
        %v2620 = vld [vmem:[%s1894 + $0xc0] sm:$0xff]
        %v2621 = vld [vmem:[%s1894 + $0xc8] sm:$0xff]
        %v2622 = vld [vmem:[%s1894 + $0xd0] sm:$0xff]
        %v2623 = vld [vmem:[%s1894 + $0xd8] sm:$0xff]
        %v2624 = vld [vmem:[%s1894 + $0xe0] sm:$0xff]
        %v2625 = vld [vmem:[%s1894 + $0xe8] sm:$0xff]
        %v2626 = vld [vmem:[%s1894 + $0xf0] sm:$0xff]
        %v2627 = vld [vmem:[%s1894 + $0xf8] sm:$0xff]
        %v2628 = vmul.f32 %v2036, %v2612
        %v2629 = vmul.f32 %v2037, %v2613
        %v2630 = vmul.f32 %v2038, %v2614
        %v2631 = vmul.f32 %v2039, %v2615
        %v2632 = vmul.f32 %v2040, %v2616
        %v2633 = vmul.f32 %v2041, %v2617
        %v2634 = vmul.f32 %v2042, %v2618
        %v2635 = vmul.f32 %v2043, %v2619
        %v2636 = vmul.f32 %v2044, %v2620
        %v2637 = vmul.f32 %v2045, %v2621
        %v2638 = vmul.f32 %v2046, %v2622
        %v2639 = vmul.f32 %v2047, %v2623
        %v2640 = vmul.f32 %v2048, %v2624
        %v2641 = vmul.f32 %v2049, %v2625
        %v2642 = vmul.f32 %v2050, %v2626
        %v2643 = vmul.f32 %v2051, %v2627
        %v2644 = vsel %vm1358, %v2628, 0.0
        %v2645 = vsel %vm1358, %v2629, 0.0
        %v2646 = vadd.f32 %v2644, %v2645
        %v2647 = vsel %vm1358, %v2630, 0.0
        %v2648 = vadd.f32 %v2646, %v2647
        %v2649 = vsel %vm1358, %v2631, 0.0
        %v2650 = vadd.f32 %v2648, %v2649
        %v2651 = vsel %vm1358, %v2632, 0.0
        %v2652 = vadd.f32 %v2650, %v2651
        %v2653 = vsel %vm1358, %v2633, 0.0
        %v2654 = vadd.f32 %v2652, %v2653
        %v2655 = vsel %vm1358, %v2634, 0.0
        %v2656 = vadd.f32 %v2654, %v2655
        %v2657 = vsel %vm1358, %v2635, 0.0
        %v2658 = vadd.f32 %v2656, %v2657
        %v2659 = vsel %vm1358, %v2636, 0.0
        %v2660 = vadd.f32 %v2658, %v2659
        %v2661 = vsel %vm1358, %v2637, 0.0
        %v2662 = vadd.f32 %v2660, %v2661
        %v2663 = vsel %vm1358, %v2638, 0.0
        %v2664 = vadd.f32 %v2662, %v2663
        %v2665 = vsel %vm1358, %v2639, 0.0
        %v2666 = vadd.f32 %v2664, %v2665
        %v2667 = vsel %vm1358, %v2640, 0.0
        %v2668 = vadd.f32 %v2666, %v2667
        %v2669 = vsel %vm1358, %v2641, 0.0
        %v2670 = vadd.f32 %v2668, %v2669
        %v2671 = vsel %vm1358, %v2642, 0.0
        %v2672 = vadd.f32 %v2670, %v2671
        %v2673 = vsel %vm1358, %v2643, 0.0
        %v2674 = vadd.f32 %v2672, %v2673
        %v2675 = vrot.slane %v2674, 4
        %v2676 = vadd.f32 %v2674, %v2675
        %v2677 = vrot.slane %v2676, 2
        %v2678 = vadd.f32 %v2676, %v2677
        %v2679 = vrot.slane %v2678, 1
        %v2680 = vadd.f32 %v2678, %v2679
        %v2681 = vadd.f32 %v1964, %v2680
        %v2682 = vld [vmem:[%s1965 + $0x80] sm:$0xff]
        %v2683 = vld [vmem:[%s1965 + $0x88] sm:$0xff]
        %v2684 = vld [vmem:[%s1965 + $0x90] sm:$0xff]
        %v2685 = vld [vmem:[%s1965 + $0x98] sm:$0xff]
        %v2686 = vld [vmem:[%s1965 + $0xa0] sm:$0xff]
        %v2687 = vld [vmem:[%s1965 + $0xa8] sm:$0xff]
        %v2688 = vld [vmem:[%s1965 + $0xb0] sm:$0xff]
        %v2689 = vld [vmem:[%s1965 + $0xb8] sm:$0xff]
        %v2690 = vld [vmem:[%s1965 + $0xc0] sm:$0xff]
        %v2691 = vld [vmem:[%s1965 + $0xc8] sm:$0xff]
        %v2692 = vld [vmem:[%s1965 + $0xd0] sm:$0xff]
        %v2693 = vld [vmem:[%s1965 + $0xd8] sm:$0xff]
        %v2694 = vld [vmem:[%s1965 + $0xe0] sm:$0xff]
        %v2695 = vld [vmem:[%s1965 + $0xe8] sm:$0xff]
        %v2696 = vld [vmem:[%s1965 + $0xf0] sm:$0xff]
        %v2697 = vld [vmem:[%s1965 + $0xf8] sm:$0xff]
        %v2698 = vmul.f32 %v2036, %v2682
        %v2699 = vmul.f32 %v2037, %v2683
        %v2700 = vmul.f32 %v2038, %v2684
        %v2701 = vmul.f32 %v2039, %v2685
        %v2702 = vmul.f32 %v2040, %v2686
        %v2703 = vmul.f32 %v2041, %v2687
        %v2704 = vmul.f32 %v2042, %v2688
        %v2705 = vmul.f32 %v2043, %v2689
        %v2706 = vmul.f32 %v2044, %v2690
        %v2707 = vmul.f32 %v2045, %v2691
        %v2708 = vmul.f32 %v2046, %v2692
        %v2709 = vmul.f32 %v2047, %v2693
        %v2710 = vmul.f32 %v2048, %v2694
        %v2711 = vmul.f32 %v2049, %v2695
        %v2712 = vmul.f32 %v2050, %v2696
        %v2713 = vmul.f32 %v2051, %v2697
        %v2714 = vsel %vm1358, %v2698, 0.0
        %v2715 = vsel %vm1358, %v2699, 0.0
        %v2716 = vadd.f32 %v2714, %v2715
        %v2717 = vsel %vm1358, %v2700, 0.0
        %v2718 = vadd.f32 %v2716, %v2717
        %v2719 = vsel %vm1358, %v2701, 0.0
        %v2720 = vadd.f32 %v2718, %v2719
        %v2721 = vsel %vm1358, %v2702, 0.0
        %v2722 = vadd.f32 %v2720, %v2721
        %v2723 = vsel %vm1358, %v2703, 0.0
        %v2724 = vadd.f32 %v2722, %v2723
        %v2725 = vsel %vm1358, %v2704, 0.0
        %v2726 = vadd.f32 %v2724, %v2725
        %v2727 = vsel %vm1358, %v2705, 0.0
        %v2728 = vadd.f32 %v2726, %v2727
        %v2729 = vsel %vm1358, %v2706, 0.0
        %v2730 = vadd.f32 %v2728, %v2729
        %v2731 = vsel %vm1358, %v2707, 0.0
        %v2732 = vadd.f32 %v2730, %v2731
        %v2733 = vsel %vm1358, %v2708, 0.0
        %v2734 = vadd.f32 %v2732, %v2733
        %v2735 = vsel %vm1358, %v2709, 0.0
        %v2736 = vadd.f32 %v2734, %v2735
        %v2737 = vsel %vm1358, %v2710, 0.0
        %v2738 = vadd.f32 %v2736, %v2737
        %v2739 = vsel %vm1358, %v2711, 0.0
        %v2740 = vadd.f32 %v2738, %v2739
        %v2741 = vsel %vm1358, %v2712, 0.0
        %v2742 = vadd.f32 %v2740, %v2741
        %v2743 = vsel %vm1358, %v2713, 0.0
        %v2744 = vadd.f32 %v2742, %v2743
        %v2745 = vrot.slane %v2744, 4
        %v2746 = vadd.f32 %v2744, %v2745
        %v2747 = vrot.slane %v2746, 2
        %v2748 = vadd.f32 %v2746, %v2747
        %v2749 = vrot.slane %v2748, 1
        %v2750 = vadd.f32 %v2748, %v2749
        %v2751 = vadd.f32 %v2035, %v2750
        %v2752 = vld [vmem:[#allocation3 + $0x100] sm:$0xff]
        %v2753 = vld [vmem:[#allocation3 + $0x108] sm:$0xff]
        %v2754 = vld [vmem:[#allocation3 + $0x110] sm:$0xff]
        %v2755 = vld [vmem:[#allocation3 + $0x118] sm:$0xff]
        %v2756 = vld [vmem:[#allocation3 + $0x120] sm:$0xff]
        %v2757 = vld [vmem:[#allocation3 + $0x128] sm:$0xff]
        %v2758 = vld [vmem:[#allocation3 + $0x130] sm:$0xff]
        %v2759 = vld [vmem:[#allocation3 + $0x138] sm:$0xff]
        %v2760 = vld [vmem:[#allocation3 + $0x140] sm:$0xff]
        %v2761 = vld [vmem:[#allocation3 + $0x148] sm:$0xff]
        %v2762 = vld [vmem:[#allocation3 + $0x150] sm:$0xff]
        %v2763 = vld [vmem:[#allocation3 + $0x158] sm:$0xff]
        %v2764 = vld [vmem:[#allocation3 + $0x160] sm:$0xff]
        %v2765 = vld [vmem:[#allocation3 + $0x168] sm:$0xff]
        %v2766 = vld [vmem:[#allocation3 + $0x170] sm:$0xff]
        %v2767 = vld [vmem:[#allocation3 + $0x178] sm:$0xff]
        %v2768 = vld [vmem:[%s3 + $0x100] sm:$0xff]
        %v2769 = vld [vmem:[%s3 + $0x108] sm:$0xff]
        %v2770 = vld [vmem:[%s3 + $0x110] sm:$0xff]
        %v2771 = vld [vmem:[%s3 + $0x118] sm:$0xff]
        %v2772 = vld [vmem:[%s3 + $0x120] sm:$0xff]
        %v2773 = vld [vmem:[%s3 + $0x128] sm:$0xff]
        %v2774 = vld [vmem:[%s3 + $0x130] sm:$0xff]
        %v2775 = vld [vmem:[%s3 + $0x138] sm:$0xff]
        %v2776 = vld [vmem:[%s3 + $0x140] sm:$0xff]
        %v2777 = vld [vmem:[%s3 + $0x148] sm:$0xff]
        %v2778 = vld [vmem:[%s3 + $0x150] sm:$0xff]
        %v2779 = vld [vmem:[%s3 + $0x158] sm:$0xff]
        %v2780 = vld [vmem:[%s3 + $0x160] sm:$0xff]
        %v2781 = vld [vmem:[%s3 + $0x168] sm:$0xff]
        %v2782 = vld [vmem:[%s3 + $0x170] sm:$0xff]
        %v2783 = vld [vmem:[%s3 + $0x178] sm:$0xff]
        %v2784 = vmul.f32 %v2752, %v2768
        %v2785 = vmul.f32 %v2753, %v2769
        %v2786 = vmul.f32 %v2754, %v2770
        %v2787 = vmul.f32 %v2755, %v2771
        %v2788 = vmul.f32 %v2756, %v2772
        %v2789 = vmul.f32 %v2757, %v2773
        %v2790 = vmul.f32 %v2758, %v2774
        %v2791 = vmul.f32 %v2759, %v2775
        %v2792 = vmul.f32 %v2760, %v2776
        %v2793 = vmul.f32 %v2761, %v2777
        %v2794 = vmul.f32 %v2762, %v2778
        %v2795 = vmul.f32 %v2763, %v2779
        %v2796 = vmul.f32 %v2764, %v2780
        %v2797 = vmul.f32 %v2765, %v2781
        %v2798 = vmul.f32 %v2766, %v2782
        %v2799 = vmul.f32 %v2767, %v2783
        %v2800 = vsel %vm1358, %v2784, 0.0
        %v2801 = vsel %vm1358, %v2785, 0.0
        %v2802 = vadd.f32 %v2800, %v2801
        %v2803 = vsel %vm1358, %v2786, 0.0
        %v2804 = vadd.f32 %v2802, %v2803
        %v2805 = vsel %vm1358, %v2787, 0.0
        %v2806 = vadd.f32 %v2804, %v2805
        %v2807 = vsel %vm1358, %v2788, 0.0
        %v2808 = vadd.f32 %v2806, %v2807
        %v2809 = vsel %vm1358, %v2789, 0.0
        %v2810 = vadd.f32 %v2808, %v2809
        %v2811 = vsel %vm1358, %v2790, 0.0
        %v2812 = vadd.f32 %v2810, %v2811
        %v2813 = vsel %vm1358, %v2791, 0.0
        %v2814 = vadd.f32 %v2812, %v2813
        %v2815 = vsel %vm1358, %v2792, 0.0
        %v2816 = vadd.f32 %v2814, %v2815
        %v2817 = vsel %vm1358, %v2793, 0.0
        %v2818 = vadd.f32 %v2816, %v2817
        %v2819 = vsel %vm1358, %v2794, 0.0
        %v2820 = vadd.f32 %v2818, %v2819
        %v2821 = vsel %vm1358, %v2795, 0.0
        %v2822 = vadd.f32 %v2820, %v2821
        %v2823 = vsel %vm1358, %v2796, 0.0
        %v2824 = vadd.f32 %v2822, %v2823
        %v2825 = vsel %vm1358, %v2797, 0.0
        %v2826 = vadd.f32 %v2824, %v2825
        %v2827 = vsel %vm1358, %v2798, 0.0
        %v2828 = vadd.f32 %v2826, %v2827
        %v2829 = vsel %vm1358, %v2799, 0.0
        %v2830 = vadd.f32 %v2828, %v2829
        %v2831 = vrot.slane %v2830, 4
        %v2832 = vadd.f32 %v2830, %v2831
        %v2833 = vrot.slane %v2832, 2
        %v2834 = vadd.f32 %v2832, %v2833
        %v2835 = vrot.slane %v2834, 1
        %v2836 = vadd.f32 %v2834, %v2835
        %v2837 = vadd.f32 %v2121, %v2836
        %v2838 = vld [vmem:[%s1397 + $0x100] sm:$0xff]
        %v2839 = vld [vmem:[%s1397 + $0x108] sm:$0xff]
        %v2840 = vld [vmem:[%s1397 + $0x110] sm:$0xff]
        %v2841 = vld [vmem:[%s1397 + $0x118] sm:$0xff]
        %v2842 = vld [vmem:[%s1397 + $0x120] sm:$0xff]
        %v2843 = vld [vmem:[%s1397 + $0x128] sm:$0xff]
        %v2844 = vld [vmem:[%s1397 + $0x130] sm:$0xff]
        %v2845 = vld [vmem:[%s1397 + $0x138] sm:$0xff]
        %v2846 = vld [vmem:[%s1397 + $0x140] sm:$0xff]
        %v2847 = vld [vmem:[%s1397 + $0x148] sm:$0xff]
        %v2848 = vld [vmem:[%s1397 + $0x150] sm:$0xff]
        %v2849 = vld [vmem:[%s1397 + $0x158] sm:$0xff]
        %v2850 = vld [vmem:[%s1397 + $0x160] sm:$0xff]
        %v2851 = vld [vmem:[%s1397 + $0x168] sm:$0xff]
        %v2852 = vld [vmem:[%s1397 + $0x170] sm:$0xff]
        %v2853 = vld [vmem:[%s1397 + $0x178] sm:$0xff]
        %v2854 = vmul.f32 %v2752, %v2838
        %v2855 = vmul.f32 %v2753, %v2839
        %v2856 = vmul.f32 %v2754, %v2840
        %v2857 = vmul.f32 %v2755, %v2841
        %v2858 = vmul.f32 %v2756, %v2842
        %v2859 = vmul.f32 %v2757, %v2843
        %v2860 = vmul.f32 %v2758, %v2844
        %v2861 = vmul.f32 %v2759, %v2845
        %v2862 = vmul.f32 %v2760, %v2846
        %v2863 = vmul.f32 %v2761, %v2847
        %v2864 = vmul.f32 %v2762, %v2848
        %v2865 = vmul.f32 %v2763, %v2849
        %v2866 = vmul.f32 %v2764, %v2850
        %v2867 = vmul.f32 %v2765, %v2851
        %v2868 = vmul.f32 %v2766, %v2852
        %v2869 = vmul.f32 %v2767, %v2853
        %v2870 = vsel %vm1358, %v2854, 0.0
        %v2871 = vsel %vm1358, %v2855, 0.0
        %v2872 = vadd.f32 %v2870, %v2871
        %v2873 = vsel %vm1358, %v2856, 0.0
        %v2874 = vadd.f32 %v2872, %v2873
        %v2875 = vsel %vm1358, %v2857, 0.0
        %v2876 = vadd.f32 %v2874, %v2875
        %v2877 = vsel %vm1358, %v2858, 0.0
        %v2878 = vadd.f32 %v2876, %v2877
        %v2879 = vsel %vm1358, %v2859, 0.0
        %v2880 = vadd.f32 %v2878, %v2879
        %v2881 = vsel %vm1358, %v2860, 0.0
        %v2882 = vadd.f32 %v2880, %v2881
        %v2883 = vsel %vm1358, %v2861, 0.0
        %v2884 = vadd.f32 %v2882, %v2883
        %v2885 = vsel %vm1358, %v2862, 0.0
        %v2886 = vadd.f32 %v2884, %v2885
        %v2887 = vsel %vm1358, %v2863, 0.0
        %v2888 = vadd.f32 %v2886, %v2887
        %v2889 = vsel %vm1358, %v2864, 0.0
        %v2890 = vadd.f32 %v2888, %v2889
        %v2891 = vsel %vm1358, %v2865, 0.0
        %v2892 = vadd.f32 %v2890, %v2891
        %v2893 = vsel %vm1358, %v2866, 0.0
        %v2894 = vadd.f32 %v2892, %v2893
        %v2895 = vsel %vm1358, %v2867, 0.0
        %v2896 = vadd.f32 %v2894, %v2895
        %v2897 = vsel %vm1358, %v2868, 0.0
        %v2898 = vadd.f32 %v2896, %v2897
        %v2899 = vsel %vm1358, %v2869, 0.0
        %v2900 = vadd.f32 %v2898, %v2899
        %v2901 = vrot.slane %v2900, 4
        %v2902 = vadd.f32 %v2900, %v2901
        %v2903 = vrot.slane %v2902, 2
        %v2904 = vadd.f32 %v2902, %v2903
        %v2905 = vrot.slane %v2904, 1
        %v2906 = vadd.f32 %v2904, %v2905
        %v2907 = vadd.f32 %v2191, %v2906
        %v2908 = vld [vmem:[%s1468 + $0x100] sm:$0xff]
        %v2909 = vld [vmem:[%s1468 + $0x108] sm:$0xff]
        %v2910 = vld [vmem:[%s1468 + $0x110] sm:$0xff]
        %v2911 = vld [vmem:[%s1468 + $0x118] sm:$0xff]
        %v2912 = vld [vmem:[%s1468 + $0x120] sm:$0xff]
        %v2913 = vld [vmem:[%s1468 + $0x128] sm:$0xff]
        %v2914 = vld [vmem:[%s1468 + $0x130] sm:$0xff]
        %v2915 = vld [vmem:[%s1468 + $0x138] sm:$0xff]
        %v2916 = vld [vmem:[%s1468 + $0x140] sm:$0xff]
        %v2917 = vld [vmem:[%s1468 + $0x148] sm:$0xff]
        %v2918 = vld [vmem:[%s1468 + $0x150] sm:$0xff]
        %v2919 = vld [vmem:[%s1468 + $0x158] sm:$0xff]
        %v2920 = vld [vmem:[%s1468 + $0x160] sm:$0xff]
        %v2921 = vld [vmem:[%s1468 + $0x168] sm:$0xff]
        %v2922 = vld [vmem:[%s1468 + $0x170] sm:$0xff]
        %v2923 = vld [vmem:[%s1468 + $0x178] sm:$0xff]
        %v2924 = vmul.f32 %v2752, %v2908
        %v2925 = vmul.f32 %v2753, %v2909
        %v2926 = vmul.f32 %v2754, %v2910
        %v2927 = vmul.f32 %v2755, %v2911
        %v2928 = vmul.f32 %v2756, %v2912
        %v2929 = vmul.f32 %v2757, %v2913
        %v2930 = vmul.f32 %v2758, %v2914
        %v2931 = vmul.f32 %v2759, %v2915
        %v2932 = vmul.f32 %v2760, %v2916
        %v2933 = vmul.f32 %v2761, %v2917
        %v2934 = vmul.f32 %v2762, %v2918
        %v2935 = vmul.f32 %v2763, %v2919
        %v2936 = vmul.f32 %v2764, %v2920
        %v2937 = vmul.f32 %v2765, %v2921
        %v2938 = vmul.f32 %v2766, %v2922
        %v2939 = vmul.f32 %v2767, %v2923
        %v2940 = vsel %vm1358, %v2924, 0.0
        %v2941 = vsel %vm1358, %v2925, 0.0
        %v2942 = vadd.f32 %v2940, %v2941
        %v2943 = vsel %vm1358, %v2926, 0.0
        %v2944 = vadd.f32 %v2942, %v2943
        %v2945 = vsel %vm1358, %v2927, 0.0
        %v2946 = vadd.f32 %v2944, %v2945
        %v2947 = vsel %vm1358, %v2928, 0.0
        %v2948 = vadd.f32 %v2946, %v2947
        %v2949 = vsel %vm1358, %v2929, 0.0
        %v2950 = vadd.f32 %v2948, %v2949
        %v2951 = vsel %vm1358, %v2930, 0.0
        %v2952 = vadd.f32 %v2950, %v2951
        %v2953 = vsel %vm1358, %v2931, 0.0
        %v2954 = vadd.f32 %v2952, %v2953
        %v2955 = vsel %vm1358, %v2932, 0.0
        %v2956 = vadd.f32 %v2954, %v2955
        %v2957 = vsel %vm1358, %v2933, 0.0
        %v2958 = vadd.f32 %v2956, %v2957
        %v2959 = vsel %vm1358, %v2934, 0.0
        %v2960 = vadd.f32 %v2958, %v2959
        %v2961 = vsel %vm1358, %v2935, 0.0
        %v2962 = vadd.f32 %v2960, %v2961
        %v2963 = vsel %vm1358, %v2936, 0.0
        %v2964 = vadd.f32 %v2962, %v2963
        %v2965 = vsel %vm1358, %v2937, 0.0
        %v2966 = vadd.f32 %v2964, %v2965
        %v2967 = vsel %vm1358, %v2938, 0.0
        %v2968 = vadd.f32 %v2966, %v2967
        %v2969 = vsel %vm1358, %v2939, 0.0
        %v2970 = vadd.f32 %v2968, %v2969
        %v2971 = vrot.slane %v2970, 4
        %v2972 = vadd.f32 %v2970, %v2971
        %v2973 = vrot.slane %v2972, 2
        %v2974 = vadd.f32 %v2972, %v2973
        %v2975 = vrot.slane %v2974, 1
        %v2976 = vadd.f32 %v2974, %v2975
        %v2977 = vadd.f32 %v2261, %v2976
        %v2978 = vld [vmem:[%s1539 + $0x100] sm:$0xff]
        %v2979 = vld [vmem:[%s1539 + $0x108] sm:$0xff]
        %v2980 = vld [vmem:[%s1539 + $0x110] sm:$0xff]
        %v2981 = vld [vmem:[%s1539 + $0x118] sm:$0xff]
        %v2982 = vld [vmem:[%s1539 + $0x120] sm:$0xff]
        %v2983 = vld [vmem:[%s1539 + $0x128] sm:$0xff]
        %v2984 = vld [vmem:[%s1539 + $0x130] sm:$0xff]
        %v2985 = vld [vmem:[%s1539 + $0x138] sm:$0xff]
        %v2986 = vld [vmem:[%s1539 + $0x140] sm:$0xff]
        %v2987 = vld [vmem:[%s1539 + $0x148] sm:$0xff]
        %v2988 = vld [vmem:[%s1539 + $0x150] sm:$0xff]
        %v2989 = vld [vmem:[%s1539 + $0x158] sm:$0xff]
        %v2990 = vld [vmem:[%s1539 + $0x160] sm:$0xff]
        %v2991 = vld [vmem:[%s1539 + $0x168] sm:$0xff]
        %v2992 = vld [vmem:[%s1539 + $0x170] sm:$0xff]
        %v2993 = vld [vmem:[%s1539 + $0x178] sm:$0xff]
        %v2994 = vmul.f32 %v2752, %v2978
        %v2995 = vmul.f32 %v2753, %v2979
        %v2996 = vmul.f32 %v2754, %v2980
        %v2997 = vmul.f32 %v2755, %v2981
        %v2998 = vmul.f32 %v2756, %v2982
        %v2999 = vmul.f32 %v2757, %v2983
        %v3000 = vmul.f32 %v2758, %v2984
        %v3001 = vmul.f32 %v2759, %v2985
        %v3002 = vmul.f32 %v2760, %v2986
        %v3003 = vmul.f32 %v2761, %v2987
        %v3004 = vmul.f32 %v2762, %v2988
        %v3005 = vmul.f32 %v2763, %v2989
        %v3006 = vmul.f32 %v2764, %v2990
        %v3007 = vmul.f32 %v2765, %v2991
        %v3008 = vmul.f32 %v2766, %v2992
        %v3009 = vmul.f32 %v2767, %v2993
        %v3010 = vsel %vm1358, %v2994, 0.0
        %v3011 = vsel %vm1358, %v2995, 0.0
        %v3012 = vadd.f32 %v3010, %v3011
        %v3013 = vsel %vm1358, %v2996, 0.0
        %v3014 = vadd.f32 %v3012, %v3013
        %v3015 = vsel %vm1358, %v2997, 0.0
        %v3016 = vadd.f32 %v3014, %v3015
        %v3017 = vsel %vm1358, %v2998, 0.0
        %v3018 = vadd.f32 %v3016, %v3017
        %v3019 = vsel %vm1358, %v2999, 0.0
        %v3020 = vadd.f32 %v3018, %v3019
        %v3021 = vsel %vm1358, %v3000, 0.0
        %v3022 = vadd.f32 %v3020, %v3021
        %v3023 = vsel %vm1358, %v3001, 0.0
        %v3024 = vadd.f32 %v3022, %v3023
        %v3025 = vsel %vm1358, %v3002, 0.0
        %v3026 = vadd.f32 %v3024, %v3025
        %v3027 = vsel %vm1358, %v3003, 0.0
        %v3028 = vadd.f32 %v3026, %v3027
        %v3029 = vsel %vm1358, %v3004, 0.0
        %v3030 = vadd.f32 %v3028, %v3029
        %v3031 = vsel %vm1358, %v3005, 0.0
        %v3032 = vadd.f32 %v3030, %v3031
        %v3033 = vsel %vm1358, %v3006, 0.0
        %v3034 = vadd.f32 %v3032, %v3033
        %v3035 = vsel %vm1358, %v3007, 0.0
        %v3036 = vadd.f32 %v3034, %v3035
        %v3037 = vsel %vm1358, %v3008, 0.0
        %v3038 = vadd.f32 %v3036, %v3037
        %v3039 = vsel %vm1358, %v3009, 0.0
        %v3040 = vadd.f32 %v3038, %v3039
        %v3041 = vrot.slane %v3040, 4
        %v3042 = vadd.f32 %v3040, %v3041
        %v3043 = vrot.slane %v3042, 2
        %v3044 = vadd.f32 %v3042, %v3043
        %v3045 = vrot.slane %v3044, 1
        %v3046 = vadd.f32 %v3044, %v3045
        %v3047 = vadd.f32 %v2331, %v3046
        %v3048 = vld [vmem:[%s1610 + $0x100] sm:$0xff]
        %v3049 = vld [vmem:[%s1610 + $0x108] sm:$0xff]
        %v3050 = vld [vmem:[%s1610 + $0x110] sm:$0xff]
        %v3051 = vld [vmem:[%s1610 + $0x118] sm:$0xff]
        %v3052 = vld [vmem:[%s1610 + $0x120] sm:$0xff]
        %v3053 = vld [vmem:[%s1610 + $0x128] sm:$0xff]
        %v3054 = vld [vmem:[%s1610 + $0x130] sm:$0xff]
        %v3055 = vld [vmem:[%s1610 + $0x138] sm:$0xff]
        %v3056 = vld [vmem:[%s1610 + $0x140] sm:$0xff]
        %v3057 = vld [vmem:[%s1610 + $0x148] sm:$0xff]
        %v3058 = vld [vmem:[%s1610 + $0x150] sm:$0xff]
        %v3059 = vld [vmem:[%s1610 + $0x158] sm:$0xff]
        %v3060 = vld [vmem:[%s1610 + $0x160] sm:$0xff]
        %v3061 = vld [vmem:[%s1610 + $0x168] sm:$0xff]
        %v3062 = vld [vmem:[%s1610 + $0x170] sm:$0xff]
        %v3063 = vld [vmem:[%s1610 + $0x178] sm:$0xff]
        %v3064 = vmul.f32 %v2752, %v3048
        %v3065 = vmul.f32 %v2753, %v3049
        %v3066 = vmul.f32 %v2754, %v3050
        %v3067 = vmul.f32 %v2755, %v3051
        %v3068 = vmul.f32 %v2756, %v3052
        %v3069 = vmul.f32 %v2757, %v3053
        %v3070 = vmul.f32 %v2758, %v3054
        %v3071 = vmul.f32 %v2759, %v3055
        %v3072 = vmul.f32 %v2760, %v3056
        %v3073 = vmul.f32 %v2761, %v3057
        %v3074 = vmul.f32 %v2762, %v3058
        %v3075 = vmul.f32 %v2763, %v3059
        %v3076 = vmul.f32 %v2764, %v3060
        %v3077 = vmul.f32 %v2765, %v3061
        %v3078 = vmul.f32 %v2766, %v3062
        %v3079 = vmul.f32 %v2767, %v3063
        %v3080 = vsel %vm1358, %v3064, 0.0
        %v3081 = vsel %vm1358, %v3065, 0.0
        %v3082 = vadd.f32 %v3080, %v3081
        %v3083 = vsel %vm1358, %v3066, 0.0
        %v3084 = vadd.f32 %v3082, %v3083
        %v3085 = vsel %vm1358, %v3067, 0.0
        %v3086 = vadd.f32 %v3084, %v3085
        %v3087 = vsel %vm1358, %v3068, 0.0
        %v3088 = vadd.f32 %v3086, %v3087
        %v3089 = vsel %vm1358, %v3069, 0.0
        %v3090 = vadd.f32 %v3088, %v3089
        %v3091 = vsel %vm1358, %v3070, 0.0
        %v3092 = vadd.f32 %v3090, %v3091
        %v3093 = vsel %vm1358, %v3071, 0.0
        %v3094 = vadd.f32 %v3092, %v3093
        %v3095 = vsel %vm1358, %v3072, 0.0
        %v3096 = vadd.f32 %v3094, %v3095
        %v3097 = vsel %vm1358, %v3073, 0.0
        %v3098 = vadd.f32 %v3096, %v3097
        %v3099 = vsel %vm1358, %v3074, 0.0
        %v3100 = vadd.f32 %v3098, %v3099
        %v3101 = vsel %vm1358, %v3075, 0.0
        %v3102 = vadd.f32 %v3100, %v3101
        %v3103 = vsel %vm1358, %v3076, 0.0
        %v3104 = vadd.f32 %v3102, %v3103
        %v3105 = vsel %vm1358, %v3077, 0.0
        %v3106 = vadd.f32 %v3104, %v3105
        %v3107 = vsel %vm1358, %v3078, 0.0
        %v3108 = vadd.f32 %v3106, %v3107
        %v3109 = vsel %vm1358, %v3079, 0.0
        %v3110 = vadd.f32 %v3108, %v3109
        %v3111 = vrot.slane %v3110, 4
        %v3112 = vadd.f32 %v3110, %v3111
        %v3113 = vrot.slane %v3112, 2
        %v3114 = vadd.f32 %v3112, %v3113
        %v3115 = vrot.slane %v3114, 1
        %v3116 = vadd.f32 %v3114, %v3115
        %v3117 = vadd.f32 %v2401, %v3116
        %v3118 = vld [vmem:[%s1681 + $0x100] sm:$0xff]
        %v3119 = vld [vmem:[%s1681 + $0x108] sm:$0xff]
        %v3120 = vld [vmem:[%s1681 + $0x110] sm:$0xff]
        %v3121 = vld [vmem:[%s1681 + $0x118] sm:$0xff]
        %v3122 = vld [vmem:[%s1681 + $0x120] sm:$0xff]
        %v3123 = vld [vmem:[%s1681 + $0x128] sm:$0xff]
        %v3124 = vld [vmem:[%s1681 + $0x130] sm:$0xff]
        %v3125 = vld [vmem:[%s1681 + $0x138] sm:$0xff]
        %v3126 = vld [vmem:[%s1681 + $0x140] sm:$0xff]
        %v3127 = vld [vmem:[%s1681 + $0x148] sm:$0xff]
        %v3128 = vld [vmem:[%s1681 + $0x150] sm:$0xff]
        %v3129 = vld [vmem:[%s1681 + $0x158] sm:$0xff]
        %v3130 = vld [vmem:[%s1681 + $0x160] sm:$0xff]
        %v3131 = vld [vmem:[%s1681 + $0x168] sm:$0xff]
        %v3132 = vld [vmem:[%s1681 + $0x170] sm:$0xff]
        %v3133 = vld [vmem:[%s1681 + $0x178] sm:$0xff]
        %v3134 = vmul.f32 %v2752, %v3118
        %v3135 = vmul.f32 %v2753, %v3119
        %v3136 = vmul.f32 %v2754, %v3120
        %v3137 = vmul.f32 %v2755, %v3121
        %v3138 = vmul.f32 %v2756, %v3122
        %v3139 = vmul.f32 %v2757, %v3123
        %v3140 = vmul.f32 %v2758, %v3124
        %v3141 = vmul.f32 %v2759, %v3125
        %v3142 = vmul.f32 %v2760, %v3126
        %v3143 = vmul.f32 %v2761, %v3127
        %v3144 = vmul.f32 %v2762, %v3128
        %v3145 = vmul.f32 %v2763, %v3129
        %v3146 = vmul.f32 %v2764, %v3130
        %v3147 = vmul.f32 %v2765, %v3131
        %v3148 = vmul.f32 %v2766, %v3132
        %v3149 = vmul.f32 %v2767, %v3133
        %v3150 = vsel %vm1358, %v3134, 0.0
        %v3151 = vsel %vm1358, %v3135, 0.0
        %v3152 = vadd.f32 %v3150, %v3151
        %v3153 = vsel %vm1358, %v3136, 0.0
        %v3154 = vadd.f32 %v3152, %v3153
        %v3155 = vsel %vm1358, %v3137, 0.0
        %v3156 = vadd.f32 %v3154, %v3155
        %v3157 = vsel %vm1358, %v3138, 0.0
        %v3158 = vadd.f32 %v3156, %v3157
        %v3159 = vsel %vm1358, %v3139, 0.0
        %v3160 = vadd.f32 %v3158, %v3159
        %v3161 = vsel %vm1358, %v3140, 0.0
        %v3162 = vadd.f32 %v3160, %v3161
        %v3163 = vsel %vm1358, %v3141, 0.0
        %v3164 = vadd.f32 %v3162, %v3163
        %v3165 = vsel %vm1358, %v3142, 0.0
        %v3166 = vadd.f32 %v3164, %v3165
        %v3167 = vsel %vm1358, %v3143, 0.0
        %v3168 = vadd.f32 %v3166, %v3167
        %v3169 = vsel %vm1358, %v3144, 0.0
        %v3170 = vadd.f32 %v3168, %v3169
        %v3171 = vsel %vm1358, %v3145, 0.0
        %v3172 = vadd.f32 %v3170, %v3171
        %v3173 = vsel %vm1358, %v3146, 0.0
        %v3174 = vadd.f32 %v3172, %v3173
        %v3175 = vsel %vm1358, %v3147, 0.0
        %v3176 = vadd.f32 %v3174, %v3175
        %v3177 = vsel %vm1358, %v3148, 0.0
        %v3178 = vadd.f32 %v3176, %v3177
        %v3179 = vsel %vm1358, %v3149, 0.0
        %v3180 = vadd.f32 %v3178, %v3179
        %v3181 = vrot.slane %v3180, 4
        %v3182 = vadd.f32 %v3180, %v3181
        %v3183 = vrot.slane %v3182, 2
        %v3184 = vadd.f32 %v3182, %v3183
        %v3185 = vrot.slane %v3184, 1
        %v3186 = vadd.f32 %v3184, %v3185
        %v3187 = vadd.f32 %v2471, %v3186
        %v3188 = vld [vmem:[%s1752 + $0x100] sm:$0xff]
        %v3189 = vld [vmem:[%s1752 + $0x108] sm:$0xff]
        %v3190 = vld [vmem:[%s1752 + $0x110] sm:$0xff]
        %v3191 = vld [vmem:[%s1752 + $0x118] sm:$0xff]
        %v3192 = vld [vmem:[%s1752 + $0x120] sm:$0xff]
        %v3193 = vld [vmem:[%s1752 + $0x128] sm:$0xff]
        %v3194 = vld [vmem:[%s1752 + $0x130] sm:$0xff]
        %v3195 = vld [vmem:[%s1752 + $0x138] sm:$0xff]
        %v3196 = vld [vmem:[%s1752 + $0x140] sm:$0xff]
        %v3197 = vld [vmem:[%s1752 + $0x148] sm:$0xff]
        %v3198 = vld [vmem:[%s1752 + $0x150] sm:$0xff]
        %v3199 = vld [vmem:[%s1752 + $0x158] sm:$0xff]
        %v3200 = vld [vmem:[%s1752 + $0x160] sm:$0xff]
        %v3201 = vld [vmem:[%s1752 + $0x168] sm:$0xff]
        %v3202 = vld [vmem:[%s1752 + $0x170] sm:$0xff]
        %v3203 = vld [vmem:[%s1752 + $0x178] sm:$0xff]
        %v3204 = vmul.f32 %v2752, %v3188
        %v3205 = vmul.f32 %v2753, %v3189
        %v3206 = vmul.f32 %v2754, %v3190
        %v3207 = vmul.f32 %v2755, %v3191
        %v3208 = vmul.f32 %v2756, %v3192
        %v3209 = vmul.f32 %v2757, %v3193
        %v3210 = vmul.f32 %v2758, %v3194
        %v3211 = vmul.f32 %v2759, %v3195
        %v3212 = vmul.f32 %v2760, %v3196
        %v3213 = vmul.f32 %v2761, %v3197
        %v3214 = vmul.f32 %v2762, %v3198
        %v3215 = vmul.f32 %v2763, %v3199
        %v3216 = vmul.f32 %v2764, %v3200
        %v3217 = vmul.f32 %v2765, %v3201
        %v3218 = vmul.f32 %v2766, %v3202
        %v3219 = vmul.f32 %v2767, %v3203
        %v3220 = vsel %vm1358, %v3204, 0.0
        %v3221 = vsel %vm1358, %v3205, 0.0
        %v3222 = vadd.f32 %v3220, %v3221
        %v3223 = vsel %vm1358, %v3206, 0.0
        %v3224 = vadd.f32 %v3222, %v3223
        %v3225 = vsel %vm1358, %v3207, 0.0
        %v3226 = vadd.f32 %v3224, %v3225
        %v3227 = vsel %vm1358, %v3208, 0.0
        %v3228 = vadd.f32 %v3226, %v3227
        %v3229 = vsel %vm1358, %v3209, 0.0
        %v3230 = vadd.f32 %v3228, %v3229
        %v3231 = vsel %vm1358, %v3210, 0.0
        %v3232 = vadd.f32 %v3230, %v3231
        %v3233 = vsel %vm1358, %v3211, 0.0
        %v3234 = vadd.f32 %v3232, %v3233
        %v3235 = vsel %vm1358, %v3212, 0.0
        %v3236 = vadd.f32 %v3234, %v3235
        %v3237 = vsel %vm1358, %v3213, 0.0
        %v3238 = vadd.f32 %v3236, %v3237
        %v3239 = vsel %vm1358, %v3214, 0.0
        %v3240 = vadd.f32 %v3238, %v3239
        %v3241 = vsel %vm1358, %v3215, 0.0
        %v3242 = vadd.f32 %v3240, %v3241
        %v3243 = vsel %vm1358, %v3216, 0.0
        %v3244 = vadd.f32 %v3242, %v3243
        %v3245 = vsel %vm1358, %v3217, 0.0
        %v3246 = vadd.f32 %v3244, %v3245
        %v3247 = vsel %vm1358, %v3218, 0.0
        %v3248 = vadd.f32 %v3246, %v3247
        %v3249 = vsel %vm1358, %v3219, 0.0
        %v3250 = vadd.f32 %v3248, %v3249
        %v3251 = vrot.slane %v3250, 4
        %v3252 = vadd.f32 %v3250, %v3251
        %v3253 = vrot.slane %v3252, 2
        %v3254 = vadd.f32 %v3252, %v3253
        %v3255 = vrot.slane %v3254, 1
        %v3256 = vadd.f32 %v3254, %v3255
        %v3257 = vadd.f32 %v2541, %v3256
        %v3258 = vld [vmem:[%s1823 + $0x100] sm:$0xff]
        %v3259 = vld [vmem:[%s1823 + $0x108] sm:$0xff]
        %v3260 = vld [vmem:[%s1823 + $0x110] sm:$0xff]
        %v3261 = vld [vmem:[%s1823 + $0x118] sm:$0xff]
        %v3262 = vld [vmem:[%s1823 + $0x120] sm:$0xff]
        %v3263 = vld [vmem:[%s1823 + $0x128] sm:$0xff]
        %v3264 = vld [vmem:[%s1823 + $0x130] sm:$0xff]
        %v3265 = vld [vmem:[%s1823 + $0x138] sm:$0xff]
        %v3266 = vld [vmem:[%s1823 + $0x140] sm:$0xff]
        %v3267 = vld [vmem:[%s1823 + $0x148] sm:$0xff]
        %v3268 = vld [vmem:[%s1823 + $0x150] sm:$0xff]
        %v3269 = vld [vmem:[%s1823 + $0x158] sm:$0xff]
        %v3270 = vld [vmem:[%s1823 + $0x160] sm:$0xff]
        %v3271 = vld [vmem:[%s1823 + $0x168] sm:$0xff]
        %v3272 = vld [vmem:[%s1823 + $0x170] sm:$0xff]
        %v3273 = vld [vmem:[%s1823 + $0x178] sm:$0xff]
        %v3274 = vmul.f32 %v2752, %v3258
        %v3275 = vmul.f32 %v2753, %v3259
        %v3276 = vmul.f32 %v2754, %v3260
        %v3277 = vmul.f32 %v2755, %v3261
        %v3278 = vmul.f32 %v2756, %v3262
        %v3279 = vmul.f32 %v2757, %v3263
        %v3280 = vmul.f32 %v2758, %v3264
        %v3281 = vmul.f32 %v2759, %v3265
        %v3282 = vmul.f32 %v2760, %v3266
        %v3283 = vmul.f32 %v2761, %v3267
        %v3284 = vmul.f32 %v2762, %v3268
        %v3285 = vmul.f32 %v2763, %v3269
        %v3286 = vmul.f32 %v2764, %v3270
        %v3287 = vmul.f32 %v2765, %v3271
        %v3288 = vmul.f32 %v2766, %v3272
        %v3289 = vmul.f32 %v2767, %v3273
        %v3290 = vsel %vm1358, %v3274, 0.0
        %v3291 = vsel %vm1358, %v3275, 0.0
        %v3292 = vadd.f32 %v3290, %v3291
        %v3293 = vsel %vm1358, %v3276, 0.0
        %v3294 = vadd.f32 %v3292, %v3293
        %v3295 = vsel %vm1358, %v3277, 0.0
        %v3296 = vadd.f32 %v3294, %v3295
        %v3297 = vsel %vm1358, %v3278, 0.0
        %v3298 = vadd.f32 %v3296, %v3297
        %v3299 = vsel %vm1358, %v3279, 0.0
        %v3300 = vadd.f32 %v3298, %v3299
        %v3301 = vsel %vm1358, %v3280, 0.0
        %v3302 = vadd.f32 %v3300, %v3301
        %v3303 = vsel %vm1358, %v3281, 0.0
        %v3304 = vadd.f32 %v3302, %v3303
        %v3305 = vsel %vm1358, %v3282, 0.0
        %v3306 = vadd.f32 %v3304, %v3305
        %v3307 = vsel %vm1358, %v3283, 0.0
        %v3308 = vadd.f32 %v3306, %v3307
        %v3309 = vsel %vm1358, %v3284, 0.0
        %v3310 = vadd.f32 %v3308, %v3309
        %v3311 = vsel %vm1358, %v3285, 0.0
        %v3312 = vadd.f32 %v3310, %v3311
        %v3313 = vsel %vm1358, %v3286, 0.0
        %v3314 = vadd.f32 %v3312, %v3313
        %v3315 = vsel %vm1358, %v3287, 0.0
        %v3316 = vadd.f32 %v3314, %v3315
        %v3317 = vsel %vm1358, %v3288, 0.0
        %v3318 = vadd.f32 %v3316, %v3317
        %v3319 = vsel %vm1358, %v3289, 0.0
        %v3320 = vadd.f32 %v3318, %v3319
        %v3321 = vrot.slane %v3320, 4
        %v3322 = vadd.f32 %v3320, %v3321
        %v3323 = vrot.slane %v3322, 2
        %v3324 = vadd.f32 %v3322, %v3323
        %v3325 = vrot.slane %v3324, 1
        %v3326 = vadd.f32 %v3324, %v3325
        %v3327 = vadd.f32 %v2611, %v3326
        %v3328 = vld [vmem:[%s1894 + $0x100] sm:$0xff]
        %v3329 = vld [vmem:[%s1894 + $0x108] sm:$0xff]
        %v3330 = vld [vmem:[%s1894 + $0x110] sm:$0xff]
        %v3331 = vld [vmem:[%s1894 + $0x118] sm:$0xff]
        %v3332 = vld [vmem:[%s1894 + $0x120] sm:$0xff]
        %v3333 = vld [vmem:[%s1894 + $0x128] sm:$0xff]
        %v3334 = vld [vmem:[%s1894 + $0x130] sm:$0xff]
        %v3335 = vld [vmem:[%s1894 + $0x138] sm:$0xff]
        %v3336 = vld [vmem:[%s1894 + $0x140] sm:$0xff]
        %v3337 = vld [vmem:[%s1894 + $0x148] sm:$0xff]
        %v3338 = vld [vmem:[%s1894 + $0x150] sm:$0xff]
        %v3339 = vld [vmem:[%s1894 + $0x158] sm:$0xff]
        %v3340 = vld [vmem:[%s1894 + $0x160] sm:$0xff]
        %v3341 = vld [vmem:[%s1894 + $0x168] sm:$0xff]
        %v3342 = vld [vmem:[%s1894 + $0x170] sm:$0xff]
        %v3343 = vld [vmem:[%s1894 + $0x178] sm:$0xff]
        %v3344 = vmul.f32 %v2752, %v3328
        %v3345 = vmul.f32 %v2753, %v3329
        %v3346 = vmul.f32 %v2754, %v3330
        %v3347 = vmul.f32 %v2755, %v3331
        %v3348 = vmul.f32 %v2756, %v3332
        %v3349 = vmul.f32 %v2757, %v3333
        %v3350 = vmul.f32 %v2758, %v3334
        %v3351 = vmul.f32 %v2759, %v3335
        %v3352 = vmul.f32 %v2760, %v3336
        %v3353 = vmul.f32 %v2761, %v3337
        %v3354 = vmul.f32 %v2762, %v3338
        %v3355 = vmul.f32 %v2763, %v3339
        %v3356 = vmul.f32 %v2764, %v3340
        %v3357 = vmul.f32 %v2765, %v3341
        %v3358 = vmul.f32 %v2766, %v3342
        %v3359 = vmul.f32 %v2767, %v3343
        %v3360 = vsel %vm1358, %v3344, 0.0
        %v3361 = vsel %vm1358, %v3345, 0.0
        %v3362 = vadd.f32 %v3360, %v3361
        %v3363 = vsel %vm1358, %v3346, 0.0
        %v3364 = vadd.f32 %v3362, %v3363
        %v3365 = vsel %vm1358, %v3347, 0.0
        %v3366 = vadd.f32 %v3364, %v3365
        %v3367 = vsel %vm1358, %v3348, 0.0
        %v3368 = vadd.f32 %v3366, %v3367
        %v3369 = vsel %vm1358, %v3349, 0.0
        %v3370 = vadd.f32 %v3368, %v3369
        %v3371 = vsel %vm1358, %v3350, 0.0
        %v3372 = vadd.f32 %v3370, %v3371
        %v3373 = vsel %vm1358, %v3351, 0.0
        %v3374 = vadd.f32 %v3372, %v3373
        %v3375 = vsel %vm1358, %v3352, 0.0
        %v3376 = vadd.f32 %v3374, %v3375
        %v3377 = vsel %vm1358, %v3353, 0.0
        %v3378 = vadd.f32 %v3376, %v3377
        %v3379 = vsel %vm1358, %v3354, 0.0
        %v3380 = vadd.f32 %v3378, %v3379
        %v3381 = vsel %vm1358, %v3355, 0.0
        %v3382 = vadd.f32 %v3380, %v3381
        %v3383 = vsel %vm1358, %v3356, 0.0
        %v3384 = vadd.f32 %v3382, %v3383
        %v3385 = vsel %vm1358, %v3357, 0.0
        %v3386 = vadd.f32 %v3384, %v3385
        %v3387 = vsel %vm1358, %v3358, 0.0
        %v3388 = vadd.f32 %v3386, %v3387
        %v3389 = vsel %vm1358, %v3359, 0.0
        %v3390 = vadd.f32 %v3388, %v3389
        %v3391 = vrot.slane %v3390, 4
        %v3392 = vadd.f32 %v3390, %v3391
        %v3393 = vrot.slane %v3392, 2
        %v3394 = vadd.f32 %v3392, %v3393
        %v3395 = vrot.slane %v3394, 1
        %v3396 = vadd.f32 %v3394, %v3395
        %v3397 = vadd.f32 %v2681, %v3396
        %v3398 = vld [vmem:[%s1965 + $0x100] sm:$0xff]
        %v3399 = vld [vmem:[%s1965 + $0x108] sm:$0xff]
        %v3400 = vld [vmem:[%s1965 + $0x110] sm:$0xff]
        %v3401 = vld [vmem:[%s1965 + $0x118] sm:$0xff]
        %v3402 = vld [vmem:[%s1965 + $0x120] sm:$0xff]
        %v3403 = vld [vmem:[%s1965 + $0x128] sm:$0xff]
        %v3404 = vld [vmem:[%s1965 + $0x130] sm:$0xff]
        %v3405 = vld [vmem:[%s1965 + $0x138] sm:$0xff]
        %v3406 = vld [vmem:[%s1965 + $0x140] sm:$0xff]
        %v3407 = vld [vmem:[%s1965 + $0x148] sm:$0xff]
        %v3408 = vld [vmem:[%s1965 + $0x150] sm:$0xff]
        %v3409 = vld [vmem:[%s1965 + $0x158] sm:$0xff]
        %v3410 = vld [vmem:[%s1965 + $0x160] sm:$0xff]
        %v3411 = vld [vmem:[%s1965 + $0x168] sm:$0xff]
        %v3412 = vld [vmem:[%s1965 + $0x170] sm:$0xff]
        %v3413 = vld [vmem:[%s1965 + $0x178] sm:$0xff]
        %v3414 = vmul.f32 %v2752, %v3398
        %v3415 = vmul.f32 %v2753, %v3399
        %v3416 = vmul.f32 %v2754, %v3400
        %v3417 = vmul.f32 %v2755, %v3401
        %v3418 = vmul.f32 %v2756, %v3402
        %v3419 = vmul.f32 %v2757, %v3403
        %v3420 = vmul.f32 %v2758, %v3404
        %v3421 = vmul.f32 %v2759, %v3405
        %v3422 = vmul.f32 %v2760, %v3406
        %v3423 = vmul.f32 %v2761, %v3407
        %v3424 = vmul.f32 %v2762, %v3408
        %v3425 = vmul.f32 %v2763, %v3409
        %v3426 = vmul.f32 %v2764, %v3410
        %v3427 = vmul.f32 %v2765, %v3411
        %v3428 = vmul.f32 %v2766, %v3412
        %v3429 = vmul.f32 %v2767, %v3413
        %v3430 = vsel %vm1358, %v3414, 0.0
        %v3431 = vsel %vm1358, %v3415, 0.0
        %v3432 = vadd.f32 %v3430, %v3431
        %v3433 = vsel %vm1358, %v3416, 0.0
        %v3434 = vadd.f32 %v3432, %v3433
        %v3435 = vsel %vm1358, %v3417, 0.0
        %v3436 = vadd.f32 %v3434, %v3435
        %v3437 = vsel %vm1358, %v3418, 0.0
        %v3438 = vadd.f32 %v3436, %v3437
        %v3439 = vsel %vm1358, %v3419, 0.0
        %v3440 = vadd.f32 %v3438, %v3439
        %v3441 = vsel %vm1358, %v3420, 0.0
        %v3442 = vadd.f32 %v3440, %v3441
        %v3443 = vsel %vm1358, %v3421, 0.0
        %v3444 = vadd.f32 %v3442, %v3443
        %v3445 = vsel %vm1358, %v3422, 0.0
        %v3446 = vadd.f32 %v3444, %v3445
        %v3447 = vsel %vm1358, %v3423, 0.0
        %v3448 = vadd.f32 %v3446, %v3447
        %v3449 = vsel %vm1358, %v3424, 0.0
        %v3450 = vadd.f32 %v3448, %v3449
        %v3451 = vsel %vm1358, %v3425, 0.0
        %v3452 = vadd.f32 %v3450, %v3451
        %v3453 = vsel %vm1358, %v3426, 0.0
        %v3454 = vadd.f32 %v3452, %v3453
        %v3455 = vsel %vm1358, %v3427, 0.0
        %v3456 = vadd.f32 %v3454, %v3455
        %v3457 = vsel %vm1358, %v3428, 0.0
        %v3458 = vadd.f32 %v3456, %v3457
        %v3459 = vsel %vm1358, %v3429, 0.0
        %v3460 = vadd.f32 %v3458, %v3459
        %v3461 = vrot.slane %v3460, 4
        %v3462 = vadd.f32 %v3460, %v3461
        %v3463 = vrot.slane %v3462, 2
        %v3464 = vadd.f32 %v3462, %v3463
        %v3465 = vrot.slane %v3464, 1
        %v3466 = vadd.f32 %v3464, %v3465
        %v3467 = vadd.f32 %v2751, %v3466
        %v3468 = vld [vmem:[#allocation3 + $0x180] sm:$0xff]
        %v3469 = vld [vmem:[#allocation3 + $0x188] sm:$0xff]
        %v3470 = vld [vmem:[#allocation3 + $0x190] sm:$0xff]
        %v3471 = vld [vmem:[#allocation3 + $0x198] sm:$0xff]
        %v3472 = vld [vmem:[#allocation3 + $0x1a0] sm:$0xff]
        %v3473 = vld [vmem:[#allocation3 + $0x1a8] sm:$0xff]
        %v3474 = vld [vmem:[#allocation3 + $0x1b0] sm:$0xff]
        %v3475 = vld [vmem:[#allocation3 + $0x1b8] sm:$0xff]
        %v3476 = vld [vmem:[#allocation3 + $0x1c0] sm:$0xff]
        %v3477 = vld [vmem:[#allocation3 + $0x1c8] sm:$0xff]
        %v3478 = vld [vmem:[#allocation3 + $0x1d0] sm:$0xff]
        %v3479 = vld [vmem:[#allocation3 + $0x1d8] sm:$0xff]
        %v3480 = vld [vmem:[#allocation3 + $0x1e0] sm:$0xff]
        %v3481 = vld [vmem:[#allocation3 + $0x1e8] sm:$0xff]
        %v3482 = vld [vmem:[#allocation3 + $0x1f0] sm:$0xff]
        %v3483 = vld [vmem:[#allocation3 + $0x1f8] sm:$0xff]
        %v3484 = vld [vmem:[%s3 + $0x180] sm:$0xff]
        %v3485 = vld [vmem:[%s3 + $0x188] sm:$0xff]
        %v3486 = vld [vmem:[%s3 + $0x190] sm:$0xff]
        %v3487 = vld [vmem:[%s3 + $0x198] sm:$0xff]
        %v3488 = vld [vmem:[%s3 + $0x1a0] sm:$0xff]
        %v3489 = vld [vmem:[%s3 + $0x1a8] sm:$0xff]
        %v3490 = vld [vmem:[%s3 + $0x1b0] sm:$0xff]
        %v3491 = vld [vmem:[%s3 + $0x1b8] sm:$0xff]
        %v3492 = vld [vmem:[%s3 + $0x1c0] sm:$0xff]
        %v3493 = vld [vmem:[%s3 + $0x1c8] sm:$0xff]
        %v3494 = vld [vmem:[%s3 + $0x1d0] sm:$0xff]
        %v3495 = vld [vmem:[%s3 + $0x1d8] sm:$0xff]
        %v3496 = vld [vmem:[%s3 + $0x1e0] sm:$0xff]
        %v3497 = vld [vmem:[%s3 + $0x1e8] sm:$0xff]
        %v3498 = vld [vmem:[%s3 + $0x1f0] sm:$0xff]
        %v3499 = vld [vmem:[%s3 + $0x1f8] sm:$0xff]
        %v3500 = vmul.f32 %v3468, %v3484
        %v3501 = vmul.f32 %v3469, %v3485
        %v3502 = vmul.f32 %v3470, %v3486
        %v3503 = vmul.f32 %v3471, %v3487
        %v3504 = vmul.f32 %v3472, %v3488
        %v3505 = vmul.f32 %v3473, %v3489
        %v3506 = vmul.f32 %v3474, %v3490
        %v3507 = vmul.f32 %v3475, %v3491
        %v3508 = vmul.f32 %v3476, %v3492
        %v3509 = vmul.f32 %v3477, %v3493
        %v3510 = vmul.f32 %v3478, %v3494
        %v3511 = vmul.f32 %v3479, %v3495
        %v3512 = vmul.f32 %v3480, %v3496
        %v3513 = vmul.f32 %v3481, %v3497
        %v3514 = vmul.f32 %v3482, %v3498
        %v3515 = vmul.f32 %v3483, %v3499
        %v3516 = vsel %vm1358, %v3500, 0.0
        %v3517 = vsel %vm1358, %v3501, 0.0
        %v3518 = vadd.f32 %v3516, %v3517
        %v3519 = vsel %vm1358, %v3502, 0.0
        %v3520 = vadd.f32 %v3518, %v3519
        %v3521 = vsel %vm1358, %v3503, 0.0
        %v3522 = vadd.f32 %v3520, %v3521
        %v3523 = vsel %vm1358, %v3504, 0.0
        %v3524 = vadd.f32 %v3522, %v3523
        %v3525 = vsel %vm1358, %v3505, 0.0
        %v3526 = vadd.f32 %v3524, %v3525
        %v3527 = vsel %vm1358, %v3506, 0.0
        %v3528 = vadd.f32 %v3526, %v3527
        %v3529 = vsel %vm1358, %v3507, 0.0
        %v3530 = vadd.f32 %v3528, %v3529
        %v3531 = vsel %vm1358, %v3508, 0.0
        %v3532 = vadd.f32 %v3530, %v3531
        %v3533 = vsel %vm1358, %v3509, 0.0
        %v3534 = vadd.f32 %v3532, %v3533
        %v3535 = vsel %vm1358, %v3510, 0.0
        %v3536 = vadd.f32 %v3534, %v3535
        %v3537 = vsel %vm1358, %v3511, 0.0
        %v3538 = vadd.f32 %v3536, %v3537
        %v3539 = vsel %vm1358, %v3512, 0.0
        %v3540 = vadd.f32 %v3538, %v3539
        %v3541 = vsel %vm1358, %v3513, 0.0
        %v3542 = vadd.f32 %v3540, %v3541
        %v3543 = vsel %vm1358, %v3514, 0.0
        %v3544 = vadd.f32 %v3542, %v3543
        %v3545 = vsel %vm1358, %v3515, 0.0
        %v3546 = vadd.f32 %v3544, %v3545
        %v3547 = vrot.slane %v3546, 4
        %v3548 = vadd.f32 %v3546, %v3547
        %v3549 = vrot.slane %v3548, 2
        %v3550 = vadd.f32 %v3548, %v3549
        %v3551 = vrot.slane %v3550, 1
        %v3552 = vadd.f32 %v3550, %v3551
        %v3553 = vadd.f32 %v2837, %v3552
        %v3554 = vld [vmem:[%s1397 + $0x180] sm:$0xff]
        %v3555 = vld [vmem:[%s1397 + $0x188] sm:$0xff]
        %v3556 = vld [vmem:[%s1397 + $0x190] sm:$0xff]
        %v3557 = vld [vmem:[%s1397 + $0x198] sm:$0xff]
        %v3558 = vld [vmem:[%s1397 + $0x1a0] sm:$0xff]
        %v3559 = vld [vmem:[%s1397 + $0x1a8] sm:$0xff]
        %v3560 = vld [vmem:[%s1397 + $0x1b0] sm:$0xff]
        %v3561 = vld [vmem:[%s1397 + $0x1b8] sm:$0xff]
        %v3562 = vld [vmem:[%s1397 + $0x1c0] sm:$0xff]
        %v3563 = vld [vmem:[%s1397 + $0x1c8] sm:$0xff]
        %v3564 = vld [vmem:[%s1397 + $0x1d0] sm:$0xff]
        %v3565 = vld [vmem:[%s1397 + $0x1d8] sm:$0xff]
        %v3566 = vld [vmem:[%s1397 + $0x1e0] sm:$0xff]
        %v3567 = vld [vmem:[%s1397 + $0x1e8] sm:$0xff]
        %v3568 = vld [vmem:[%s1397 + $0x1f0] sm:$0xff]
        %v3569 = vld [vmem:[%s1397 + $0x1f8] sm:$0xff]
        %v3570 = vmul.f32 %v3468, %v3554
        %v3571 = vmul.f32 %v3469, %v3555
        %v3572 = vmul.f32 %v3470, %v3556
        %v3573 = vmul.f32 %v3471, %v3557
        %v3574 = vmul.f32 %v3472, %v3558
        %v3575 = vmul.f32 %v3473, %v3559
        %v3576 = vmul.f32 %v3474, %v3560
        %v3577 = vmul.f32 %v3475, %v3561
        %v3578 = vmul.f32 %v3476, %v3562
        %v3579 = vmul.f32 %v3477, %v3563
        %v3580 = vmul.f32 %v3478, %v3564
        %v3581 = vmul.f32 %v3479, %v3565
        %v3582 = vmul.f32 %v3480, %v3566
        %v3583 = vmul.f32 %v3481, %v3567
        %v3584 = vmul.f32 %v3482, %v3568
        %v3585 = vmul.f32 %v3483, %v3569
        %v3586 = vsel %vm1358, %v3570, 0.0
        %v3587 = vsel %vm1358, %v3571, 0.0
        %v3588 = vadd.f32 %v3586, %v3587
        %v3589 = vsel %vm1358, %v3572, 0.0
        %v3590 = vadd.f32 %v3588, %v3589
        %v3591 = vsel %vm1358, %v3573, 0.0
        %v3592 = vadd.f32 %v3590, %v3591
        %v3593 = vsel %vm1358, %v3574, 0.0
        %v3594 = vadd.f32 %v3592, %v3593
        %v3595 = vsel %vm1358, %v3575, 0.0
        %v3596 = vadd.f32 %v3594, %v3595
        %v3597 = vsel %vm1358, %v3576, 0.0
        %v3598 = vadd.f32 %v3596, %v3597
        %v3599 = vsel %vm1358, %v3577, 0.0
        %v3600 = vadd.f32 %v3598, %v3599
        %v3601 = vsel %vm1358, %v3578, 0.0
        %v3602 = vadd.f32 %v3600, %v3601
        %v3603 = vsel %vm1358, %v3579, 0.0
        %v3604 = vadd.f32 %v3602, %v3603
        %v3605 = vsel %vm1358, %v3580, 0.0
        %v3606 = vadd.f32 %v3604, %v3605
        %v3607 = vsel %vm1358, %v3581, 0.0
        %v3608 = vadd.f32 %v3606, %v3607
        %v3609 = vsel %vm1358, %v3582, 0.0
        %v3610 = vadd.f32 %v3608, %v3609
        %v3611 = vsel %vm1358, %v3583, 0.0
        %v3612 = vadd.f32 %v3610, %v3611
        %v3613 = vsel %vm1358, %v3584, 0.0
        %v3614 = vadd.f32 %v3612, %v3613
        %v3615 = vsel %vm1358, %v3585, 0.0
        %v3616 = vadd.f32 %v3614, %v3615
        %v3617 = vrot.slane %v3616, 4
        %v3618 = vadd.f32 %v3616, %v3617
        %v3619 = vrot.slane %v3618, 2
        %v3620 = vadd.f32 %v3618, %v3619
        %v3621 = vrot.slane %v3620, 1
        %v3622 = vadd.f32 %v3620, %v3621
        %v3623 = vadd.f32 %v2907, %v3622
        %v3624 = vld [vmem:[%s1468 + $0x180] sm:$0xff]
        %v3625 = vld [vmem:[%s1468 + $0x188] sm:$0xff]
        %v3626 = vld [vmem:[%s1468 + $0x190] sm:$0xff]
        %v3627 = vld [vmem:[%s1468 + $0x198] sm:$0xff]
        %v3628 = vld [vmem:[%s1468 + $0x1a0] sm:$0xff]
        %v3629 = vld [vmem:[%s1468 + $0x1a8] sm:$0xff]
        %v3630 = vld [vmem:[%s1468 + $0x1b0] sm:$0xff]
        %v3631 = vld [vmem:[%s1468 + $0x1b8] sm:$0xff]
        %v3632 = vld [vmem:[%s1468 + $0x1c0] sm:$0xff]
        %v3633 = vld [vmem:[%s1468 + $0x1c8] sm:$0xff]
        %v3634 = vld [vmem:[%s1468 + $0x1d0] sm:$0xff]
        %v3635 = vld [vmem:[%s1468 + $0x1d8] sm:$0xff]
        %v3636 = vld [vmem:[%s1468 + $0x1e0] sm:$0xff]
        %v3637 = vld [vmem:[%s1468 + $0x1e8] sm:$0xff]
        %v3638 = vld [vmem:[%s1468 + $0x1f0] sm:$0xff]
        %v3639 = vld [vmem:[%s1468 + $0x1f8] sm:$0xff]
        %v3640 = vmul.f32 %v3468, %v3624
        %v3641 = vmul.f32 %v3469, %v3625
        %v3642 = vmul.f32 %v3470, %v3626
        %v3643 = vmul.f32 %v3471, %v3627
        %v3644 = vmul.f32 %v3472, %v3628
        %v3645 = vmul.f32 %v3473, %v3629
        %v3646 = vmul.f32 %v3474, %v3630
        %v3647 = vmul.f32 %v3475, %v3631
        %v3648 = vmul.f32 %v3476, %v3632
        %v3649 = vmul.f32 %v3477, %v3633
        %v3650 = vmul.f32 %v3478, %v3634
        %v3651 = vmul.f32 %v3479, %v3635
        %v3652 = vmul.f32 %v3480, %v3636
        %v3653 = vmul.f32 %v3481, %v3637
        %v3654 = vmul.f32 %v3482, %v3638
        %v3655 = vmul.f32 %v3483, %v3639
        %v3656 = vsel %vm1358, %v3640, 0.0
        %v3657 = vsel %vm1358, %v3641, 0.0
        %v3658 = vadd.f32 %v3656, %v3657
        %v3659 = vsel %vm1358, %v3642, 0.0
        %v3660 = vadd.f32 %v3658, %v3659
        %v3661 = vsel %vm1358, %v3643, 0.0
        %v3662 = vadd.f32 %v3660, %v3661
        %v3663 = vsel %vm1358, %v3644, 0.0
        %v3664 = vadd.f32 %v3662, %v3663
        %v3665 = vsel %vm1358, %v3645, 0.0
        %v3666 = vadd.f32 %v3664, %v3665
        %v3667 = vsel %vm1358, %v3646, 0.0
        %v3668 = vadd.f32 %v3666, %v3667
        %v3669 = vsel %vm1358, %v3647, 0.0
        %v3670 = vadd.f32 %v3668, %v3669
        %v3671 = vsel %vm1358, %v3648, 0.0
        %v3672 = vadd.f32 %v3670, %v3671
        %v3673 = vsel %vm1358, %v3649, 0.0
        %v3674 = vadd.f32 %v3672, %v3673
        %v3675 = vsel %vm1358, %v3650, 0.0
        %v3676 = vadd.f32 %v3674, %v3675
        %v3677 = vsel %vm1358, %v3651, 0.0
        %v3678 = vadd.f32 %v3676, %v3677
        %v3679 = vsel %vm1358, %v3652, 0.0
        %v3680 = vadd.f32 %v3678, %v3679
        %v3681 = vsel %vm1358, %v3653, 0.0
        %v3682 = vadd.f32 %v3680, %v3681
        %v3683 = vsel %vm1358, %v3654, 0.0
        %v3684 = vadd.f32 %v3682, %v3683
        %v3685 = vsel %vm1358, %v3655, 0.0
        %v3686 = vadd.f32 %v3684, %v3685
        %v3687 = vrot.slane %v3686, 4
        %v3688 = vadd.f32 %v3686, %v3687
        %v3689 = vrot.slane %v3688, 2
        %v3690 = vadd.f32 %v3688, %v3689
        %v3691 = vrot.slane %v3690, 1
        %v3692 = vadd.f32 %v3690, %v3691
        %v3693 = vadd.f32 %v2977, %v3692
        %v3694 = vld [vmem:[%s1539 + $0x180] sm:$0xff]
        %v3695 = vld [vmem:[%s1539 + $0x188] sm:$0xff]
        %v3696 = vld [vmem:[%s1539 + $0x190] sm:$0xff]
        %v3697 = vld [vmem:[%s1539 + $0x198] sm:$0xff]
        %v3698 = vld [vmem:[%s1539 + $0x1a0] sm:$0xff]
        %v3699 = vld [vmem:[%s1539 + $0x1a8] sm:$0xff]
        %v3700 = vld [vmem:[%s1539 + $0x1b0] sm:$0xff]
        %v3701 = vld [vmem:[%s1539 + $0x1b8] sm:$0xff]
        %v3702 = vld [vmem:[%s1539 + $0x1c0] sm:$0xff]
        %v3703 = vld [vmem:[%s1539 + $0x1c8] sm:$0xff]
        %v3704 = vld [vmem:[%s1539 + $0x1d0] sm:$0xff]
        %v3705 = vld [vmem:[%s1539 + $0x1d8] sm:$0xff]
        %v3706 = vld [vmem:[%s1539 + $0x1e0] sm:$0xff]
        %v3707 = vld [vmem:[%s1539 + $0x1e8] sm:$0xff]
        %v3708 = vld [vmem:[%s1539 + $0x1f0] sm:$0xff]
        %v3709 = vld [vmem:[%s1539 + $0x1f8] sm:$0xff]
        %v3710 = vmul.f32 %v3468, %v3694
        %v3711 = vmul.f32 %v3469, %v3695
        %v3712 = vmul.f32 %v3470, %v3696
        %v3713 = vmul.f32 %v3471, %v3697
        %v3714 = vmul.f32 %v3472, %v3698
        %v3715 = vmul.f32 %v3473, %v3699
        %v3716 = vmul.f32 %v3474, %v3700
        %v3717 = vmul.f32 %v3475, %v3701
        %v3718 = vmul.f32 %v3476, %v3702
        %v3719 = vmul.f32 %v3477, %v3703
        %v3720 = vmul.f32 %v3478, %v3704
        %v3721 = vmul.f32 %v3479, %v3705
        %v3722 = vmul.f32 %v3480, %v3706
        %v3723 = vmul.f32 %v3481, %v3707
        %v3724 = vmul.f32 %v3482, %v3708
        %v3725 = vmul.f32 %v3483, %v3709
        %v3726 = vsel %vm1358, %v3710, 0.0
        %v3727 = vsel %vm1358, %v3711, 0.0
        %v3728 = vadd.f32 %v3726, %v3727
        %v3729 = vsel %vm1358, %v3712, 0.0
        %v3730 = vadd.f32 %v3728, %v3729
        %v3731 = vsel %vm1358, %v3713, 0.0
        %v3732 = vadd.f32 %v3730, %v3731
        %v3733 = vsel %vm1358, %v3714, 0.0
        %v3734 = vadd.f32 %v3732, %v3733
        %v3735 = vsel %vm1358, %v3715, 0.0
        %v3736 = vadd.f32 %v3734, %v3735
        %v3737 = vsel %vm1358, %v3716, 0.0
        %v3738 = vadd.f32 %v3736, %v3737
        %v3739 = vsel %vm1358, %v3717, 0.0
        %v3740 = vadd.f32 %v3738, %v3739
        %v3741 = vsel %vm1358, %v3718, 0.0
        %v3742 = vadd.f32 %v3740, %v3741
        %v3743 = vsel %vm1358, %v3719, 0.0
        %v3744 = vadd.f32 %v3742, %v3743
        %v3745 = vsel %vm1358, %v3720, 0.0
        %v3746 = vadd.f32 %v3744, %v3745
        %v3747 = vsel %vm1358, %v3721, 0.0
        %v3748 = vadd.f32 %v3746, %v3747
        %v3749 = vsel %vm1358, %v3722, 0.0
        %v3750 = vadd.f32 %v3748, %v3749
        %v3751 = vsel %vm1358, %v3723, 0.0
        %v3752 = vadd.f32 %v3750, %v3751
        %v3753 = vsel %vm1358, %v3724, 0.0
        %v3754 = vadd.f32 %v3752, %v3753
        %v3755 = vsel %vm1358, %v3725, 0.0
        %v3756 = vadd.f32 %v3754, %v3755
        %v3757 = vrot.slane %v3756, 4
        %v3758 = vadd.f32 %v3756, %v3757
        %v3759 = vrot.slane %v3758, 2
        %v3760 = vadd.f32 %v3758, %v3759
        %v3761 = vrot.slane %v3760, 1
        %v3762 = vadd.f32 %v3760, %v3761
        %v3763 = vadd.f32 %v3047, %v3762
        %v3764 = vld [vmem:[%s1610 + $0x180] sm:$0xff]
        %v3765 = vld [vmem:[%s1610 + $0x188] sm:$0xff]
        %v3766 = vld [vmem:[%s1610 + $0x190] sm:$0xff]
        %v3767 = vld [vmem:[%s1610 + $0x198] sm:$0xff]
        %v3768 = vld [vmem:[%s1610 + $0x1a0] sm:$0xff]
        %v3769 = vld [vmem:[%s1610 + $0x1a8] sm:$0xff]
        %v3770 = vld [vmem:[%s1610 + $0x1b0] sm:$0xff]
        %v3771 = vld [vmem:[%s1610 + $0x1b8] sm:$0xff]
        %v3772 = vld [vmem:[%s1610 + $0x1c0] sm:$0xff]
        %v3773 = vld [vmem:[%s1610 + $0x1c8] sm:$0xff]
        %v3774 = vld [vmem:[%s1610 + $0x1d0] sm:$0xff]
        %v3775 = vld [vmem:[%s1610 + $0x1d8] sm:$0xff]
        %v3776 = vld [vmem:[%s1610 + $0x1e0] sm:$0xff]
        %v3777 = vld [vmem:[%s1610 + $0x1e8] sm:$0xff]
        %v3778 = vld [vmem:[%s1610 + $0x1f0] sm:$0xff]
        %v3779 = vld [vmem:[%s1610 + $0x1f8] sm:$0xff]
        %v3780 = vmul.f32 %v3468, %v3764
        %v3781 = vmul.f32 %v3469, %v3765
        %v3782 = vmul.f32 %v3470, %v3766
        %v3783 = vmul.f32 %v3471, %v3767
        %v3784 = vmul.f32 %v3472, %v3768
        %v3785 = vmul.f32 %v3473, %v3769
        %v3786 = vmul.f32 %v3474, %v3770
        %v3787 = vmul.f32 %v3475, %v3771
        %v3788 = vmul.f32 %v3476, %v3772
        %v3789 = vmul.f32 %v3477, %v3773
        %v3790 = vmul.f32 %v3478, %v3774
        %v3791 = vmul.f32 %v3479, %v3775
        %v3792 = vmul.f32 %v3480, %v3776
        %v3793 = vmul.f32 %v3481, %v3777
        %v3794 = vmul.f32 %v3482, %v3778
        %v3795 = vmul.f32 %v3483, %v3779
        %v3796 = vsel %vm1358, %v3780, 0.0
        %v3797 = vsel %vm1358, %v3781, 0.0
        %v3798 = vadd.f32 %v3796, %v3797
        %v3799 = vsel %vm1358, %v3782, 0.0
        %v3800 = vadd.f32 %v3798, %v3799
        %v3801 = vsel %vm1358, %v3783, 0.0
        %v3802 = vadd.f32 %v3800, %v3801
        %v3803 = vsel %vm1358, %v3784, 0.0
        %v3804 = vadd.f32 %v3802, %v3803
        %v3805 = vsel %vm1358, %v3785, 0.0
        %v3806 = vadd.f32 %v3804, %v3805
        %v3807 = vsel %vm1358, %v3786, 0.0
        %v3808 = vadd.f32 %v3806, %v3807
        %v3809 = vsel %vm1358, %v3787, 0.0
        %v3810 = vadd.f32 %v3808, %v3809
        %v3811 = vsel %vm1358, %v3788, 0.0
        %v3812 = vadd.f32 %v3810, %v3811
        %v3813 = vsel %vm1358, %v3789, 0.0
        %v3814 = vadd.f32 %v3812, %v3813
        %v3815 = vsel %vm1358, %v3790, 0.0
        %v3816 = vadd.f32 %v3814, %v3815
        %v3817 = vsel %vm1358, %v3791, 0.0
        %v3818 = vadd.f32 %v3816, %v3817
        %v3819 = vsel %vm1358, %v3792, 0.0
        %v3820 = vadd.f32 %v3818, %v3819
        %v3821 = vsel %vm1358, %v3793, 0.0
        %v3822 = vadd.f32 %v3820, %v3821
        %v3823 = vsel %vm1358, %v3794, 0.0
        %v3824 = vadd.f32 %v3822, %v3823
        %v3825 = vsel %vm1358, %v3795, 0.0
        %v3826 = vadd.f32 %v3824, %v3825
        %v3827 = vrot.slane %v3826, 4
        %v3828 = vadd.f32 %v3826, %v3827
        %v3829 = vrot.slane %v3828, 2
        %v3830 = vadd.f32 %v3828, %v3829
        %v3831 = vrot.slane %v3830, 1
        %v3832 = vadd.f32 %v3830, %v3831
        %v3833 = vadd.f32 %v3117, %v3832
        %v3834 = vld [vmem:[%s1681 + $0x180] sm:$0xff]
        %v3835 = vld [vmem:[%s1681 + $0x188] sm:$0xff]
        %v3836 = vld [vmem:[%s1681 + $0x190] sm:$0xff]
        %v3837 = vld [vmem:[%s1681 + $0x198] sm:$0xff]
        %v3838 = vld [vmem:[%s1681 + $0x1a0] sm:$0xff]
        %v3839 = vld [vmem:[%s1681 + $0x1a8] sm:$0xff]
        %v3840 = vld [vmem:[%s1681 + $0x1b0] sm:$0xff]
        %v3841 = vld [vmem:[%s1681 + $0x1b8] sm:$0xff]
        %v3842 = vld [vmem:[%s1681 + $0x1c0] sm:$0xff]
        %v3843 = vld [vmem:[%s1681 + $0x1c8] sm:$0xff]
        %v3844 = vld [vmem:[%s1681 + $0x1d0] sm:$0xff]
        %v3845 = vld [vmem:[%s1681 + $0x1d8] sm:$0xff]
        %v3846 = vld [vmem:[%s1681 + $0x1e0] sm:$0xff]
        %v3847 = vld [vmem:[%s1681 + $0x1e8] sm:$0xff]
        %v3848 = vld [vmem:[%s1681 + $0x1f0] sm:$0xff]
        %v3849 = vld [vmem:[%s1681 + $0x1f8] sm:$0xff]
        %v3850 = vmul.f32 %v3468, %v3834
        %v3851 = vmul.f32 %v3469, %v3835
        %v3852 = vmul.f32 %v3470, %v3836
        %v3853 = vmul.f32 %v3471, %v3837
        %v3854 = vmul.f32 %v3472, %v3838
        %v3855 = vmul.f32 %v3473, %v3839
        %v3856 = vmul.f32 %v3474, %v3840
        %v3857 = vmul.f32 %v3475, %v3841
        %v3858 = vmul.f32 %v3476, %v3842
        %v3859 = vmul.f32 %v3477, %v3843
        %v3860 = vmul.f32 %v3478, %v3844
        %v3861 = vmul.f32 %v3479, %v3845
        %v3862 = vmul.f32 %v3480, %v3846
        %v3863 = vmul.f32 %v3481, %v3847
        %v3864 = vmul.f32 %v3482, %v3848
        %v3865 = vmul.f32 %v3483, %v3849
        %v3866 = vsel %vm1358, %v3850, 0.0
        %v3867 = vsel %vm1358, %v3851, 0.0
        %v3868 = vadd.f32 %v3866, %v3867
        %v3869 = vsel %vm1358, %v3852, 0.0
        %v3870 = vadd.f32 %v3868, %v3869
        %v3871 = vsel %vm1358, %v3853, 0.0
        %v3872 = vadd.f32 %v3870, %v3871
        %v3873 = vsel %vm1358, %v3854, 0.0
        %v3874 = vadd.f32 %v3872, %v3873
        %v3875 = vsel %vm1358, %v3855, 0.0
        %v3876 = vadd.f32 %v3874, %v3875
        %v3877 = vsel %vm1358, %v3856, 0.0
        %v3878 = vadd.f32 %v3876, %v3877
        %v3879 = vsel %vm1358, %v3857, 0.0
        %v3880 = vadd.f32 %v3878, %v3879
        %v3881 = vsel %vm1358, %v3858, 0.0
        %v3882 = vadd.f32 %v3880, %v3881
        %v3883 = vsel %vm1358, %v3859, 0.0
        %v3884 = vadd.f32 %v3882, %v3883
        %v3885 = vsel %vm1358, %v3860, 0.0
        %v3886 = vadd.f32 %v3884, %v3885
        %v3887 = vsel %vm1358, %v3861, 0.0
        %v3888 = vadd.f32 %v3886, %v3887
        %v3889 = vsel %vm1358, %v3862, 0.0
        %v3890 = vadd.f32 %v3888, %v3889
        %v3891 = vsel %vm1358, %v3863, 0.0
        %v3892 = vadd.f32 %v3890, %v3891
        %v3893 = vsel %vm1358, %v3864, 0.0
        %v3894 = vadd.f32 %v3892, %v3893
        %v3895 = vsel %vm1358, %v3865, 0.0
        %v3896 = vadd.f32 %v3894, %v3895
        %v3897 = vrot.slane %v3896, 4
        %v3898 = vadd.f32 %v3896, %v3897
        %v3899 = vrot.slane %v3898, 2
        %v3900 = vadd.f32 %v3898, %v3899
        %v3901 = vrot.slane %v3900, 1
        %v3902 = vadd.f32 %v3900, %v3901
        %v3903 = vadd.f32 %v3187, %v3902
        %v3904 = vld [vmem:[%s1752 + $0x180] sm:$0xff]
        %v3905 = vld [vmem:[%s1752 + $0x188] sm:$0xff]
        %v3906 = vld [vmem:[%s1752 + $0x190] sm:$0xff]
        %v3907 = vld [vmem:[%s1752 + $0x198] sm:$0xff]
        %v3908 = vld [vmem:[%s1752 + $0x1a0] sm:$0xff]
        %v3909 = vld [vmem:[%s1752 + $0x1a8] sm:$0xff]
        %v3910 = vld [vmem:[%s1752 + $0x1b0] sm:$0xff]
        %v3911 = vld [vmem:[%s1752 + $0x1b8] sm:$0xff]
        %v3912 = vld [vmem:[%s1752 + $0x1c0] sm:$0xff]
        %v3913 = vld [vmem:[%s1752 + $0x1c8] sm:$0xff]
        %v3914 = vld [vmem:[%s1752 + $0x1d0] sm:$0xff]
        %v3915 = vld [vmem:[%s1752 + $0x1d8] sm:$0xff]
        %v3916 = vld [vmem:[%s1752 + $0x1e0] sm:$0xff]
        %v3917 = vld [vmem:[%s1752 + $0x1e8] sm:$0xff]
        %v3918 = vld [vmem:[%s1752 + $0x1f0] sm:$0xff]
        %v3919 = vld [vmem:[%s1752 + $0x1f8] sm:$0xff]
        %v3920 = vmul.f32 %v3468, %v3904
        %v3921 = vmul.f32 %v3469, %v3905
        %v3922 = vmul.f32 %v3470, %v3906
        %v3923 = vmul.f32 %v3471, %v3907
        %v3924 = vmul.f32 %v3472, %v3908
        %v3925 = vmul.f32 %v3473, %v3909
        %v3926 = vmul.f32 %v3474, %v3910
        %v3927 = vmul.f32 %v3475, %v3911
        %v3928 = vmul.f32 %v3476, %v3912
        %v3929 = vmul.f32 %v3477, %v3913
        %v3930 = vmul.f32 %v3478, %v3914
        %v3931 = vmul.f32 %v3479, %v3915
        %v3932 = vmul.f32 %v3480, %v3916
        %v3933 = vmul.f32 %v3481, %v3917
        %v3934 = vmul.f32 %v3482, %v3918
        %v3935 = vmul.f32 %v3483, %v3919
        %v3936 = vsel %vm1358, %v3920, 0.0
        %v3937 = vsel %vm1358, %v3921, 0.0
        %v3938 = vadd.f32 %v3936, %v3937
        %v3939 = vsel %vm1358, %v3922, 0.0
        %v3940 = vadd.f32 %v3938, %v3939
        %v3941 = vsel %vm1358, %v3923, 0.0
        %v3942 = vadd.f32 %v3940, %v3941
        %v3943 = vsel %vm1358, %v3924, 0.0
        %v3944 = vadd.f32 %v3942, %v3943
        %v3945 = vsel %vm1358, %v3925, 0.0
        %v3946 = vadd.f32 %v3944, %v3945
        %v3947 = vsel %vm1358, %v3926, 0.0
        %v3948 = vadd.f32 %v3946, %v3947
        %v3949 = vsel %vm1358, %v3927, 0.0
        %v3950 = vadd.f32 %v3948, %v3949
        %v3951 = vsel %vm1358, %v3928, 0.0
        %v3952 = vadd.f32 %v3950, %v3951
        %v3953 = vsel %vm1358, %v3929, 0.0
        %v3954 = vadd.f32 %v3952, %v3953
        %v3955 = vsel %vm1358, %v3930, 0.0
        %v3956 = vadd.f32 %v3954, %v3955
        %v3957 = vsel %vm1358, %v3931, 0.0
        %v3958 = vadd.f32 %v3956, %v3957
        %v3959 = vsel %vm1358, %v3932, 0.0
        %v3960 = vadd.f32 %v3958, %v3959
        %v3961 = vsel %vm1358, %v3933, 0.0
        %v3962 = vadd.f32 %v3960, %v3961
        %v3963 = vsel %vm1358, %v3934, 0.0
        %v3964 = vadd.f32 %v3962, %v3963
        %v3965 = vsel %vm1358, %v3935, 0.0
        %v3966 = vadd.f32 %v3964, %v3965
        %v3967 = vrot.slane %v3966, 4
        %v3968 = vadd.f32 %v3966, %v3967
        %v3969 = vrot.slane %v3968, 2
        %v3970 = vadd.f32 %v3968, %v3969
        %v3971 = vrot.slane %v3970, 1
        %v3972 = vadd.f32 %v3970, %v3971
        %v3973 = vadd.f32 %v3257, %v3972
        %v3974 = vld [vmem:[%s1823 + $0x180] sm:$0xff]
        %v3975 = vld [vmem:[%s1823 + $0x188] sm:$0xff]
        %v3976 = vld [vmem:[%s1823 + $0x190] sm:$0xff]
        %v3977 = vld [vmem:[%s1823 + $0x198] sm:$0xff]
        %v3978 = vld [vmem:[%s1823 + $0x1a0] sm:$0xff]
        %v3979 = vld [vmem:[%s1823 + $0x1a8] sm:$0xff]
        %v3980 = vld [vmem:[%s1823 + $0x1b0] sm:$0xff]
        %v3981 = vld [vmem:[%s1823 + $0x1b8] sm:$0xff]
        %v3982 = vld [vmem:[%s1823 + $0x1c0] sm:$0xff]
        %v3983 = vld [vmem:[%s1823 + $0x1c8] sm:$0xff]
        %v3984 = vld [vmem:[%s1823 + $0x1d0] sm:$0xff]
        %v3985 = vld [vmem:[%s1823 + $0x1d8] sm:$0xff]
        %v3986 = vld [vmem:[%s1823 + $0x1e0] sm:$0xff]
        %v3987 = vld [vmem:[%s1823 + $0x1e8] sm:$0xff]
        %v3988 = vld [vmem:[%s1823 + $0x1f0] sm:$0xff]
        %v3989 = vld [vmem:[%s1823 + $0x1f8] sm:$0xff]
        %v3990 = vmul.f32 %v3468, %v3974
        %v3991 = vmul.f32 %v3469, %v3975
        %v3992 = vmul.f32 %v3470, %v3976
        %v3993 = vmul.f32 %v3471, %v3977
        %v3994 = vmul.f32 %v3472, %v3978
        %v3995 = vmul.f32 %v3473, %v3979
        %v3996 = vmul.f32 %v3474, %v3980
        %v3997 = vmul.f32 %v3475, %v3981
        %v3998 = vmul.f32 %v3476, %v3982
        %v3999 = vmul.f32 %v3477, %v3983
        %v4000 = vmul.f32 %v3478, %v3984
        %v4001 = vmul.f32 %v3479, %v3985
        %v4002 = vmul.f32 %v3480, %v3986
        %v4003 = vmul.f32 %v3481, %v3987
        %v4004 = vmul.f32 %v3482, %v3988
        %v4005 = vmul.f32 %v3483, %v3989
        %v4006 = vsel %vm1358, %v3990, 0.0
        %v4007 = vsel %vm1358, %v3991, 0.0
        %v4008 = vadd.f32 %v4006, %v4007
        %v4009 = vsel %vm1358, %v3992, 0.0
        %v4010 = vadd.f32 %v4008, %v4009
        %v4011 = vsel %vm1358, %v3993, 0.0
        %v4012 = vadd.f32 %v4010, %v4011
        %v4013 = vsel %vm1358, %v3994, 0.0
        %v4014 = vadd.f32 %v4012, %v4013
        %v4015 = vsel %vm1358, %v3995, 0.0
        %v4016 = vadd.f32 %v4014, %v4015
        %v4017 = vsel %vm1358, %v3996, 0.0
        %v4018 = vadd.f32 %v4016, %v4017
        %v4019 = vsel %vm1358, %v3997, 0.0
        %v4020 = vadd.f32 %v4018, %v4019
        %v4021 = vsel %vm1358, %v3998, 0.0
        %v4022 = vadd.f32 %v4020, %v4021
        %v4023 = vsel %vm1358, %v3999, 0.0
        %v4024 = vadd.f32 %v4022, %v4023
        %v4025 = vsel %vm1358, %v4000, 0.0
        %v4026 = vadd.f32 %v4024, %v4025
        %v4027 = vsel %vm1358, %v4001, 0.0
        %v4028 = vadd.f32 %v4026, %v4027
        %v4029 = vsel %vm1358, %v4002, 0.0
        %v4030 = vadd.f32 %v4028, %v4029
        %v4031 = vsel %vm1358, %v4003, 0.0
        %v4032 = vadd.f32 %v4030, %v4031
        %v4033 = vsel %vm1358, %v4004, 0.0
        %v4034 = vadd.f32 %v4032, %v4033
        %v4035 = vsel %vm1358, %v4005, 0.0
        %v4036 = vadd.f32 %v4034, %v4035
        %v4037 = vrot.slane %v4036, 4
        %v4038 = vadd.f32 %v4036, %v4037
        %v4039 = vrot.slane %v4038, 2
        %v4040 = vadd.f32 %v4038, %v4039
        %v4041 = vrot.slane %v4040, 1
        %v4042 = vadd.f32 %v4040, %v4041
        %v4043 = vadd.f32 %v3327, %v4042
        %v4044 = vld [vmem:[%s1894 + $0x180] sm:$0xff]
        %v4045 = vld [vmem:[%s1894 + $0x188] sm:$0xff]
        %v4046 = vld [vmem:[%s1894 + $0x190] sm:$0xff]
        %v4047 = vld [vmem:[%s1894 + $0x198] sm:$0xff]
        %v4048 = vld [vmem:[%s1894 + $0x1a0] sm:$0xff]
        %v4049 = vld [vmem:[%s1894 + $0x1a8] sm:$0xff]
        %v4050 = vld [vmem:[%s1894 + $0x1b0] sm:$0xff]
        %v4051 = vld [vmem:[%s1894 + $0x1b8] sm:$0xff]
        %v4052 = vld [vmem:[%s1894 + $0x1c0] sm:$0xff]
        %v4053 = vld [vmem:[%s1894 + $0x1c8] sm:$0xff]
        %v4054 = vld [vmem:[%s1894 + $0x1d0] sm:$0xff]
        %v4055 = vld [vmem:[%s1894 + $0x1d8] sm:$0xff]
        %v4056 = vld [vmem:[%s1894 + $0x1e0] sm:$0xff]
        %v4057 = vld [vmem:[%s1894 + $0x1e8] sm:$0xff]
        %v4058 = vld [vmem:[%s1894 + $0x1f0] sm:$0xff]
        %v4059 = vld [vmem:[%s1894 + $0x1f8] sm:$0xff]
        %v4060 = vmul.f32 %v3468, %v4044
        %v4061 = vmul.f32 %v3469, %v4045
        %v4062 = vmul.f32 %v3470, %v4046
        %v4063 = vmul.f32 %v3471, %v4047
        %v4064 = vmul.f32 %v3472, %v4048
        %v4065 = vmul.f32 %v3473, %v4049
        %v4066 = vmul.f32 %v3474, %v4050
        %v4067 = vmul.f32 %v3475, %v4051
        %v4068 = vmul.f32 %v3476, %v4052
        %v4069 = vmul.f32 %v3477, %v4053
        %v4070 = vmul.f32 %v3478, %v4054
        %v4071 = vmul.f32 %v3479, %v4055
        %v4072 = vmul.f32 %v3480, %v4056
        %v4073 = vmul.f32 %v3481, %v4057
        %v4074 = vmul.f32 %v3482, %v4058
        %v4075 = vmul.f32 %v3483, %v4059
        %v4076 = vsel %vm1358, %v4060, 0.0
        %v4077 = vsel %vm1358, %v4061, 0.0
        %v4078 = vadd.f32 %v4076, %v4077
        %v4079 = vsel %vm1358, %v4062, 0.0
        %v4080 = vadd.f32 %v4078, %v4079
        %v4081 = vsel %vm1358, %v4063, 0.0
        %v4082 = vadd.f32 %v4080, %v4081
        %v4083 = vsel %vm1358, %v4064, 0.0
        %v4084 = vadd.f32 %v4082, %v4083
        %v4085 = vsel %vm1358, %v4065, 0.0
        %v4086 = vadd.f32 %v4084, %v4085
        %v4087 = vsel %vm1358, %v4066, 0.0
        %v4088 = vadd.f32 %v4086, %v4087
        %v4089 = vsel %vm1358, %v4067, 0.0
        %v4090 = vadd.f32 %v4088, %v4089
        %v4091 = vsel %vm1358, %v4068, 0.0
        %v4092 = vadd.f32 %v4090, %v4091
        %v4093 = vsel %vm1358, %v4069, 0.0
        %v4094 = vadd.f32 %v4092, %v4093
        %v4095 = vsel %vm1358, %v4070, 0.0
        %v4096 = vadd.f32 %v4094, %v4095
        %v4097 = vsel %vm1358, %v4071, 0.0
        %v4098 = vadd.f32 %v4096, %v4097
        %v4099 = vsel %vm1358, %v4072, 0.0
        %v4100 = vadd.f32 %v4098, %v4099
        %v4101 = vsel %vm1358, %v4073, 0.0
        %v4102 = vadd.f32 %v4100, %v4101
        %v4103 = vsel %vm1358, %v4074, 0.0
        %v4104 = vadd.f32 %v4102, %v4103
        %v4105 = vsel %vm1358, %v4075, 0.0
        %v4106 = vadd.f32 %v4104, %v4105
        %v4107 = vrot.slane %v4106, 4
        %v4108 = vadd.f32 %v4106, %v4107
        %v4109 = vrot.slane %v4108, 2
        %v4110 = vadd.f32 %v4108, %v4109
        %v4111 = vrot.slane %v4110, 1
        %v4112 = vadd.f32 %v4110, %v4111
        %v4113 = vadd.f32 %v3397, %v4112
        %v4114 = vld [vmem:[%s1965 + $0x180] sm:$0xff]
        %v4115 = vld [vmem:[%s1965 + $0x188] sm:$0xff]
        %v4116 = vld [vmem:[%s1965 + $0x190] sm:$0xff]
        %v4117 = vld [vmem:[%s1965 + $0x198] sm:$0xff]
        %v4118 = vld [vmem:[%s1965 + $0x1a0] sm:$0xff]
        %v4119 = vld [vmem:[%s1965 + $0x1a8] sm:$0xff]
        %v4120 = vld [vmem:[%s1965 + $0x1b0] sm:$0xff]
        %v4121 = vld [vmem:[%s1965 + $0x1b8] sm:$0xff]
        %v4122 = vld [vmem:[%s1965 + $0x1c0] sm:$0xff]
        %v4123 = vld [vmem:[%s1965 + $0x1c8] sm:$0xff]
        %v4124 = vld [vmem:[%s1965 + $0x1d0] sm:$0xff]
        %v4125 = vld [vmem:[%s1965 + $0x1d8] sm:$0xff]
        %v4126 = vld [vmem:[%s1965 + $0x1e0] sm:$0xff]
        %v4127 = vld [vmem:[%s1965 + $0x1e8] sm:$0xff]
        %v4128 = vld [vmem:[%s1965 + $0x1f0] sm:$0xff]
        %v4129 = vld [vmem:[%s1965 + $0x1f8] sm:$0xff]
        %v4130 = vmul.f32 %v3468, %v4114
        %v4131 = vmul.f32 %v3469, %v4115
        %v4132 = vmul.f32 %v3470, %v4116
        %v4133 = vmul.f32 %v3471, %v4117
        %v4134 = vmul.f32 %v3472, %v4118
        %v4135 = vmul.f32 %v3473, %v4119
        %v4136 = vmul.f32 %v3474, %v4120
        %v4137 = vmul.f32 %v3475, %v4121
        %v4138 = vmul.f32 %v3476, %v4122
        %v4139 = vmul.f32 %v3477, %v4123
        %v4140 = vmul.f32 %v3478, %v4124
        %v4141 = vmul.f32 %v3479, %v4125
        %v4142 = vmul.f32 %v3480, %v4126
        %v4143 = vmul.f32 %v3481, %v4127
        %v4144 = vmul.f32 %v3482, %v4128
        %v4145 = vmul.f32 %v3483, %v4129
        %v4146 = vsel %vm1358, %v4130, 0.0
        %v4147 = vsel %vm1358, %v4131, 0.0
        %v4148 = vadd.f32 %v4146, %v4147
        %v4149 = vsel %vm1358, %v4132, 0.0
        %v4150 = vadd.f32 %v4148, %v4149
        %v4151 = vsel %vm1358, %v4133, 0.0
        %v4152 = vadd.f32 %v4150, %v4151
        %v4153 = vsel %vm1358, %v4134, 0.0
        %v4154 = vadd.f32 %v4152, %v4153
        %v4155 = vsel %vm1358, %v4135, 0.0
        %v4156 = vadd.f32 %v4154, %v4155
        %v4157 = vsel %vm1358, %v4136, 0.0
        %v4158 = vadd.f32 %v4156, %v4157
        %v4159 = vsel %vm1358, %v4137, 0.0
        %v4160 = vadd.f32 %v4158, %v4159
        %v4161 = vsel %vm1358, %v4138, 0.0
        %v4162 = vadd.f32 %v4160, %v4161
        %v4163 = vsel %vm1358, %v4139, 0.0
        %v4164 = vadd.f32 %v4162, %v4163
        %v4165 = vsel %vm1358, %v4140, 0.0
        %v4166 = vadd.f32 %v4164, %v4165
        %v4167 = vsel %vm1358, %v4141, 0.0
        %v4168 = vadd.f32 %v4166, %v4167
        %v4169 = vsel %vm1358, %v4142, 0.0
        %v4170 = vadd.f32 %v4168, %v4169
        %v4171 = vsel %vm1358, %v4143, 0.0
        %v4172 = vadd.f32 %v4170, %v4171
        %v4173 = vsel %vm1358, %v4144, 0.0
        %v4174 = vadd.f32 %v4172, %v4173
        %v4175 = vsel %vm1358, %v4145, 0.0
        %v4176 = vadd.f32 %v4174, %v4175
        %v4177 = vrot.slane %v4176, 4
        %v4178 = vadd.f32 %v4176, %v4177
        %v4179 = vrot.slane %v4178, 2
        %v4180 = vadd.f32 %v4178, %v4179
        %v4181 = vrot.slane %v4180, 1
        %v4182 = vadd.f32 %v4180, %v4181
        %v4183 = vadd.f32 %v3467, %v4182
        %v4184 = vld [vmem:[#allocation3 + $0x200] sm:$0xff]
        %v4185 = vld [vmem:[#allocation3 + $0x208] sm:$0xff]
        %v4186 = vld [vmem:[#allocation3 + $0x210] sm:$0xff]
        %v4187 = vld [vmem:[#allocation3 + $0x218] sm:$0xff]
        %v4188 = vld [vmem:[#allocation3 + $0x220] sm:$0xff]
        %v4189 = vld [vmem:[#allocation3 + $0x228] sm:$0xff]
        %v4190 = vld [vmem:[#allocation3 + $0x230] sm:$0xff]
        %v4191 = vld [vmem:[#allocation3 + $0x238] sm:$0xff]
        %v4192 = vld [vmem:[#allocation3 + $0x240] sm:$0xff]
        %v4193 = vld [vmem:[#allocation3 + $0x248] sm:$0xff]
        %v4194 = vld [vmem:[#allocation3 + $0x250] sm:$0xff]
        %v4195 = vld [vmem:[#allocation3 + $0x258] sm:$0xff]
        %v4196 = vld [vmem:[#allocation3 + $0x260] sm:$0xff]
        %v4197 = vld [vmem:[#allocation3 + $0x268] sm:$0xff]
        %v4198 = vld [vmem:[#allocation3 + $0x270] sm:$0xff]
        %v4199 = vld [vmem:[#allocation3 + $0x278] sm:$0xff]
        %v4200 = vld [vmem:[%s3 + $0x200] sm:$0xff]
        %v4201 = vld [vmem:[%s3 + $0x208] sm:$0xff]
        %v4202 = vld [vmem:[%s3 + $0x210] sm:$0xff]
        %v4203 = vld [vmem:[%s3 + $0x218] sm:$0xff]
        %v4204 = vld [vmem:[%s3 + $0x220] sm:$0xff]
        %v4205 = vld [vmem:[%s3 + $0x228] sm:$0xff]
        %v4206 = vld [vmem:[%s3 + $0x230] sm:$0xff]
        %v4207 = vld [vmem:[%s3 + $0x238] sm:$0xff]
        %v4208 = vld [vmem:[%s3 + $0x240] sm:$0xff]
        %v4209 = vld [vmem:[%s3 + $0x248] sm:$0xff]
        %v4210 = vld [vmem:[%s3 + $0x250] sm:$0xff]
        %v4211 = vld [vmem:[%s3 + $0x258] sm:$0xff]
        %v4212 = vld [vmem:[%s3 + $0x260] sm:$0xff]
        %v4213 = vld [vmem:[%s3 + $0x268] sm:$0xff]
        %v4214 = vld [vmem:[%s3 + $0x270] sm:$0xff]
        %v4215 = vld [vmem:[%s3 + $0x278] sm:$0xff]
        %v4216 = vmul.f32 %v4184, %v4200
        %v4217 = vmul.f32 %v4185, %v4201
        %v4218 = vmul.f32 %v4186, %v4202
        %v4219 = vmul.f32 %v4187, %v4203
        %v4220 = vmul.f32 %v4188, %v4204
        %v4221 = vmul.f32 %v4189, %v4205
        %v4222 = vmul.f32 %v4190, %v4206
        %v4223 = vmul.f32 %v4191, %v4207
        %v4224 = vmul.f32 %v4192, %v4208
        %v4225 = vmul.f32 %v4193, %v4209
        %v4226 = vmul.f32 %v4194, %v4210
        %v4227 = vmul.f32 %v4195, %v4211
        %v4228 = vmul.f32 %v4196, %v4212
        %v4229 = vmul.f32 %v4197, %v4213
        %v4230 = vmul.f32 %v4198, %v4214
        %v4231 = vmul.f32 %v4199, %v4215
        %v4232 = vsel %vm1358, %v4216, 0.0
        %v4233 = vsel %vm1358, %v4217, 0.0
        %v4234 = vadd.f32 %v4232, %v4233
        %v4235 = vsel %vm1358, %v4218, 0.0
        %v4236 = vadd.f32 %v4234, %v4235
        %v4237 = vsel %vm1358, %v4219, 0.0
        %v4238 = vadd.f32 %v4236, %v4237
        %v4239 = vsel %vm1358, %v4220, 0.0
        %v4240 = vadd.f32 %v4238, %v4239
        %v4241 = vsel %vm1358, %v4221, 0.0
        %v4242 = vadd.f32 %v4240, %v4241
        %v4243 = vsel %vm1358, %v4222, 0.0
        %v4244 = vadd.f32 %v4242, %v4243
        %v4245 = vsel %vm1358, %v4223, 0.0
        %v4246 = vadd.f32 %v4244, %v4245
        %v4247 = vsel %vm1358, %v4224, 0.0
        %v4248 = vadd.f32 %v4246, %v4247
        %v4249 = vsel %vm1358, %v4225, 0.0
        %v4250 = vadd.f32 %v4248, %v4249
        %v4251 = vsel %vm1358, %v4226, 0.0
        %v4252 = vadd.f32 %v4250, %v4251
        %v4253 = vsel %vm1358, %v4227, 0.0
        %v4254 = vadd.f32 %v4252, %v4253
        %v4255 = vsel %vm1358, %v4228, 0.0
        %v4256 = vadd.f32 %v4254, %v4255
        %v4257 = vsel %vm1358, %v4229, 0.0
        %v4258 = vadd.f32 %v4256, %v4257
        %v4259 = vsel %vm1358, %v4230, 0.0
        %v4260 = vadd.f32 %v4258, %v4259
        %v4261 = vsel %vm1358, %v4231, 0.0
        %v4262 = vadd.f32 %v4260, %v4261
        %v4263 = vrot.slane %v4262, 4
        %v4264 = vadd.f32 %v4262, %v4263
        %v4265 = vrot.slane %v4264, 2
        %v4266 = vadd.f32 %v4264, %v4265
        %v4267 = vrot.slane %v4266, 1
        %v4268 = vadd.f32 %v4266, %v4267
        %v4269 = vadd.f32 %v3553, %v4268
        %v4270 = vld [vmem:[%s1397 + $0x200] sm:$0xff]
        %v4271 = vld [vmem:[%s1397 + $0x208] sm:$0xff]
        %v4272 = vld [vmem:[%s1397 + $0x210] sm:$0xff]
        %v4273 = vld [vmem:[%s1397 + $0x218] sm:$0xff]
        %v4274 = vld [vmem:[%s1397 + $0x220] sm:$0xff]
        %v4275 = vld [vmem:[%s1397 + $0x228] sm:$0xff]
        %v4276 = vld [vmem:[%s1397 + $0x230] sm:$0xff]
        %v4277 = vld [vmem:[%s1397 + $0x238] sm:$0xff]
        %v4278 = vld [vmem:[%s1397 + $0x240] sm:$0xff]
        %v4279 = vld [vmem:[%s1397 + $0x248] sm:$0xff]
        %v4280 = vld [vmem:[%s1397 + $0x250] sm:$0xff]
        %v4281 = vld [vmem:[%s1397 + $0x258] sm:$0xff]
        %v4282 = vld [vmem:[%s1397 + $0x260] sm:$0xff]
        %v4283 = vld [vmem:[%s1397 + $0x268] sm:$0xff]
        %v4284 = vld [vmem:[%s1397 + $0x270] sm:$0xff]
        %v4285 = vld [vmem:[%s1397 + $0x278] sm:$0xff]
        %v4286 = vmul.f32 %v4184, %v4270
        %v4287 = vmul.f32 %v4185, %v4271
        %v4288 = vmul.f32 %v4186, %v4272
        %v4289 = vmul.f32 %v4187, %v4273
        %v4290 = vmul.f32 %v4188, %v4274
        %v4291 = vmul.f32 %v4189, %v4275
        %v4292 = vmul.f32 %v4190, %v4276
        %v4293 = vmul.f32 %v4191, %v4277
        %v4294 = vmul.f32 %v4192, %v4278
        %v4295 = vmul.f32 %v4193, %v4279
        %v4296 = vmul.f32 %v4194, %v4280
        %v4297 = vmul.f32 %v4195, %v4281
        %v4298 = vmul.f32 %v4196, %v4282
        %v4299 = vmul.f32 %v4197, %v4283
        %v4300 = vmul.f32 %v4198, %v4284
        %v4301 = vmul.f32 %v4199, %v4285
        %v4302 = vsel %vm1358, %v4286, 0.0
        %v4303 = vsel %vm1358, %v4287, 0.0
        %v4304 = vadd.f32 %v4302, %v4303
        %v4305 = vsel %vm1358, %v4288, 0.0
        %v4306 = vadd.f32 %v4304, %v4305
        %v4307 = vsel %vm1358, %v4289, 0.0
        %v4308 = vadd.f32 %v4306, %v4307
        %v4309 = vsel %vm1358, %v4290, 0.0
        %v4310 = vadd.f32 %v4308, %v4309
        %v4311 = vsel %vm1358, %v4291, 0.0
        %v4312 = vadd.f32 %v4310, %v4311
        %v4313 = vsel %vm1358, %v4292, 0.0
        %v4314 = vadd.f32 %v4312, %v4313
        %v4315 = vsel %vm1358, %v4293, 0.0
        %v4316 = vadd.f32 %v4314, %v4315
        %v4317 = vsel %vm1358, %v4294, 0.0
        %v4318 = vadd.f32 %v4316, %v4317
        %v4319 = vsel %vm1358, %v4295, 0.0
        %v4320 = vadd.f32 %v4318, %v4319
        %v4321 = vsel %vm1358, %v4296, 0.0
        %v4322 = vadd.f32 %v4320, %v4321
        %v4323 = vsel %vm1358, %v4297, 0.0
        %v4324 = vadd.f32 %v4322, %v4323
        %v4325 = vsel %vm1358, %v4298, 0.0
        %v4326 = vadd.f32 %v4324, %v4325
        %v4327 = vsel %vm1358, %v4299, 0.0
        %v4328 = vadd.f32 %v4326, %v4327
        %v4329 = vsel %vm1358, %v4300, 0.0
        %v4330 = vadd.f32 %v4328, %v4329
        %v4331 = vsel %vm1358, %v4301, 0.0
        %v4332 = vadd.f32 %v4330, %v4331
        %v4333 = vrot.slane %v4332, 4
        %v4334 = vadd.f32 %v4332, %v4333
        %v4335 = vrot.slane %v4334, 2
        %v4336 = vadd.f32 %v4334, %v4335
        %v4337 = vrot.slane %v4336, 1
        %v4338 = vadd.f32 %v4336, %v4337
        %v4339 = vadd.f32 %v3623, %v4338
        %v4340 = vld [vmem:[%s1468 + $0x200] sm:$0xff]
        %v4341 = vld [vmem:[%s1468 + $0x208] sm:$0xff]
        %v4342 = vld [vmem:[%s1468 + $0x210] sm:$0xff]
        %v4343 = vld [vmem:[%s1468 + $0x218] sm:$0xff]
        %v4344 = vld [vmem:[%s1468 + $0x220] sm:$0xff]
        %v4345 = vld [vmem:[%s1468 + $0x228] sm:$0xff]
        %v4346 = vld [vmem:[%s1468 + $0x230] sm:$0xff]
        %v4347 = vld [vmem:[%s1468 + $0x238] sm:$0xff]
        %v4348 = vld [vmem:[%s1468 + $0x240] sm:$0xff]
        %v4349 = vld [vmem:[%s1468 + $0x248] sm:$0xff]
        %v4350 = vld [vmem:[%s1468 + $0x250] sm:$0xff]
        %v4351 = vld [vmem:[%s1468 + $0x258] sm:$0xff]
        %v4352 = vld [vmem:[%s1468 + $0x260] sm:$0xff]
        %v4353 = vld [vmem:[%s1468 + $0x268] sm:$0xff]
        %v4354 = vld [vmem:[%s1468 + $0x270] sm:$0xff]
        %v4355 = vld [vmem:[%s1468 + $0x278] sm:$0xff]
        %v4356 = vmul.f32 %v4184, %v4340
        %v4357 = vmul.f32 %v4185, %v4341
        %v4358 = vmul.f32 %v4186, %v4342
        %v4359 = vmul.f32 %v4187, %v4343
        %v4360 = vmul.f32 %v4188, %v4344
        %v4361 = vmul.f32 %v4189, %v4345
        %v4362 = vmul.f32 %v4190, %v4346
        %v4363 = vmul.f32 %v4191, %v4347
        %v4364 = vmul.f32 %v4192, %v4348
        %v4365 = vmul.f32 %v4193, %v4349
        %v4366 = vmul.f32 %v4194, %v4350
        %v4367 = vmul.f32 %v4195, %v4351
        %v4368 = vmul.f32 %v4196, %v4352
        %v4369 = vmul.f32 %v4197, %v4353
        %v4370 = vmul.f32 %v4198, %v4354
        %v4371 = vmul.f32 %v4199, %v4355
        %v4372 = vsel %vm1358, %v4356, 0.0
        %v4373 = vsel %vm1358, %v4357, 0.0
        %v4374 = vadd.f32 %v4372, %v4373
        %v4375 = vsel %vm1358, %v4358, 0.0
        %v4376 = vadd.f32 %v4374, %v4375
        %v4377 = vsel %vm1358, %v4359, 0.0
        %v4378 = vadd.f32 %v4376, %v4377
        %v4379 = vsel %vm1358, %v4360, 0.0
        %v4380 = vadd.f32 %v4378, %v4379
        %v4381 = vsel %vm1358, %v4361, 0.0
        %v4382 = vadd.f32 %v4380, %v4381
        %v4383 = vsel %vm1358, %v4362, 0.0
        %v4384 = vadd.f32 %v4382, %v4383
        %v4385 = vsel %vm1358, %v4363, 0.0
        %v4386 = vadd.f32 %v4384, %v4385
        %v4387 = vsel %vm1358, %v4364, 0.0
        %v4388 = vadd.f32 %v4386, %v4387
        %v4389 = vsel %vm1358, %v4365, 0.0
        %v4390 = vadd.f32 %v4388, %v4389
        %v4391 = vsel %vm1358, %v4366, 0.0
        %v4392 = vadd.f32 %v4390, %v4391
        %v4393 = vsel %vm1358, %v4367, 0.0
        %v4394 = vadd.f32 %v4392, %v4393
        %v4395 = vsel %vm1358, %v4368, 0.0
        %v4396 = vadd.f32 %v4394, %v4395
        %v4397 = vsel %vm1358, %v4369, 0.0
        %v4398 = vadd.f32 %v4396, %v4397
        %v4399 = vsel %vm1358, %v4370, 0.0
        %v4400 = vadd.f32 %v4398, %v4399
        %v4401 = vsel %vm1358, %v4371, 0.0
        %v4402 = vadd.f32 %v4400, %v4401
        %v4403 = vrot.slane %v4402, 4
        %v4404 = vadd.f32 %v4402, %v4403
        %v4405 = vrot.slane %v4404, 2
        %v4406 = vadd.f32 %v4404, %v4405
        %v4407 = vrot.slane %v4406, 1
        %v4408 = vadd.f32 %v4406, %v4407
        %v4409 = vadd.f32 %v3693, %v4408
        %v4410 = vld [vmem:[%s1539 + $0x200] sm:$0xff]
        %v4411 = vld [vmem:[%s1539 + $0x208] sm:$0xff]
        %v4412 = vld [vmem:[%s1539 + $0x210] sm:$0xff]
        %v4413 = vld [vmem:[%s1539 + $0x218] sm:$0xff]
        %v4414 = vld [vmem:[%s1539 + $0x220] sm:$0xff]
        %v4415 = vld [vmem:[%s1539 + $0x228] sm:$0xff]
        %v4416 = vld [vmem:[%s1539 + $0x230] sm:$0xff]
        %v4417 = vld [vmem:[%s1539 + $0x238] sm:$0xff]
        %v4418 = vld [vmem:[%s1539 + $0x240] sm:$0xff]
        %v4419 = vld [vmem:[%s1539 + $0x248] sm:$0xff]
        %v4420 = vld [vmem:[%s1539 + $0x250] sm:$0xff]
        %v4421 = vld [vmem:[%s1539 + $0x258] sm:$0xff]
        %v4422 = vld [vmem:[%s1539 + $0x260] sm:$0xff]
        %v4423 = vld [vmem:[%s1539 + $0x268] sm:$0xff]
        %v4424 = vld [vmem:[%s1539 + $0x270] sm:$0xff]
        %v4425 = vld [vmem:[%s1539 + $0x278] sm:$0xff]
        %v4426 = vmul.f32 %v4184, %v4410
        %v4427 = vmul.f32 %v4185, %v4411
        %v4428 = vmul.f32 %v4186, %v4412
        %v4429 = vmul.f32 %v4187, %v4413
        %v4430 = vmul.f32 %v4188, %v4414
        %v4431 = vmul.f32 %v4189, %v4415
        %v4432 = vmul.f32 %v4190, %v4416
        %v4433 = vmul.f32 %v4191, %v4417
        %v4434 = vmul.f32 %v4192, %v4418
        %v4435 = vmul.f32 %v4193, %v4419
        %v4436 = vmul.f32 %v4194, %v4420
        %v4437 = vmul.f32 %v4195, %v4421
        %v4438 = vmul.f32 %v4196, %v4422
        %v4439 = vmul.f32 %v4197, %v4423
        %v4440 = vmul.f32 %v4198, %v4424
        %v4441 = vmul.f32 %v4199, %v4425
        %v4442 = vsel %vm1358, %v4426, 0.0
        %v4443 = vsel %vm1358, %v4427, 0.0
        %v4444 = vadd.f32 %v4442, %v4443
        %v4445 = vsel %vm1358, %v4428, 0.0
        %v4446 = vadd.f32 %v4444, %v4445
        %v4447 = vsel %vm1358, %v4429, 0.0
        %v4448 = vadd.f32 %v4446, %v4447
        %v4449 = vsel %vm1358, %v4430, 0.0
        %v4450 = vadd.f32 %v4448, %v4449
        %v4451 = vsel %vm1358, %v4431, 0.0
        %v4452 = vadd.f32 %v4450, %v4451
        %v4453 = vsel %vm1358, %v4432, 0.0
        %v4454 = vadd.f32 %v4452, %v4453
        %v4455 = vsel %vm1358, %v4433, 0.0
        %v4456 = vadd.f32 %v4454, %v4455
        %v4457 = vsel %vm1358, %v4434, 0.0
        %v4458 = vadd.f32 %v4456, %v4457
        %v4459 = vsel %vm1358, %v4435, 0.0
        %v4460 = vadd.f32 %v4458, %v4459
        %v4461 = vsel %vm1358, %v4436, 0.0
        %v4462 = vadd.f32 %v4460, %v4461
        %v4463 = vsel %vm1358, %v4437, 0.0
        %v4464 = vadd.f32 %v4462, %v4463
        %v4465 = vsel %vm1358, %v4438, 0.0
        %v4466 = vadd.f32 %v4464, %v4465
        %v4467 = vsel %vm1358, %v4439, 0.0
        %v4468 = vadd.f32 %v4466, %v4467
        %v4469 = vsel %vm1358, %v4440, 0.0
        %v4470 = vadd.f32 %v4468, %v4469
        %v4471 = vsel %vm1358, %v4441, 0.0
        %v4472 = vadd.f32 %v4470, %v4471
        %v4473 = vrot.slane %v4472, 4
        %v4474 = vadd.f32 %v4472, %v4473
        %v4475 = vrot.slane %v4474, 2
        %v4476 = vadd.f32 %v4474, %v4475
        %v4477 = vrot.slane %v4476, 1
        %v4478 = vadd.f32 %v4476, %v4477
        %v4479 = vadd.f32 %v3763, %v4478
        %v4480 = vld [vmem:[%s1610 + $0x200] sm:$0xff]
        %v4481 = vld [vmem:[%s1610 + $0x208] sm:$0xff]
        %v4482 = vld [vmem:[%s1610 + $0x210] sm:$0xff]
        %v4483 = vld [vmem:[%s1610 + $0x218] sm:$0xff]
        %v4484 = vld [vmem:[%s1610 + $0x220] sm:$0xff]
        %v4485 = vld [vmem:[%s1610 + $0x228] sm:$0xff]
        %v4486 = vld [vmem:[%s1610 + $0x230] sm:$0xff]
        %v4487 = vld [vmem:[%s1610 + $0x238] sm:$0xff]
        %v4488 = vld [vmem:[%s1610 + $0x240] sm:$0xff]
        %v4489 = vld [vmem:[%s1610 + $0x248] sm:$0xff]
        %v4490 = vld [vmem:[%s1610 + $0x250] sm:$0xff]
        %v4491 = vld [vmem:[%s1610 + $0x258] sm:$0xff]
        %v4492 = vld [vmem:[%s1610 + $0x260] sm:$0xff]
        %v4493 = vld [vmem:[%s1610 + $0x268] sm:$0xff]
        %v4494 = vld [vmem:[%s1610 + $0x270] sm:$0xff]
        %v4495 = vld [vmem:[%s1610 + $0x278] sm:$0xff]
        %v4496 = vmul.f32 %v4184, %v4480
        %v4497 = vmul.f32 %v4185, %v4481
        %v4498 = vmul.f32 %v4186, %v4482
        %v4499 = vmul.f32 %v4187, %v4483
        %v4500 = vmul.f32 %v4188, %v4484
        %v4501 = vmul.f32 %v4189, %v4485
        %v4502 = vmul.f32 %v4190, %v4486
        %v4503 = vmul.f32 %v4191, %v4487
        %v4504 = vmul.f32 %v4192, %v4488
        %v4505 = vmul.f32 %v4193, %v4489
        %v4506 = vmul.f32 %v4194, %v4490
        %v4507 = vmul.f32 %v4195, %v4491
        %v4508 = vmul.f32 %v4196, %v4492
        %v4509 = vmul.f32 %v4197, %v4493
        %v4510 = vmul.f32 %v4198, %v4494
        %v4511 = vmul.f32 %v4199, %v4495
        %v4512 = vsel %vm1358, %v4496, 0.0
        %v4513 = vsel %vm1358, %v4497, 0.0
        %v4514 = vadd.f32 %v4512, %v4513
        %v4515 = vsel %vm1358, %v4498, 0.0
        %v4516 = vadd.f32 %v4514, %v4515
        %v4517 = vsel %vm1358, %v4499, 0.0
        %v4518 = vadd.f32 %v4516, %v4517
        %v4519 = vsel %vm1358, %v4500, 0.0
        %v4520 = vadd.f32 %v4518, %v4519
        %v4521 = vsel %vm1358, %v4501, 0.0
        %v4522 = vadd.f32 %v4520, %v4521
        %v4523 = vsel %vm1358, %v4502, 0.0
        %v4524 = vadd.f32 %v4522, %v4523
        %v4525 = vsel %vm1358, %v4503, 0.0
        %v4526 = vadd.f32 %v4524, %v4525
        %v4527 = vsel %vm1358, %v4504, 0.0
        %v4528 = vadd.f32 %v4526, %v4527
        %v4529 = vsel %vm1358, %v4505, 0.0
        %v4530 = vadd.f32 %v4528, %v4529
        %v4531 = vsel %vm1358, %v4506, 0.0
        %v4532 = vadd.f32 %v4530, %v4531
        %v4533 = vsel %vm1358, %v4507, 0.0
        %v4534 = vadd.f32 %v4532, %v4533
        %v4535 = vsel %vm1358, %v4508, 0.0
        %v4536 = vadd.f32 %v4534, %v4535
        %v4537 = vsel %vm1358, %v4509, 0.0
        %v4538 = vadd.f32 %v4536, %v4537
        %v4539 = vsel %vm1358, %v4510, 0.0
        %v4540 = vadd.f32 %v4538, %v4539
        %v4541 = vsel %vm1358, %v4511, 0.0
        %v4542 = vadd.f32 %v4540, %v4541
        %v4543 = vrot.slane %v4542, 4
        %v4544 = vadd.f32 %v4542, %v4543
        %v4545 = vrot.slane %v4544, 2
        %v4546 = vadd.f32 %v4544, %v4545
        %v4547 = vrot.slane %v4546, 1
        %v4548 = vadd.f32 %v4546, %v4547
        %v4549 = vadd.f32 %v3833, %v4548
        %v4550 = vld [vmem:[%s1681 + $0x200] sm:$0xff]
        %v4551 = vld [vmem:[%s1681 + $0x208] sm:$0xff]
        %v4552 = vld [vmem:[%s1681 + $0x210] sm:$0xff]
        %v4553 = vld [vmem:[%s1681 + $0x218] sm:$0xff]
        %v4554 = vld [vmem:[%s1681 + $0x220] sm:$0xff]
        %v4555 = vld [vmem:[%s1681 + $0x228] sm:$0xff]
        %v4556 = vld [vmem:[%s1681 + $0x230] sm:$0xff]
        %v4557 = vld [vmem:[%s1681 + $0x238] sm:$0xff]
        %v4558 = vld [vmem:[%s1681 + $0x240] sm:$0xff]
        %v4559 = vld [vmem:[%s1681 + $0x248] sm:$0xff]
        %v4560 = vld [vmem:[%s1681 + $0x250] sm:$0xff]
        %v4561 = vld [vmem:[%s1681 + $0x258] sm:$0xff]
        %v4562 = vld [vmem:[%s1681 + $0x260] sm:$0xff]
        %v4563 = vld [vmem:[%s1681 + $0x268] sm:$0xff]
        %v4564 = vld [vmem:[%s1681 + $0x270] sm:$0xff]
        %v4565 = vld [vmem:[%s1681 + $0x278] sm:$0xff]
        %v4566 = vmul.f32 %v4184, %v4550
        %v4567 = vmul.f32 %v4185, %v4551
        %v4568 = vmul.f32 %v4186, %v4552
        %v4569 = vmul.f32 %v4187, %v4553
        %v4570 = vmul.f32 %v4188, %v4554
        %v4571 = vmul.f32 %v4189, %v4555
        %v4572 = vmul.f32 %v4190, %v4556
        %v4573 = vmul.f32 %v4191, %v4557
        %v4574 = vmul.f32 %v4192, %v4558
        %v4575 = vmul.f32 %v4193, %v4559
        %v4576 = vmul.f32 %v4194, %v4560
        %v4577 = vmul.f32 %v4195, %v4561
        %v4578 = vmul.f32 %v4196, %v4562
        %v4579 = vmul.f32 %v4197, %v4563
        %v4580 = vmul.f32 %v4198, %v4564
        %v4581 = vmul.f32 %v4199, %v4565
        %v4582 = vsel %vm1358, %v4566, 0.0
        %v4583 = vsel %vm1358, %v4567, 0.0
        %v4584 = vadd.f32 %v4582, %v4583
        %v4585 = vsel %vm1358, %v4568, 0.0
        %v4586 = vadd.f32 %v4584, %v4585
        %v4587 = vsel %vm1358, %v4569, 0.0
        %v4588 = vadd.f32 %v4586, %v4587
        %v4589 = vsel %vm1358, %v4570, 0.0
        %v4590 = vadd.f32 %v4588, %v4589
        %v4591 = vsel %vm1358, %v4571, 0.0
        %v4592 = vadd.f32 %v4590, %v4591
        %v4593 = vsel %vm1358, %v4572, 0.0
        %v4594 = vadd.f32 %v4592, %v4593
        %v4595 = vsel %vm1358, %v4573, 0.0
        %v4596 = vadd.f32 %v4594, %v4595
        %v4597 = vsel %vm1358, %v4574, 0.0
        %v4598 = vadd.f32 %v4596, %v4597
        %v4599 = vsel %vm1358, %v4575, 0.0
        %v4600 = vadd.f32 %v4598, %v4599
        %v4601 = vsel %vm1358, %v4576, 0.0
        %v4602 = vadd.f32 %v4600, %v4601
        %v4603 = vsel %vm1358, %v4577, 0.0
        %v4604 = vadd.f32 %v4602, %v4603
        %v4605 = vsel %vm1358, %v4578, 0.0
        %v4606 = vadd.f32 %v4604, %v4605
        %v4607 = vsel %vm1358, %v4579, 0.0
        %v4608 = vadd.f32 %v4606, %v4607
        %v4609 = vsel %vm1358, %v4580, 0.0
        %v4610 = vadd.f32 %v4608, %v4609
        %v4611 = vsel %vm1358, %v4581, 0.0
        %v4612 = vadd.f32 %v4610, %v4611
        %v4613 = vrot.slane %v4612, 4
        %v4614 = vadd.f32 %v4612, %v4613
        %v4615 = vrot.slane %v4614, 2
        %v4616 = vadd.f32 %v4614, %v4615
        %v4617 = vrot.slane %v4616, 1
        %v4618 = vadd.f32 %v4616, %v4617
        %v4619 = vadd.f32 %v3903, %v4618
        %v4620 = vld [vmem:[%s1752 + $0x200] sm:$0xff]
        %v4621 = vld [vmem:[%s1752 + $0x208] sm:$0xff]
        %v4622 = vld [vmem:[%s1752 + $0x210] sm:$0xff]
        %v4623 = vld [vmem:[%s1752 + $0x218] sm:$0xff]
        %v4624 = vld [vmem:[%s1752 + $0x220] sm:$0xff]
        %v4625 = vld [vmem:[%s1752 + $0x228] sm:$0xff]
        %v4626 = vld [vmem:[%s1752 + $0x230] sm:$0xff]
        %v4627 = vld [vmem:[%s1752 + $0x238] sm:$0xff]
        %v4628 = vld [vmem:[%s1752 + $0x240] sm:$0xff]
        %v4629 = vld [vmem:[%s1752 + $0x248] sm:$0xff]
        %v4630 = vld [vmem:[%s1752 + $0x250] sm:$0xff]
        %v4631 = vld [vmem:[%s1752 + $0x258] sm:$0xff]
        %v4632 = vld [vmem:[%s1752 + $0x260] sm:$0xff]
        %v4633 = vld [vmem:[%s1752 + $0x268] sm:$0xff]
        %v4634 = vld [vmem:[%s1752 + $0x270] sm:$0xff]
        %v4635 = vld [vmem:[%s1752 + $0x278] sm:$0xff]
        %v4636 = vmul.f32 %v4184, %v4620
        %v4637 = vmul.f32 %v4185, %v4621
        %v4638 = vmul.f32 %v4186, %v4622
        %v4639 = vmul.f32 %v4187, %v4623
        %v4640 = vmul.f32 %v4188, %v4624
        %v4641 = vmul.f32 %v4189, %v4625
        %v4642 = vmul.f32 %v4190, %v4626
        %v4643 = vmul.f32 %v4191, %v4627
        %v4644 = vmul.f32 %v4192, %v4628
        %v4645 = vmul.f32 %v4193, %v4629
        %v4646 = vmul.f32 %v4194, %v4630
        %v4647 = vmul.f32 %v4195, %v4631
        %v4648 = vmul.f32 %v4196, %v4632
        %v4649 = vmul.f32 %v4197, %v4633
        %v4650 = vmul.f32 %v4198, %v4634
        %v4651 = vmul.f32 %v4199, %v4635
        %v4652 = vsel %vm1358, %v4636, 0.0
        %v4653 = vsel %vm1358, %v4637, 0.0
        %v4654 = vadd.f32 %v4652, %v4653
        %v4655 = vsel %vm1358, %v4638, 0.0
        %v4656 = vadd.f32 %v4654, %v4655
        %v4657 = vsel %vm1358, %v4639, 0.0
        %v4658 = vadd.f32 %v4656, %v4657
        %v4659 = vsel %vm1358, %v4640, 0.0
        %v4660 = vadd.f32 %v4658, %v4659
        %v4661 = vsel %vm1358, %v4641, 0.0
        %v4662 = vadd.f32 %v4660, %v4661
        %v4663 = vsel %vm1358, %v4642, 0.0
        %v4664 = vadd.f32 %v4662, %v4663
        %v4665 = vsel %vm1358, %v4643, 0.0
        %v4666 = vadd.f32 %v4664, %v4665
        %v4667 = vsel %vm1358, %v4644, 0.0
        %v4668 = vadd.f32 %v4666, %v4667
        %v4669 = vsel %vm1358, %v4645, 0.0
        %v4670 = vadd.f32 %v4668, %v4669
        %v4671 = vsel %vm1358, %v4646, 0.0
        %v4672 = vadd.f32 %v4670, %v4671
        %v4673 = vsel %vm1358, %v4647, 0.0
        %v4674 = vadd.f32 %v4672, %v4673
        %v4675 = vsel %vm1358, %v4648, 0.0
        %v4676 = vadd.f32 %v4674, %v4675
        %v4677 = vsel %vm1358, %v4649, 0.0
        %v4678 = vadd.f32 %v4676, %v4677
        %v4679 = vsel %vm1358, %v4650, 0.0
        %v4680 = vadd.f32 %v4678, %v4679
        %v4681 = vsel %vm1358, %v4651, 0.0
        %v4682 = vadd.f32 %v4680, %v4681
        %v4683 = vrot.slane %v4682, 4
        %v4684 = vadd.f32 %v4682, %v4683
        %v4685 = vrot.slane %v4684, 2
        %v4686 = vadd.f32 %v4684, %v4685
        %v4687 = vrot.slane %v4686, 1
        %v4688 = vadd.f32 %v4686, %v4687
        %v4689 = vadd.f32 %v3973, %v4688
        %v4690 = vld [vmem:[%s1823 + $0x200] sm:$0xff]
        %v4691 = vld [vmem:[%s1823 + $0x208] sm:$0xff]
        %v4692 = vld [vmem:[%s1823 + $0x210] sm:$0xff]
        %v4693 = vld [vmem:[%s1823 + $0x218] sm:$0xff]
        %v4694 = vld [vmem:[%s1823 + $0x220] sm:$0xff]
        %v4695 = vld [vmem:[%s1823 + $0x228] sm:$0xff]
        %v4696 = vld [vmem:[%s1823 + $0x230] sm:$0xff]
        %v4697 = vld [vmem:[%s1823 + $0x238] sm:$0xff]
        %v4698 = vld [vmem:[%s1823 + $0x240] sm:$0xff]
        %v4699 = vld [vmem:[%s1823 + $0x248] sm:$0xff]
        %v4700 = vld [vmem:[%s1823 + $0x250] sm:$0xff]
        %v4701 = vld [vmem:[%s1823 + $0x258] sm:$0xff]
        %v4702 = vld [vmem:[%s1823 + $0x260] sm:$0xff]
        %v4703 = vld [vmem:[%s1823 + $0x268] sm:$0xff]
        %v4704 = vld [vmem:[%s1823 + $0x270] sm:$0xff]
        %v4705 = vld [vmem:[%s1823 + $0x278] sm:$0xff]
        %v4706 = vmul.f32 %v4184, %v4690
        %v4707 = vmul.f32 %v4185, %v4691
        %v4708 = vmul.f32 %v4186, %v4692
        %v4709 = vmul.f32 %v4187, %v4693
        %v4710 = vmul.f32 %v4188, %v4694
        %v4711 = vmul.f32 %v4189, %v4695
        %v4712 = vmul.f32 %v4190, %v4696
        %v4713 = vmul.f32 %v4191, %v4697
        %v4714 = vmul.f32 %v4192, %v4698
        %v4715 = vmul.f32 %v4193, %v4699
        %v4716 = vmul.f32 %v4194, %v4700
        %v4717 = vmul.f32 %v4195, %v4701
        %v4718 = vmul.f32 %v4196, %v4702
        %v4719 = vmul.f32 %v4197, %v4703
        %v4720 = vmul.f32 %v4198, %v4704
        %v4721 = vmul.f32 %v4199, %v4705
        %v4722 = vsel %vm1358, %v4706, 0.0
        %v4723 = vsel %vm1358, %v4707, 0.0
        %v4724 = vadd.f32 %v4722, %v4723
        %v4725 = vsel %vm1358, %v4708, 0.0
        %v4726 = vadd.f32 %v4724, %v4725
        %v4727 = vsel %vm1358, %v4709, 0.0
        %v4728 = vadd.f32 %v4726, %v4727
        %v4729 = vsel %vm1358, %v4710, 0.0
        %v4730 = vadd.f32 %v4728, %v4729
        %v4731 = vsel %vm1358, %v4711, 0.0
        %v4732 = vadd.f32 %v4730, %v4731
        %v4733 = vsel %vm1358, %v4712, 0.0
        %v4734 = vadd.f32 %v4732, %v4733
        %v4735 = vsel %vm1358, %v4713, 0.0
        %v4736 = vadd.f32 %v4734, %v4735
        %v4737 = vsel %vm1358, %v4714, 0.0
        %v4738 = vadd.f32 %v4736, %v4737
        %v4739 = vsel %vm1358, %v4715, 0.0
        %v4740 = vadd.f32 %v4738, %v4739
        %v4741 = vsel %vm1358, %v4716, 0.0
        %v4742 = vadd.f32 %v4740, %v4741
        %v4743 = vsel %vm1358, %v4717, 0.0
        %v4744 = vadd.f32 %v4742, %v4743
        %v4745 = vsel %vm1358, %v4718, 0.0
        %v4746 = vadd.f32 %v4744, %v4745
        %v4747 = vsel %vm1358, %v4719, 0.0
        %v4748 = vadd.f32 %v4746, %v4747
        %v4749 = vsel %vm1358, %v4720, 0.0
        %v4750 = vadd.f32 %v4748, %v4749
        %v4751 = vsel %vm1358, %v4721, 0.0
        %v4752 = vadd.f32 %v4750, %v4751
        %v4753 = vrot.slane %v4752, 4
        %v4754 = vadd.f32 %v4752, %v4753
        %v4755 = vrot.slane %v4754, 2
        %v4756 = vadd.f32 %v4754, %v4755
        %v4757 = vrot.slane %v4756, 1
        %v4758 = vadd.f32 %v4756, %v4757
        %v4759 = vadd.f32 %v4043, %v4758
        %v4760 = vld [vmem:[%s1894 + $0x200] sm:$0xff]
        %v4761 = vld [vmem:[%s1894 + $0x208] sm:$0xff]
        %v4762 = vld [vmem:[%s1894 + $0x210] sm:$0xff]
        %v4763 = vld [vmem:[%s1894 + $0x218] sm:$0xff]
        %v4764 = vld [vmem:[%s1894 + $0x220] sm:$0xff]
        %v4765 = vld [vmem:[%s1894 + $0x228] sm:$0xff]
        %v4766 = vld [vmem:[%s1894 + $0x230] sm:$0xff]
        %v4767 = vld [vmem:[%s1894 + $0x238] sm:$0xff]
        %v4768 = vld [vmem:[%s1894 + $0x240] sm:$0xff]
        %v4769 = vld [vmem:[%s1894 + $0x248] sm:$0xff]
        %v4770 = vld [vmem:[%s1894 + $0x250] sm:$0xff]
        %v4771 = vld [vmem:[%s1894 + $0x258] sm:$0xff]
        %v4772 = vld [vmem:[%s1894 + $0x260] sm:$0xff]
        %v4773 = vld [vmem:[%s1894 + $0x268] sm:$0xff]
        %v4774 = vld [vmem:[%s1894 + $0x270] sm:$0xff]
        %v4775 = vld [vmem:[%s1894 + $0x278] sm:$0xff]
        %v4776 = vmul.f32 %v4184, %v4760
        %v4777 = vmul.f32 %v4185, %v4761
        %v4778 = vmul.f32 %v4186, %v4762
        %v4779 = vmul.f32 %v4187, %v4763
        %v4780 = vmul.f32 %v4188, %v4764
        %v4781 = vmul.f32 %v4189, %v4765
        %v4782 = vmul.f32 %v4190, %v4766
        %v4783 = vmul.f32 %v4191, %v4767
        %v4784 = vmul.f32 %v4192, %v4768
        %v4785 = vmul.f32 %v4193, %v4769
        %v4786 = vmul.f32 %v4194, %v4770
        %v4787 = vmul.f32 %v4195, %v4771
        %v4788 = vmul.f32 %v4196, %v4772
        %v4789 = vmul.f32 %v4197, %v4773
        %v4790 = vmul.f32 %v4198, %v4774
        %v4791 = vmul.f32 %v4199, %v4775
        %v4792 = vsel %vm1358, %v4776, 0.0
        %v4793 = vsel %vm1358, %v4777, 0.0
        %v4794 = vadd.f32 %v4792, %v4793
        %v4795 = vsel %vm1358, %v4778, 0.0
        %v4796 = vadd.f32 %v4794, %v4795
        %v4797 = vsel %vm1358, %v4779, 0.0
        %v4798 = vadd.f32 %v4796, %v4797
        %v4799 = vsel %vm1358, %v4780, 0.0
        %v4800 = vadd.f32 %v4798, %v4799
        %v4801 = vsel %vm1358, %v4781, 0.0
        %v4802 = vadd.f32 %v4800, %v4801
        %v4803 = vsel %vm1358, %v4782, 0.0
        %v4804 = vadd.f32 %v4802, %v4803
        %v4805 = vsel %vm1358, %v4783, 0.0
        %v4806 = vadd.f32 %v4804, %v4805
        %v4807 = vsel %vm1358, %v4784, 0.0
        %v4808 = vadd.f32 %v4806, %v4807
        %v4809 = vsel %vm1358, %v4785, 0.0
        %v4810 = vadd.f32 %v4808, %v4809
        %v4811 = vsel %vm1358, %v4786, 0.0
        %v4812 = vadd.f32 %v4810, %v4811
        %v4813 = vsel %vm1358, %v4787, 0.0
        %v4814 = vadd.f32 %v4812, %v4813
        %v4815 = vsel %vm1358, %v4788, 0.0
        %v4816 = vadd.f32 %v4814, %v4815
        %v4817 = vsel %vm1358, %v4789, 0.0
        %v4818 = vadd.f32 %v4816, %v4817
        %v4819 = vsel %vm1358, %v4790, 0.0
        %v4820 = vadd.f32 %v4818, %v4819
        %v4821 = vsel %vm1358, %v4791, 0.0
        %v4822 = vadd.f32 %v4820, %v4821
        %v4823 = vrot.slane %v4822, 4
        %v4824 = vadd.f32 %v4822, %v4823
        %v4825 = vrot.slane %v4824, 2
        %v4826 = vadd.f32 %v4824, %v4825
        %v4827 = vrot.slane %v4826, 1
        %v4828 = vadd.f32 %v4826, %v4827
        %v4829 = vadd.f32 %v4113, %v4828
        %v4830 = vld [vmem:[%s1965 + $0x200] sm:$0xff]
        %v4831 = vld [vmem:[%s1965 + $0x208] sm:$0xff]
        %v4832 = vld [vmem:[%s1965 + $0x210] sm:$0xff]
        %v4833 = vld [vmem:[%s1965 + $0x218] sm:$0xff]
        %v4834 = vld [vmem:[%s1965 + $0x220] sm:$0xff]
        %v4835 = vld [vmem:[%s1965 + $0x228] sm:$0xff]
        %v4836 = vld [vmem:[%s1965 + $0x230] sm:$0xff]
        %v4837 = vld [vmem:[%s1965 + $0x238] sm:$0xff]
        %v4838 = vld [vmem:[%s1965 + $0x240] sm:$0xff]
        %v4839 = vld [vmem:[%s1965 + $0x248] sm:$0xff]
        %v4840 = vld [vmem:[%s1965 + $0x250] sm:$0xff]
        %v4841 = vld [vmem:[%s1965 + $0x258] sm:$0xff]
        %v4842 = vld [vmem:[%s1965 + $0x260] sm:$0xff]
        %v4843 = vld [vmem:[%s1965 + $0x268] sm:$0xff]
        %v4844 = vld [vmem:[%s1965 + $0x270] sm:$0xff]
        %v4845 = vld [vmem:[%s1965 + $0x278] sm:$0xff]
        %v4846 = vmul.f32 %v4184, %v4830
        %v4847 = vmul.f32 %v4185, %v4831
        %v4848 = vmul.f32 %v4186, %v4832
        %v4849 = vmul.f32 %v4187, %v4833
        %v4850 = vmul.f32 %v4188, %v4834
        %v4851 = vmul.f32 %v4189, %v4835
        %v4852 = vmul.f32 %v4190, %v4836
        %v4853 = vmul.f32 %v4191, %v4837
        %v4854 = vmul.f32 %v4192, %v4838
        %v4855 = vmul.f32 %v4193, %v4839
        %v4856 = vmul.f32 %v4194, %v4840
        %v4857 = vmul.f32 %v4195, %v4841
        %v4858 = vmul.f32 %v4196, %v4842
        %v4859 = vmul.f32 %v4197, %v4843
        %v4860 = vmul.f32 %v4198, %v4844
        %v4861 = vmul.f32 %v4199, %v4845
        %v4862 = vsel %vm1358, %v4846, 0.0
        %v4863 = vsel %vm1358, %v4847, 0.0
        %v4864 = vadd.f32 %v4862, %v4863
        %v4865 = vsel %vm1358, %v4848, 0.0
        %v4866 = vadd.f32 %v4864, %v4865
        %v4867 = vsel %vm1358, %v4849, 0.0
        %v4868 = vadd.f32 %v4866, %v4867
        %v4869 = vsel %vm1358, %v4850, 0.0
        %v4870 = vadd.f32 %v4868, %v4869
        %v4871 = vsel %vm1358, %v4851, 0.0
        %v4872 = vadd.f32 %v4870, %v4871
        %v4873 = vsel %vm1358, %v4852, 0.0
        %v4874 = vadd.f32 %v4872, %v4873
        %v4875 = vsel %vm1358, %v4853, 0.0
        %v4876 = vadd.f32 %v4874, %v4875
        %v4877 = vsel %vm1358, %v4854, 0.0
        %v4878 = vadd.f32 %v4876, %v4877
        %v4879 = vsel %vm1358, %v4855, 0.0
        %v4880 = vadd.f32 %v4878, %v4879
        %v4881 = vsel %vm1358, %v4856, 0.0
        %v4882 = vadd.f32 %v4880, %v4881
        %v4883 = vsel %vm1358, %v4857, 0.0
        %v4884 = vadd.f32 %v4882, %v4883
        %v4885 = vsel %vm1358, %v4858, 0.0
        %v4886 = vadd.f32 %v4884, %v4885
        %v4887 = vsel %vm1358, %v4859, 0.0
        %v4888 = vadd.f32 %v4886, %v4887
        %v4889 = vsel %vm1358, %v4860, 0.0
        %v4890 = vadd.f32 %v4888, %v4889
        %v4891 = vsel %vm1358, %v4861, 0.0
        %v4892 = vadd.f32 %v4890, %v4891
        %v4893 = vrot.slane %v4892, 4
        %v4894 = vadd.f32 %v4892, %v4893
        %v4895 = vrot.slane %v4894, 2
        %v4896 = vadd.f32 %v4894, %v4895
        %v4897 = vrot.slane %v4896, 1
        %v4898 = vadd.f32 %v4896, %v4897
        %v4899 = vadd.f32 %v4183, %v4898
        %v4900 = vld [vmem:[#allocation3 + $0x280] sm:$0xff]
        %v4901 = vld [vmem:[#allocation3 + $0x288] sm:$0xff]
        %v4902 = vld [vmem:[#allocation3 + $0x290] sm:$0xff]
        %v4903 = vld [vmem:[#allocation3 + $0x298] sm:$0xff]
        %v4904 = vld [vmem:[#allocation3 + $0x2a0] sm:$0xff]
        %v4905 = vld [vmem:[#allocation3 + $0x2a8] sm:$0xff]
        %v4906 = vld [vmem:[#allocation3 + $0x2b0] sm:$0xff]
        %v4907 = vld [vmem:[#allocation3 + $0x2b8] sm:$0xff]
        %v4908 = vld [vmem:[#allocation3 + $0x2c0] sm:$0xff]
        %v4909 = vld [vmem:[#allocation3 + $0x2c8] sm:$0xff]
        %v4910 = vld [vmem:[#allocation3 + $0x2d0] sm:$0xff]
        %v4911 = vld [vmem:[#allocation3 + $0x2d8] sm:$0xff]
        %v4912 = vld [vmem:[#allocation3 + $0x2e0] sm:$0xff]
        %v4913 = vld [vmem:[#allocation3 + $0x2e8] sm:$0xff]
        %v4914 = vld [vmem:[#allocation3 + $0x2f0] sm:$0xff]
        %v4915 = vld [vmem:[#allocation3 + $0x2f8] sm:$0xff]
        %v4916 = vld [vmem:[%s3 + $0x280] sm:$0xff]
        %v4917 = vld [vmem:[%s3 + $0x288] sm:$0xff]
        %v4918 = vld [vmem:[%s3 + $0x290] sm:$0xff]
        %v4919 = vld [vmem:[%s3 + $0x298] sm:$0xff]
        %v4920 = vld [vmem:[%s3 + $0x2a0] sm:$0xff]
        %v4921 = vld [vmem:[%s3 + $0x2a8] sm:$0xff]
        %v4922 = vld [vmem:[%s3 + $0x2b0] sm:$0xff]
        %v4923 = vld [vmem:[%s3 + $0x2b8] sm:$0xff]
        %v4924 = vld [vmem:[%s3 + $0x2c0] sm:$0xff]
        %v4925 = vld [vmem:[%s3 + $0x2c8] sm:$0xff]
        %v4926 = vld [vmem:[%s3 + $0x2d0] sm:$0xff]
        %v4927 = vld [vmem:[%s3 + $0x2d8] sm:$0xff]
        %v4928 = vld [vmem:[%s3 + $0x2e0] sm:$0xff]
        %v4929 = vld [vmem:[%s3 + $0x2e8] sm:$0xff]
        %v4930 = vld [vmem:[%s3 + $0x2f0] sm:$0xff]
        %v4931 = vld [vmem:[%s3 + $0x2f8] sm:$0xff]
        %v4932 = vmul.f32 %v4900, %v4916
        %v4933 = vmul.f32 %v4901, %v4917
        %v4934 = vmul.f32 %v4902, %v4918
        %v4935 = vmul.f32 %v4903, %v4919
        %v4936 = vmul.f32 %v4904, %v4920
        %v4937 = vmul.f32 %v4905, %v4921
        %v4938 = vmul.f32 %v4906, %v4922
        %v4939 = vmul.f32 %v4907, %v4923
        %v4940 = vmul.f32 %v4908, %v4924
        %v4941 = vmul.f32 %v4909, %v4925
        %v4942 = vmul.f32 %v4910, %v4926
        %v4943 = vmul.f32 %v4911, %v4927
        %v4944 = vmul.f32 %v4912, %v4928
        %v4945 = vmul.f32 %v4913, %v4929
        %v4946 = vmul.f32 %v4914, %v4930
        %v4947 = vmul.f32 %v4915, %v4931
        %v4948 = vsel %vm1358, %v4932, 0.0
        %v4949 = vsel %vm1358, %v4933, 0.0
        %v4950 = vadd.f32 %v4948, %v4949
        %v4951 = vsel %vm1358, %v4934, 0.0
        %v4952 = vadd.f32 %v4950, %v4951
        %v4953 = vsel %vm1358, %v4935, 0.0
        %v4954 = vadd.f32 %v4952, %v4953
        %v4955 = vsel %vm1358, %v4936, 0.0
        %v4956 = vadd.f32 %v4954, %v4955
        %v4957 = vsel %vm1358, %v4937, 0.0
        %v4958 = vadd.f32 %v4956, %v4957
        %v4959 = vsel %vm1358, %v4938, 0.0
        %v4960 = vadd.f32 %v4958, %v4959
        %v4961 = vsel %vm1358, %v4939, 0.0
        %v4962 = vadd.f32 %v4960, %v4961
        %v4963 = vsel %vm1358, %v4940, 0.0
        %v4964 = vadd.f32 %v4962, %v4963
        %v4965 = vsel %vm1358, %v4941, 0.0
        %v4966 = vadd.f32 %v4964, %v4965
        %v4967 = vsel %vm1358, %v4942, 0.0
        %v4968 = vadd.f32 %v4966, %v4967
        %v4969 = vsel %vm1358, %v4943, 0.0
        %v4970 = vadd.f32 %v4968, %v4969
        %v4971 = vsel %vm1358, %v4944, 0.0
        %v4972 = vadd.f32 %v4970, %v4971
        %v4973 = vsel %vm1358, %v4945, 0.0
        %v4974 = vadd.f32 %v4972, %v4973
        %v4975 = vsel %vm1358, %v4946, 0.0
        %v4976 = vadd.f32 %v4974, %v4975
        %v4977 = vsel %vm1358, %v4947, 0.0
        %v4978 = vadd.f32 %v4976, %v4977
        %v4979 = vrot.slane %v4978, 4
        %v4980 = vadd.f32 %v4978, %v4979
        %v4981 = vrot.slane %v4980, 2
        %v4982 = vadd.f32 %v4980, %v4981
        %v4983 = vrot.slane %v4982, 1
        %v4984 = vadd.f32 %v4982, %v4983
        %v4985 = vadd.f32 %v4269, %v4984
        %v4986 = vld [vmem:[%s1397 + $0x280] sm:$0xff]
        %v4987 = vld [vmem:[%s1397 + $0x288] sm:$0xff]
        %v4988 = vld [vmem:[%s1397 + $0x290] sm:$0xff]
        %v4989 = vld [vmem:[%s1397 + $0x298] sm:$0xff]
        %v4990 = vld [vmem:[%s1397 + $0x2a0] sm:$0xff]
        %v4991 = vld [vmem:[%s1397 + $0x2a8] sm:$0xff]
        %v4992 = vld [vmem:[%s1397 + $0x2b0] sm:$0xff]
        %v4993 = vld [vmem:[%s1397 + $0x2b8] sm:$0xff]
        %v4994 = vld [vmem:[%s1397 + $0x2c0] sm:$0xff]
        %v4995 = vld [vmem:[%s1397 + $0x2c8] sm:$0xff]
        %v4996 = vld [vmem:[%s1397 + $0x2d0] sm:$0xff]
        %v4997 = vld [vmem:[%s1397 + $0x2d8] sm:$0xff]
        %v4998 = vld [vmem:[%s1397 + $0x2e0] sm:$0xff]
        %v4999 = vld [vmem:[%s1397 + $0x2e8] sm:$0xff]
        %v5000 = vld [vmem:[%s1397 + $0x2f0] sm:$0xff]
        %v5001 = vld [vmem:[%s1397 + $0x2f8] sm:$0xff]
        %v5002 = vmul.f32 %v4900, %v4986
        %v5003 = vmul.f32 %v4901, %v4987
        %v5004 = vmul.f32 %v4902, %v4988
        %v5005 = vmul.f32 %v4903, %v4989
        %v5006 = vmul.f32 %v4904, %v4990
        %v5007 = vmul.f32 %v4905, %v4991
        %v5008 = vmul.f32 %v4906, %v4992
        %v5009 = vmul.f32 %v4907, %v4993
        %v5010 = vmul.f32 %v4908, %v4994
        %v5011 = vmul.f32 %v4909, %v4995
        %v5012 = vmul.f32 %v4910, %v4996
        %v5013 = vmul.f32 %v4911, %v4997
        %v5014 = vmul.f32 %v4912, %v4998
        %v5015 = vmul.f32 %v4913, %v4999
        %v5016 = vmul.f32 %v4914, %v5000
        %v5017 = vmul.f32 %v4915, %v5001
        %v5018 = vsel %vm1358, %v5002, 0.0
        %v5019 = vsel %vm1358, %v5003, 0.0
        %v5020 = vadd.f32 %v5018, %v5019
        %v5021 = vsel %vm1358, %v5004, 0.0
        %v5022 = vadd.f32 %v5020, %v5021
        %v5023 = vsel %vm1358, %v5005, 0.0
        %v5024 = vadd.f32 %v5022, %v5023
        %v5025 = vsel %vm1358, %v5006, 0.0
        %v5026 = vadd.f32 %v5024, %v5025
        %v5027 = vsel %vm1358, %v5007, 0.0
        %v5028 = vadd.f32 %v5026, %v5027
        %v5029 = vsel %vm1358, %v5008, 0.0
        %v5030 = vadd.f32 %v5028, %v5029
        %v5031 = vsel %vm1358, %v5009, 0.0
        %v5032 = vadd.f32 %v5030, %v5031
        %v5033 = vsel %vm1358, %v5010, 0.0
        %v5034 = vadd.f32 %v5032, %v5033
        %v5035 = vsel %vm1358, %v5011, 0.0
        %v5036 = vadd.f32 %v5034, %v5035
        %v5037 = vsel %vm1358, %v5012, 0.0
        %v5038 = vadd.f32 %v5036, %v5037
        %v5039 = vsel %vm1358, %v5013, 0.0
        %v5040 = vadd.f32 %v5038, %v5039
        %v5041 = vsel %vm1358, %v5014, 0.0
        %v5042 = vadd.f32 %v5040, %v5041
        %v5043 = vsel %vm1358, %v5015, 0.0
        %v5044 = vadd.f32 %v5042, %v5043
        %v5045 = vsel %vm1358, %v5016, 0.0
        %v5046 = vadd.f32 %v5044, %v5045
        %v5047 = vsel %vm1358, %v5017, 0.0
        %v5048 = vadd.f32 %v5046, %v5047
        %v5049 = vrot.slane %v5048, 4
        %v5050 = vadd.f32 %v5048, %v5049
        %v5051 = vrot.slane %v5050, 2
        %v5052 = vadd.f32 %v5050, %v5051
        %v5053 = vrot.slane %v5052, 1
        %v5054 = vadd.f32 %v5052, %v5053
        %v5055 = vadd.f32 %v4339, %v5054
        %v5056 = vld [vmem:[%s1468 + $0x280] sm:$0xff]
        %v5057 = vld [vmem:[%s1468 + $0x288] sm:$0xff]
        %v5058 = vld [vmem:[%s1468 + $0x290] sm:$0xff]
        %v5059 = vld [vmem:[%s1468 + $0x298] sm:$0xff]
        %v5060 = vld [vmem:[%s1468 + $0x2a0] sm:$0xff]
        %v5061 = vld [vmem:[%s1468 + $0x2a8] sm:$0xff]
        %v5062 = vld [vmem:[%s1468 + $0x2b0] sm:$0xff]
        %v5063 = vld [vmem:[%s1468 + $0x2b8] sm:$0xff]
        %v5064 = vld [vmem:[%s1468 + $0x2c0] sm:$0xff]
        %v5065 = vld [vmem:[%s1468 + $0x2c8] sm:$0xff]
        %v5066 = vld [vmem:[%s1468 + $0x2d0] sm:$0xff]
        %v5067 = vld [vmem:[%s1468 + $0x2d8] sm:$0xff]
        %v5068 = vld [vmem:[%s1468 + $0x2e0] sm:$0xff]
        %v5069 = vld [vmem:[%s1468 + $0x2e8] sm:$0xff]
        %v5070 = vld [vmem:[%s1468 + $0x2f0] sm:$0xff]
        %v5071 = vld [vmem:[%s1468 + $0x2f8] sm:$0xff]
        %v5072 = vmul.f32 %v4900, %v5056
        %v5073 = vmul.f32 %v4901, %v5057
        %v5074 = vmul.f32 %v4902, %v5058
        %v5075 = vmul.f32 %v4903, %v5059
        %v5076 = vmul.f32 %v4904, %v5060
        %v5077 = vmul.f32 %v4905, %v5061
        %v5078 = vmul.f32 %v4906, %v5062
        %v5079 = vmul.f32 %v4907, %v5063
        %v5080 = vmul.f32 %v4908, %v5064
        %v5081 = vmul.f32 %v4909, %v5065
        %v5082 = vmul.f32 %v4910, %v5066
        %v5083 = vmul.f32 %v4911, %v5067
        %v5084 = vmul.f32 %v4912, %v5068
        %v5085 = vmul.f32 %v4913, %v5069
        %v5086 = vmul.f32 %v4914, %v5070
        %v5087 = vmul.f32 %v4915, %v5071
        %v5088 = vsel %vm1358, %v5072, 0.0
        %v5089 = vsel %vm1358, %v5073, 0.0
        %v5090 = vadd.f32 %v5088, %v5089
        %v5091 = vsel %vm1358, %v5074, 0.0
        %v5092 = vadd.f32 %v5090, %v5091
        %v5093 = vsel %vm1358, %v5075, 0.0
        %v5094 = vadd.f32 %v5092, %v5093
        %v5095 = vsel %vm1358, %v5076, 0.0
        %v5096 = vadd.f32 %v5094, %v5095
        %v5097 = vsel %vm1358, %v5077, 0.0
        %v5098 = vadd.f32 %v5096, %v5097
        %v5099 = vsel %vm1358, %v5078, 0.0
        %v5100 = vadd.f32 %v5098, %v5099
        %v5101 = vsel %vm1358, %v5079, 0.0
        %v5102 = vadd.f32 %v5100, %v5101
        %v5103 = vsel %vm1358, %v5080, 0.0
        %v5104 = vadd.f32 %v5102, %v5103
        %v5105 = vsel %vm1358, %v5081, 0.0
        %v5106 = vadd.f32 %v5104, %v5105
        %v5107 = vsel %vm1358, %v5082, 0.0
        %v5108 = vadd.f32 %v5106, %v5107
        %v5109 = vsel %vm1358, %v5083, 0.0
        %v5110 = vadd.f32 %v5108, %v5109
        %v5111 = vsel %vm1358, %v5084, 0.0
        %v5112 = vadd.f32 %v5110, %v5111
        %v5113 = vsel %vm1358, %v5085, 0.0
        %v5114 = vadd.f32 %v5112, %v5113
        %v5115 = vsel %vm1358, %v5086, 0.0
        %v5116 = vadd.f32 %v5114, %v5115
        %v5117 = vsel %vm1358, %v5087, 0.0
        %v5118 = vadd.f32 %v5116, %v5117
        %v5119 = vrot.slane %v5118, 4
        %v5120 = vadd.f32 %v5118, %v5119
        %v5121 = vrot.slane %v5120, 2
        %v5122 = vadd.f32 %v5120, %v5121
        %v5123 = vrot.slane %v5122, 1
        %v5124 = vadd.f32 %v5122, %v5123
        %v5125 = vadd.f32 %v4409, %v5124
        %v5126 = vld [vmem:[%s1539 + $0x280] sm:$0xff]
        %v5127 = vld [vmem:[%s1539 + $0x288] sm:$0xff]
        %v5128 = vld [vmem:[%s1539 + $0x290] sm:$0xff]
        %v5129 = vld [vmem:[%s1539 + $0x298] sm:$0xff]
        %v5130 = vld [vmem:[%s1539 + $0x2a0] sm:$0xff]
        %v5131 = vld [vmem:[%s1539 + $0x2a8] sm:$0xff]
        %v5132 = vld [vmem:[%s1539 + $0x2b0] sm:$0xff]
        %v5133 = vld [vmem:[%s1539 + $0x2b8] sm:$0xff]
        %v5134 = vld [vmem:[%s1539 + $0x2c0] sm:$0xff]
        %v5135 = vld [vmem:[%s1539 + $0x2c8] sm:$0xff]
        %v5136 = vld [vmem:[%s1539 + $0x2d0] sm:$0xff]
        %v5137 = vld [vmem:[%s1539 + $0x2d8] sm:$0xff]
        %v5138 = vld [vmem:[%s1539 + $0x2e0] sm:$0xff]
        %v5139 = vld [vmem:[%s1539 + $0x2e8] sm:$0xff]
        %v5140 = vld [vmem:[%s1539 + $0x2f0] sm:$0xff]
        %v5141 = vld [vmem:[%s1539 + $0x2f8] sm:$0xff]
        %v5142 = vmul.f32 %v4900, %v5126
        %v5143 = vmul.f32 %v4901, %v5127
        %v5144 = vmul.f32 %v4902, %v5128
        %v5145 = vmul.f32 %v4903, %v5129
        %v5146 = vmul.f32 %v4904, %v5130
        %v5147 = vmul.f32 %v4905, %v5131
        %v5148 = vmul.f32 %v4906, %v5132
        %v5149 = vmul.f32 %v4907, %v5133
        %v5150 = vmul.f32 %v4908, %v5134
        %v5151 = vmul.f32 %v4909, %v5135
        %v5152 = vmul.f32 %v4910, %v5136
        %v5153 = vmul.f32 %v4911, %v5137
        %v5154 = vmul.f32 %v4912, %v5138
        %v5155 = vmul.f32 %v4913, %v5139
        %v5156 = vmul.f32 %v4914, %v5140
        %v5157 = vmul.f32 %v4915, %v5141
        %v5158 = vsel %vm1358, %v5142, 0.0
        %v5159 = vsel %vm1358, %v5143, 0.0
        %v5160 = vadd.f32 %v5158, %v5159
        %v5161 = vsel %vm1358, %v5144, 0.0
        %v5162 = vadd.f32 %v5160, %v5161
        %v5163 = vsel %vm1358, %v5145, 0.0
        %v5164 = vadd.f32 %v5162, %v5163
        %v5165 = vsel %vm1358, %v5146, 0.0
        %v5166 = vadd.f32 %v5164, %v5165
        %v5167 = vsel %vm1358, %v5147, 0.0
        %v5168 = vadd.f32 %v5166, %v5167
        %v5169 = vsel %vm1358, %v5148, 0.0
        %v5170 = vadd.f32 %v5168, %v5169
        %v5171 = vsel %vm1358, %v5149, 0.0
        %v5172 = vadd.f32 %v5170, %v5171
        %v5173 = vsel %vm1358, %v5150, 0.0
        %v5174 = vadd.f32 %v5172, %v5173
        %v5175 = vsel %vm1358, %v5151, 0.0
        %v5176 = vadd.f32 %v5174, %v5175
        %v5177 = vsel %vm1358, %v5152, 0.0
        %v5178 = vadd.f32 %v5176, %v5177
        %v5179 = vsel %vm1358, %v5153, 0.0
        %v5180 = vadd.f32 %v5178, %v5179
        %v5181 = vsel %vm1358, %v5154, 0.0
        %v5182 = vadd.f32 %v5180, %v5181
        %v5183 = vsel %vm1358, %v5155, 0.0
        %v5184 = vadd.f32 %v5182, %v5183
        %v5185 = vsel %vm1358, %v5156, 0.0
        %v5186 = vadd.f32 %v5184, %v5185
        %v5187 = vsel %vm1358, %v5157, 0.0
        %v5188 = vadd.f32 %v5186, %v5187
        %v5189 = vrot.slane %v5188, 4
        %v5190 = vadd.f32 %v5188, %v5189
        %v5191 = vrot.slane %v5190, 2
        %v5192 = vadd.f32 %v5190, %v5191
        %v5193 = vrot.slane %v5192, 1
        %v5194 = vadd.f32 %v5192, %v5193
        %v5195 = vadd.f32 %v4479, %v5194
        %v5196 = vld [vmem:[%s1610 + $0x280] sm:$0xff]
        %v5197 = vld [vmem:[%s1610 + $0x288] sm:$0xff]
        %v5198 = vld [vmem:[%s1610 + $0x290] sm:$0xff]
        %v5199 = vld [vmem:[%s1610 + $0x298] sm:$0xff]
        %v5200 = vld [vmem:[%s1610 + $0x2a0] sm:$0xff]
        %v5201 = vld [vmem:[%s1610 + $0x2a8] sm:$0xff]
        %v5202 = vld [vmem:[%s1610 + $0x2b0] sm:$0xff]
        %v5203 = vld [vmem:[%s1610 + $0x2b8] sm:$0xff]
        %v5204 = vld [vmem:[%s1610 + $0x2c0] sm:$0xff]
        %v5205 = vld [vmem:[%s1610 + $0x2c8] sm:$0xff]
        %v5206 = vld [vmem:[%s1610 + $0x2d0] sm:$0xff]
        %v5207 = vld [vmem:[%s1610 + $0x2d8] sm:$0xff]
        %v5208 = vld [vmem:[%s1610 + $0x2e0] sm:$0xff]
        %v5209 = vld [vmem:[%s1610 + $0x2e8] sm:$0xff]
        %v5210 = vld [vmem:[%s1610 + $0x2f0] sm:$0xff]
        %v5211 = vld [vmem:[%s1610 + $0x2f8] sm:$0xff]
        %v5212 = vmul.f32 %v4900, %v5196
        %v5213 = vmul.f32 %v4901, %v5197
        %v5214 = vmul.f32 %v4902, %v5198
        %v5215 = vmul.f32 %v4903, %v5199
        %v5216 = vmul.f32 %v4904, %v5200
        %v5217 = vmul.f32 %v4905, %v5201
        %v5218 = vmul.f32 %v4906, %v5202
        %v5219 = vmul.f32 %v4907, %v5203
        %v5220 = vmul.f32 %v4908, %v5204
        %v5221 = vmul.f32 %v4909, %v5205
        %v5222 = vmul.f32 %v4910, %v5206
        %v5223 = vmul.f32 %v4911, %v5207
        %v5224 = vmul.f32 %v4912, %v5208
        %v5225 = vmul.f32 %v4913, %v5209
        %v5226 = vmul.f32 %v4914, %v5210
        %v5227 = vmul.f32 %v4915, %v5211
        %v5228 = vsel %vm1358, %v5212, 0.0
        %v5229 = vsel %vm1358, %v5213, 0.0
        %v5230 = vadd.f32 %v5228, %v5229
        %v5231 = vsel %vm1358, %v5214, 0.0
        %v5232 = vadd.f32 %v5230, %v5231
        %v5233 = vsel %vm1358, %v5215, 0.0
        %v5234 = vadd.f32 %v5232, %v5233
        %v5235 = vsel %vm1358, %v5216, 0.0
        %v5236 = vadd.f32 %v5234, %v5235
        %v5237 = vsel %vm1358, %v5217, 0.0
        %v5238 = vadd.f32 %v5236, %v5237
        %v5239 = vsel %vm1358, %v5218, 0.0
        %v5240 = vadd.f32 %v5238, %v5239
        %v5241 = vsel %vm1358, %v5219, 0.0
        %v5242 = vadd.f32 %v5240, %v5241
        %v5243 = vsel %vm1358, %v5220, 0.0
        %v5244 = vadd.f32 %v5242, %v5243
        %v5245 = vsel %vm1358, %v5221, 0.0
        %v5246 = vadd.f32 %v5244, %v5245
        %v5247 = vsel %vm1358, %v5222, 0.0
        %v5248 = vadd.f32 %v5246, %v5247
        %v5249 = vsel %vm1358, %v5223, 0.0
        %v5250 = vadd.f32 %v5248, %v5249
        %v5251 = vsel %vm1358, %v5224, 0.0
        %v5252 = vadd.f32 %v5250, %v5251
        %v5253 = vsel %vm1358, %v5225, 0.0
        %v5254 = vadd.f32 %v5252, %v5253
        %v5255 = vsel %vm1358, %v5226, 0.0
        %v5256 = vadd.f32 %v5254, %v5255
        %v5257 = vsel %vm1358, %v5227, 0.0
        %v5258 = vadd.f32 %v5256, %v5257
        %v5259 = vrot.slane %v5258, 4
        %v5260 = vadd.f32 %v5258, %v5259
        %v5261 = vrot.slane %v5260, 2
        %v5262 = vadd.f32 %v5260, %v5261
        %v5263 = vrot.slane %v5262, 1
        %v5264 = vadd.f32 %v5262, %v5263
        %v5265 = vadd.f32 %v4549, %v5264
        %v5266 = vld [vmem:[%s1681 + $0x280] sm:$0xff]
        %v5267 = vld [vmem:[%s1681 + $0x288] sm:$0xff]
        %v5268 = vld [vmem:[%s1681 + $0x290] sm:$0xff]
        %v5269 = vld [vmem:[%s1681 + $0x298] sm:$0xff]
        %v5270 = vld [vmem:[%s1681 + $0x2a0] sm:$0xff]
        %v5271 = vld [vmem:[%s1681 + $0x2a8] sm:$0xff]
        %v5272 = vld [vmem:[%s1681 + $0x2b0] sm:$0xff]
        %v5273 = vld [vmem:[%s1681 + $0x2b8] sm:$0xff]
        %v5274 = vld [vmem:[%s1681 + $0x2c0] sm:$0xff]
        %v5275 = vld [vmem:[%s1681 + $0x2c8] sm:$0xff]
        %v5276 = vld [vmem:[%s1681 + $0x2d0] sm:$0xff]
        %v5277 = vld [vmem:[%s1681 + $0x2d8] sm:$0xff]
        %v5278 = vld [vmem:[%s1681 + $0x2e0] sm:$0xff]
        %v5279 = vld [vmem:[%s1681 + $0x2e8] sm:$0xff]
        %v5280 = vld [vmem:[%s1681 + $0x2f0] sm:$0xff]
        %v5281 = vld [vmem:[%s1681 + $0x2f8] sm:$0xff]
        %v5282 = vmul.f32 %v4900, %v5266
        %v5283 = vmul.f32 %v4901, %v5267
        %v5284 = vmul.f32 %v4902, %v5268
        %v5285 = vmul.f32 %v4903, %v5269
        %v5286 = vmul.f32 %v4904, %v5270
        %v5287 = vmul.f32 %v4905, %v5271
        %v5288 = vmul.f32 %v4906, %v5272
        %v5289 = vmul.f32 %v4907, %v5273
        %v5290 = vmul.f32 %v4908, %v5274
        %v5291 = vmul.f32 %v4909, %v5275
        %v5292 = vmul.f32 %v4910, %v5276
        %v5293 = vmul.f32 %v4911, %v5277
        %v5294 = vmul.f32 %v4912, %v5278
        %v5295 = vmul.f32 %v4913, %v5279
        %v5296 = vmul.f32 %v4914, %v5280
        %v5297 = vmul.f32 %v4915, %v5281
        %v5298 = vsel %vm1358, %v5282, 0.0
        %v5299 = vsel %vm1358, %v5283, 0.0
        %v5300 = vadd.f32 %v5298, %v5299
        %v5301 = vsel %vm1358, %v5284, 0.0
        %v5302 = vadd.f32 %v5300, %v5301
        %v5303 = vsel %vm1358, %v5285, 0.0
        %v5304 = vadd.f32 %v5302, %v5303
        %v5305 = vsel %vm1358, %v5286, 0.0
        %v5306 = vadd.f32 %v5304, %v5305
        %v5307 = vsel %vm1358, %v5287, 0.0
        %v5308 = vadd.f32 %v5306, %v5307
        %v5309 = vsel %vm1358, %v5288, 0.0
        %v5310 = vadd.f32 %v5308, %v5309
        %v5311 = vsel %vm1358, %v5289, 0.0
        %v5312 = vadd.f32 %v5310, %v5311
        %v5313 = vsel %vm1358, %v5290, 0.0
        %v5314 = vadd.f32 %v5312, %v5313
        %v5315 = vsel %vm1358, %v5291, 0.0
        %v5316 = vadd.f32 %v5314, %v5315
        %v5317 = vsel %vm1358, %v5292, 0.0
        %v5318 = vadd.f32 %v5316, %v5317
        %v5319 = vsel %vm1358, %v5293, 0.0
        %v5320 = vadd.f32 %v5318, %v5319
        %v5321 = vsel %vm1358, %v5294, 0.0
        %v5322 = vadd.f32 %v5320, %v5321
        %v5323 = vsel %vm1358, %v5295, 0.0
        %v5324 = vadd.f32 %v5322, %v5323
        %v5325 = vsel %vm1358, %v5296, 0.0
        %v5326 = vadd.f32 %v5324, %v5325
        %v5327 = vsel %vm1358, %v5297, 0.0
        %v5328 = vadd.f32 %v5326, %v5327
        %v5329 = vrot.slane %v5328, 4
        %v5330 = vadd.f32 %v5328, %v5329
        %v5331 = vrot.slane %v5330, 2
        %v5332 = vadd.f32 %v5330, %v5331
        %v5333 = vrot.slane %v5332, 1
        %v5334 = vadd.f32 %v5332, %v5333
        %v5335 = vadd.f32 %v4619, %v5334
        %v5336 = vld [vmem:[%s1752 + $0x280] sm:$0xff]
        %v5337 = vld [vmem:[%s1752 + $0x288] sm:$0xff]
        %v5338 = vld [vmem:[%s1752 + $0x290] sm:$0xff]
        %v5339 = vld [vmem:[%s1752 + $0x298] sm:$0xff]
        %v5340 = vld [vmem:[%s1752 + $0x2a0] sm:$0xff]
        %v5341 = vld [vmem:[%s1752 + $0x2a8] sm:$0xff]
        %v5342 = vld [vmem:[%s1752 + $0x2b0] sm:$0xff]
        %v5343 = vld [vmem:[%s1752 + $0x2b8] sm:$0xff]
        %v5344 = vld [vmem:[%s1752 + $0x2c0] sm:$0xff]
        %v5345 = vld [vmem:[%s1752 + $0x2c8] sm:$0xff]
        %v5346 = vld [vmem:[%s1752 + $0x2d0] sm:$0xff]
        %v5347 = vld [vmem:[%s1752 + $0x2d8] sm:$0xff]
        %v5348 = vld [vmem:[%s1752 + $0x2e0] sm:$0xff]
        %v5349 = vld [vmem:[%s1752 + $0x2e8] sm:$0xff]
        %v5350 = vld [vmem:[%s1752 + $0x2f0] sm:$0xff]
        %v5351 = vld [vmem:[%s1752 + $0x2f8] sm:$0xff]
        %v5352 = vmul.f32 %v4900, %v5336
        %v5353 = vmul.f32 %v4901, %v5337
        %v5354 = vmul.f32 %v4902, %v5338
        %v5355 = vmul.f32 %v4903, %v5339
        %v5356 = vmul.f32 %v4904, %v5340
        %v5357 = vmul.f32 %v4905, %v5341
        %v5358 = vmul.f32 %v4906, %v5342
        %v5359 = vmul.f32 %v4907, %v5343
        %v5360 = vmul.f32 %v4908, %v5344
        %v5361 = vmul.f32 %v4909, %v5345
        %v5362 = vmul.f32 %v4910, %v5346
        %v5363 = vmul.f32 %v4911, %v5347
        %v5364 = vmul.f32 %v4912, %v5348
        %v5365 = vmul.f32 %v4913, %v5349
        %v5366 = vmul.f32 %v4914, %v5350
        %v5367 = vmul.f32 %v4915, %v5351
        %v5368 = vsel %vm1358, %v5352, 0.0
        %v5369 = vsel %vm1358, %v5353, 0.0
        %v5370 = vadd.f32 %v5368, %v5369
        %v5371 = vsel %vm1358, %v5354, 0.0
        %v5372 = vadd.f32 %v5370, %v5371
        %v5373 = vsel %vm1358, %v5355, 0.0
        %v5374 = vadd.f32 %v5372, %v5373
        %v5375 = vsel %vm1358, %v5356, 0.0
        %v5376 = vadd.f32 %v5374, %v5375
        %v5377 = vsel %vm1358, %v5357, 0.0
        %v5378 = vadd.f32 %v5376, %v5377
        %v5379 = vsel %vm1358, %v5358, 0.0
        %v5380 = vadd.f32 %v5378, %v5379
        %v5381 = vsel %vm1358, %v5359, 0.0
        %v5382 = vadd.f32 %v5380, %v5381
        %v5383 = vsel %vm1358, %v5360, 0.0
        %v5384 = vadd.f32 %v5382, %v5383
        %v5385 = vsel %vm1358, %v5361, 0.0
        %v5386 = vadd.f32 %v5384, %v5385
        %v5387 = vsel %vm1358, %v5362, 0.0
        %v5388 = vadd.f32 %v5386, %v5387
        %v5389 = vsel %vm1358, %v5363, 0.0
        %v5390 = vadd.f32 %v5388, %v5389
        %v5391 = vsel %vm1358, %v5364, 0.0
        %v5392 = vadd.f32 %v5390, %v5391
        %v5393 = vsel %vm1358, %v5365, 0.0
        %v5394 = vadd.f32 %v5392, %v5393
        %v5395 = vsel %vm1358, %v5366, 0.0
        %v5396 = vadd.f32 %v5394, %v5395
        %v5397 = vsel %vm1358, %v5367, 0.0
        %v5398 = vadd.f32 %v5396, %v5397
        %v5399 = vrot.slane %v5398, 4
        %v5400 = vadd.f32 %v5398, %v5399
        %v5401 = vrot.slane %v5400, 2
        %v5402 = vadd.f32 %v5400, %v5401
        %v5403 = vrot.slane %v5402, 1
        %v5404 = vadd.f32 %v5402, %v5403
        %v5405 = vadd.f32 %v4689, %v5404
        %v5406 = vld [vmem:[%s1823 + $0x280] sm:$0xff]
        %v5407 = vld [vmem:[%s1823 + $0x288] sm:$0xff]
        %v5408 = vld [vmem:[%s1823 + $0x290] sm:$0xff]
        %v5409 = vld [vmem:[%s1823 + $0x298] sm:$0xff]
        %v5410 = vld [vmem:[%s1823 + $0x2a0] sm:$0xff]
        %v5411 = vld [vmem:[%s1823 + $0x2a8] sm:$0xff]
        %v5412 = vld [vmem:[%s1823 + $0x2b0] sm:$0xff]
        %v5413 = vld [vmem:[%s1823 + $0x2b8] sm:$0xff]
        %v5414 = vld [vmem:[%s1823 + $0x2c0] sm:$0xff]
        %v5415 = vld [vmem:[%s1823 + $0x2c8] sm:$0xff]
        %v5416 = vld [vmem:[%s1823 + $0x2d0] sm:$0xff]
        %v5417 = vld [vmem:[%s1823 + $0x2d8] sm:$0xff]
        %v5418 = vld [vmem:[%s1823 + $0x2e0] sm:$0xff]
        %v5419 = vld [vmem:[%s1823 + $0x2e8] sm:$0xff]
        %v5420 = vld [vmem:[%s1823 + $0x2f0] sm:$0xff]
        %v5421 = vld [vmem:[%s1823 + $0x2f8] sm:$0xff]
        %v5422 = vmul.f32 %v4900, %v5406
        %v5423 = vmul.f32 %v4901, %v5407
        %v5424 = vmul.f32 %v4902, %v5408
        %v5425 = vmul.f32 %v4903, %v5409
        %v5426 = vmul.f32 %v4904, %v5410
        %v5427 = vmul.f32 %v4905, %v5411
        %v5428 = vmul.f32 %v4906, %v5412
        %v5429 = vmul.f32 %v4907, %v5413
        %v5430 = vmul.f32 %v4908, %v5414
        %v5431 = vmul.f32 %v4909, %v5415
        %v5432 = vmul.f32 %v4910, %v5416
        %v5433 = vmul.f32 %v4911, %v5417
        %v5434 = vmul.f32 %v4912, %v5418
        %v5435 = vmul.f32 %v4913, %v5419
        %v5436 = vmul.f32 %v4914, %v5420
        %v5437 = vmul.f32 %v4915, %v5421
        %v5438 = vsel %vm1358, %v5422, 0.0
        %v5439 = vsel %vm1358, %v5423, 0.0
        %v5440 = vadd.f32 %v5438, %v5439
        %v5441 = vsel %vm1358, %v5424, 0.0
        %v5442 = vadd.f32 %v5440, %v5441
        %v5443 = vsel %vm1358, %v5425, 0.0
        %v5444 = vadd.f32 %v5442, %v5443
        %v5445 = vsel %vm1358, %v5426, 0.0
        %v5446 = vadd.f32 %v5444, %v5445
        %v5447 = vsel %vm1358, %v5427, 0.0
        %v5448 = vadd.f32 %v5446, %v5447
        %v5449 = vsel %vm1358, %v5428, 0.0
        %v5450 = vadd.f32 %v5448, %v5449
        %v5451 = vsel %vm1358, %v5429, 0.0
        %v5452 = vadd.f32 %v5450, %v5451
        %v5453 = vsel %vm1358, %v5430, 0.0
        %v5454 = vadd.f32 %v5452, %v5453
        %v5455 = vsel %vm1358, %v5431, 0.0
        %v5456 = vadd.f32 %v5454, %v5455
        %v5457 = vsel %vm1358, %v5432, 0.0
        %v5458 = vadd.f32 %v5456, %v5457
        %v5459 = vsel %vm1358, %v5433, 0.0
        %v5460 = vadd.f32 %v5458, %v5459
        %v5461 = vsel %vm1358, %v5434, 0.0
        %v5462 = vadd.f32 %v5460, %v5461
        %v5463 = vsel %vm1358, %v5435, 0.0
        %v5464 = vadd.f32 %v5462, %v5463
        %v5465 = vsel %vm1358, %v5436, 0.0
        %v5466 = vadd.f32 %v5464, %v5465
        %v5467 = vsel %vm1358, %v5437, 0.0
        %v5468 = vadd.f32 %v5466, %v5467
        %v5469 = vrot.slane %v5468, 4
        %v5470 = vadd.f32 %v5468, %v5469
        %v5471 = vrot.slane %v5470, 2
        %v5472 = vadd.f32 %v5470, %v5471
        %v5473 = vrot.slane %v5472, 1
        %v5474 = vadd.f32 %v5472, %v5473
        %v5475 = vadd.f32 %v4759, %v5474
        %v5476 = vld [vmem:[%s1894 + $0x280] sm:$0xff]
        %v5477 = vld [vmem:[%s1894 + $0x288] sm:$0xff]
        %v5478 = vld [vmem:[%s1894 + $0x290] sm:$0xff]
        %v5479 = vld [vmem:[%s1894 + $0x298] sm:$0xff]
        %v5480 = vld [vmem:[%s1894 + $0x2a0] sm:$0xff]
        %v5481 = vld [vmem:[%s1894 + $0x2a8] sm:$0xff]
        %v5482 = vld [vmem:[%s1894 + $0x2b0] sm:$0xff]
        %v5483 = vld [vmem:[%s1894 + $0x2b8] sm:$0xff]
        %v5484 = vld [vmem:[%s1894 + $0x2c0] sm:$0xff]
        %v5485 = vld [vmem:[%s1894 + $0x2c8] sm:$0xff]
        %v5486 = vld [vmem:[%s1894 + $0x2d0] sm:$0xff]
        %v5487 = vld [vmem:[%s1894 + $0x2d8] sm:$0xff]
        %v5488 = vld [vmem:[%s1894 + $0x2e0] sm:$0xff]
        %v5489 = vld [vmem:[%s1894 + $0x2e8] sm:$0xff]
        %v5490 = vld [vmem:[%s1894 + $0x2f0] sm:$0xff]
        %v5491 = vld [vmem:[%s1894 + $0x2f8] sm:$0xff]
        %v5492 = vmul.f32 %v4900, %v5476
        %v5493 = vmul.f32 %v4901, %v5477
        %v5494 = vmul.f32 %v4902, %v5478
        %v5495 = vmul.f32 %v4903, %v5479
        %v5496 = vmul.f32 %v4904, %v5480
        %v5497 = vmul.f32 %v4905, %v5481
        %v5498 = vmul.f32 %v4906, %v5482
        %v5499 = vmul.f32 %v4907, %v5483
        %v5500 = vmul.f32 %v4908, %v5484
        %v5501 = vmul.f32 %v4909, %v5485
        %v5502 = vmul.f32 %v4910, %v5486
        %v5503 = vmul.f32 %v4911, %v5487
        %v5504 = vmul.f32 %v4912, %v5488
        %v5505 = vmul.f32 %v4913, %v5489
        %v5506 = vmul.f32 %v4914, %v5490
        %v5507 = vmul.f32 %v4915, %v5491
        %v5508 = vsel %vm1358, %v5492, 0.0
        %v5509 = vsel %vm1358, %v5493, 0.0
        %v5510 = vadd.f32 %v5508, %v5509
        %v5511 = vsel %vm1358, %v5494, 0.0
        %v5512 = vadd.f32 %v5510, %v5511
        %v5513 = vsel %vm1358, %v5495, 0.0
        %v5514 = vadd.f32 %v5512, %v5513
        %v5515 = vsel %vm1358, %v5496, 0.0
        %v5516 = vadd.f32 %v5514, %v5515
        %v5517 = vsel %vm1358, %v5497, 0.0
        %v5518 = vadd.f32 %v5516, %v5517
        %v5519 = vsel %vm1358, %v5498, 0.0
        %v5520 = vadd.f32 %v5518, %v5519
        %v5521 = vsel %vm1358, %v5499, 0.0
        %v5522 = vadd.f32 %v5520, %v5521
        %v5523 = vsel %vm1358, %v5500, 0.0
        %v5524 = vadd.f32 %v5522, %v5523
        %v5525 = vsel %vm1358, %v5501, 0.0
        %v5526 = vadd.f32 %v5524, %v5525
        %v5527 = vsel %vm1358, %v5502, 0.0
        %v5528 = vadd.f32 %v5526, %v5527
        %v5529 = vsel %vm1358, %v5503, 0.0
        %v5530 = vadd.f32 %v5528, %v5529
        %v5531 = vsel %vm1358, %v5504, 0.0
        %v5532 = vadd.f32 %v5530, %v5531
        %v5533 = vsel %vm1358, %v5505, 0.0
        %v5534 = vadd.f32 %v5532, %v5533
        %v5535 = vsel %vm1358, %v5506, 0.0
        %v5536 = vadd.f32 %v5534, %v5535
        %v5537 = vsel %vm1358, %v5507, 0.0
        %v5538 = vadd.f32 %v5536, %v5537
        %v5539 = vrot.slane %v5538, 4
        %v5540 = vadd.f32 %v5538, %v5539
        %v5541 = vrot.slane %v5540, 2
        %v5542 = vadd.f32 %v5540, %v5541
        %v5543 = vrot.slane %v5542, 1
        %v5544 = vadd.f32 %v5542, %v5543
        %v5545 = vadd.f32 %v4829, %v5544
        %v5546 = vld [vmem:[%s1965 + $0x280] sm:$0xff]
        %v5547 = vld [vmem:[%s1965 + $0x288] sm:$0xff]
        %v5548 = vld [vmem:[%s1965 + $0x290] sm:$0xff]
        %v5549 = vld [vmem:[%s1965 + $0x298] sm:$0xff]
        %v5550 = vld [vmem:[%s1965 + $0x2a0] sm:$0xff]
        %v5551 = vld [vmem:[%s1965 + $0x2a8] sm:$0xff]
        %v5552 = vld [vmem:[%s1965 + $0x2b0] sm:$0xff]
        %v5553 = vld [vmem:[%s1965 + $0x2b8] sm:$0xff]
        %v5554 = vld [vmem:[%s1965 + $0x2c0] sm:$0xff]
        %v5555 = vld [vmem:[%s1965 + $0x2c8] sm:$0xff]
        %v5556 = vld [vmem:[%s1965 + $0x2d0] sm:$0xff]
        %v5557 = vld [vmem:[%s1965 + $0x2d8] sm:$0xff]
        %v5558 = vld [vmem:[%s1965 + $0x2e0] sm:$0xff]
        %v5559 = vld [vmem:[%s1965 + $0x2e8] sm:$0xff]
        %v5560 = vld [vmem:[%s1965 + $0x2f0] sm:$0xff]
        %v5561 = vld [vmem:[%s1965 + $0x2f8] sm:$0xff]
        %v5562 = vmul.f32 %v4900, %v5546
        %v5563 = vmul.f32 %v4901, %v5547
        %v5564 = vmul.f32 %v4902, %v5548
        %v5565 = vmul.f32 %v4903, %v5549
        %v5566 = vmul.f32 %v4904, %v5550
        %v5567 = vmul.f32 %v4905, %v5551
        %v5568 = vmul.f32 %v4906, %v5552
        %v5569 = vmul.f32 %v4907, %v5553
        %v5570 = vmul.f32 %v4908, %v5554
        %v5571 = vmul.f32 %v4909, %v5555
        %v5572 = vmul.f32 %v4910, %v5556
        %v5573 = vmul.f32 %v4911, %v5557
        %v5574 = vmul.f32 %v4912, %v5558
        %v5575 = vmul.f32 %v4913, %v5559
        %v5576 = vmul.f32 %v4914, %v5560
        %v5577 = vmul.f32 %v4915, %v5561
        %v5578 = vsel %vm1358, %v5562, 0.0
        %v5579 = vsel %vm1358, %v5563, 0.0
        %v5580 = vadd.f32 %v5578, %v5579
        %v5581 = vsel %vm1358, %v5564, 0.0
        %v5582 = vadd.f32 %v5580, %v5581
        %v5583 = vsel %vm1358, %v5565, 0.0
        %v5584 = vadd.f32 %v5582, %v5583
        %v5585 = vsel %vm1358, %v5566, 0.0
        %v5586 = vadd.f32 %v5584, %v5585
        %v5587 = vsel %vm1358, %v5567, 0.0
        %v5588 = vadd.f32 %v5586, %v5587
        %v5589 = vsel %vm1358, %v5568, 0.0
        %v5590 = vadd.f32 %v5588, %v5589
        %v5591 = vsel %vm1358, %v5569, 0.0
        %v5592 = vadd.f32 %v5590, %v5591
        %v5593 = vsel %vm1358, %v5570, 0.0
        %v5594 = vadd.f32 %v5592, %v5593
        %v5595 = vsel %vm1358, %v5571, 0.0
        %v5596 = vadd.f32 %v5594, %v5595
        %v5597 = vsel %vm1358, %v5572, 0.0
        %v5598 = vadd.f32 %v5596, %v5597
        %v5599 = vsel %vm1358, %v5573, 0.0
        %v5600 = vadd.f32 %v5598, %v5599
        %v5601 = vsel %vm1358, %v5574, 0.0
        %v5602 = vadd.f32 %v5600, %v5601
        %v5603 = vsel %vm1358, %v5575, 0.0
        %v5604 = vadd.f32 %v5602, %v5603
        %v5605 = vsel %vm1358, %v5576, 0.0
        %v5606 = vadd.f32 %v5604, %v5605
        %v5607 = vsel %vm1358, %v5577, 0.0
        %v5608 = vadd.f32 %v5606, %v5607
        %v5609 = vrot.slane %v5608, 4
        %v5610 = vadd.f32 %v5608, %v5609
        %v5611 = vrot.slane %v5610, 2
        %v5612 = vadd.f32 %v5610, %v5611
        %v5613 = vrot.slane %v5612, 1
        %v5614 = vadd.f32 %v5612, %v5613
        %v5615 = vadd.f32 %v4899, %v5614
        %v5616 = vld [vmem:[#allocation3 + $0x300] sm:$0xff]
        %v5617 = vld [vmem:[#allocation3 + $0x308] sm:$0xff]
        %v5618 = vld [vmem:[#allocation3 + $0x310] sm:$0xff]
        %v5619 = vld [vmem:[#allocation3 + $0x318] sm:$0xff]
        %v5620 = vld [vmem:[#allocation3 + $0x320] sm:$0xff]
        %v5621 = vld [vmem:[#allocation3 + $0x328] sm:$0xff]
        %v5622 = vld [vmem:[#allocation3 + $0x330] sm:$0xff]
        %v5623 = vld [vmem:[#allocation3 + $0x338] sm:$0xff]
        %v5624 = vld [vmem:[#allocation3 + $0x340] sm:$0xff]
        %v5625 = vld [vmem:[#allocation3 + $0x348] sm:$0xff]
        %v5626 = vld [vmem:[#allocation3 + $0x350] sm:$0xff]
        %v5627 = vld [vmem:[#allocation3 + $0x358] sm:$0xff]
        %v5628 = vld [vmem:[#allocation3 + $0x360] sm:$0xff]
        %v5629 = vld [vmem:[#allocation3 + $0x368] sm:$0xff]
        %v5630 = vld [vmem:[#allocation3 + $0x370] sm:$0xff]
        %v5631 = vld [vmem:[#allocation3 + $0x378] sm:$0xff]
        %v5632 = vld [vmem:[%s3 + $0x300] sm:$0xff]
        %v5633 = vld [vmem:[%s3 + $0x308] sm:$0xff]
        %v5634 = vld [vmem:[%s3 + $0x310] sm:$0xff]
        %v5635 = vld [vmem:[%s3 + $0x318] sm:$0xff]
        %v5636 = vld [vmem:[%s3 + $0x320] sm:$0xff]
        %v5637 = vld [vmem:[%s3 + $0x328] sm:$0xff]
        %v5638 = vld [vmem:[%s3 + $0x330] sm:$0xff]
        %v5639 = vld [vmem:[%s3 + $0x338] sm:$0xff]
        %v5640 = vld [vmem:[%s3 + $0x340] sm:$0xff]
        %v5641 = vld [vmem:[%s3 + $0x348] sm:$0xff]
        %v5642 = vld [vmem:[%s3 + $0x350] sm:$0xff]
        %v5643 = vld [vmem:[%s3 + $0x358] sm:$0xff]
        %v5644 = vld [vmem:[%s3 + $0x360] sm:$0xff]
        %v5645 = vld [vmem:[%s3 + $0x368] sm:$0xff]
        %v5646 = vld [vmem:[%s3 + $0x370] sm:$0xff]
        %v5647 = vld [vmem:[%s3 + $0x378] sm:$0xff]
        %v5648 = vmul.f32 %v5616, %v5632
        %v5649 = vmul.f32 %v5617, %v5633
        %v5650 = vmul.f32 %v5618, %v5634
        %v5651 = vmul.f32 %v5619, %v5635
        %v5652 = vmul.f32 %v5620, %v5636
        %v5653 = vmul.f32 %v5621, %v5637
        %v5654 = vmul.f32 %v5622, %v5638
        %v5655 = vmul.f32 %v5623, %v5639
        %v5656 = vmul.f32 %v5624, %v5640
        %v5657 = vmul.f32 %v5625, %v5641
        %v5658 = vmul.f32 %v5626, %v5642
        %v5659 = vmul.f32 %v5627, %v5643
        %v5660 = vmul.f32 %v5628, %v5644
        %v5661 = vmul.f32 %v5629, %v5645
        %v5662 = vmul.f32 %v5630, %v5646
        %v5663 = vmul.f32 %v5631, %v5647
        %v5664 = vsel %vm1358, %v5648, 0.0
        %v5665 = vsel %vm1358, %v5649, 0.0
        %v5666 = vadd.f32 %v5664, %v5665
        %v5667 = vsel %vm1358, %v5650, 0.0
        %v5668 = vadd.f32 %v5666, %v5667
        %v5669 = vsel %vm1358, %v5651, 0.0
        %v5670 = vadd.f32 %v5668, %v5669
        %v5671 = vsel %vm1358, %v5652, 0.0
        %v5672 = vadd.f32 %v5670, %v5671
        %v5673 = vsel %vm1358, %v5653, 0.0
        %v5674 = vadd.f32 %v5672, %v5673
        %v5675 = vsel %vm1358, %v5654, 0.0
        %v5676 = vadd.f32 %v5674, %v5675
        %v5677 = vsel %vm1358, %v5655, 0.0
        %v5678 = vadd.f32 %v5676, %v5677
        %v5679 = vsel %vm1358, %v5656, 0.0
        %v5680 = vadd.f32 %v5678, %v5679
        %v5681 = vsel %vm1358, %v5657, 0.0
        %v5682 = vadd.f32 %v5680, %v5681
        %v5683 = vsel %vm1358, %v5658, 0.0
        %v5684 = vadd.f32 %v5682, %v5683
        %v5685 = vsel %vm1358, %v5659, 0.0
        %v5686 = vadd.f32 %v5684, %v5685
        %v5687 = vsel %vm1358, %v5660, 0.0
        %v5688 = vadd.f32 %v5686, %v5687
        %v5689 = vsel %vm1358, %v5661, 0.0
        %v5690 = vadd.f32 %v5688, %v5689
        %v5691 = vsel %vm1358, %v5662, 0.0
        %v5692 = vadd.f32 %v5690, %v5691
        %v5693 = vsel %vm1358, %v5663, 0.0
        %v5694 = vadd.f32 %v5692, %v5693
        %v5695 = vrot.slane %v5694, 4
        %v5696 = vadd.f32 %v5694, %v5695
        %v5697 = vrot.slane %v5696, 2
        %v5698 = vadd.f32 %v5696, %v5697
        %v5699 = vrot.slane %v5698, 1
        %v5700 = vadd.f32 %v5698, %v5699
        %v5701 = vadd.f32 %v4985, %v5700
        %v5702 = vld [vmem:[%s1397 + $0x300] sm:$0xff]
        %v5703 = vld [vmem:[%s1397 + $0x308] sm:$0xff]
        %v5704 = vld [vmem:[%s1397 + $0x310] sm:$0xff]
        %v5705 = vld [vmem:[%s1397 + $0x318] sm:$0xff]
        %v5706 = vld [vmem:[%s1397 + $0x320] sm:$0xff]
        %v5707 = vld [vmem:[%s1397 + $0x328] sm:$0xff]
        %v5708 = vld [vmem:[%s1397 + $0x330] sm:$0xff]
        %v5709 = vld [vmem:[%s1397 + $0x338] sm:$0xff]
        %v5710 = vld [vmem:[%s1397 + $0x340] sm:$0xff]
        %v5711 = vld [vmem:[%s1397 + $0x348] sm:$0xff]
        %v5712 = vld [vmem:[%s1397 + $0x350] sm:$0xff]
        %v5713 = vld [vmem:[%s1397 + $0x358] sm:$0xff]
        %v5714 = vld [vmem:[%s1397 + $0x360] sm:$0xff]
        %v5715 = vld [vmem:[%s1397 + $0x368] sm:$0xff]
        %v5716 = vld [vmem:[%s1397 + $0x370] sm:$0xff]
        %v5717 = vld [vmem:[%s1397 + $0x378] sm:$0xff]
        %v5718 = vmul.f32 %v5616, %v5702
        %v5719 = vmul.f32 %v5617, %v5703
        %v5720 = vmul.f32 %v5618, %v5704
        %v5721 = vmul.f32 %v5619, %v5705
        %v5722 = vmul.f32 %v5620, %v5706
        %v5723 = vmul.f32 %v5621, %v5707
        %v5724 = vmul.f32 %v5622, %v5708
        %v5725 = vmul.f32 %v5623, %v5709
        %v5726 = vmul.f32 %v5624, %v5710
        %v5727 = vmul.f32 %v5625, %v5711
        %v5728 = vmul.f32 %v5626, %v5712
        %v5729 = vmul.f32 %v5627, %v5713
        %v5730 = vmul.f32 %v5628, %v5714
        %v5731 = vmul.f32 %v5629, %v5715
        %v5732 = vmul.f32 %v5630, %v5716
        %v5733 = vmul.f32 %v5631, %v5717
        %v5734 = vsel %vm1358, %v5718, 0.0
        %v5735 = vsel %vm1358, %v5719, 0.0
        %v5736 = vadd.f32 %v5734, %v5735
        %v5737 = vsel %vm1358, %v5720, 0.0
        %v5738 = vadd.f32 %v5736, %v5737
        %v5739 = vsel %vm1358, %v5721, 0.0
        %v5740 = vadd.f32 %v5738, %v5739
        %v5741 = vsel %vm1358, %v5722, 0.0
        %v5742 = vadd.f32 %v5740, %v5741
        %v5743 = vsel %vm1358, %v5723, 0.0
        %v5744 = vadd.f32 %v5742, %v5743
        %v5745 = vsel %vm1358, %v5724, 0.0
        %v5746 = vadd.f32 %v5744, %v5745
        %v5747 = vsel %vm1358, %v5725, 0.0
        %v5748 = vadd.f32 %v5746, %v5747
        %v5749 = vsel %vm1358, %v5726, 0.0
        %v5750 = vadd.f32 %v5748, %v5749
        %v5751 = vsel %vm1358, %v5727, 0.0
        %v5752 = vadd.f32 %v5750, %v5751
        %v5753 = vsel %vm1358, %v5728, 0.0
        %v5754 = vadd.f32 %v5752, %v5753
        %v5755 = vsel %vm1358, %v5729, 0.0
        %v5756 = vadd.f32 %v5754, %v5755
        %v5757 = vsel %vm1358, %v5730, 0.0
        %v5758 = vadd.f32 %v5756, %v5757
        %v5759 = vsel %vm1358, %v5731, 0.0
        %v5760 = vadd.f32 %v5758, %v5759
        %v5761 = vsel %vm1358, %v5732, 0.0
        %v5762 = vadd.f32 %v5760, %v5761
        %v5763 = vsel %vm1358, %v5733, 0.0
        %v5764 = vadd.f32 %v5762, %v5763
        %v5765 = vrot.slane %v5764, 4
        %v5766 = vadd.f32 %v5764, %v5765
        %v5767 = vrot.slane %v5766, 2
        %v5768 = vadd.f32 %v5766, %v5767
        %v5769 = vrot.slane %v5768, 1
        %v5770 = vadd.f32 %v5768, %v5769
        %v5771 = vadd.f32 %v5055, %v5770
        %v5772 = vld [vmem:[%s1468 + $0x300] sm:$0xff]
        %v5773 = vld [vmem:[%s1468 + $0x308] sm:$0xff]
        %v5774 = vld [vmem:[%s1468 + $0x310] sm:$0xff]
        %v5775 = vld [vmem:[%s1468 + $0x318] sm:$0xff]
        %v5776 = vld [vmem:[%s1468 + $0x320] sm:$0xff]
        %v5777 = vld [vmem:[%s1468 + $0x328] sm:$0xff]
        %v5778 = vld [vmem:[%s1468 + $0x330] sm:$0xff]
        %v5779 = vld [vmem:[%s1468 + $0x338] sm:$0xff]
        %v5780 = vld [vmem:[%s1468 + $0x340] sm:$0xff]
        %v5781 = vld [vmem:[%s1468 + $0x348] sm:$0xff]
        %v5782 = vld [vmem:[%s1468 + $0x350] sm:$0xff]
        %v5783 = vld [vmem:[%s1468 + $0x358] sm:$0xff]
        %v5784 = vld [vmem:[%s1468 + $0x360] sm:$0xff]
        %v5785 = vld [vmem:[%s1468 + $0x368] sm:$0xff]
        %v5786 = vld [vmem:[%s1468 + $0x370] sm:$0xff]
        %v5787 = vld [vmem:[%s1468 + $0x378] sm:$0xff]
        %v5788 = vmul.f32 %v5616, %v5772
        %v5789 = vmul.f32 %v5617, %v5773
        %v5790 = vmul.f32 %v5618, %v5774
        %v5791 = vmul.f32 %v5619, %v5775
        %v5792 = vmul.f32 %v5620, %v5776
        %v5793 = vmul.f32 %v5621, %v5777
        %v5794 = vmul.f32 %v5622, %v5778
        %v5795 = vmul.f32 %v5623, %v5779
        %v5796 = vmul.f32 %v5624, %v5780
        %v5797 = vmul.f32 %v5625, %v5781
        %v5798 = vmul.f32 %v5626, %v5782
        %v5799 = vmul.f32 %v5627, %v5783
        %v5800 = vmul.f32 %v5628, %v5784
        %v5801 = vmul.f32 %v5629, %v5785
        %v5802 = vmul.f32 %v5630, %v5786
        %v5803 = vmul.f32 %v5631, %v5787
        %v5804 = vsel %vm1358, %v5788, 0.0
        %v5805 = vsel %vm1358, %v5789, 0.0
        %v5806 = vadd.f32 %v5804, %v5805
        %v5807 = vsel %vm1358, %v5790, 0.0
        %v5808 = vadd.f32 %v5806, %v5807
        %v5809 = vsel %vm1358, %v5791, 0.0
        %v5810 = vadd.f32 %v5808, %v5809
        %v5811 = vsel %vm1358, %v5792, 0.0
        %v5812 = vadd.f32 %v5810, %v5811
        %v5813 = vsel %vm1358, %v5793, 0.0
        %v5814 = vadd.f32 %v5812, %v5813
        %v5815 = vsel %vm1358, %v5794, 0.0
        %v5816 = vadd.f32 %v5814, %v5815
        %v5817 = vsel %vm1358, %v5795, 0.0
        %v5818 = vadd.f32 %v5816, %v5817
        %v5819 = vsel %vm1358, %v5796, 0.0
        %v5820 = vadd.f32 %v5818, %v5819
        %v5821 = vsel %vm1358, %v5797, 0.0
        %v5822 = vadd.f32 %v5820, %v5821
        %v5823 = vsel %vm1358, %v5798, 0.0
        %v5824 = vadd.f32 %v5822, %v5823
        %v5825 = vsel %vm1358, %v5799, 0.0
        %v5826 = vadd.f32 %v5824, %v5825
        %v5827 = vsel %vm1358, %v5800, 0.0
        %v5828 = vadd.f32 %v5826, %v5827
        %v5829 = vsel %vm1358, %v5801, 0.0
        %v5830 = vadd.f32 %v5828, %v5829
        %v5831 = vsel %vm1358, %v5802, 0.0
        %v5832 = vadd.f32 %v5830, %v5831
        %v5833 = vsel %vm1358, %v5803, 0.0
        %v5834 = vadd.f32 %v5832, %v5833
        %v5835 = vrot.slane %v5834, 4
        %v5836 = vadd.f32 %v5834, %v5835
        %v5837 = vrot.slane %v5836, 2
        %v5838 = vadd.f32 %v5836, %v5837
        %v5839 = vrot.slane %v5838, 1
        %v5840 = vadd.f32 %v5838, %v5839
        %v5841 = vadd.f32 %v5125, %v5840
        %v5842 = vld [vmem:[%s1539 + $0x300] sm:$0xff]
        %v5843 = vld [vmem:[%s1539 + $0x308] sm:$0xff]
        %v5844 = vld [vmem:[%s1539 + $0x310] sm:$0xff]
        %v5845 = vld [vmem:[%s1539 + $0x318] sm:$0xff]
        %v5846 = vld [vmem:[%s1539 + $0x320] sm:$0xff]
        %v5847 = vld [vmem:[%s1539 + $0x328] sm:$0xff]
        %v5848 = vld [vmem:[%s1539 + $0x330] sm:$0xff]
        %v5849 = vld [vmem:[%s1539 + $0x338] sm:$0xff]
        %v5850 = vld [vmem:[%s1539 + $0x340] sm:$0xff]
        %v5851 = vld [vmem:[%s1539 + $0x348] sm:$0xff]
        %v5852 = vld [vmem:[%s1539 + $0x350] sm:$0xff]
        %v5853 = vld [vmem:[%s1539 + $0x358] sm:$0xff]
        %v5854 = vld [vmem:[%s1539 + $0x360] sm:$0xff]
        %v5855 = vld [vmem:[%s1539 + $0x368] sm:$0xff]
        %v5856 = vld [vmem:[%s1539 + $0x370] sm:$0xff]
        %v5857 = vld [vmem:[%s1539 + $0x378] sm:$0xff]
        %v5858 = vmul.f32 %v5616, %v5842
        %v5859 = vmul.f32 %v5617, %v5843
        %v5860 = vmul.f32 %v5618, %v5844
        %v5861 = vmul.f32 %v5619, %v5845
        %v5862 = vmul.f32 %v5620, %v5846
        %v5863 = vmul.f32 %v5621, %v5847
        %v5864 = vmul.f32 %v5622, %v5848
        %v5865 = vmul.f32 %v5623, %v5849
        %v5866 = vmul.f32 %v5624, %v5850
        %v5867 = vmul.f32 %v5625, %v5851
        %v5868 = vmul.f32 %v5626, %v5852
        %v5869 = vmul.f32 %v5627, %v5853
        %v5870 = vmul.f32 %v5628, %v5854
        %v5871 = vmul.f32 %v5629, %v5855
        %v5872 = vmul.f32 %v5630, %v5856
        %v5873 = vmul.f32 %v5631, %v5857
        %v5874 = vsel %vm1358, %v5858, 0.0
        %v5875 = vsel %vm1358, %v5859, 0.0
        %v5876 = vadd.f32 %v5874, %v5875
        %v5877 = vsel %vm1358, %v5860, 0.0
        %v5878 = vadd.f32 %v5876, %v5877
        %v5879 = vsel %vm1358, %v5861, 0.0
        %v5880 = vadd.f32 %v5878, %v5879
        %v5881 = vsel %vm1358, %v5862, 0.0
        %v5882 = vadd.f32 %v5880, %v5881
        %v5883 = vsel %vm1358, %v5863, 0.0
        %v5884 = vadd.f32 %v5882, %v5883
        %v5885 = vsel %vm1358, %v5864, 0.0
        %v5886 = vadd.f32 %v5884, %v5885
        %v5887 = vsel %vm1358, %v5865, 0.0
        %v5888 = vadd.f32 %v5886, %v5887
        %v5889 = vsel %vm1358, %v5866, 0.0
        %v5890 = vadd.f32 %v5888, %v5889
        %v5891 = vsel %vm1358, %v5867, 0.0
        %v5892 = vadd.f32 %v5890, %v5891
        %v5893 = vsel %vm1358, %v5868, 0.0
        %v5894 = vadd.f32 %v5892, %v5893
        %v5895 = vsel %vm1358, %v5869, 0.0
        %v5896 = vadd.f32 %v5894, %v5895
        %v5897 = vsel %vm1358, %v5870, 0.0
        %v5898 = vadd.f32 %v5896, %v5897
        %v5899 = vsel %vm1358, %v5871, 0.0
        %v5900 = vadd.f32 %v5898, %v5899
        %v5901 = vsel %vm1358, %v5872, 0.0
        %v5902 = vadd.f32 %v5900, %v5901
        %v5903 = vsel %vm1358, %v5873, 0.0
        %v5904 = vadd.f32 %v5902, %v5903
        %v5905 = vrot.slane %v5904, 4
        %v5906 = vadd.f32 %v5904, %v5905
        %v5907 = vrot.slane %v5906, 2
        %v5908 = vadd.f32 %v5906, %v5907
        %v5909 = vrot.slane %v5908, 1
        %v5910 = vadd.f32 %v5908, %v5909
        %v5911 = vadd.f32 %v5195, %v5910
        %v5912 = vld [vmem:[%s1610 + $0x300] sm:$0xff]
        %v5913 = vld [vmem:[%s1610 + $0x308] sm:$0xff]
        %v5914 = vld [vmem:[%s1610 + $0x310] sm:$0xff]
        %v5915 = vld [vmem:[%s1610 + $0x318] sm:$0xff]
        %v5916 = vld [vmem:[%s1610 + $0x320] sm:$0xff]
        %v5917 = vld [vmem:[%s1610 + $0x328] sm:$0xff]
        %v5918 = vld [vmem:[%s1610 + $0x330] sm:$0xff]
        %v5919 = vld [vmem:[%s1610 + $0x338] sm:$0xff]
        %v5920 = vld [vmem:[%s1610 + $0x340] sm:$0xff]
        %v5921 = vld [vmem:[%s1610 + $0x348] sm:$0xff]
        %v5922 = vld [vmem:[%s1610 + $0x350] sm:$0xff]
        %v5923 = vld [vmem:[%s1610 + $0x358] sm:$0xff]
        %v5924 = vld [vmem:[%s1610 + $0x360] sm:$0xff]
        %v5925 = vld [vmem:[%s1610 + $0x368] sm:$0xff]
        %v5926 = vld [vmem:[%s1610 + $0x370] sm:$0xff]
        %v5927 = vld [vmem:[%s1610 + $0x378] sm:$0xff]
        %v5928 = vmul.f32 %v5616, %v5912
        %v5929 = vmul.f32 %v5617, %v5913
        %v5930 = vmul.f32 %v5618, %v5914
        %v5931 = vmul.f32 %v5619, %v5915
        %v5932 = vmul.f32 %v5620, %v5916
        %v5933 = vmul.f32 %v5621, %v5917
        %v5934 = vmul.f32 %v5622, %v5918
        %v5935 = vmul.f32 %v5623, %v5919
        %v5936 = vmul.f32 %v5624, %v5920
        %v5937 = vmul.f32 %v5625, %v5921
        %v5938 = vmul.f32 %v5626, %v5922
        %v5939 = vmul.f32 %v5627, %v5923
        %v5940 = vmul.f32 %v5628, %v5924
        %v5941 = vmul.f32 %v5629, %v5925
        %v5942 = vmul.f32 %v5630, %v5926
        %v5943 = vmul.f32 %v5631, %v5927
        %v5944 = vsel %vm1358, %v5928, 0.0
        %v5945 = vsel %vm1358, %v5929, 0.0
        %v5946 = vadd.f32 %v5944, %v5945
        %v5947 = vsel %vm1358, %v5930, 0.0
        %v5948 = vadd.f32 %v5946, %v5947
        %v5949 = vsel %vm1358, %v5931, 0.0
        %v5950 = vadd.f32 %v5948, %v5949
        %v5951 = vsel %vm1358, %v5932, 0.0
        %v5952 = vadd.f32 %v5950, %v5951
        %v5953 = vsel %vm1358, %v5933, 0.0
        %v5954 = vadd.f32 %v5952, %v5953
        %v5955 = vsel %vm1358, %v5934, 0.0
        %v5956 = vadd.f32 %v5954, %v5955
        %v5957 = vsel %vm1358, %v5935, 0.0
        %v5958 = vadd.f32 %v5956, %v5957
        %v5959 = vsel %vm1358, %v5936, 0.0
        %v5960 = vadd.f32 %v5958, %v5959
        %v5961 = vsel %vm1358, %v5937, 0.0
        %v5962 = vadd.f32 %v5960, %v5961
        %v5963 = vsel %vm1358, %v5938, 0.0
        %v5964 = vadd.f32 %v5962, %v5963
        %v5965 = vsel %vm1358, %v5939, 0.0
        %v5966 = vadd.f32 %v5964, %v5965
        %v5967 = vsel %vm1358, %v5940, 0.0
        %v5968 = vadd.f32 %v5966, %v5967
        %v5969 = vsel %vm1358, %v5941, 0.0
        %v5970 = vadd.f32 %v5968, %v5969
        %v5971 = vsel %vm1358, %v5942, 0.0
        %v5972 = vadd.f32 %v5970, %v5971
        %v5973 = vsel %vm1358, %v5943, 0.0
        %v5974 = vadd.f32 %v5972, %v5973
        %v5975 = vrot.slane %v5974, 4
        %v5976 = vadd.f32 %v5974, %v5975
        %v5977 = vrot.slane %v5976, 2
        %v5978 = vadd.f32 %v5976, %v5977
        %v5979 = vrot.slane %v5978, 1
        %v5980 = vadd.f32 %v5978, %v5979
        %v5981 = vadd.f32 %v5265, %v5980
        %v5982 = vld [vmem:[%s1681 + $0x300] sm:$0xff]
        %v5983 = vld [vmem:[%s1681 + $0x308] sm:$0xff]
        %v5984 = vld [vmem:[%s1681 + $0x310] sm:$0xff]
        %v5985 = vld [vmem:[%s1681 + $0x318] sm:$0xff]
        %v5986 = vld [vmem:[%s1681 + $0x320] sm:$0xff]
        %v5987 = vld [vmem:[%s1681 + $0x328] sm:$0xff]
        %v5988 = vld [vmem:[%s1681 + $0x330] sm:$0xff]
        %v5989 = vld [vmem:[%s1681 + $0x338] sm:$0xff]
        %v5990 = vld [vmem:[%s1681 + $0x340] sm:$0xff]
        %v5991 = vld [vmem:[%s1681 + $0x348] sm:$0xff]
        %v5992 = vld [vmem:[%s1681 + $0x350] sm:$0xff]
        %v5993 = vld [vmem:[%s1681 + $0x358] sm:$0xff]
        %v5994 = vld [vmem:[%s1681 + $0x360] sm:$0xff]
        %v5995 = vld [vmem:[%s1681 + $0x368] sm:$0xff]
        %v5996 = vld [vmem:[%s1681 + $0x370] sm:$0xff]
        %v5997 = vld [vmem:[%s1681 + $0x378] sm:$0xff]
        %v5998 = vmul.f32 %v5616, %v5982
        %v5999 = vmul.f32 %v5617, %v5983
        %v6000 = vmul.f32 %v5618, %v5984
        %v6001 = vmul.f32 %v5619, %v5985
        %v6002 = vmul.f32 %v5620, %v5986
        %v6003 = vmul.f32 %v5621, %v5987
        %v6004 = vmul.f32 %v5622, %v5988
        %v6005 = vmul.f32 %v5623, %v5989
        %v6006 = vmul.f32 %v5624, %v5990
        %v6007 = vmul.f32 %v5625, %v5991
        %v6008 = vmul.f32 %v5626, %v5992
        %v6009 = vmul.f32 %v5627, %v5993
        %v6010 = vmul.f32 %v5628, %v5994
        %v6011 = vmul.f32 %v5629, %v5995
        %v6012 = vmul.f32 %v5630, %v5996
        %v6013 = vmul.f32 %v5631, %v5997
        %v6014 = vsel %vm1358, %v5998, 0.0
        %v6015 = vsel %vm1358, %v5999, 0.0
        %v6016 = vadd.f32 %v6014, %v6015
        %v6017 = vsel %vm1358, %v6000, 0.0
        %v6018 = vadd.f32 %v6016, %v6017
        %v6019 = vsel %vm1358, %v6001, 0.0
        %v6020 = vadd.f32 %v6018, %v6019
        %v6021 = vsel %vm1358, %v6002, 0.0
        %v6022 = vadd.f32 %v6020, %v6021
        %v6023 = vsel %vm1358, %v6003, 0.0
        %v6024 = vadd.f32 %v6022, %v6023
        %v6025 = vsel %vm1358, %v6004, 0.0
        %v6026 = vadd.f32 %v6024, %v6025
        %v6027 = vsel %vm1358, %v6005, 0.0
        %v6028 = vadd.f32 %v6026, %v6027
        %v6029 = vsel %vm1358, %v6006, 0.0
        %v6030 = vadd.f32 %v6028, %v6029
        %v6031 = vsel %vm1358, %v6007, 0.0
        %v6032 = vadd.f32 %v6030, %v6031
        %v6033 = vsel %vm1358, %v6008, 0.0
        %v6034 = vadd.f32 %v6032, %v6033
        %v6035 = vsel %vm1358, %v6009, 0.0
        %v6036 = vadd.f32 %v6034, %v6035
        %v6037 = vsel %vm1358, %v6010, 0.0
        %v6038 = vadd.f32 %v6036, %v6037
        %v6039 = vsel %vm1358, %v6011, 0.0
        %v6040 = vadd.f32 %v6038, %v6039
        %v6041 = vsel %vm1358, %v6012, 0.0
        %v6042 = vadd.f32 %v6040, %v6041
        %v6043 = vsel %vm1358, %v6013, 0.0
        %v6044 = vadd.f32 %v6042, %v6043
        %v6045 = vrot.slane %v6044, 4
        %v6046 = vadd.f32 %v6044, %v6045
        %v6047 = vrot.slane %v6046, 2
        %v6048 = vadd.f32 %v6046, %v6047
        %v6049 = vrot.slane %v6048, 1
        %v6050 = vadd.f32 %v6048, %v6049
        %v6051 = vadd.f32 %v5335, %v6050
        %v6052 = vld [vmem:[%s1752 + $0x300] sm:$0xff]
        %v6053 = vld [vmem:[%s1752 + $0x308] sm:$0xff]
        %v6054 = vld [vmem:[%s1752 + $0x310] sm:$0xff]
        %v6055 = vld [vmem:[%s1752 + $0x318] sm:$0xff]
        %v6056 = vld [vmem:[%s1752 + $0x320] sm:$0xff]
        %v6057 = vld [vmem:[%s1752 + $0x328] sm:$0xff]
        %v6058 = vld [vmem:[%s1752 + $0x330] sm:$0xff]
        %v6059 = vld [vmem:[%s1752 + $0x338] sm:$0xff]
        %v6060 = vld [vmem:[%s1752 + $0x340] sm:$0xff]
        %v6061 = vld [vmem:[%s1752 + $0x348] sm:$0xff]
        %v6062 = vld [vmem:[%s1752 + $0x350] sm:$0xff]
        %v6063 = vld [vmem:[%s1752 + $0x358] sm:$0xff]
        %v6064 = vld [vmem:[%s1752 + $0x360] sm:$0xff]
        %v6065 = vld [vmem:[%s1752 + $0x368] sm:$0xff]
        %v6066 = vld [vmem:[%s1752 + $0x370] sm:$0xff]
        %v6067 = vld [vmem:[%s1752 + $0x378] sm:$0xff]
        %v6068 = vmul.f32 %v5616, %v6052
        %v6069 = vmul.f32 %v5617, %v6053
        %v6070 = vmul.f32 %v5618, %v6054
        %v6071 = vmul.f32 %v5619, %v6055
        %v6072 = vmul.f32 %v5620, %v6056
        %v6073 = vmul.f32 %v5621, %v6057
        %v6074 = vmul.f32 %v5622, %v6058
        %v6075 = vmul.f32 %v5623, %v6059
        %v6076 = vmul.f32 %v5624, %v6060
        %v6077 = vmul.f32 %v5625, %v6061
        %v6078 = vmul.f32 %v5626, %v6062
        %v6079 = vmul.f32 %v5627, %v6063
        %v6080 = vmul.f32 %v5628, %v6064
        %v6081 = vmul.f32 %v5629, %v6065
        %v6082 = vmul.f32 %v5630, %v6066
        %v6083 = vmul.f32 %v5631, %v6067
        %v6084 = vsel %vm1358, %v6068, 0.0
        %v6085 = vsel %vm1358, %v6069, 0.0
        %v6086 = vadd.f32 %v6084, %v6085
        %v6087 = vsel %vm1358, %v6070, 0.0
        %v6088 = vadd.f32 %v6086, %v6087
        %v6089 = vsel %vm1358, %v6071, 0.0
        %v6090 = vadd.f32 %v6088, %v6089
        %v6091 = vsel %vm1358, %v6072, 0.0
        %v6092 = vadd.f32 %v6090, %v6091
        %v6093 = vsel %vm1358, %v6073, 0.0
        %v6094 = vadd.f32 %v6092, %v6093
        %v6095 = vsel %vm1358, %v6074, 0.0
        %v6096 = vadd.f32 %v6094, %v6095
        %v6097 = vsel %vm1358, %v6075, 0.0
        %v6098 = vadd.f32 %v6096, %v6097
        %v6099 = vsel %vm1358, %v6076, 0.0
        %v6100 = vadd.f32 %v6098, %v6099
        %v6101 = vsel %vm1358, %v6077, 0.0
        %v6102 = vadd.f32 %v6100, %v6101
        %v6103 = vsel %vm1358, %v6078, 0.0
        %v6104 = vadd.f32 %v6102, %v6103
        %v6105 = vsel %vm1358, %v6079, 0.0
        %v6106 = vadd.f32 %v6104, %v6105
        %v6107 = vsel %vm1358, %v6080, 0.0
        %v6108 = vadd.f32 %v6106, %v6107
        %v6109 = vsel %vm1358, %v6081, 0.0
        %v6110 = vadd.f32 %v6108, %v6109
        %v6111 = vsel %vm1358, %v6082, 0.0
        %v6112 = vadd.f32 %v6110, %v6111
        %v6113 = vsel %vm1358, %v6083, 0.0
        %v6114 = vadd.f32 %v6112, %v6113
        %v6115 = vrot.slane %v6114, 4
        %v6116 = vadd.f32 %v6114, %v6115
        %v6117 = vrot.slane %v6116, 2
        %v6118 = vadd.f32 %v6116, %v6117
        %v6119 = vrot.slane %v6118, 1
        %v6120 = vadd.f32 %v6118, %v6119
        %v6121 = vadd.f32 %v5405, %v6120
        %v6122 = vld [vmem:[%s1823 + $0x300] sm:$0xff]
        %v6123 = vld [vmem:[%s1823 + $0x308] sm:$0xff]
        %v6124 = vld [vmem:[%s1823 + $0x310] sm:$0xff]
        %v6125 = vld [vmem:[%s1823 + $0x318] sm:$0xff]
        %v6126 = vld [vmem:[%s1823 + $0x320] sm:$0xff]
        %v6127 = vld [vmem:[%s1823 + $0x328] sm:$0xff]
        %v6128 = vld [vmem:[%s1823 + $0x330] sm:$0xff]
        %v6129 = vld [vmem:[%s1823 + $0x338] sm:$0xff]
        %v6130 = vld [vmem:[%s1823 + $0x340] sm:$0xff]
        %v6131 = vld [vmem:[%s1823 + $0x348] sm:$0xff]
        %v6132 = vld [vmem:[%s1823 + $0x350] sm:$0xff]
        %v6133 = vld [vmem:[%s1823 + $0x358] sm:$0xff]
        %v6134 = vld [vmem:[%s1823 + $0x360] sm:$0xff]
        %v6135 = vld [vmem:[%s1823 + $0x368] sm:$0xff]
        %v6136 = vld [vmem:[%s1823 + $0x370] sm:$0xff]
        %v6137 = vld [vmem:[%s1823 + $0x378] sm:$0xff]
        %v6138 = vmul.f32 %v5616, %v6122
        %v6139 = vmul.f32 %v5617, %v6123
        %v6140 = vmul.f32 %v5618, %v6124
        %v6141 = vmul.f32 %v5619, %v6125
        %v6142 = vmul.f32 %v5620, %v6126
        %v6143 = vmul.f32 %v5621, %v6127
        %v6144 = vmul.f32 %v5622, %v6128
        %v6145 = vmul.f32 %v5623, %v6129
        %v6146 = vmul.f32 %v5624, %v6130
        %v6147 = vmul.f32 %v5625, %v6131
        %v6148 = vmul.f32 %v5626, %v6132
        %v6149 = vmul.f32 %v5627, %v6133
        %v6150 = vmul.f32 %v5628, %v6134
        %v6151 = vmul.f32 %v5629, %v6135
        %v6152 = vmul.f32 %v5630, %v6136
        %v6153 = vmul.f32 %v5631, %v6137
        %v6154 = vsel %vm1358, %v6138, 0.0
        %v6155 = vsel %vm1358, %v6139, 0.0
        %v6156 = vadd.f32 %v6154, %v6155
        %v6157 = vsel %vm1358, %v6140, 0.0
        %v6158 = vadd.f32 %v6156, %v6157
        %v6159 = vsel %vm1358, %v6141, 0.0
        %v6160 = vadd.f32 %v6158, %v6159
        %v6161 = vsel %vm1358, %v6142, 0.0
        %v6162 = vadd.f32 %v6160, %v6161
        %v6163 = vsel %vm1358, %v6143, 0.0
        %v6164 = vadd.f32 %v6162, %v6163
        %v6165 = vsel %vm1358, %v6144, 0.0
        %v6166 = vadd.f32 %v6164, %v6165
        %v6167 = vsel %vm1358, %v6145, 0.0
        %v6168 = vadd.f32 %v6166, %v6167
        %v6169 = vsel %vm1358, %v6146, 0.0
        %v6170 = vadd.f32 %v6168, %v6169
        %v6171 = vsel %vm1358, %v6147, 0.0
        %v6172 = vadd.f32 %v6170, %v6171
        %v6173 = vsel %vm1358, %v6148, 0.0
        %v6174 = vadd.f32 %v6172, %v6173
        %v6175 = vsel %vm1358, %v6149, 0.0
        %v6176 = vadd.f32 %v6174, %v6175
        %v6177 = vsel %vm1358, %v6150, 0.0
        %v6178 = vadd.f32 %v6176, %v6177
        %v6179 = vsel %vm1358, %v6151, 0.0
        %v6180 = vadd.f32 %v6178, %v6179
        %v6181 = vsel %vm1358, %v6152, 0.0
        %v6182 = vadd.f32 %v6180, %v6181
        %v6183 = vsel %vm1358, %v6153, 0.0
        %v6184 = vadd.f32 %v6182, %v6183
        %v6185 = vrot.slane %v6184, 4
        %v6186 = vadd.f32 %v6184, %v6185
        %v6187 = vrot.slane %v6186, 2
        %v6188 = vadd.f32 %v6186, %v6187
        %v6189 = vrot.slane %v6188, 1
        %v6190 = vadd.f32 %v6188, %v6189
        %v6191 = vadd.f32 %v5475, %v6190
        %v6192 = vld [vmem:[%s1894 + $0x300] sm:$0xff]
        %v6193 = vld [vmem:[%s1894 + $0x308] sm:$0xff]
        %v6194 = vld [vmem:[%s1894 + $0x310] sm:$0xff]
        %v6195 = vld [vmem:[%s1894 + $0x318] sm:$0xff]
        %v6196 = vld [vmem:[%s1894 + $0x320] sm:$0xff]
        %v6197 = vld [vmem:[%s1894 + $0x328] sm:$0xff]
        %v6198 = vld [vmem:[%s1894 + $0x330] sm:$0xff]
        %v6199 = vld [vmem:[%s1894 + $0x338] sm:$0xff]
        %v6200 = vld [vmem:[%s1894 + $0x340] sm:$0xff]
        %v6201 = vld [vmem:[%s1894 + $0x348] sm:$0xff]
        %v6202 = vld [vmem:[%s1894 + $0x350] sm:$0xff]
        %v6203 = vld [vmem:[%s1894 + $0x358] sm:$0xff]
        %v6204 = vld [vmem:[%s1894 + $0x360] sm:$0xff]
        %v6205 = vld [vmem:[%s1894 + $0x368] sm:$0xff]
        %v6206 = vld [vmem:[%s1894 + $0x370] sm:$0xff]
        %v6207 = vld [vmem:[%s1894 + $0x378] sm:$0xff]
        %v6208 = vmul.f32 %v5616, %v6192
        %v6209 = vmul.f32 %v5617, %v6193
        %v6210 = vmul.f32 %v5618, %v6194
        %v6211 = vmul.f32 %v5619, %v6195
        %v6212 = vmul.f32 %v5620, %v6196
        %v6213 = vmul.f32 %v5621, %v6197
        %v6214 = vmul.f32 %v5622, %v6198
        %v6215 = vmul.f32 %v5623, %v6199
        %v6216 = vmul.f32 %v5624, %v6200
        %v6217 = vmul.f32 %v5625, %v6201
        %v6218 = vmul.f32 %v5626, %v6202
        %v6219 = vmul.f32 %v5627, %v6203
        %v6220 = vmul.f32 %v5628, %v6204
        %v6221 = vmul.f32 %v5629, %v6205
        %v6222 = vmul.f32 %v5630, %v6206
        %v6223 = vmul.f32 %v5631, %v6207
        %v6224 = vsel %vm1358, %v6208, 0.0
        %v6225 = vsel %vm1358, %v6209, 0.0
        %v6226 = vadd.f32 %v6224, %v6225
        %v6227 = vsel %vm1358, %v6210, 0.0
        %v6228 = vadd.f32 %v6226, %v6227
        %v6229 = vsel %vm1358, %v6211, 0.0
        %v6230 = vadd.f32 %v6228, %v6229
        %v6231 = vsel %vm1358, %v6212, 0.0
        %v6232 = vadd.f32 %v6230, %v6231
        %v6233 = vsel %vm1358, %v6213, 0.0
        %v6234 = vadd.f32 %v6232, %v6233
        %v6235 = vsel %vm1358, %v6214, 0.0
        %v6236 = vadd.f32 %v6234, %v6235
        %v6237 = vsel %vm1358, %v6215, 0.0
        %v6238 = vadd.f32 %v6236, %v6237
        %v6239 = vsel %vm1358, %v6216, 0.0
        %v6240 = vadd.f32 %v6238, %v6239
        %v6241 = vsel %vm1358, %v6217, 0.0
        %v6242 = vadd.f32 %v6240, %v6241
        %v6243 = vsel %vm1358, %v6218, 0.0
        %v6244 = vadd.f32 %v6242, %v6243
        %v6245 = vsel %vm1358, %v6219, 0.0
        %v6246 = vadd.f32 %v6244, %v6245
        %v6247 = vsel %vm1358, %v6220, 0.0
        %v6248 = vadd.f32 %v6246, %v6247
        %v6249 = vsel %vm1358, %v6221, 0.0
        %v6250 = vadd.f32 %v6248, %v6249
        %v6251 = vsel %vm1358, %v6222, 0.0
        %v6252 = vadd.f32 %v6250, %v6251
        %v6253 = vsel %vm1358, %v6223, 0.0
        %v6254 = vadd.f32 %v6252, %v6253
        %v6255 = vrot.slane %v6254, 4
        %v6256 = vadd.f32 %v6254, %v6255
        %v6257 = vrot.slane %v6256, 2
        %v6258 = vadd.f32 %v6256, %v6257
        %v6259 = vrot.slane %v6258, 1
        %v6260 = vadd.f32 %v6258, %v6259
        %v6261 = vadd.f32 %v5545, %v6260
        %v6262 = vld [vmem:[%s1965 + $0x300] sm:$0xff]
        %v6263 = vld [vmem:[%s1965 + $0x308] sm:$0xff]
        %v6264 = vld [vmem:[%s1965 + $0x310] sm:$0xff]
        %v6265 = vld [vmem:[%s1965 + $0x318] sm:$0xff]
        %v6266 = vld [vmem:[%s1965 + $0x320] sm:$0xff]
        %v6267 = vld [vmem:[%s1965 + $0x328] sm:$0xff]
        %v6268 = vld [vmem:[%s1965 + $0x330] sm:$0xff]
        %v6269 = vld [vmem:[%s1965 + $0x338] sm:$0xff]
        %v6270 = vld [vmem:[%s1965 + $0x340] sm:$0xff]
        %v6271 = vld [vmem:[%s1965 + $0x348] sm:$0xff]
        %v6272 = vld [vmem:[%s1965 + $0x350] sm:$0xff]
        %v6273 = vld [vmem:[%s1965 + $0x358] sm:$0xff]
        %v6274 = vld [vmem:[%s1965 + $0x360] sm:$0xff]
        %v6275 = vld [vmem:[%s1965 + $0x368] sm:$0xff]
        %v6276 = vld [vmem:[%s1965 + $0x370] sm:$0xff]
        %v6277 = vld [vmem:[%s1965 + $0x378] sm:$0xff]
        %v6278 = vmul.f32 %v5616, %v6262
        %v6279 = vmul.f32 %v5617, %v6263
        %v6280 = vmul.f32 %v5618, %v6264
        %v6281 = vmul.f32 %v5619, %v6265
        %v6282 = vmul.f32 %v5620, %v6266
        %v6283 = vmul.f32 %v5621, %v6267
        %v6284 = vmul.f32 %v5622, %v6268
        %v6285 = vmul.f32 %v5623, %v6269
        %v6286 = vmul.f32 %v5624, %v6270
        %v6287 = vmul.f32 %v5625, %v6271
        %v6288 = vmul.f32 %v5626, %v6272
        %v6289 = vmul.f32 %v5627, %v6273
        %v6290 = vmul.f32 %v5628, %v6274
        %v6291 = vmul.f32 %v5629, %v6275
        %v6292 = vmul.f32 %v5630, %v6276
        %v6293 = vmul.f32 %v5631, %v6277
        %v6294 = vsel %vm1358, %v6278, 0.0
        %v6295 = vsel %vm1358, %v6279, 0.0
        %v6296 = vadd.f32 %v6294, %v6295
        %v6297 = vsel %vm1358, %v6280, 0.0
        %v6298 = vadd.f32 %v6296, %v6297
        %v6299 = vsel %vm1358, %v6281, 0.0
        %v6300 = vadd.f32 %v6298, %v6299
        %v6301 = vsel %vm1358, %v6282, 0.0
        %v6302 = vadd.f32 %v6300, %v6301
        %v6303 = vsel %vm1358, %v6283, 0.0
        %v6304 = vadd.f32 %v6302, %v6303
        %v6305 = vsel %vm1358, %v6284, 0.0
        %v6306 = vadd.f32 %v6304, %v6305
        %v6307 = vsel %vm1358, %v6285, 0.0
        %v6308 = vadd.f32 %v6306, %v6307
        %v6309 = vsel %vm1358, %v6286, 0.0
        %v6310 = vadd.f32 %v6308, %v6309
        %v6311 = vsel %vm1358, %v6287, 0.0
        %v6312 = vadd.f32 %v6310, %v6311
        %v6313 = vsel %vm1358, %v6288, 0.0
        %v6314 = vadd.f32 %v6312, %v6313
        %v6315 = vsel %vm1358, %v6289, 0.0
        %v6316 = vadd.f32 %v6314, %v6315
        %v6317 = vsel %vm1358, %v6290, 0.0
        %v6318 = vadd.f32 %v6316, %v6317
        %v6319 = vsel %vm1358, %v6291, 0.0
        %v6320 = vadd.f32 %v6318, %v6319
        %v6321 = vsel %vm1358, %v6292, 0.0
        %v6322 = vadd.f32 %v6320, %v6321
        %v6323 = vsel %vm1358, %v6293, 0.0
        %v6324 = vadd.f32 %v6322, %v6323
        %v6325 = vrot.slane %v6324, 4
        %v6326 = vadd.f32 %v6324, %v6325
        %v6327 = vrot.slane %v6326, 2
        %v6328 = vadd.f32 %v6326, %v6327
        %v6329 = vrot.slane %v6328, 1
        %v6330 = vadd.f32 %v6328, %v6329
        %v6331 = vadd.f32 %v5615, %v6330
        %v6332 = vld [vmem:[#allocation3 + $0x380] sm:$0xff]
        %v6333 = vld [vmem:[#allocation3 + $0x388] sm:$0xff]
        %v6334 = vld [vmem:[#allocation3 + $0x390] sm:$0xff]
        %v6335 = vld [vmem:[#allocation3 + $0x398] sm:$0xff]
        %v6336 = vld [vmem:[#allocation3 + $0x3a0] sm:$0xff]
        %v6337 = vld [vmem:[#allocation3 + $0x3a8] sm:$0xff]
        %v6338 = vld [vmem:[#allocation3 + $0x3b0] sm:$0xff]
        %v6339 = vld [vmem:[#allocation3 + $0x3b8] sm:$0xff]
        %v6340 = vld [vmem:[#allocation3 + $0x3c0] sm:$0xff]
        %v6341 = vld [vmem:[#allocation3 + $0x3c8] sm:$0xff]
        %v6342 = vld [vmem:[#allocation3 + $0x3d0] sm:$0xff]
        %v6343 = vld [vmem:[#allocation3 + $0x3d8] sm:$0xff]
        %v6344 = vld [vmem:[#allocation3 + $0x3e0] sm:$0xff]
        %v6345 = vld [vmem:[#allocation3 + $0x3e8] sm:$0xff]
        %v6346 = vld [vmem:[#allocation3 + $0x3f0] sm:$0xff]
        %v6347 = vld [vmem:[#allocation3 + $0x3f8] sm:$0xff]
        %v6348 = vld [vmem:[%s3 + $0x380] sm:$0xff]
        %v6349 = vld [vmem:[%s3 + $0x388] sm:$0xff]
        %v6350 = vld [vmem:[%s3 + $0x390] sm:$0xff]
        %v6351 = vld [vmem:[%s3 + $0x398] sm:$0xff]
        %v6352 = vld [vmem:[%s3 + $0x3a0] sm:$0xff]
        %v6353 = vld [vmem:[%s3 + $0x3a8] sm:$0xff]
        %v6354 = vld [vmem:[%s3 + $0x3b0] sm:$0xff]
        %v6355 = vld [vmem:[%s3 + $0x3b8] sm:$0xff]
        %v6356 = vld [vmem:[%s3 + $0x3c0] sm:$0xff]
        %v6357 = vld [vmem:[%s3 + $0x3c8] sm:$0xff]
        %v6358 = vld [vmem:[%s3 + $0x3d0] sm:$0xff]
        %v6359 = vld [vmem:[%s3 + $0x3d8] sm:$0xff]
        %v6360 = vld [vmem:[%s3 + $0x3e0] sm:$0xff]
        %v6361 = vld [vmem:[%s3 + $0x3e8] sm:$0xff]
        %v6362 = vld [vmem:[%s3 + $0x3f0] sm:$0xff]
        %v6363 = vld [vmem:[%s3 + $0x3f8] sm:$0xff]
        %v6364 = vmul.f32 %v6332, %v6348
        %v6365 = vmul.f32 %v6333, %v6349
        %v6366 = vmul.f32 %v6334, %v6350
        %v6367 = vmul.f32 %v6335, %v6351
        %v6368 = vmul.f32 %v6336, %v6352
        %v6369 = vmul.f32 %v6337, %v6353
        %v6370 = vmul.f32 %v6338, %v6354
        %v6371 = vmul.f32 %v6339, %v6355
        %v6372 = vmul.f32 %v6340, %v6356
        %v6373 = vmul.f32 %v6341, %v6357
        %v6374 = vmul.f32 %v6342, %v6358
        %v6375 = vmul.f32 %v6343, %v6359
        %v6376 = vmul.f32 %v6344, %v6360
        %v6377 = vmul.f32 %v6345, %v6361
        %v6378 = vmul.f32 %v6346, %v6362
        %v6379 = vmul.f32 %v6347, %v6363
        %v6380 = vsel %vm1358, %v6364, 0.0
        %v6381 = vsel %vm1358, %v6365, 0.0
        %v6382 = vadd.f32 %v6380, %v6381
        %v6383 = vsel %vm1358, %v6366, 0.0
        %v6384 = vadd.f32 %v6382, %v6383
        %v6385 = vsel %vm1358, %v6367, 0.0
        %v6386 = vadd.f32 %v6384, %v6385
        %v6387 = vsel %vm1358, %v6368, 0.0
        %v6388 = vadd.f32 %v6386, %v6387
        %v6389 = vsel %vm1358, %v6369, 0.0
        %v6390 = vadd.f32 %v6388, %v6389
        %v6391 = vsel %vm1358, %v6370, 0.0
        %v6392 = vadd.f32 %v6390, %v6391
        %v6393 = vsel %vm1358, %v6371, 0.0
        %v6394 = vadd.f32 %v6392, %v6393
        %v6395 = vsel %vm1358, %v6372, 0.0
        %v6396 = vadd.f32 %v6394, %v6395
        %v6397 = vsel %vm1358, %v6373, 0.0
        %v6398 = vadd.f32 %v6396, %v6397
        %v6399 = vsel %vm1358, %v6374, 0.0
        %v6400 = vadd.f32 %v6398, %v6399
        %v6401 = vsel %vm1358, %v6375, 0.0
        %v6402 = vadd.f32 %v6400, %v6401
        %v6403 = vsel %vm1358, %v6376, 0.0
        %v6404 = vadd.f32 %v6402, %v6403
        %v6405 = vsel %vm1358, %v6377, 0.0
        %v6406 = vadd.f32 %v6404, %v6405
        %v6407 = vsel %vm1358, %v6378, 0.0
        %v6408 = vadd.f32 %v6406, %v6407
        %v6409 = vsel %vm1358, %v6379, 0.0
        %v6410 = vadd.f32 %v6408, %v6409
        %v6411 = vrot.slane %v6410, 4
        %v6412 = vadd.f32 %v6410, %v6411
        %v6413 = vrot.slane %v6412, 2
        %v6414 = vadd.f32 %v6412, %v6413
        %v6415 = vrot.slane %v6414, 1
        %v6416 = vadd.f32 %v6414, %v6415
        %v6417 = vadd.f32 %v5701, %v6416
        %v6418 = vld [vmem:[%s1397 + $0x380] sm:$0xff]
        %v6419 = vld [vmem:[%s1397 + $0x388] sm:$0xff]
        %v6420 = vld [vmem:[%s1397 + $0x390] sm:$0xff]
        %v6421 = vld [vmem:[%s1397 + $0x398] sm:$0xff]
        %v6422 = vld [vmem:[%s1397 + $0x3a0] sm:$0xff]
        %v6423 = vld [vmem:[%s1397 + $0x3a8] sm:$0xff]
        %v6424 = vld [vmem:[%s1397 + $0x3b0] sm:$0xff]
        %v6425 = vld [vmem:[%s1397 + $0x3b8] sm:$0xff]
        %v6426 = vld [vmem:[%s1397 + $0x3c0] sm:$0xff]
        %v6427 = vld [vmem:[%s1397 + $0x3c8] sm:$0xff]
        %v6428 = vld [vmem:[%s1397 + $0x3d0] sm:$0xff]
        %v6429 = vld [vmem:[%s1397 + $0x3d8] sm:$0xff]
        %v6430 = vld [vmem:[%s1397 + $0x3e0] sm:$0xff]
        %v6431 = vld [vmem:[%s1397 + $0x3e8] sm:$0xff]
        %v6432 = vld [vmem:[%s1397 + $0x3f0] sm:$0xff]
        %v6433 = vld [vmem:[%s1397 + $0x3f8] sm:$0xff]
        %v6434 = vmul.f32 %v6332, %v6418
        %v6435 = vmul.f32 %v6333, %v6419
        %v6436 = vmul.f32 %v6334, %v6420
        %v6437 = vmul.f32 %v6335, %v6421
        %v6438 = vmul.f32 %v6336, %v6422
        %v6439 = vmul.f32 %v6337, %v6423
        %v6440 = vmul.f32 %v6338, %v6424
        %v6441 = vmul.f32 %v6339, %v6425
        %v6442 = vmul.f32 %v6340, %v6426
        %v6443 = vmul.f32 %v6341, %v6427
        %v6444 = vmul.f32 %v6342, %v6428
        %v6445 = vmul.f32 %v6343, %v6429
        %v6446 = vmul.f32 %v6344, %v6430
        %v6447 = vmul.f32 %v6345, %v6431
        %v6448 = vmul.f32 %v6346, %v6432
        %v6449 = vmul.f32 %v6347, %v6433
        %v6450 = vsel %vm1358, %v6434, 0.0
        %v6451 = vsel %vm1358, %v6435, 0.0
        %v6452 = vadd.f32 %v6450, %v6451
        %v6453 = vsel %vm1358, %v6436, 0.0
        %v6454 = vadd.f32 %v6452, %v6453
        %v6455 = vsel %vm1358, %v6437, 0.0
        %v6456 = vadd.f32 %v6454, %v6455
        %v6457 = vsel %vm1358, %v6438, 0.0
        %v6458 = vadd.f32 %v6456, %v6457
        %v6459 = vsel %vm1358, %v6439, 0.0
        %v6460 = vadd.f32 %v6458, %v6459
        %v6461 = vsel %vm1358, %v6440, 0.0
        %v6462 = vadd.f32 %v6460, %v6461
        %v6463 = vsel %vm1358, %v6441, 0.0
        %v6464 = vadd.f32 %v6462, %v6463
        %v6465 = vsel %vm1358, %v6442, 0.0
        %v6466 = vadd.f32 %v6464, %v6465
        %v6467 = vsel %vm1358, %v6443, 0.0
        %v6468 = vadd.f32 %v6466, %v6467
        %v6469 = vsel %vm1358, %v6444, 0.0
        %v6470 = vadd.f32 %v6468, %v6469
        %v6471 = vsel %vm1358, %v6445, 0.0
        %v6472 = vadd.f32 %v6470, %v6471
        %v6473 = vsel %vm1358, %v6446, 0.0
        %v6474 = vadd.f32 %v6472, %v6473
        %v6475 = vsel %vm1358, %v6447, 0.0
        %v6476 = vadd.f32 %v6474, %v6475
        %v6477 = vsel %vm1358, %v6448, 0.0
        %v6478 = vadd.f32 %v6476, %v6477
        %v6479 = vsel %vm1358, %v6449, 0.0
        %v6480 = vadd.f32 %v6478, %v6479
        %v6481 = vrot.slane %v6480, 4
        %v6482 = vadd.f32 %v6480, %v6481
        %v6483 = vrot.slane %v6482, 2
        %v6484 = vadd.f32 %v6482, %v6483
        %v6485 = vrot.slane %v6484, 1
        %v6486 = vadd.f32 %v6484, %v6485
        %v6487 = vadd.f32 %v5771, %v6486
        %v6488 = vld [vmem:[%s1468 + $0x380] sm:$0xff]
        %v6489 = vld [vmem:[%s1468 + $0x388] sm:$0xff]
        %v6490 = vld [vmem:[%s1468 + $0x390] sm:$0xff]
        %v6491 = vld [vmem:[%s1468 + $0x398] sm:$0xff]
        %v6492 = vld [vmem:[%s1468 + $0x3a0] sm:$0xff]
        %v6493 = vld [vmem:[%s1468 + $0x3a8] sm:$0xff]
        %v6494 = vld [vmem:[%s1468 + $0x3b0] sm:$0xff]
        %v6495 = vld [vmem:[%s1468 + $0x3b8] sm:$0xff]
        %v6496 = vld [vmem:[%s1468 + $0x3c0] sm:$0xff]
        %v6497 = vld [vmem:[%s1468 + $0x3c8] sm:$0xff]
        %v6498 = vld [vmem:[%s1468 + $0x3d0] sm:$0xff]
        %v6499 = vld [vmem:[%s1468 + $0x3d8] sm:$0xff]
        %v6500 = vld [vmem:[%s1468 + $0x3e0] sm:$0xff]
        %v6501 = vld [vmem:[%s1468 + $0x3e8] sm:$0xff]
        %v6502 = vld [vmem:[%s1468 + $0x3f0] sm:$0xff]
        %v6503 = vld [vmem:[%s1468 + $0x3f8] sm:$0xff]
        %v6504 = vmul.f32 %v6332, %v6488
        %v6505 = vmul.f32 %v6333, %v6489
        %v6506 = vmul.f32 %v6334, %v6490
        %v6507 = vmul.f32 %v6335, %v6491
        %v6508 = vmul.f32 %v6336, %v6492
        %v6509 = vmul.f32 %v6337, %v6493
        %v6510 = vmul.f32 %v6338, %v6494
        %v6511 = vmul.f32 %v6339, %v6495
        %v6512 = vmul.f32 %v6340, %v6496
        %v6513 = vmul.f32 %v6341, %v6497
        %v6514 = vmul.f32 %v6342, %v6498
        %v6515 = vmul.f32 %v6343, %v6499
        %v6516 = vmul.f32 %v6344, %v6500
        %v6517 = vmul.f32 %v6345, %v6501
        %v6518 = vmul.f32 %v6346, %v6502
        %v6519 = vmul.f32 %v6347, %v6503
        %v6520 = vsel %vm1358, %v6504, 0.0
        %v6521 = vsel %vm1358, %v6505, 0.0
        %v6522 = vadd.f32 %v6520, %v6521
        %v6523 = vsel %vm1358, %v6506, 0.0
        %v6524 = vadd.f32 %v6522, %v6523
        %v6525 = vsel %vm1358, %v6507, 0.0
        %v6526 = vadd.f32 %v6524, %v6525
        %v6527 = vsel %vm1358, %v6508, 0.0
        %v6528 = vadd.f32 %v6526, %v6527
        %v6529 = vsel %vm1358, %v6509, 0.0
        %v6530 = vadd.f32 %v6528, %v6529
        %v6531 = vsel %vm1358, %v6510, 0.0
        %v6532 = vadd.f32 %v6530, %v6531
        %v6533 = vsel %vm1358, %v6511, 0.0
        %v6534 = vadd.f32 %v6532, %v6533
        %v6535 = vsel %vm1358, %v6512, 0.0
        %v6536 = vadd.f32 %v6534, %v6535
        %v6537 = vsel %vm1358, %v6513, 0.0
        %v6538 = vadd.f32 %v6536, %v6537
        %v6539 = vsel %vm1358, %v6514, 0.0
        %v6540 = vadd.f32 %v6538, %v6539
        %v6541 = vsel %vm1358, %v6515, 0.0
        %v6542 = vadd.f32 %v6540, %v6541
        %v6543 = vsel %vm1358, %v6516, 0.0
        %v6544 = vadd.f32 %v6542, %v6543
        %v6545 = vsel %vm1358, %v6517, 0.0
        %v6546 = vadd.f32 %v6544, %v6545
        %v6547 = vsel %vm1358, %v6518, 0.0
        %v6548 = vadd.f32 %v6546, %v6547
        %v6549 = vsel %vm1358, %v6519, 0.0
        %v6550 = vadd.f32 %v6548, %v6549
        %v6551 = vrot.slane %v6550, 4
        %v6552 = vadd.f32 %v6550, %v6551
        %v6553 = vrot.slane %v6552, 2
        %v6554 = vadd.f32 %v6552, %v6553
        %v6555 = vrot.slane %v6554, 1
        %v6556 = vadd.f32 %v6554, %v6555
        %v6557 = vadd.f32 %v5841, %v6556
        %v6558 = vld [vmem:[%s1539 + $0x380] sm:$0xff]
        %v6559 = vld [vmem:[%s1539 + $0x388] sm:$0xff]
        %v6560 = vld [vmem:[%s1539 + $0x390] sm:$0xff]
        %v6561 = vld [vmem:[%s1539 + $0x398] sm:$0xff]
        %v6562 = vld [vmem:[%s1539 + $0x3a0] sm:$0xff]
        %v6563 = vld [vmem:[%s1539 + $0x3a8] sm:$0xff]
        %v6564 = vld [vmem:[%s1539 + $0x3b0] sm:$0xff]
        %v6565 = vld [vmem:[%s1539 + $0x3b8] sm:$0xff]
        %v6566 = vld [vmem:[%s1539 + $0x3c0] sm:$0xff]
        %v6567 = vld [vmem:[%s1539 + $0x3c8] sm:$0xff]
        %v6568 = vld [vmem:[%s1539 + $0x3d0] sm:$0xff]
        %v6569 = vld [vmem:[%s1539 + $0x3d8] sm:$0xff]
        %v6570 = vld [vmem:[%s1539 + $0x3e0] sm:$0xff]
        %v6571 = vld [vmem:[%s1539 + $0x3e8] sm:$0xff]
        %v6572 = vld [vmem:[%s1539 + $0x3f0] sm:$0xff]
        %v6573 = vld [vmem:[%s1539 + $0x3f8] sm:$0xff]
        %v6574 = vmul.f32 %v6332, %v6558
        %v6575 = vmul.f32 %v6333, %v6559
        %v6576 = vmul.f32 %v6334, %v6560
        %v6577 = vmul.f32 %v6335, %v6561
        %v6578 = vmul.f32 %v6336, %v6562
        %v6579 = vmul.f32 %v6337, %v6563
        %v6580 = vmul.f32 %v6338, %v6564
        %v6581 = vmul.f32 %v6339, %v6565
        %v6582 = vmul.f32 %v6340, %v6566
        %v6583 = vmul.f32 %v6341, %v6567
        %v6584 = vmul.f32 %v6342, %v6568
        %v6585 = vmul.f32 %v6343, %v6569
        %v6586 = vmul.f32 %v6344, %v6570
        %v6587 = vmul.f32 %v6345, %v6571
        %v6588 = vmul.f32 %v6346, %v6572
        %v6589 = vmul.f32 %v6347, %v6573
        %v6590 = vsel %vm1358, %v6574, 0.0
        %v6591 = vsel %vm1358, %v6575, 0.0
        %v6592 = vadd.f32 %v6590, %v6591
        %v6593 = vsel %vm1358, %v6576, 0.0
        %v6594 = vadd.f32 %v6592, %v6593
        %v6595 = vsel %vm1358, %v6577, 0.0
        %v6596 = vadd.f32 %v6594, %v6595
        %v6597 = vsel %vm1358, %v6578, 0.0
        %v6598 = vadd.f32 %v6596, %v6597
        %v6599 = vsel %vm1358, %v6579, 0.0
        %v6600 = vadd.f32 %v6598, %v6599
        %v6601 = vsel %vm1358, %v6580, 0.0
        %v6602 = vadd.f32 %v6600, %v6601
        %v6603 = vsel %vm1358, %v6581, 0.0
        %v6604 = vadd.f32 %v6602, %v6603
        %v6605 = vsel %vm1358, %v6582, 0.0
        %v6606 = vadd.f32 %v6604, %v6605
        %v6607 = vsel %vm1358, %v6583, 0.0
        %v6608 = vadd.f32 %v6606, %v6607
        %v6609 = vsel %vm1358, %v6584, 0.0
        %v6610 = vadd.f32 %v6608, %v6609
        %v6611 = vsel %vm1358, %v6585, 0.0
        %v6612 = vadd.f32 %v6610, %v6611
        %v6613 = vsel %vm1358, %v6586, 0.0
        %v6614 = vadd.f32 %v6612, %v6613
        %v6615 = vsel %vm1358, %v6587, 0.0
        %v6616 = vadd.f32 %v6614, %v6615
        %v6617 = vsel %vm1358, %v6588, 0.0
        %v6618 = vadd.f32 %v6616, %v6617
        %v6619 = vsel %vm1358, %v6589, 0.0
        %v6620 = vadd.f32 %v6618, %v6619
        %v6621 = vrot.slane %v6620, 4
        %v6622 = vadd.f32 %v6620, %v6621
        %v6623 = vrot.slane %v6622, 2
        %v6624 = vadd.f32 %v6622, %v6623
        %v6625 = vrot.slane %v6624, 1
        %v6626 = vadd.f32 %v6624, %v6625
        %v6627 = vadd.f32 %v5911, %v6626
        %v6628 = vld [vmem:[%s1610 + $0x380] sm:$0xff]
        %v6629 = vld [vmem:[%s1610 + $0x388] sm:$0xff]
        %v6630 = vld [vmem:[%s1610 + $0x390] sm:$0xff]
        %v6631 = vld [vmem:[%s1610 + $0x398] sm:$0xff]
        %v6632 = vld [vmem:[%s1610 + $0x3a0] sm:$0xff]
        %v6633 = vld [vmem:[%s1610 + $0x3a8] sm:$0xff]
        %v6634 = vld [vmem:[%s1610 + $0x3b0] sm:$0xff]
        %v6635 = vld [vmem:[%s1610 + $0x3b8] sm:$0xff]
        %v6636 = vld [vmem:[%s1610 + $0x3c0] sm:$0xff]
        %v6637 = vld [vmem:[%s1610 + $0x3c8] sm:$0xff]
        %v6638 = vld [vmem:[%s1610 + $0x3d0] sm:$0xff]
        %v6639 = vld [vmem:[%s1610 + $0x3d8] sm:$0xff]
        %v6640 = vld [vmem:[%s1610 + $0x3e0] sm:$0xff]
        %v6641 = vld [vmem:[%s1610 + $0x3e8] sm:$0xff]
        %v6642 = vld [vmem:[%s1610 + $0x3f0] sm:$0xff]
        %v6643 = vld [vmem:[%s1610 + $0x3f8] sm:$0xff]
        %v6644 = vmul.f32 %v6332, %v6628
        %v6645 = vmul.f32 %v6333, %v6629
        %v6646 = vmul.f32 %v6334, %v6630
        %v6647 = vmul.f32 %v6335, %v6631
        %v6648 = vmul.f32 %v6336, %v6632
        %v6649 = vmul.f32 %v6337, %v6633
        %v6650 = vmul.f32 %v6338, %v6634
        %v6651 = vmul.f32 %v6339, %v6635
        %v6652 = vmul.f32 %v6340, %v6636
        %v6653 = vmul.f32 %v6341, %v6637
        %v6654 = vmul.f32 %v6342, %v6638
        %v6655 = vmul.f32 %v6343, %v6639
        %v6656 = vmul.f32 %v6344, %v6640
        %v6657 = vmul.f32 %v6345, %v6641
        %v6658 = vmul.f32 %v6346, %v6642
        %v6659 = vmul.f32 %v6347, %v6643
        %v6660 = vsel %vm1358, %v6644, 0.0
        %v6661 = vsel %vm1358, %v6645, 0.0
        %v6662 = vadd.f32 %v6660, %v6661
        %v6663 = vsel %vm1358, %v6646, 0.0
        %v6664 = vadd.f32 %v6662, %v6663
        %v6665 = vsel %vm1358, %v6647, 0.0
        %v6666 = vadd.f32 %v6664, %v6665
        %v6667 = vsel %vm1358, %v6648, 0.0
        %v6668 = vadd.f32 %v6666, %v6667
        %v6669 = vsel %vm1358, %v6649, 0.0
        %v6670 = vadd.f32 %v6668, %v6669
        %v6671 = vsel %vm1358, %v6650, 0.0
        %v6672 = vadd.f32 %v6670, %v6671
        %v6673 = vsel %vm1358, %v6651, 0.0
        %v6674 = vadd.f32 %v6672, %v6673
        %v6675 = vsel %vm1358, %v6652, 0.0
        %v6676 = vadd.f32 %v6674, %v6675
        %v6677 = vsel %vm1358, %v6653, 0.0
        %v6678 = vadd.f32 %v6676, %v6677
        %v6679 = vsel %vm1358, %v6654, 0.0
        %v6680 = vadd.f32 %v6678, %v6679
        %v6681 = vsel %vm1358, %v6655, 0.0
        %v6682 = vadd.f32 %v6680, %v6681
        %v6683 = vsel %vm1358, %v6656, 0.0
        %v6684 = vadd.f32 %v6682, %v6683
        %v6685 = vsel %vm1358, %v6657, 0.0
        %v6686 = vadd.f32 %v6684, %v6685
        %v6687 = vsel %vm1358, %v6658, 0.0
        %v6688 = vadd.f32 %v6686, %v6687
        %v6689 = vsel %vm1358, %v6659, 0.0
        %v6690 = vadd.f32 %v6688, %v6689
        %v6691 = vrot.slane %v6690, 4
        %v6692 = vadd.f32 %v6690, %v6691
        %v6693 = vrot.slane %v6692, 2
        %v6694 = vadd.f32 %v6692, %v6693
        %v6695 = vrot.slane %v6694, 1
        %v6696 = vadd.f32 %v6694, %v6695
        %v6697 = vadd.f32 %v5981, %v6696
        %v6698 = vld [vmem:[%s1681 + $0x380] sm:$0xff]
        %v6699 = vld [vmem:[%s1681 + $0x388] sm:$0xff]
        %v6700 = vld [vmem:[%s1681 + $0x390] sm:$0xff]
        %v6701 = vld [vmem:[%s1681 + $0x398] sm:$0xff]
        %v6702 = vld [vmem:[%s1681 + $0x3a0] sm:$0xff]
        %v6703 = vld [vmem:[%s1681 + $0x3a8] sm:$0xff]
        %v6704 = vld [vmem:[%s1681 + $0x3b0] sm:$0xff]
        %v6705 = vld [vmem:[%s1681 + $0x3b8] sm:$0xff]
        %v6706 = vld [vmem:[%s1681 + $0x3c0] sm:$0xff]
        %v6707 = vld [vmem:[%s1681 + $0x3c8] sm:$0xff]
        %v6708 = vld [vmem:[%s1681 + $0x3d0] sm:$0xff]
        %v6709 = vld [vmem:[%s1681 + $0x3d8] sm:$0xff]
        %v6710 = vld [vmem:[%s1681 + $0x3e0] sm:$0xff]
        %v6711 = vld [vmem:[%s1681 + $0x3e8] sm:$0xff]
        %v6712 = vld [vmem:[%s1681 + $0x3f0] sm:$0xff]
        %v6713 = vld [vmem:[%s1681 + $0x3f8] sm:$0xff]
        %v6714 = vmul.f32 %v6332, %v6698
        %v6715 = vmul.f32 %v6333, %v6699
        %v6716 = vmul.f32 %v6334, %v6700
        %v6717 = vmul.f32 %v6335, %v6701
        %v6718 = vmul.f32 %v6336, %v6702
        %v6719 = vmul.f32 %v6337, %v6703
        %v6720 = vmul.f32 %v6338, %v6704
        %v6721 = vmul.f32 %v6339, %v6705
        %v6722 = vmul.f32 %v6340, %v6706
        %v6723 = vmul.f32 %v6341, %v6707
        %v6724 = vmul.f32 %v6342, %v6708
        %v6725 = vmul.f32 %v6343, %v6709
        %v6726 = vmul.f32 %v6344, %v6710
        %v6727 = vmul.f32 %v6345, %v6711
        %v6728 = vmul.f32 %v6346, %v6712
        %v6729 = vmul.f32 %v6347, %v6713
        %v6730 = vsel %vm1358, %v6714, 0.0
        %v6731 = vsel %vm1358, %v6715, 0.0
        %v6732 = vadd.f32 %v6730, %v6731
        %v6733 = vsel %vm1358, %v6716, 0.0
        %v6734 = vadd.f32 %v6732, %v6733
        %v6735 = vsel %vm1358, %v6717, 0.0
        %v6736 = vadd.f32 %v6734, %v6735
        %v6737 = vsel %vm1358, %v6718, 0.0
        %v6738 = vadd.f32 %v6736, %v6737
        %v6739 = vsel %vm1358, %v6719, 0.0
        %v6740 = vadd.f32 %v6738, %v6739
        %v6741 = vsel %vm1358, %v6720, 0.0
        %v6742 = vadd.f32 %v6740, %v6741
        %v6743 = vsel %vm1358, %v6721, 0.0
        %v6744 = vadd.f32 %v6742, %v6743
        %v6745 = vsel %vm1358, %v6722, 0.0
        %v6746 = vadd.f32 %v6744, %v6745
        %v6747 = vsel %vm1358, %v6723, 0.0
        %v6748 = vadd.f32 %v6746, %v6747
        %v6749 = vsel %vm1358, %v6724, 0.0
        %v6750 = vadd.f32 %v6748, %v6749
        %v6751 = vsel %vm1358, %v6725, 0.0
        %v6752 = vadd.f32 %v6750, %v6751
        %v6753 = vsel %vm1358, %v6726, 0.0
        %v6754 = vadd.f32 %v6752, %v6753
        %v6755 = vsel %vm1358, %v6727, 0.0
        %v6756 = vadd.f32 %v6754, %v6755
        %v6757 = vsel %vm1358, %v6728, 0.0
        %v6758 = vadd.f32 %v6756, %v6757
        %v6759 = vsel %vm1358, %v6729, 0.0
        %v6760 = vadd.f32 %v6758, %v6759
        %v6761 = vrot.slane %v6760, 4
        %v6762 = vadd.f32 %v6760, %v6761
        %v6763 = vrot.slane %v6762, 2
        %v6764 = vadd.f32 %v6762, %v6763
        %v6765 = vrot.slane %v6764, 1
        %v6766 = vadd.f32 %v6764, %v6765
        %v6767 = vadd.f32 %v6051, %v6766
        %v6768 = vld [vmem:[%s1752 + $0x380] sm:$0xff]
        %v6769 = vld [vmem:[%s1752 + $0x388] sm:$0xff]
        %v6770 = vld [vmem:[%s1752 + $0x390] sm:$0xff]
        %v6771 = vld [vmem:[%s1752 + $0x398] sm:$0xff]
        %v6772 = vld [vmem:[%s1752 + $0x3a0] sm:$0xff]
        %v6773 = vld [vmem:[%s1752 + $0x3a8] sm:$0xff]
        %v6774 = vld [vmem:[%s1752 + $0x3b0] sm:$0xff]
        %v6775 = vld [vmem:[%s1752 + $0x3b8] sm:$0xff]
        %v6776 = vld [vmem:[%s1752 + $0x3c0] sm:$0xff]
        %v6777 = vld [vmem:[%s1752 + $0x3c8] sm:$0xff]
        %v6778 = vld [vmem:[%s1752 + $0x3d0] sm:$0xff]
        %v6779 = vld [vmem:[%s1752 + $0x3d8] sm:$0xff]
        %v6780 = vld [vmem:[%s1752 + $0x3e0] sm:$0xff]
        %v6781 = vld [vmem:[%s1752 + $0x3e8] sm:$0xff]
        %v6782 = vld [vmem:[%s1752 + $0x3f0] sm:$0xff]
        %v6783 = vld [vmem:[%s1752 + $0x3f8] sm:$0xff]
        %v6784 = vmul.f32 %v6332, %v6768
        %v6785 = vmul.f32 %v6333, %v6769
        %v6786 = vmul.f32 %v6334, %v6770
        %v6787 = vmul.f32 %v6335, %v6771
        %v6788 = vmul.f32 %v6336, %v6772
        %v6789 = vmul.f32 %v6337, %v6773
        %v6790 = vmul.f32 %v6338, %v6774
        %v6791 = vmul.f32 %v6339, %v6775
        %v6792 = vmul.f32 %v6340, %v6776
        %v6793 = vmul.f32 %v6341, %v6777
        %v6794 = vmul.f32 %v6342, %v6778
        %v6795 = vmul.f32 %v6343, %v6779
        %v6796 = vmul.f32 %v6344, %v6780
        %v6797 = vmul.f32 %v6345, %v6781
        %v6798 = vmul.f32 %v6346, %v6782
        %v6799 = vmul.f32 %v6347, %v6783
        %v6800 = vsel %vm1358, %v6784, 0.0
        %v6801 = vsel %vm1358, %v6785, 0.0
        %v6802 = vadd.f32 %v6800, %v6801
        %v6803 = vsel %vm1358, %v6786, 0.0
        %v6804 = vadd.f32 %v6802, %v6803
        %v6805 = vsel %vm1358, %v6787, 0.0
        %v6806 = vadd.f32 %v6804, %v6805
        %v6807 = vsel %vm1358, %v6788, 0.0
        %v6808 = vadd.f32 %v6806, %v6807
        %v6809 = vsel %vm1358, %v6789, 0.0
        %v6810 = vadd.f32 %v6808, %v6809
        %v6811 = vsel %vm1358, %v6790, 0.0
        %v6812 = vadd.f32 %v6810, %v6811
        %v6813 = vsel %vm1358, %v6791, 0.0
        %v6814 = vadd.f32 %v6812, %v6813
        %v6815 = vsel %vm1358, %v6792, 0.0
        %v6816 = vadd.f32 %v6814, %v6815
        %v6817 = vsel %vm1358, %v6793, 0.0
        %v6818 = vadd.f32 %v6816, %v6817
        %v6819 = vsel %vm1358, %v6794, 0.0
        %v6820 = vadd.f32 %v6818, %v6819
        %v6821 = vsel %vm1358, %v6795, 0.0
        %v6822 = vadd.f32 %v6820, %v6821
        %v6823 = vsel %vm1358, %v6796, 0.0
        %v6824 = vadd.f32 %v6822, %v6823
        %v6825 = vsel %vm1358, %v6797, 0.0
        %v6826 = vadd.f32 %v6824, %v6825
        %v6827 = vsel %vm1358, %v6798, 0.0
        %v6828 = vadd.f32 %v6826, %v6827
        %v6829 = vsel %vm1358, %v6799, 0.0
        %v6830 = vadd.f32 %v6828, %v6829
        %v6831 = vrot.slane %v6830, 4
        %v6832 = vadd.f32 %v6830, %v6831
        %v6833 = vrot.slane %v6832, 2
        %v6834 = vadd.f32 %v6832, %v6833
        %v6835 = vrot.slane %v6834, 1
        %v6836 = vadd.f32 %v6834, %v6835
        %v6837 = vadd.f32 %v6121, %v6836
        %v6838 = vld [vmem:[%s1823 + $0x380] sm:$0xff]
        %v6839 = vld [vmem:[%s1823 + $0x388] sm:$0xff]
        %v6840 = vld [vmem:[%s1823 + $0x390] sm:$0xff]
        %v6841 = vld [vmem:[%s1823 + $0x398] sm:$0xff]
        %v6842 = vld [vmem:[%s1823 + $0x3a0] sm:$0xff]
        %v6843 = vld [vmem:[%s1823 + $0x3a8] sm:$0xff]
        %v6844 = vld [vmem:[%s1823 + $0x3b0] sm:$0xff]
        %v6845 = vld [vmem:[%s1823 + $0x3b8] sm:$0xff]
        %v6846 = vld [vmem:[%s1823 + $0x3c0] sm:$0xff]
        %v6847 = vld [vmem:[%s1823 + $0x3c8] sm:$0xff]
        %v6848 = vld [vmem:[%s1823 + $0x3d0] sm:$0xff]
        %v6849 = vld [vmem:[%s1823 + $0x3d8] sm:$0xff]
        %v6850 = vld [vmem:[%s1823 + $0x3e0] sm:$0xff]
        %v6851 = vld [vmem:[%s1823 + $0x3e8] sm:$0xff]
        %v6852 = vld [vmem:[%s1823 + $0x3f0] sm:$0xff]
        %v6853 = vld [vmem:[%s1823 + $0x3f8] sm:$0xff]
        %v6854 = vmul.f32 %v6332, %v6838
        %v6855 = vmul.f32 %v6333, %v6839
        %v6856 = vmul.f32 %v6334, %v6840
        %v6857 = vmul.f32 %v6335, %v6841
        %v6858 = vmul.f32 %v6336, %v6842
        %v6859 = vmul.f32 %v6337, %v6843
        %v6860 = vmul.f32 %v6338, %v6844
        %v6861 = vmul.f32 %v6339, %v6845
        %v6862 = vmul.f32 %v6340, %v6846
        %v6863 = vmul.f32 %v6341, %v6847
        %v6864 = vmul.f32 %v6342, %v6848
        %v6865 = vmul.f32 %v6343, %v6849
        %v6866 = vmul.f32 %v6344, %v6850
        %v6867 = vmul.f32 %v6345, %v6851
        %v6868 = vmul.f32 %v6346, %v6852
        %v6869 = vmul.f32 %v6347, %v6853
        %v6870 = vsel %vm1358, %v6854, 0.0
        %v6871 = vsel %vm1358, %v6855, 0.0
        %v6872 = vadd.f32 %v6870, %v6871
        %v6873 = vsel %vm1358, %v6856, 0.0
        %v6874 = vadd.f32 %v6872, %v6873
        %v6875 = vsel %vm1358, %v6857, 0.0
        %v6876 = vadd.f32 %v6874, %v6875
        %v6877 = vsel %vm1358, %v6858, 0.0
        %v6878 = vadd.f32 %v6876, %v6877
        %v6879 = vsel %vm1358, %v6859, 0.0
        %v6880 = vadd.f32 %v6878, %v6879
        %v6881 = vsel %vm1358, %v6860, 0.0
        %v6882 = vadd.f32 %v6880, %v6881
        %v6883 = vsel %vm1358, %v6861, 0.0
        %v6884 = vadd.f32 %v6882, %v6883
        %v6885 = vsel %vm1358, %v6862, 0.0
        %v6886 = vadd.f32 %v6884, %v6885
        %v6887 = vsel %vm1358, %v6863, 0.0
        %v6888 = vadd.f32 %v6886, %v6887
        %v6889 = vsel %vm1358, %v6864, 0.0
        %v6890 = vadd.f32 %v6888, %v6889
        %v6891 = vsel %vm1358, %v6865, 0.0
        %v6892 = vadd.f32 %v6890, %v6891
        %v6893 = vsel %vm1358, %v6866, 0.0
        %v6894 = vadd.f32 %v6892, %v6893
        %v6895 = vsel %vm1358, %v6867, 0.0
        %v6896 = vadd.f32 %v6894, %v6895
        %v6897 = vsel %vm1358, %v6868, 0.0
        %v6898 = vadd.f32 %v6896, %v6897
        %v6899 = vsel %vm1358, %v6869, 0.0
        %v6900 = vadd.f32 %v6898, %v6899
        %v6901 = vrot.slane %v6900, 4
        %v6902 = vadd.f32 %v6900, %v6901
        %v6903 = vrot.slane %v6902, 2
        %v6904 = vadd.f32 %v6902, %v6903
        %v6905 = vrot.slane %v6904, 1
        %v6906 = vadd.f32 %v6904, %v6905
        %v6907 = vadd.f32 %v6191, %v6906
        %v6908 = vld [vmem:[%s1894 + $0x380] sm:$0xff]
        %v6909 = vld [vmem:[%s1894 + $0x388] sm:$0xff]
        %v6910 = vld [vmem:[%s1894 + $0x390] sm:$0xff]
        %v6911 = vld [vmem:[%s1894 + $0x398] sm:$0xff]
        %v6912 = vld [vmem:[%s1894 + $0x3a0] sm:$0xff]
        %v6913 = vld [vmem:[%s1894 + $0x3a8] sm:$0xff]
        %v6914 = vld [vmem:[%s1894 + $0x3b0] sm:$0xff]
        %v6915 = vld [vmem:[%s1894 + $0x3b8] sm:$0xff]
        %v6916 = vld [vmem:[%s1894 + $0x3c0] sm:$0xff]
        %v6917 = vld [vmem:[%s1894 + $0x3c8] sm:$0xff]
        %v6918 = vld [vmem:[%s1894 + $0x3d0] sm:$0xff]
        %v6919 = vld [vmem:[%s1894 + $0x3d8] sm:$0xff]
        %v6920 = vld [vmem:[%s1894 + $0x3e0] sm:$0xff]
        %v6921 = vld [vmem:[%s1894 + $0x3e8] sm:$0xff]
        %v6922 = vld [vmem:[%s1894 + $0x3f0] sm:$0xff]
        %v6923 = vld [vmem:[%s1894 + $0x3f8] sm:$0xff]
        %v6924 = vmul.f32 %v6332, %v6908
        %v6925 = vmul.f32 %v6333, %v6909
        %v6926 = vmul.f32 %v6334, %v6910
        %v6927 = vmul.f32 %v6335, %v6911
        %v6928 = vmul.f32 %v6336, %v6912
        %v6929 = vmul.f32 %v6337, %v6913
        %v6930 = vmul.f32 %v6338, %v6914
        %v6931 = vmul.f32 %v6339, %v6915
        %v6932 = vmul.f32 %v6340, %v6916
        %v6933 = vmul.f32 %v6341, %v6917
        %v6934 = vmul.f32 %v6342, %v6918
        %v6935 = vmul.f32 %v6343, %v6919
        %v6936 = vmul.f32 %v6344, %v6920
        %v6937 = vmul.f32 %v6345, %v6921
        %v6938 = vmul.f32 %v6346, %v6922
        %v6939 = vmul.f32 %v6347, %v6923
        %v6940 = vsel %vm1358, %v6924, 0.0
        %v6941 = vsel %vm1358, %v6925, 0.0
        %v6942 = vadd.f32 %v6940, %v6941
        %v6943 = vsel %vm1358, %v6926, 0.0
        %v6944 = vadd.f32 %v6942, %v6943
        %v6945 = vsel %vm1358, %v6927, 0.0
        %v6946 = vadd.f32 %v6944, %v6945
        %v6947 = vsel %vm1358, %v6928, 0.0
        %v6948 = vadd.f32 %v6946, %v6947
        %v6949 = vsel %vm1358, %v6929, 0.0
        %v6950 = vadd.f32 %v6948, %v6949
        %v6951 = vsel %vm1358, %v6930, 0.0
        %v6952 = vadd.f32 %v6950, %v6951
        %v6953 = vsel %vm1358, %v6931, 0.0
        %v6954 = vadd.f32 %v6952, %v6953
        %v6955 = vsel %vm1358, %v6932, 0.0
        %v6956 = vadd.f32 %v6954, %v6955
        %v6957 = vsel %vm1358, %v6933, 0.0
        %v6958 = vadd.f32 %v6956, %v6957
        %v6959 = vsel %vm1358, %v6934, 0.0
        %v6960 = vadd.f32 %v6958, %v6959
        %v6961 = vsel %vm1358, %v6935, 0.0
        %v6962 = vadd.f32 %v6960, %v6961
        %v6963 = vsel %vm1358, %v6936, 0.0
        %v6964 = vadd.f32 %v6962, %v6963
        %v6965 = vsel %vm1358, %v6937, 0.0
        %v6966 = vadd.f32 %v6964, %v6965
        %v6967 = vsel %vm1358, %v6938, 0.0
        %v6968 = vadd.f32 %v6966, %v6967
        %v6969 = vsel %vm1358, %v6939, 0.0
        %v6970 = vadd.f32 %v6968, %v6969
        %v6971 = vrot.slane %v6970, 4
        %v6972 = vadd.f32 %v6970, %v6971
        %v6973 = vrot.slane %v6972, 2
        %v6974 = vadd.f32 %v6972, %v6973
        %v6975 = vrot.slane %v6974, 1
        %v6976 = vadd.f32 %v6974, %v6975
        %v6977 = vadd.f32 %v6261, %v6976
        %v6978 = vld [vmem:[%s1965 + $0x380] sm:$0xff]
        %v6979 = vld [vmem:[%s1965 + $0x388] sm:$0xff]
        %v6980 = vld [vmem:[%s1965 + $0x390] sm:$0xff]
        %v6981 = vld [vmem:[%s1965 + $0x398] sm:$0xff]
        %v6982 = vld [vmem:[%s1965 + $0x3a0] sm:$0xff]
        %v6983 = vld [vmem:[%s1965 + $0x3a8] sm:$0xff]
        %v6984 = vld [vmem:[%s1965 + $0x3b0] sm:$0xff]
        %v6985 = vld [vmem:[%s1965 + $0x3b8] sm:$0xff]
        %v6986 = vld [vmem:[%s1965 + $0x3c0] sm:$0xff]
        %v6987 = vld [vmem:[%s1965 + $0x3c8] sm:$0xff]
        %v6988 = vld [vmem:[%s1965 + $0x3d0] sm:$0xff]
        %v6989 = vld [vmem:[%s1965 + $0x3d8] sm:$0xff]
        %v6990 = vld [vmem:[%s1965 + $0x3e0] sm:$0xff]
        %v6991 = vld [vmem:[%s1965 + $0x3e8] sm:$0xff]
        %v6992 = vld [vmem:[%s1965 + $0x3f0] sm:$0xff]
        %v6993 = vld [vmem:[%s1965 + $0x3f8] sm:$0xff]
        %v6994 = vmul.f32 %v6332, %v6978
        %v6995 = vmul.f32 %v6333, %v6979
        %v6996 = vmul.f32 %v6334, %v6980
        %v6997 = vmul.f32 %v6335, %v6981
        %v6998 = vmul.f32 %v6336, %v6982
        %v6999 = vmul.f32 %v6337, %v6983
        %v7000 = vmul.f32 %v6338, %v6984
        %v7001 = vmul.f32 %v6339, %v6985
        %v7002 = vmul.f32 %v6340, %v6986
        %v7003 = vmul.f32 %v6341, %v6987
        %v7004 = vmul.f32 %v6342, %v6988
        %v7005 = vmul.f32 %v6343, %v6989
        %v7006 = vmul.f32 %v6344, %v6990
        %v7007 = vmul.f32 %v6345, %v6991
        %v7008 = vmul.f32 %v6346, %v6992
        %v7009 = vmul.f32 %v6347, %v6993
        %v7010 = vsel %vm1358, %v6994, 0.0
        %v7011 = vsel %vm1358, %v6995, 0.0
        %v7012 = vadd.f32 %v7010, %v7011
        %v7013 = vsel %vm1358, %v6996, 0.0
        %v7014 = vadd.f32 %v7012, %v7013
        %v7015 = vsel %vm1358, %v6997, 0.0
        %v7016 = vadd.f32 %v7014, %v7015
        %v7017 = vsel %vm1358, %v6998, 0.0
        %v7018 = vadd.f32 %v7016, %v7017
        %v7019 = vsel %vm1358, %v6999, 0.0
        %v7020 = vadd.f32 %v7018, %v7019
        %v7021 = vsel %vm1358, %v7000, 0.0
        %v7022 = vadd.f32 %v7020, %v7021
        %v7023 = vsel %vm1358, %v7001, 0.0
        %v7024 = vadd.f32 %v7022, %v7023
        %v7025 = vsel %vm1358, %v7002, 0.0
        %v7026 = vadd.f32 %v7024, %v7025
        %v7027 = vsel %vm1358, %v7003, 0.0
        %v7028 = vadd.f32 %v7026, %v7027
        %v7029 = vsel %vm1358, %v7004, 0.0
        %v7030 = vadd.f32 %v7028, %v7029
        %v7031 = vsel %vm1358, %v7005, 0.0
        %v7032 = vadd.f32 %v7030, %v7031
        %v7033 = vsel %vm1358, %v7006, 0.0
        %v7034 = vadd.f32 %v7032, %v7033
        %v7035 = vsel %vm1358, %v7007, 0.0
        %v7036 = vadd.f32 %v7034, %v7035
        %v7037 = vsel %vm1358, %v7008, 0.0
        %v7038 = vadd.f32 %v7036, %v7037
        %v7039 = vsel %vm1358, %v7009, 0.0
        %v7040 = vadd.f32 %v7038, %v7039
        %v7041 = vrot.slane %v7040, 4
        %v7042 = vadd.f32 %v7040, %v7041
        %v7043 = vrot.slane %v7042, 2
        %v7044 = vadd.f32 %v7042, %v7043
        %v7045 = vrot.slane %v7044, 1
        %v7046 = vadd.f32 %v7044, %v7045
        %v7047 = vadd.f32 %v6331, %v7046
        %v7048 = vsel %vm1358, %v6417, 0.0
        %7049 = vadd.xlane.f32.xlu0 %v7048
        %v7050 = vpop.xlane.xlu0 %7049
        %v7051 = vsel %vm1358, %v6487, 0.0
        %7052 = vadd.xlane.f32.xlu0 %v7051
        %v7053 = vpop.xlane.xlu0 %7052
        %v7054 = vsel %vm1358, %v6557, 0.0
        %7055 = vadd.xlane.f32.xlu0 %v7054
        %v7056 = vpop.xlane.xlu0 %7055
        %v7057 = vsel %vm1358, %v6627, 0.0
        %7058 = vadd.xlane.f32.xlu0 %v7057
        %v7059 = vpop.xlane.xlu0 %7058
        %v7060 = vsel %vm1358, %v6697, 0.0
        %7061 = vadd.xlane.f32.xlu0 %v7060
        %v7062 = vpop.xlane.xlu0 %7061
        %v7063 = vsel %vm1358, %v6767, 0.0
        %7064 = vadd.xlane.f32.xlu0 %v7063
        %v7065 = vpop.xlane.xlu0 %7064
        %v7066 = vsel %vm1358, %v6837, 0.0
        %7067 = vadd.xlane.f32.xlu0 %v7066
        %v7068 = vpop.xlane.xlu0 %7067
        %v7069 = vsel %vm1358, %v6907, 0.0
        %7070 = vadd.xlane.f32.xlu0 %v7069
        %v7071 = vpop.xlane.xlu0 %7070
        %v7072 = vsel %vm1358, %v6977, 0.0
        %7073 = vadd.xlane.f32.xlu0 %v7072
        %v7074 = vpop.xlane.xlu0 %7073
        %v7075 = vsel %vm1358, %v7047, 0.0
        %7076 = vadd.xlane.f32.xlu0 %v7075
        %v7077 = vpop.xlane.xlu0 %7076
        %vm7078 = vcmask 7168
        %v7079 = vsel %vm7078, %v7050, %v7053
        %vm7080 = vcmask 15360
        %v7081 = vsel %vm7080, %v7079, %v7056
        %vm7082 = vcmask 23552
        %v7083 = vsel %vm7082, %v7081, %v7059
        %vm7084 = vcmask 31744
        %v7085 = vsel %vm7084, %v7083, %v7062
        %vm7086 = vcmask 39936
        %v7087 = vsel %vm7086, %v7085, %v7065
        %vm7088 = vcmask 48128
        %v7089 = vsel %vm7088, %v7087, %v7068
        %vm7090 = vcmask 56320
        %v7091 = vsel %vm7090, %v7089, %v7071
        %vm7092 = vcmask 64512
        %v7093 = vsel %vm7092, %v7091, %v7074
        %vm7094 = vcmask 72704
        %v7095 = vsel %vm7094, %v7093, %v7077
        %v7096 = vld [vmem:[%s4] sm:$0x1]
        %v7097 = vadd.f32 %v7095, %v7096
        %vm7098 = vcmask 73728
        %7099 = vst.msk [vmem:[%s253] sm:$0x1] %vm7098, %v7097
        %v7100 = vsel %vm7098, %v7097, -inf
        %7101 = vmax.xlane.f32.xlu0 %v7100
        %v7102 = vpop.xlane.xlu0 %7101
        %v7103 = vsub.f32 %v7097, %v7102
        %v7104 = vmul.f32 %v7103, 1.442695
        %v7105 = vpow.pop %v7104
        %v7106 = vsel %vm7098, %v7105, 0.0
        %7107 = vadd.xlane.f32.xlu0 %v7106
        %v7108 = vpop.xlane.xlu0 %7107
        %v7109 = vrcp.pop %v7108
        %v7110 = vmul.f32 %v7105, %v7109
        %7111 = vst.msk [vmem:[%s247] sm:$0x1] %vm7098, %v7110
        %s7112 = sand.u32 %s142, 1
        %s7113 = scalar_lea.sflag [#allocation5], %s7112
        %s7114 = sand.u32 %s142, 1
        %s7115 = scalar_lea.vmem [#allocation4], %s7114
        %s7116 = sand.u32 %s168, 1
        %s7117 = scalar_lea.sflag [#allocation7], %s7116
        %s7118 = sand.u32 %s168, 1
        %s7119 = scalar_lea.vmem [#allocation6], %s7118
        // Predicated region
        $region55: #{two_layer_cnn_forward.1} parent=39 // pred_check
          %p7120 = pneg %p152
        $region56: #{two_layer_cnn_forward.1} parent=39 // pred_check_branch
          %7122 = sbr.rel (%p7120) target = $region58
        $region57: #{two_layer_cnn_forward.1} parent=39 // pred_region
          %s7124 = ssub.s32 16, 16
          %7125 = vsyncadd %s7113, %s7124
          %s7126 = smul.addr %s24, 16
          %s7127 = scalar_lea.hbm %s5, %s7126
          %s7129 = sshll.u32 %s7115, 4
          %s7130 = int_to_ptr.vmem [resolvable:$true] %s7129
          %7132 = dma.vmem_to_hbm [thread:$0]  %s7130, 16, %s7127, %s7113
        $region58: #{two_layer_cnn_forward.1} parent=39 // pred_fallthru
          _
        // Predicated region
        $region59: #{two_layer_cnn_forward.1} parent=39 // pred_check
          %p7133 = pneg %p178
        $region60: #{two_layer_cnn_forward.1} parent=39 // pred_check_branch
          %7135 = sbr.rel (%p7133) target = $region62
        $region61: #{two_layer_cnn_forward.1} parent=39 // pred_region
          %s7137 = ssub.s32 16, 16
          %7138 = vsyncadd %s7117, %s7137
          %s7139 = smul.addr %s24, 16
          %s7140 = scalar_lea.hbm %s6, %s7139
          %s7142 = sshll.u32 %s7119, 4
          %s7143 = int_to_ptr.vmem [resolvable:$true] %s7142
          %7145 = dma.vmem_to_hbm [thread:$0]  %s7143, 16, %s7140, %s7117
        $region62: #{two_layer_cnn_forward.1} parent=39 // pred_fallthru
          _
      $region40: #{two_layer_cnn_forward.1} parent=5 // pred_fallthru
        _
      %p7146 = scmp.le.s32.totalorder 2, %s19
      // Predicated region
      $region63: #{two_layer_cnn_forward.1} parent=5 // pred_check
        %p7147 = pneg %p7146
      $region64: #{two_layer_cnn_forward.1} parent=5 // pred_check_branch
        %7149 = sbr.rel (%p7147) target = $region66
      $region65: #{two_layer_cnn_forward.1} parent=5 // pred_region
        %s7150 = ssub.s32 %s19, 2
        // Predicated region
        $region67: #{two_layer_cnn_forward.1} parent=65 // pred_check
          %p7151 = pneg %p158
        $region68: #{two_layer_cnn_forward.1} parent=65 // pred_check_branch
          %7153 = sbr.rel (%p7151) target = $region70
        $region69: #{two_layer_cnn_forward.1} parent=65 // pred_region
          %s7154 = sand.u32 %s143, 1
          %s7155 = scalar_lea.sflag [#allocation5], %s7154
          %s7156 = sand.u32 %s143, 1
          %s7157 = scalar_lea.vmem [#allocation4], %s7156
          %7158 = dma.done %s7155, 16
        $region70: #{two_layer_cnn_forward.1} parent=65 // pred_fallthru
          _
        // Predicated region
        $region71: #{two_layer_cnn_forward.1} parent=65 // pred_check
          %p7159 = pneg %p184
        $region72: #{two_layer_cnn_forward.1} parent=65 // pred_check_branch
          %7161 = sbr.rel (%p7159) target = $region74
        $region73: #{two_layer_cnn_forward.1} parent=65 // pred_region
          %s7162 = sand.u32 %s169, 1
          %s7163 = scalar_lea.sflag [#allocation7], %s7162
          %s7164 = sand.u32 %s169, 1
          %s7165 = scalar_lea.vmem [#allocation6], %s7164
          %7166 = dma.done %s7163, 16
        $region74: #{two_layer_cnn_forward.1} parent=65 // pred_fallthru
          _
      $region66: #{two_layer_cnn_forward.1} parent=5 // pred_fallthru
        _
    $region6: #{two_layer_cnn_forward.1} parent=1 // loop_footer
      %s23 = sadd.s32 1, %s19
    $region7: #{two_layer_cnn_forward.1} parent=1 // loop_footer_branch
      %18 = sbr.rel target = $region3
    $region8: #{two_layer_cnn_forward.1} parent=1 // loop_exit
      _
    %7167 = vsyncpa [#allocation5], 1
    %s7168 = scalar_lea.sflag [#allocation5], 1
    %7169 = vsyncpa %s7168, 1
    %7170 = vsyncpa [#allocation7], 1
    %s7171 = scalar_lea.sflag [#allocation7], 1
    %7172 = vsyncpa %s7171, 1

</llo_original>
